<compile_context>
chip_gen: v7x
topology: tpu7x:2x2x1
jax: 0.10.0
libtpu: 0.0.40
codegen_flags: <defaults>
</compile_context>

<pallas_src>
import jax
import jax.numpy as jnp
from jax import lax
from jax.experimental import pallas as pl
from jax.experimental.pallas import tpu as pltpu

# ----- hyperparameters from the PyTorch module -----
VOCAB_SIZE = 64
N_EMBD = 128
BLOCK_SIZE = 256
N_LAYER = 6
N_HEAD_CFG = 12                       # only used to derive head_size
HEAD_SIZE = N_EMBD // N_HEAD_CFG      # = 10
N_ATTN_HEADS = 4                      # MultiHeadAttention(4, head_size) in Block
ATTN_SCALE = float(N_EMBD) ** (-5)    # verbatim `C ** (-5)` quirk == 2**-35 exactly
LN_EPS = 1e-5
NEG_BIG = -1e30                       # finite mask value (bf16/mixed-precision safe)


def _layer_norm(h, w, b):
    """Biased-variance LayerNorm (PyTorch default), f32. Broadcasts (1,C) params."""
    mu = jnp.mean(h, axis=-1, keepdims=True)
    var = jnp.mean((h - mu) ** 2, axis=-1, keepdims=True)
    return (h - mu) * lax.rsqrt(var + LN_EPS) * w + b


# ---------------------------------------------------------------------------
# Fused kernel: all N_LAYER transformer blocks + final LN + LM head.
# grid = (batch_group, layer); residual stream kept in a VMEM scratch that is
# resident across the serial "layer" axis.
# ---------------------------------------------------------------------------
def gpt_kernel(
    x_ref,                          # (Bb, T, C)  f32 initial activations (read at layer 0)
    ln1_w_ref, ln1_b_ref,           # (1, C)  f32
    wqkvo_ref,                      # (C, 2*H*C) bf16: [wq@wk.T*scale | wv@wproj], heads on lanes
    bproj_ref,                      # (1, C)  f32
    ln2_w_ref, ln2_b_ref,           # (1, C)  f32
    w1_ref, b1_ref,                 # (C, 4C) bf16 / (1, 4C) f32
    w2_ref, b2_ref,                 # (4C, C) bf16 / (1, C)  f32
    lnf_w_ref, lnf_b_ref,           # (1, C)  f32
    wlm_ref, blm_ref,               # (C, VP) bf16 / (1, VP) f32
    logits_ref,                     # (Bb, T, VP) f32 output (written at last layer only)
    res_ref,                        # (Bb, T, C)  f32 VMEM scratch: residual stream
):
    layer = pl.program_id(1)
    n_layer = pl.num_programs(1)

    @pl.when(layer == 0)
    def _init():
        res_ref[...] = x_ref[...]

    x = res_ref[...]                                   # (Bb, T, C) f32 residual stream
    Bb, T, C = x.shape
    H = N_ATTN_HEADS

    # causal mask: built once per step, shared by all heads / batch elements
    row = lax.broadcasted_iota(jnp.int32, (T, T), 0)
    col = lax.broadcasted_iota(jnp.int32, (T, T), 1)
    causal = col <= row

    # ----- multi-head causal self-attention (pre-LN), folded per-head factors -----
    xn = _layer_norm(x.reshape(Bb * T, C), ln1_w_ref[...], ln1_b_ref[...])
    xn_b = xn.astype(jnp.bfloat16)

    # one wide matmul on the (Bb*T, C) slab for all heads' effective q and v
    qv = jnp.dot(xn_b, wqkvo_ref[...], preferred_element_type=jnp.float32)   # (Bb*T, 2*H*C)
    qv = qv.astype(jnp.bfloat16).reshape(Bb, T, 2 * H * C)   # cast once; keep bf16 live
    xn3 = xn_b.reshape(Bb, T, C)

    attn = jnp.zeros((Bb, T, C), jnp.float32)
    for h in range(H):
        qh = qv[:, :, h * C:(h + 1) * C]                      # (Bb, T, C) bf16
        vh = qv[:, :, (H + h) * C:(H + 1 + h) * C]            # (Bb, T, C) bf16
        # scores_h = (xn @ (wq_h wk_h^T * 2^-35)) @ xn^T  -- scale already folded in.
        # Lane-contracted dot_general (bqd,bkd->bqk) is handled natively by the MXU;
        # no per-head transpose is materialized.
        scores = jnp.einsum('bqd,bkd->bqk', qh, xn3,
                            preferred_element_type=jnp.float32)
        scores = jnp.where(causal, scores, NEG_BIG)
        scores = scores - jnp.max(scores, axis=-1, keepdims=True)
        p = jnp.exp(scores)
        p = p * pl.reciprocal(jnp.sum(p, axis=-1, keepdims=True), approx=True)
        # attention dropout: identity in eval mode
        attn = attn + jnp.einsum('bqk,bkd->bqd', p.astype(jnp.bfloat16), vh,
                                 preferred_element_type=jnp.float32)
    x = x + attn + bproj_ref[...]                             # residual

    # ----- feed-forward (pre-LN), done on the (Bb*T, C) slab -----
    xn2 = _layer_norm(x.reshape(Bb * T, C),
                      ln2_w_ref[...], ln2_b_ref[...]).astype(jnp.bfloat16)
    hidden = jnp.dot(xn2, w1_ref[...], preferred_element_type=jnp.float32) + b1_ref[...]
    hidden = jnp.maximum(hidden, 0.0).astype(jnp.bfloat16)    # ReLU
    ff = jnp.dot(hidden, w2_ref[...], preferred_element_type=jnp.float32) + b2_ref[...]
    x = x + ff.reshape(Bb, T, C)                              # residual (ffwd dropout = identity)
    res_ref[...] = x

    # ----- LM head epilogue, fused into the last layer step -----
    @pl.when(layer == n_layer - 1)
    def _lm_head():
        VP = logits_ref.shape[-1]
        xn_f = _layer_norm(x.reshape(Bb * T, C),
                           lnf_w_ref[...], lnf_b_ref[...]).astype(jnp.bfloat16)
        lg = jnp.dot(xn_f, wlm_ref[...], preferred_element_type=jnp.float32) + blm_ref[...]
        logits_ref[...] = lg.reshape(Bb, T, VP)


# ---------------------------------------------------------------------------
# Wrapper
# ---------------------------------------------------------------------------
def _layer_spec(arr):
    """Per-layer stacked weight: leading layer dim squeezed, indexed by grid axis 1."""
    nrest = arr.ndim - 1
    return pl.BlockSpec((pl.Squeezed(),) + arr.shape[1:],
                        lambda bg, l, _n=nrest: (l,) + (0,) * _n)


def _const_spec(arr):
    """Whole-array weight, same block for every grid step (fetched once)."""
    n = arr.ndim
    return pl.BlockSpec(arr.shape, lambda bg, l, _n=n: (0,) * _n)


def run_model(x, prep):
    """(B, T, C) f32 activations -> (B, T, VP) f32 padded logits; one pallas_call."""
    B, T, C = x.shape
    st = prep['blocks']
    names = ('ln1_w', 'ln1_b', 'wqkvo', 'bproj', 'ln2_w', 'ln2_b', 'w1', 'b1', 'w2', 'b2')
    ws = [st[n] for n in names]
    L = ws[0].shape[0]
    head_ws = [prep['lnf_w'], prep['lnf_b'], prep['wlm'], prep['blm']]
    VP = prep['wlm'].shape[1]

    # size-2 parallel batch-group axis: keeps both v7x TensorCores busy while streaming
    # each layer's weights only twice (instead of once per batch element).
    BG = 2 if (B % 2 == 0 and B >= 2) else 1
    Bb = B // BG

    return pl.pallas_call(
        gpt_kernel,
        out_shape=jax.ShapeDtypeStruct((B, T, VP), jnp.float32),
        grid_spec=pltpu.PrefetchScalarGridSpec(
            num_scalar_prefetch=0,
            grid=(BG, L),                         # layer axis last (serial / accumulator)
            in_specs=[pl.BlockSpec((Bb, T, C), lambda bg, l: (bg, 0, 0))]
                     + [_layer_spec(w) for w in ws]
                     + [_const_spec(w) for w in head_ws],
            out_specs=pl.BlockSpec((Bb, T, VP), lambda bg, l: (bg, 0, 0)),
            scratch_shapes=[pltpu.VMEM((Bb, T, C), jnp.float32)],
        ),
        compiler_params=pltpu.CompilerParams(
            dimension_semantics=("parallel", "arbitrary")),
    )(x, *ws, *head_ws)


# ---------------------------------------------------------------------------
# Parameters
# ---------------------------------------------------------------------------
def init_params(key):
    keys = iter(jax.random.split(key, 8 * N_LAYER + 8))

    def nrm(shape, scale=0.02):
        return (scale * jax.random.normal(next(keys), shape)).astype(jnp.float32)

    params = {
        'tok_emb': nrm((VOCAB_SIZE, N_EMBD)),
        'pos_emb': nrm((BLOCK_SIZE, N_EMBD)),
        'lnf_w': jnp.ones((1, N_EMBD), jnp.float32),
        'lnf_b': jnp.zeros((1, N_EMBD), jnp.float32),
        'wlm': nrm((N_EMBD, VOCAB_SIZE)),
        'blm': jnp.zeros((1, VOCAB_SIZE), jnp.float32),
        'blocks': [],
    }
    for _ in range(N_LAYER):
        params['blocks'].append(dict(
            ln1_w=jnp.ones((1, N_EMBD), jnp.float32),
            ln1_b=jnp.zeros((1, N_EMBD), jnp.float32),
            wq=nrm((N_ATTN_HEADS, N_EMBD, HEAD_SIZE)),
            wk=nrm((N_ATTN_HEADS, N_EMBD, HEAD_SIZE)),
            wv=nrm((N_ATTN_HEADS, N_EMBD, HEAD_SIZE)),
            wproj=nrm((N_ATTN_HEADS, HEAD_SIZE, N_EMBD)),
            bproj=jnp.zeros((1, N_EMBD), jnp.float32),
            ln2_w=jnp.ones((1, N_EMBD), jnp.float32),
            ln2_b=jnp.zeros((1, N_EMBD), jnp.float32),
            w1=nrm((N_EMBD, 4 * N_EMBD)),
            b1=jnp.zeros((1, 4 * N_EMBD), jnp.float32),
            w2=nrm((4 * N_EMBD, N_EMBD)),
            b2=jnp.zeros((1, N_EMBD), jnp.float32),
        ))
    return params


def prepare_kernel_params(params):
    """One-time wrapper-side prep: stack per-layer weights, fold the rank-10 head
    matmuls (and the exact power-of-two attention scale) into 128x128 per-head
    factors, concatenate q/v factors, cast matmul weights to bf16, pad vocab to 128."""
    blocks = params['blocks']
    L = len(blocks)
    st = lambda name: jnp.stack([blk[name] for blk in blocks])   # (L, ...)

    wq, wk = st('wq'), st('wk')            # (L, H, C, hs)
    wv, wproj = st('wv'), st('wproj')      # (L, H, C, hs), (L, H, hs, C)
    wqk = jnp.einsum('lhck,lhdk->lhcd', wq, wk) * ATTN_SCALE   # fold 2**-35 (bit-exact)
    wvo = jnp.einsum('lhck,lhkd->lhcd', wv, wproj)             # Wvo[h] = wv[h] @ wproj[h]
    HC = N_ATTN_HEADS * N_EMBD
    wqk = jnp.transpose(wqk, (0, 2, 1, 3)).reshape(L, N_EMBD, HC)   # heads on lanes
    wvo = jnp.transpose(wvo, (0, 2, 1, 3)).reshape(L, N_EMBD, HC)
    wqkvo = jnp.concatenate([wqk, wvo], axis=-1).astype(jnp.bfloat16)   # (L, C, 2*H*C)

    stacked = dict(
        ln1_w=st('ln1_w'), ln1_b=st('ln1_b'),
        wqkvo=wqkvo, bproj=st('bproj'),
        ln2_w=st('ln2_w'), ln2_b=st('ln2_b'),
        w1=st('w1').astype(jnp.bfloat16), b1=st('b1'),
        w2=st('w2').astype(jnp.bfloat16), b2=st('b2'),
    )

    # pad vocab 64 -> 128 for lane-dense output stores
    VP = ((VOCAB_SIZE + 127) // 128) * 128
    wlm_p = jnp.zeros((N_EMBD, VP), jnp.float32).at[:, :VOCAB_SIZE].set(params['wlm'])
    blm_p = jnp.zeros((1, VP), jnp.float32).at[:, :VOCAB_SIZE].set(params['blm'])

    return dict(
        tok_emb=params['tok_emb'], pos_emb=params['pos_emb'], blocks=stacked,
        lnf_w=params['lnf_w'], lnf_b=params['lnf_b'],
        wlm=wlm_p.astype(jnp.bfloat16), blm=blm_p,
    )


def transformer_forward(prep, idx, targets=None):
    B, T = idx.shape
    tok_emb = prep['tok_emb'][idx]            # embedding gather: plain JAX glue
    pos_emb = prep['pos_emb'][:T]
    x = (tok_emb + pos_emb[None]).astype(jnp.float32)
    logits_p = run_model(x, prep)             # single fused call: all layers + LM head
    logits = logits_p[..., :VOCAB_SIZE]       # drop lane padding
    loss = None  # TODO(synk): cross-entropy loss path (targets is None in this demo)
    return logits, loss


# ---------------------------------------------------------------------------
# Pure-JAX f32 reference (mirrors the PyTorch module) for validation
# ---------------------------------------------------------------------------
def reference_forward(params, idx):
    B, T = idx.shape
    x = (params['tok_emb'][idx] + params['pos_emb'][:T][None]).astype(jnp.float32)
    causal = jnp.tril(jnp.ones((T, T), dtype=bool))
    for blk in params['blocks']:
        xn = _layer_norm(x, blk['ln1_w'], blk['ln1_b'])
        heads = []
        for h in range(N_ATTN_HEADS):
            q = xn @ blk['wq'][h]
            k = xn @ blk['wk'][h]
            v = xn @ blk['wv'][h]
            w = jnp.einsum('btd,bsd->bts', q, k) * ATTN_SCALE
            w = jnp.where(causal[None], w, -jnp.inf)
            w = jax.nn.softmax(w, axis=-1)
            heads.append(w @ v)
        cat = jnp.concatenate(heads, axis=-1)                        # (B,T,H*hs)
        proj_w = blk['wproj'].reshape(N_ATTN_HEADS * HEAD_SIZE, N_EMBD)
        x = x + cat @ proj_w + blk['bproj'][0]
        xn2 = _layer_norm(x, blk['ln2_w'], blk['ln2_b'])
        hdn = jnp.maximum(xn2 @ blk['w1'] + blk['b1'][0], 0.0)
        x = x + hdn @ blk['w2'] + blk['b2'][0]
    xn = _layer_norm(x, params['lnf_w'], params['lnf_b'])
    return xn @ params['wlm'] + params['blm'][0]


if __name__ == "__main__":
    key = jax.random.PRNGKey(0)
    pkey, ikey = jax.random.split(key)
    params = init_params(pkey)
    prep = prepare_kernel_params(params)

    B, T = 4, 128                               # T <= block_size = 256; B=4 -> 2 batch
    idx = jax.random.randint(ikey, (B, T), 0,   # groups of 2 (megacore-parallel axis)
                             VOCAB_SIZE, dtype=jnp.int32)

    logits, loss = transformer_forward(prep, idx)
    logits = jax.block_until_ready(logits)

    assert logits.shape == (B, T, VOCAB_SIZE), logits.shape
    assert logits.dtype == jnp.float32
    assert bool(jnp.all(jnp.isfinite(logits)))

    # validate against the f32 reference (relaxed tolerance for bf16 matmuls)
    ref = reference_forward(params, idx)
    max_err = float(jnp.max(jnp.abs(logits - ref)))
    assert max_err < 1e-1, f"max abs err vs f32 reference: {max_err}"
    print("KERNEL_OK")
</pallas_src>

<mosaic_0001>
module attributes {stable_mosaic.version = 11 : i64} {
  func.func @gpt_kernel(%arg0: i32, %arg1: i32, %arg2: memref<2x128x128xf32, #tpu.memory_space<vmem>>, %arg3: memref<1x1x128xf32, #tpu.memory_space<vmem>>, %arg4: memref<1x1x128xf32, #tpu.memory_space<vmem>>, %arg5: memref<1x128x1024xbf16, #tpu.memory_space<vmem>>, %arg6: memref<1x1x128xf32, #tpu.memory_space<vmem>>, %arg7: memref<1x1x128xf32, #tpu.memory_space<vmem>>, %arg8: memref<1x1x128xf32, #tpu.memory_space<vmem>>, %arg9: memref<1x128x512xbf16, #tpu.memory_space<vmem>>, %arg10: memref<1x1x512xf32, #tpu.memory_space<vmem>>, %arg11: memref<1x512x128xbf16, #tpu.memory_space<vmem>>, %arg12: memref<1x1x128xf32, #tpu.memory_space<vmem>>, %arg13: memref<1x128xf32, #tpu.memory_space<vmem>>, %arg14: memref<1x128xf32, #tpu.memory_space<vmem>>, %arg15: memref<128x128xbf16, #tpu.memory_space<vmem>>, %arg16: memref<1x128xf32, #tpu.memory_space<vmem>>, %arg17: memref<2x128x128xf32, #tpu.memory_space<vmem>>, %arg18: memref<2x128x128xf32, #tpu.memory_space<vmem>>) attributes {dimension_semantics = [#tpu.dimension_semantics<parallel>, #tpu.dimension_semantics<arbitrary>], iteration_bounds = array<i64: 2, 6>, scalar_prefetch = 0 : i64, scratch_operands = 1 : i64, tpu.core_type = #tpu.core_type<tc>, window_params = [{transform_indices = @transform_0, window_bounds = array<i64: 2, 128, 128>}, {transform_indices = @transform_1, window_bounds = array<i64: 1, 1, 128>}, {transform_indices = @transform_2, window_bounds = array<i64: 1, 1, 128>}, {transform_indices = @transform_3, window_bounds = array<i64: 1, 128, 1024>}, {transform_indices = @transform_4, window_bounds = array<i64: 1, 1, 128>}, {transform_indices = @transform_5, window_bounds = array<i64: 1, 1, 128>}, {transform_indices = @transform_6, window_bounds = array<i64: 1, 1, 128>}, {transform_indices = @transform_7, window_bounds = array<i64: 1, 128, 512>}, {transform_indices = @transform_8, window_bounds = array<i64: 1, 1, 512>}, {transform_indices = @transform_9, window_bounds = array<i64: 1, 512, 128>}, {transform_indices = @transform_10, window_bounds = array<i64: 1, 1, 128>}, {pipeline_mode = #tpu.pipeline_mode<synchronous>, transform_indices = @transform_11, window_bounds = array<i64: 1, 128>}, {pipeline_mode = #tpu.pipeline_mode<synchronous>, transform_indices = @transform_12, window_bounds = array<i64: 1, 128>}, {pipeline_mode = #tpu.pipeline_mode<synchronous>, transform_indices = @transform_13, window_bounds = array<i64: 128, 128>}, {pipeline_mode = #tpu.pipeline_mode<synchronous>, transform_indices = @transform_14, window_bounds = array<i64: 1, 128>}, {transform_indices = @transform_15, window_bounds = array<i64: 2, 128, 128>}]} {
    %c0_i32 = arith.constant 0 : i32
    %0 = arith.cmpi eq, %arg1, %c0_i32 : i32
    %1 = arith.extui %0 : i1 to i32
    %c0_i32_0 = arith.constant 0 : i32
    %2 = arith.cmpi ne, %1, %c0_i32_0 : i32
    scf.if %2 {
      %c0_71 = arith.constant 0 : index
      %c0_72 = arith.constant 0 : index
      %c0_73 = arith.constant 0 : index
      %179 = vector.load %arg2[%c0_71, %c0_72, %c0_73] : memref<2x128x128xf32, #tpu.memory_space<vmem>>, vector<2x128x128xf32>
      %c0_74 = arith.constant 0 : index
      %c0_75 = arith.constant 0 : index
      %c0_76 = arith.constant 0 : index
      %180 = vector.load %arg18[%c0_74, %c0_75, %c0_76] : memref<2x128x128xf32, #tpu.memory_space<vmem>>, vector<2x128x128xf32>
      tpu.vector_store %arg18[%c0_74, %c0_75, %c0_76], %179 {strides = array<i32>} : memref<2x128x128xf32, #tpu.memory_space<vmem>>, vector<2x128x128xf32>,
    } else {
    }
    %c0 = arith.constant 0 : index
    %c0_1 = arith.constant 0 : index
    %c0_2 = arith.constant 0 : index
    %3 = vector.load %arg18[%c0, %c0_1, %c0_2] : memref<2x128x128xf32, #tpu.memory_space<vmem>>, vector<2x128x128xf32>
    %4 = tpu.iota {dimensions = array<i32: 0>} : vector<128x128xi32>
    %5 = tpu.iota {dimensions = array<i32: 1>} : vector<128x128xi32>
    %6 = arith.cmpi sle, %5, %4 : vector<128x128xi32>
    %7 = vector.shape_cast %3 : vector<2x128x128xf32> to vector<256x128xf32>
    %c0_3 = arith.constant 0 : index
    %c0_4 = arith.constant 0 : index
    %c0_5 = arith.constant 0 : index
    %8 = vector.load %arg3[%c0_3, %c0_4, %c0_5] : memref<1x1x128xf32, #tpu.memory_space<vmem>>, vector<1x1x128xf32>
    %9 = vector.shape_cast %8 : vector<1x1x128xf32> to vector<1x128xf32>
    %c0_6 = arith.constant 0 : index
    %c0_7 = arith.constant 0 : index
    %c0_8 = arith.constant 0 : index
    %10 = vector.load %arg4[%c0_6, %c0_7, %c0_8] : memref<1x1x128xf32, #tpu.memory_space<vmem>>, vector<1x1x128xf32>
    %11 = vector.shape_cast %10 : vector<1x1x128xf32> to vector<1x128xf32>
    %cst = arith.constant dense<0.000000e+00> : vector<256xf32>
    %12 = vector.multi_reduction <add>, %7, %cst [1] : vector<256x128xf32> to vector<256xf32>
    %13 = vector.shape_cast %12 : vector<256xf32> to vector<256x1xf32>
    %cst_9 = arith.constant 1.280000e+02 : f32
    %14 = vector.broadcast %cst_9 : f32 to vector<256x1xf32>
    %15 = arith.divf %13, %14 : vector<256x1xf32>
    %16 = vector.broadcast %15 : vector<256x1xf32> to vector<256x128xf32>
    %17 = arith.subf %7, %16 : vector<256x128xf32>
    %18 = arith.mulf %17, %17 : vector<256x128xf32>
    %cst_10 = arith.constant dense<0.000000e+00> : vector<256xf32>
    %19 = vector.multi_reduction <add>, %18, %cst_10 [1] : vector<256x128xf32> to vector<256xf32>
    %20 = vector.shape_cast %19 : vector<256xf32> to vector<256x1xf32>
    %cst_11 = arith.constant 1.280000e+02 : f32
    %21 = vector.broadcast %cst_11 : f32 to vector<256x1xf32>
    %22 = arith.divf %20, %21 : vector<256x1xf32>
    %23 = vector.broadcast %15 : vector<256x1xf32> to vector<256x128xf32>
    %24 = arith.subf %7, %23 : vector<256x128xf32>
    %cst_12 = arith.constant 9.99999974E-6 : f32
    %25 = vector.broadcast %cst_12 : f32 to vector<256x1xf32>
    %26 = arith.addf %22, %25 : vector<256x1xf32>
    %27 = math.rsqrt %26 : vector<256x1xf32>
    %28 = vector.broadcast %27 : vector<256x1xf32> to vector<256x128xf32>
    %29 = arith.mulf %24, %28 : vector<256x128xf32>
    %30 = vector.broadcast %9 : vector<1x128xf32> to vector<256x128xf32>
    %31 = arith.mulf %29, %30 : vector<256x128xf32>
    %32 = vector.broadcast %11 : vector<1x128xf32> to vector<256x128xf32>
    %33 = arith.addf %31, %32 : vector<256x128xf32>
    %34 = arith.truncf %33 : vector<256x128xf32> to vector<256x128xbf16>
    %c0_13 = arith.constant 0 : index
    %c0_14 = arith.constant 0 : index
    %c0_15 = arith.constant 0 : index
    %35 = vector.load %arg5[%c0_13, %c0_14, %c0_15] : memref<1x128x1024xbf16, #tpu.memory_space<vmem>>, vector<1x128x1024xbf16>
    %36 = vector.shape_cast %35 : vector<1x128x1024xbf16> to vector<128x1024xbf16>
    %cst_16 = arith.constant dense<0.000000e+00> : vector<256x1024xf32>
    %37 = tpu.matmul %34, %36, %cst_16 {dimension_numbers = #tpu.dot_dimension_numbers<[1], [0], [0], [1], [0, 0, 1, 1], [], []>} : vector<256x128xbf16>, vector<128x1024xbf16>, vector<256x1024xf32> -> vector<256x1024xf32>
    %38 = arith.truncf %37 : vector<256x1024xf32> to vector<256x1024xbf16>
    %39 = vector.shape_cast %38 : vector<256x1024xbf16> to vector<2x128x1024xbf16>
    %40 = vector.shape_cast %34 : vector<256x128xbf16> to vector<2x128x128xbf16>
    %cst_17 = arith.constant 0.000000e+00 : f32
    %41 = vector.broadcast %cst_17 : f32 to vector<2x128x128xf32>
    %42 = vector.extract_strided_slice %39 {offsets = [0, 0, 0], sizes = [2, 128, 128], strides = [1, 1, 1]} : vector<2x128x1024xbf16> to vector<2x128x128xbf16>
    %43 = vector.extract_strided_slice %39 {offsets = [0, 0, 512], sizes = [2, 128, 128], strides = [1, 1, 1]} : vector<2x128x1024xbf16> to vector<2x128x128xbf16>
    "tpu.trace_start"() <{level = 10 : i32, message = "bqd,bkd->bqk"}> : () -> ()
    %cst_18 = arith.constant dense<0.000000e+00> : vector<2x128x128xf32>
    %44 = tpu.matmul %42, %40, %cst_18 {dimension_numbers = #tpu.dot_dimension_numbers<[2], [2], [1], [1], [0, 0, 0, 1, 1, 1], [0], [0]>} : vector<2x128x128xbf16>, vector<2x128x128xbf16>, vector<2x128x128xf32> -> vector<2x128x128xf32>
    %cst_19 = arith.constant -1.000000e+30 : f32
    "tpu.trace_stop"() : () -> ()
    %45 = vector.shape_cast %6 : vector<128x128xi1> to vector<1x128x128xi1>
    %46 = vector.broadcast %45 : vector<1x128x128xi1> to vector<2x128x128xi1>
    %47 = vector.broadcast %cst_19 : f32 to vector<2x128x128xf32>
    %48 = arith.select %46, %44, %47 : vector<2x128x128xi1>, vector<2x128x128xf32>
    %cst_20 = arith.constant dense<0xFF800000> : vector<2x128xf32>
    %49 = vector.multi_reduction <maximumf>, %48, %cst_20 [2] : vector<2x128x128xf32> to vector<2x128xf32>
    %50 = vector.shape_cast %49 : vector<2x128xf32> to vector<2x128x1xf32>
    %51 = vector.broadcast %50 : vector<2x128x1xf32> to vector<2x128x128xf32>
    %52 = arith.subf %48, %51 : vector<2x128x128xf32>
    %53 = math.exp %52 : vector<2x128x128xf32>
    %cst_21 = arith.constant dense<0.000000e+00> : vector<2x128xf32>
    %54 = vector.multi_reduction <add>, %53, %cst_21 [2] : vector<2x128x128xf32> to vector<2x128xf32>
    %55 = vector.shape_cast %54 : vector<2x128xf32> to vector<2x128x1xf32>
    %56 = tpu.reciprocal %55 {approx = true} : vector<2x128x1xf32> -> vector<2x128x1xf32>
    %57 = vector.broadcast %56 : vector<2x128x1xf32> to vector<2x128x128xf32>
    %58 = arith.mulf %53, %57 : vector<2x128x128xf32>
    %59 = arith.truncf %58 : vector<2x128x128xf32> to vector<2x128x128xbf16>
    "tpu.trace_start"() <{level = 10 : i32, message = "bqk,bkd->bqd"}> : () -> ()
    %cst_22 = arith.constant dense<0.000000e+00> : vector<2x128x128xf32>
    %60 = tpu.matmul %59, %43, %cst_22 {dimension_numbers = #tpu.dot_dimension_numbers<[2], [1], [1], [2], [0, 0, 0, 1, 1, 2], [0], [0]>} : vector<2x128x128xbf16>, vector<2x128x128xbf16>, vector<2x128x128xf32> -> vector<2x128x128xf32>
    "tpu.trace_stop"() : () -> ()
    %61 = arith.addf %41, %60 : vector<2x128x128xf32>
    %62 = vector.extract_strided_slice %39 {offsets = [0, 0, 128], sizes = [2, 128, 128], strides = [1, 1, 1]} : vector<2x128x1024xbf16> to vector<2x128x128xbf16>
    %63 = vector.extract_strided_slice %39 {offsets = [0, 0, 640], sizes = [2, 128, 128], strides = [1, 1, 1]} : vector<2x128x1024xbf16> to vector<2x128x128xbf16>
    "tpu.trace_start"() <{level = 10 : i32, message = "bqd,bkd->bqk"}> : () -> ()
    %cst_23 = arith.constant dense<0.000000e+00> : vector<2x128x128xf32>
    %64 = tpu.matmul %62, %40, %cst_23 {dimension_numbers = #tpu.dot_dimension_numbers<[2], [2], [1], [1], [0, 0, 0, 1, 1, 1], [0], [0]>} : vector<2x128x128xbf16>, vector<2x128x128xbf16>, vector<2x128x128xf32> -> vector<2x128x128xf32>
    %cst_24 = arith.constant -1.000000e+30 : f32
    "tpu.trace_stop"() : () -> ()
    %65 = vector.shape_cast %6 : vector<128x128xi1> to vector<1x128x128xi1>
    %66 = vector.broadcast %65 : vector<1x128x128xi1> to vector<2x128x128xi1>
    %67 = vector.broadcast %cst_24 : f32 to vector<2x128x128xf32>
    %68 = arith.select %66, %64, %67 : vector<2x128x128xi1>, vector<2x128x128xf32>
    %cst_25 = arith.constant dense<0xFF800000> : vector<2x128xf32>
    %69 = vector.multi_reduction <maximumf>, %68, %cst_25 [2] : vector<2x128x128xf32> to vector<2x128xf32>
    %70 = vector.shape_cast %69 : vector<2x128xf32> to vector<2x128x1xf32>
    %71 = vector.broadcast %70 : vector<2x128x1xf32> to vector<2x128x128xf32>
    %72 = arith.subf %68, %71 : vector<2x128x128xf32>
    %73 = math.exp %72 : vector<2x128x128xf32>
    %cst_26 = arith.constant dense<0.000000e+00> : vector<2x128xf32>
    %74 = vector.multi_reduction <add>, %73, %cst_26 [2] : vector<2x128x128xf32> to vector<2x128xf32>
    %75 = vector.shape_cast %74 : vector<2x128xf32> to vector<2x128x1xf32>
    %76 = tpu.reciprocal %75 {approx = true} : vector<2x128x1xf32> -> vector<2x128x1xf32>
    %77 = vector.broadcast %76 : vector<2x128x1xf32> to vector<2x128x128xf32>
    %78 = arith.mulf %73, %77 : vector<2x128x128xf32>
    %79 = arith.truncf %78 : vector<2x128x128xf32> to vector<2x128x128xbf16>
    "tpu.trace_start"() <{level = 10 : i32, message = "bqk,bkd->bqd"}> : () -> ()
    %cst_27 = arith.constant dense<0.000000e+00> : vector<2x128x128xf32>
    %80 = tpu.matmul %79, %63, %cst_27 {dimension_numbers = #tpu.dot_dimension_numbers<[2], [1], [1], [2], [0, 0, 0, 1, 1, 2], [0], [0]>} : vector<2x128x128xbf16>, vector<2x128x128xbf16>, vector<2x128x128xf32> -> vector<2x128x128xf32>
    "tpu.trace_stop"() : () -> ()
    %81 = arith.addf %61, %80 : vector<2x128x128xf32>
    %82 = vector.extract_strided_slice %39 {offsets = [0, 0, 256], sizes = [2, 128, 128], strides = [1, 1, 1]} : vector<2x128x1024xbf16> to vector<2x128x128xbf16>
    %83 = vector.extract_strided_slice %39 {offsets = [0, 0, 768], sizes = [2, 128, 128], strides = [1, 1, 1]} : vector<2x128x1024xbf16> to vector<2x128x128xbf16>
    "tpu.trace_start"() <{level = 10 : i32, message = "bqd,bkd->bqk"}> : () -> ()
    %cst_28 = arith.constant dense<0.000000e+00> : vector<2x128x128xf32>
    %84 = tpu.matmul %82, %40, %cst_28 {dimension_numbers = #tpu.dot_dimension_numbers<[2], [2], [1], [1], [0, 0, 0, 1, 1, 1], [0], [0]>} : vector<2x128x128xbf16>, vector<2x128x128xbf16>, vector<2x128x128xf32> -> vector<2x128x128xf32>
    %cst_29 = arith.constant -1.000000e+30 : f32
    "tpu.trace_stop"() : () -> ()
    %85 = vector.shape_cast %6 : vector<128x128xi1> to vector<1x128x128xi1>
    %86 = vector.broadcast %85 : vector<1x128x128xi1> to vector<2x128x128xi1>
    %87 = vector.broadcast %cst_29 : f32 to vector<2x128x128xf32>
    %88 = arith.select %86, %84, %87 : vector<2x128x128xi1>, vector<2x128x128xf32>
    %cst_30 = arith.constant dense<0xFF800000> : vector<2x128xf32>
    %89 = vector.multi_reduction <maximumf>, %88, %cst_30 [2] : vector<2x128x128xf32> to vector<2x128xf32>
    %90 = vector.shape_cast %89 : vector<2x128xf32> to vector<2x128x1xf32>
    %91 = vector.broadcast %90 : vector<2x128x1xf32> to vector<2x128x128xf32>
    %92 = arith.subf %88, %91 : vector<2x128x128xf32>
    %93 = math.exp %92 : vector<2x128x128xf32>
    %cst_31 = arith.constant dense<0.000000e+00> : vector<2x128xf32>
    %94 = vector.multi_reduction <add>, %93, %cst_31 [2] : vector<2x128x128xf32> to vector<2x128xf32>
    %95 = vector.shape_cast %94 : vector<2x128xf32> to vector<2x128x1xf32>
    %96 = tpu.reciprocal %95 {approx = true} : vector<2x128x1xf32> -> vector<2x128x1xf32>
    %97 = vector.broadcast %96 : vector<2x128x1xf32> to vector<2x128x128xf32>
    %98 = arith.mulf %93, %97 : vector<2x128x128xf32>
    %99 = arith.truncf %98 : vector<2x128x128xf32> to vector<2x128x128xbf16>
    "tpu.trace_start"() <{level = 10 : i32, message = "bqk,bkd->bqd"}> : () -> ()
    %cst_32 = arith.constant dense<0.000000e+00> : vector<2x128x128xf32>
    %100 = tpu.matmul %99, %83, %cst_32 {dimension_numbers = #tpu.dot_dimension_numbers<[2], [1], [1], [2], [0, 0, 0, 1, 1, 2], [0], [0]>} : vector<2x128x128xbf16>, vector<2x128x128xbf16>, vector<2x128x128xf32> -> vector<2x128x128xf32>
    "tpu.trace_stop"() : () -> ()
    %101 = arith.addf %81, %100 : vector<2x128x128xf32>
    %102 = vector.extract_strided_slice %39 {offsets = [0, 0, 384], sizes = [2, 128, 128], strides = [1, 1, 1]} : vector<2x128x1024xbf16> to vector<2x128x128xbf16>
    %103 = vector.extract_strided_slice %39 {offsets = [0, 0, 896], sizes = [2, 128, 128], strides = [1, 1, 1]} : vector<2x128x1024xbf16> to vector<2x128x128xbf16>
    "tpu.trace_start"() <{level = 10 : i32, message = "bqd,bkd->bqk"}> : () -> ()
    %cst_33 = arith.constant dense<0.000000e+00> : vector<2x128x128xf32>
    %104 = tpu.matmul %102, %40, %cst_33 {dimension_numbers = #tpu.dot_dimension_numbers<[2], [2], [1], [1], [0, 0, 0, 1, 1, 1], [0], [0]>} : vector<2x128x128xbf16>, vector<2x128x128xbf16>, vector<2x128x128xf32> -> vector<2x128x128xf32>
    %cst_34 = arith.constant -1.000000e+30 : f32
    "tpu.trace_stop"() : () -> ()
    %105 = vector.shape_cast %6 : vector<128x128xi1> to vector<1x128x128xi1>
    %106 = vector.broadcast %105 : vector<1x128x128xi1> to vector<2x128x128xi1>
    %107 = vector.broadcast %cst_34 : f32 to vector<2x128x128xf32>
    %108 = arith.select %106, %104, %107 : vector<2x128x128xi1>, vector<2x128x128xf32>
    %cst_35 = arith.constant dense<0xFF800000> : vector<2x128xf32>
    %109 = vector.multi_reduction <maximumf>, %108, %cst_35 [2] : vector<2x128x128xf32> to vector<2x128xf32>
    %110 = vector.shape_cast %109 : vector<2x128xf32> to vector<2x128x1xf32>
    %111 = vector.broadcast %110 : vector<2x128x1xf32> to vector<2x128x128xf32>
    %112 = arith.subf %108, %111 : vector<2x128x128xf32>
    %113 = math.exp %112 : vector<2x128x128xf32>
    %cst_36 = arith.constant dense<0.000000e+00> : vector<2x128xf32>
    %114 = vector.multi_reduction <add>, %113, %cst_36 [2] : vector<2x128x128xf32> to vector<2x128xf32>
    %115 = vector.shape_cast %114 : vector<2x128xf32> to vector<2x128x1xf32>
    %116 = tpu.reciprocal %115 {approx = true} : vector<2x128x1xf32> -> vector<2x128x1xf32>
    %117 = vector.broadcast %116 : vector<2x128x1xf32> to vector<2x128x128xf32>
    %118 = arith.mulf %113, %117 : vector<2x128x128xf32>
    %119 = arith.truncf %118 : vector<2x128x128xf32> to vector<2x128x128xbf16>
    "tpu.trace_start"() <{level = 10 : i32, message = "bqk,bkd->bqd"}> : () -> ()
    %cst_37 = arith.constant dense<0.000000e+00> : vector<2x128x128xf32>
    %120 = tpu.matmul %119, %103, %cst_37 {dimension_numbers = #tpu.dot_dimension_numbers<[2], [1], [1], [2], [0, 0, 0, 1, 1, 2], [0], [0]>} : vector<2x128x128xbf16>, vector<2x128x128xbf16>, vector<2x128x128xf32> -> vector<2x128x128xf32>
    "tpu.trace_stop"() : () -> ()
    %121 = arith.addf %101, %120 : vector<2x128x128xf32>
    %122 = arith.addf %3, %121 : vector<2x128x128xf32>
    %c0_38 = arith.constant 0 : index
    %c0_39 = arith.constant 0 : index
    %c0_40 = arith.constant 0 : index
    %123 = vector.load %arg6[%c0_38, %c0_39, %c0_40] : memref<1x1x128xf32, #tpu.memory_space<vmem>>, vector<1x1x128xf32>
    %124 = vector.shape_cast %123 : vector<1x1x128xf32> to vector<1x128xf32>
    %125 = vector.shape_cast %124 : vector<1x128xf32> to vector<1x1x128xf32>
    %126 = vector.broadcast %125 : vector<1x1x128xf32> to vector<2x128x128xf32>
    %127 = arith.addf %122, %126 : vector<2x128x128xf32>
    %128 = vector.shape_cast %127 : vector<2x128x128xf32> to vector<256x128xf32>
    %c0_41 = arith.constant 0 : index
    %c0_42 = arith.constant 0 : index
    %c0_43 = arith.constant 0 : index
    %129 = vector.load %arg7[%c0_41, %c0_42, %c0_43] : memref<1x1x128xf32, #tpu.memory_space<vmem>>, vector<1x1x128xf32>
    %130 = vector.shape_cast %129 : vector<1x1x128xf32> to vector<1x128xf32>
    %c0_44 = arith.constant 0 : index
    %c0_45 = arith.constant 0 : index
    %c0_46 = arith.constant 0 : index
    %131 = vector.load %arg8[%c0_44, %c0_45, %c0_46] : memref<1x1x128xf32, #tpu.memory_space<vmem>>, vector<1x1x128xf32>
    %132 = vector.shape_cast %131 : vector<1x1x128xf32> to vector<1x128xf32>
    %cst_47 = arith.constant dense<0.000000e+00> : vector<256xf32>
    %133 = vector.multi_reduction <add>, %128, %cst_47 [1] : vector<256x128xf32> to vector<256xf32>
    %134 = vector.shape_cast %133 : vector<256xf32> to vector<256x1xf32>
    %cst_48 = arith.constant 1.280000e+02 : f32
    %135 = vector.broadcast %cst_48 : f32 to vector<256x1xf32>
    %136 = arith.divf %134, %135 : vector<256x1xf32>
    %137 = vector.broadcast %136 : vector<256x1xf32> to vector<256x128xf32>
    %138 = arith.subf %128, %137 : vector<256x128xf32>
    %139 = arith.mulf %138, %138 : vector<256x128xf32>
    %cst_49 = arith.constant dense<0.000000e+00> : vector<256xf32>
    %140 = vector.multi_reduction <add>, %139, %cst_49 [1] : vector<256x128xf32> to vector<256xf32>
    %141 = vector.shape_cast %140 : vector<256xf32> to vector<256x1xf32>
    %cst_50 = arith.constant 1.280000e+02 : f32
    %142 = vector.broadcast %cst_50 : f32 to vector<256x1xf32>
    %143 = arith.divf %141, %142 : vector<256x1xf32>
    %144 = vector.broadcast %136 : vector<256x1xf32> to vector<256x128xf32>
    %145 = arith.subf %128, %144 : vector<256x128xf32>
    %cst_51 = arith.constant 9.99999974E-6 : f32
    %146 = vector.broadcast %cst_51 : f32 to vector<256x1xf32>
    %147 = arith.addf %143, %146 : vector<256x1xf32>
    %148 = math.rsqrt %147 : vector<256x1xf32>
    %149 = vector.broadcast %148 : vector<256x1xf32> to vector<256x128xf32>
    %150 = arith.mulf %145, %149 : vector<256x128xf32>
    %151 = vector.broadcast %130 : vector<1x128xf32> to vector<256x128xf32>
    %152 = arith.mulf %150, %151 : vector<256x128xf32>
    %153 = vector.broadcast %132 : vector<1x128xf32> to vector<256x128xf32>
    %154 = arith.addf %152, %153 : vector<256x128xf32>
    %155 = arith.truncf %154 : vector<256x128xf32> to vector<256x128xbf16>
    %c0_52 = arith.constant 0 : index
    %c0_53 = arith.constant 0 : index
    %c0_54 = arith.constant 0 : index
    %156 = vector.load %arg9[%c0_52, %c0_53, %c0_54] : memref<1x128x512xbf16, #tpu.memory_space<vmem>>, vector<1x128x512xbf16>
    %157 = vector.shape_cast %156 : vector<1x128x512xbf16> to vector<128x512xbf16>
    %cst_55 = arith.constant dense<0.000000e+00> : vector<256x512xf32>
    %158 = tpu.matmul %155, %157, %cst_55 {dimension_numbers = #tpu.dot_dimension_numbers<[1], [0], [0], [1], [0, 0, 1, 1], [], []>} : vector<256x128xbf16>, vector<128x512xbf16>, vector<256x512xf32> -> vector<256x512xf32>
    %c0_56 = arith.constant 0 : index
    %c0_57 = arith.constant 0 : index
    %c0_58 = arith.constant 0 : index
    %159 = vector.load %arg10[%c0_56, %c0_57, %c0_58] : memref<1x1x512xf32, #tpu.memory_space<vmem>>, vector<1x1x512xf32>
    %160 = vector.shape_cast %159 : vector<1x1x512xf32> to vector<1x512xf32>
    %161 = vector.broadcast %160 : vector<1x512xf32> to vector<256x512xf32>
    %162 = arith.addf %158, %161 : vector<256x512xf32>
    %cst_59 = arith.constant 0.000000e+00 : f32
    %163 = vector.broadcast %cst_59 : f32 to vector<256x512xf32>
    %164 = arith.maximumf %162, %163 : vector<256x512xf32>
    %165 = arith.truncf %164 : vector<256x512xf32> to vector<256x512xbf16>
    %c0_60 = arith.constant 0 : index
    %c0_61 = arith.constant 0 : index
    %c0_62 = arith.constant 0 : index
    %166 = vector.load %arg11[%c0_60, %c0_61, %c0_62] : memref<1x512x128xbf16, #tpu.memory_space<vmem>>, vector<1x512x128xbf16>
    %167 = vector.shape_cast %166 : vector<1x512x128xbf16> to vector<512x128xbf16>
    %cst_63 = arith.constant dense<0.000000e+00> : vector<256x128xf32>
    %168 = tpu.matmul %165, %167, %cst_63 {dimension_numbers = #tpu.dot_dimension_numbers<[1], [0], [0], [1], [0, 0, 1, 1], [], []>} : vector<256x512xbf16>, vector<512x128xbf16>, vector<256x128xf32> -> vector<256x128xf32>
    %c0_64 = arith.constant 0 : index
    %c0_65 = arith.constant 0 : index
    %c0_66 = arith.constant 0 : index
    %169 = vector.load %arg12[%c0_64, %c0_65, %c0_66] : memref<1x1x128xf32, #tpu.memory_space<vmem>>, vector<1x1x128xf32>
    %170 = vector.shape_cast %169 : vector<1x1x128xf32> to vector<1x128xf32>
    %171 = vector.broadcast %170 : vector<1x128xf32> to vector<256x128xf32>
    %172 = arith.addf %168, %171 : vector<256x128xf32>
    %173 = vector.shape_cast %172 : vector<256x128xf32> to vector<2x128x128xf32>
    %174 = arith.addf %127, %173 : vector<2x128x128xf32>
    %c0_67 = arith.constant 0 : index
    %c0_68 = arith.constant 0 : index
    %c0_69 = arith.constant 0 : index
    %175 = vector.load %arg18[%c0_67, %c0_68, %c0_69] : memref<2x128x128xf32, #tpu.memory_space<vmem>>, vector<2x128x128xf32>
    tpu.vector_store %arg18[%c0_67, %c0_68, %c0_69], %174 {strides = array<i32>} : memref<2x128x128xf32, #tpu.memory_space<vmem>>, vector<2x128x128xf32>,
    %c5_i32 = arith.constant 5 : i32
    %176 = arith.cmpi eq, %arg1, %c5_i32 : i32
    %177 = arith.extui %176 : i1 to i32
    %c0_i32_70 = arith.constant 0 : i32
    %178 = arith.cmpi ne, %177, %c0_i32_70 : i32
    scf.if %178 {
      %179 = vector.shape_cast %174 : vector<2x128x128xf32> to vector<256x128xf32>
      %c0_71 = arith.constant 0 : index
      %c0_72 = arith.constant 0 : index
      %180 = vector.load %arg13[%c0_71, %c0_72] : memref<1x128xf32, #tpu.memory_space<vmem>>, vector<1x128xf32>
      %c0_73 = arith.constant 0 : index
      %c0_74 = arith.constant 0 : index
      %181 = vector.load %arg14[%c0_73, %c0_74] : memref<1x128xf32, #tpu.memory_space<vmem>>, vector<1x128xf32>
      %cst_75 = arith.constant dense<0.000000e+00> : vector<256xf32>
      %182 = vector.multi_reduction <add>, %179, %cst_75 [1] : vector<256x128xf32> to vector<256xf32>
      %183 = vector.shape_cast %182 : vector<256xf32> to vector<256x1xf32>
      %cst_76 = arith.constant 1.280000e+02 : f32
      %184 = vector.broadcast %cst_76 : f32 to vector<256x1xf32>
      %185 = arith.divf %183, %184 : vector<256x1xf32>
      %186 = vector.broadcast %185 : vector<256x1xf32> to vector<256x128xf32>
      %187 = arith.subf %179, %186 : vector<256x128xf32>
      %188 = arith.mulf %187, %187 : vector<256x128xf32>
      %cst_77 = arith.constant dense<0.000000e+00> : vector<256xf32>
      %189 = vector.multi_reduction <add>, %188, %cst_77 [1] : vector<256x128xf32> to vector<256xf32>
      %190 = vector.shape_cast %189 : vector<256xf32> to vector<256x1xf32>
      %cst_78 = arith.constant 1.280000e+02 : f32
      %191 = vector.broadcast %cst_78 : f32 to vector<256x1xf32>
      %192 = arith.divf %190, %191 : vector<256x1xf32>
      %193 = vector.broadcast %185 : vector<256x1xf32> to vector<256x128xf32>
      %194 = arith.subf %179, %193 : vector<256x128xf32>
      %cst_79 = arith.constant 9.99999974E-6 : f32
      %195 = vector.broadcast %cst_79 : f32 to vector<256x1xf32>
      %196 = arith.addf %192, %195 : vector<256x1xf32>
      %197 = math.rsqrt %196 : vector<256x1xf32>
      %198 = vector.broadcast %197 : vector<256x1xf32> to vector<256x128xf32>
      %199 = arith.mulf %194, %198 : vector<256x128xf32>
      %200 = vector.broadcast %180 : vector<1x128xf32> to vector<256x128xf32>
      %201 = arith.mulf %199, %200 : vector<256x128xf32>
      %202 = vector.broadcast %181 : vector<1x128xf32> to vector<256x128xf32>
      %203 = arith.addf %201, %202 : vector<256x128xf32>
      %204 = arith.truncf %203 : vector<256x128xf32> to vector<256x128xbf16>
      %c0_80 = arith.constant 0 : index
      %c0_81 = arith.constant 0 : index
      %205 = vector.load %arg15[%c0_80, %c0_81] : memref<128x128xbf16, #tpu.memory_space<vmem>>, vector<128x128xbf16>
      %cst_82 = arith.constant dense<0.000000e+00> : vector<256x128xf32>
      %206 = tpu.matmul %204, %205, %cst_82 {dimension_numbers = #tpu.dot_dimension_numbers<[1], [0], [0], [1], [0, 0, 1, 1], [], []>} : vector<256x128xbf16>, vector<128x128xbf16>, vector<256x128xf32> -> vector<256x128xf32>
      %c0_83 = arith.constant 0 : index
      %c0_84 = arith.constant 0 : index
      %207 = vector.load %arg16[%c0_83, %c0_84] : memref<1x128xf32, #tpu.memory_space<vmem>>, vector<1x128xf32>
      %208 = vector.broadcast %207 : vector<1x128xf32> to vector<256x128xf32>
      %209 = arith.addf %206, %208 : vector<256x128xf32>
      %210 = vector.shape_cast %209 : vector<256x128xf32> to vector<2x128x128xf32>
      %c0_85 = arith.constant 0 : index
      %c0_86 = arith.constant 0 : index
      %c0_87 = arith.constant 0 : index
      %211 = vector.load %arg17[%c0_85, %c0_86, %c0_87] : memref<2x128x128xf32, #tpu.memory_space<vmem>>, vector<2x128x128xf32>
      tpu.vector_store %arg17[%c0_85, %c0_86, %c0_87], %210 {strides = array<i32>} : memref<2x128x128xf32, #tpu.memory_space<vmem>>, vector<2x128x128xf32>,
    } else {
    }
    return
  }
  func.func @transform_0(%arg0: i32, %arg1: i32) -> (i32, i32, i32) {
    %c0_i32 = arith.constant 0 : i32
    %c0_i32_0 = arith.constant 0 : i32
    %c0_i32_1 = arith.constant 0 : i32
    return %arg0, %c0_i32, %c0_i32_0 : i32, i32, i32
  }
  func.func @transform_1(%arg0: i32, %arg1: i32) -> (i32, i32, i32) {
    %c0_i32 = arith.constant 0 : i32
    %c0_i32_0 = arith.constant 0 : i32
    %c0_i32_1 = arith.constant 0 : i32
    return %arg1, %c0_i32, %c0_i32_0 : i32, i32, i32
  }
  func.func @transform_2(%arg0: i32, %arg1: i32) -> (i32, i32, i32) {
    %c0_i32 = arith.constant 0 : i32
    %c0_i32_0 = arith.constant 0 : i32
    %c0_i32_1 = arith.constant 0 : i32
    return %arg1, %c0_i32, %c0_i32_0 : i32, i32, i32
  }
  func.func @transform_3(%arg0: i32, %arg1: i32) -> (i32, i32, i32) {
    %c0_i32 = arith.constant 0 : i32
    %c0_i32_0 = arith.constant 0 : i32
    %c0_i32_1 = arith.constant 0 : i32
    return %arg1, %c0_i32, %c0_i32_0 : i32, i32, i32
  }
  func.func @transform_4(%arg0: i32, %arg1: i32) -> (i32, i32, i32) {
    %c0_i32 = arith.constant 0 : i32
    %c0_i32_0 = arith.constant 0 : i32
    %c0_i32_1 = arith.constant 0 : i32
    return %arg1, %c0_i32, %c0_i32_0 : i32, i32, i32
  }
  func.func @transform_5(%arg0: i32, %arg1: i32) -> (i32, i32, i32) {
    %c0_i32 = arith.constant 0 : i32
    %c0_i32_0 = arith.constant 0 : i32
    %c0_i32_1 = arith.constant 0 : i32
    return %arg1, %c0_i32, %c0_i32_0 : i32, i32, i32
  }
  func.func @transform_6(%arg0: i32, %arg1: i32) -> (i32, i32, i32) {
    %c0_i32 = arith.constant 0 : i32
    %c0_i32_0 = arith.constant 0 : i32
    %c0_i32_1 = arith.constant 0 : i32
    return %arg1, %c0_i32, %c0_i32_0 : i32, i32, i32
  }
  func.func @transform_7(%arg0: i32, %arg1: i32) -> (i32, i32, i32) {
    %c0_i32 = arith.constant 0 : i32
    %c0_i32_0 = arith.constant 0 : i32
    %c0_i32_1 = arith.constant 0 : i32
    return %arg1, %c0_i32, %c0_i32_0 : i32, i32, i32
  }
  func.func @transform_8(%arg0: i32, %arg1: i32) -> (i32, i32, i32) {
    %c0_i32 = arith.constant 0 : i32
    %c0_i32_0 = arith.constant 0 : i32
    %c0_i32_1 = arith.constant 0 : i32
    return %arg1, %c0_i32, %c0_i32_0 : i32, i32, i32
  }
  func.func @transform_9(%arg0: i32, %arg1: i32) -> (i32, i32, i32) {
    %c0_i32 = arith.constant 0 : i32
    %c0_i32_0 = arith.constant 0 : i32
    %c0_i32_1 = arith.constant 0 : i32
    return %arg1, %c0_i32, %c0_i32_0 : i32, i32, i32
  }
  func.func @transform_10(%arg0: i32, %arg1: i32) -> (i32, i32, i32) {
    %c0_i32 = arith.constant 0 : i32
    %c0_i32_0 = arith.constant 0 : i32
    %c0_i32_1 = arith.constant 0 : i32
    return %arg1, %c0_i32, %c0_i32_0 : i32, i32, i32
  }
  func.func @transform_11(%arg0: i32, %arg1: i32) -> (i32, i32) {
    %c0_i32 = arith.constant 0 : i32
    %c0_i32_0 = arith.constant 0 : i32
    %c0_i32_1 = arith.constant 0 : i32
    return %c0_i32, %c0_i32_0 : i32, i32
  }
  func.func @transform_12(%arg0: i32, %arg1: i32) -> (i32, i32) {
    %c0_i32 = arith.constant 0 : i32
    %c0_i32_0 = arith.constant 0 : i32
    %c0_i32_1 = arith.constant 0 : i32
    return %c0_i32, %c0_i32_0 : i32, i32
  }
  func.func @transform_13(%arg0: i32, %arg1: i32) -> (i32, i32) {
    %c0_i32 = arith.constant 0 : i32
    %c0_i32_0 = arith.constant 0 : i32
    %c0_i32_1 = arith.constant 0 : i32
    return %c0_i32, %c0_i32_0 : i32, i32
  }
  func.func @transform_14(%arg0: i32, %arg1: i32) -> (i32, i32) {
    %c0_i32 = arith.constant 0 : i32
    %c0_i32_0 = arith.constant 0 : i32
    %c0_i32_1 = arith.constant 0 : i32
    return %c0_i32, %c0_i32_0 : i32, i32
  }
  func.func @transform_15(%arg0: i32, %arg1: i32) -> (i32, i32, i32) {
    %c0_i32 = arith.constant 0 : i32
    %c0_i32_0 = arith.constant 0 : i32
    %c0_i32_1 = arith.constant 0 : i32
    return %arg0, %c0_i32, %c0_i32_0 : i32, i32, i32
  }
}

</mosaic_0001>

<llo_original>
// kernel: tpu_custom_call.1
$region0: #{tpu_custom_call.1}
  #allocation0 [shape = 'u32[]', space=smem, size = 0x4, offset = 0x4, fixed_abs, tag = 'smem constant byte address 0x4 - core index']
  #allocation1 [shape = 'u32[144,128]{1,0:T(1,128)}', space=vmem, size = 0x12000, scoped, tag = 'internal scratch']
  #allocation2 [shape = 'f32[2,128,128]{2,1,0:T(8,128)}', space=vmem, size = 0x20000, scoped, tag = 'scratch operand']
  %s0 = inlined_call_operand.hbm [shape: f32[4,128,128], index: 0, kind: input, shape index: {}]
  %s1 = inlined_call_operand.hbm [shape: f32[6,1,128], index: 1, kind: input, shape index: {}]
  %s2 = inlined_call_operand.hbm [shape: f32[6,1,128], index: 2, kind: input, shape index: {}]
  %s3 = inlined_call_operand.hbm [shape: bf16[6,128,1024], index: 3, kind: input, shape index: {}]
  %s4 = inlined_call_operand.hbm [shape: f32[6,1,128], index: 4, kind: input, shape index: {}]
  %s5 = inlined_call_operand.hbm [shape: f32[6,1,128], index: 5, kind: input, shape index: {}]
  %s6 = inlined_call_operand.hbm [shape: f32[6,1,128], index: 6, kind: input, shape index: {}]
  %s7 = inlined_call_operand.hbm [shape: bf16[6,128,512], index: 7, kind: input, shape index: {}]
  %s8 = inlined_call_operand.hbm [shape: f32[6,1,512], index: 8, kind: input, shape index: {}]
  %s9 = inlined_call_operand.hbm [shape: bf16[6,512,128], index: 9, kind: input, shape index: {}]
  %s10 = inlined_call_operand.hbm [shape: f32[6,1,128], index: 10, kind: input, shape index: {}]
  %s11 = inlined_call_operand.hbm [shape: f32[1,128], index: 11, kind: input, shape index: {}]
  %s12 = inlined_call_operand.hbm [shape: f32[1,128], index: 12, kind: input, shape index: {}]
  %s13 = inlined_call_operand.hbm [shape: bf16[128,128], index: 13, kind: input, shape index: {}]
  %s14 = inlined_call_operand.hbm [shape: f32[1,128], index: 14, kind: input, shape index: {}]
  %s15 = inlined_call_operand.hbm [shape: f32[4,128,128], index: 15, kind: output, shape index: {}]
  %s16 = sld [smem:[#allocation0]]
  $region161: #{tpu_custom_call.1} parent=0
    _
  %s18 = ssub.s32 1, %s16
  %s19 = scalar_select 0, %s18, %s16
  $region1: #{tpu_custom_call.1} parent=0
    #allocation3 [shape = 'u8[262144]{0}', space=vmem, size = 0x40000, scoped, tag = 'input window, operand 0']
    #allocation4 [shape = 's32[2]{0}', space=sflag, size = 0x8, scoped, tag = 'scoped memory for tpu_custom_call.1']
    #allocation5 [shape = 's32[2]{0}', space=sflag, size = 0x8, scoped, tag = 'scoped memory for tpu_custom_call.1']
    #allocation6 [shape = 'u8[1024]{0}', space=vmem, size = 0x400, scoped, tag = 'input window, operand 1']
    #allocation7 [shape = 's32[2]{0}', space=sflag, size = 0x8, scoped, tag = 'scoped memory for tpu_custom_call.1']
    #allocation8 [shape = 'u8[1024]{0}', space=vmem, size = 0x400, scoped, tag = 'input window, operand 2']
    #allocation9 [shape = 'u8[524288]{0}', space=vmem, size = 0x80000, scoped, tag = 'input window, operand 3']
    #allocation10 [shape = 's32[2]{0}', space=sflag, size = 0x8, scoped, tag = 'scoped memory for tpu_custom_call.1']
    #allocation11 [shape = 'u8[1024]{0}', space=vmem, size = 0x400, scoped, tag = 'input window, operand 4']
    #allocation12 [shape = 'u8[1024]{0}', space=vmem, size = 0x400, scoped, tag = 'input window, operand 5']
    #allocation13 [shape = 's32[2]{0}', space=sflag, size = 0x8, scoped, tag = 'scoped memory for tpu_custom_call.1']
    #allocation14 [shape = 'u8[1024]{0}', space=vmem, size = 0x400, scoped, tag = 'input window, operand 6']
    #allocation15 [shape = 'u8[262144]{0}', space=vmem, size = 0x40000, scoped, tag = 'input window, operand 7']
    #allocation16 [shape = 's32[2]{0}', space=sflag, size = 0x8, scoped, tag = 'scoped memory for tpu_custom_call.1']
    #allocation17 [shape = 'u8[4096]{0}', space=vmem, size = 0x1000, scoped, tag = 'input window, operand 8']
    #allocation18 [shape = 'u8[262144]{0}', space=vmem, size = 0x40000, scoped, tag = 'input window, operand 9']
    #allocation19 [shape = 's32[2]{0}', space=sflag, size = 0x8, scoped, tag = 'scoped memory for tpu_custom_call.1']
    #allocation20 [shape = 'u8[1024]{0}', space=vmem, size = 0x400, scoped, tag = 'input window, operand 10']
    #allocation21 [shape = 'u8[512]{0}', space=vmem, size = 0x400, scoped, tag = 'input window, operand 11, single buffered']
    #allocation22 [shape = 's32[1]{0}', space=sflag, size = 0x4, scoped, tag = 'scoped memory for tpu_custom_call.1']
    #allocation23 [shape = 'u8[512]{0}', space=vmem, size = 0x400, scoped, tag = 'input window, operand 12, single buffered']
    #allocation24 [shape = 'u8[32768]{0}', space=vmem, size = 0x8000, scoped, tag = 'input window, operand 13, single buffered']
    #allocation25 [shape = 's32[1]{0}', space=sflag, size = 0x4, scoped, tag = 'scoped memory for tpu_custom_call.1']
    #allocation26 [shape = 'u8[512]{0}', space=vmem, size = 0x400, scoped, tag = 'input window, operand 14, single buffered']
    #allocation27 [shape = 'u8[262144]{0}', space=vmem, size = 0x40000, scoped, tag = 'output window, operand 0']
    %20 = vsyncpa [#allocation4], 0
    %s21 = scalar_lea.sflag [#allocation4], 1
    %22 = vsyncpa %s21, 0
    %23 = vsyncpa [#allocation7], 0
    %s24 = scalar_lea.sflag [#allocation7], 1
    %25 = vsyncpa %s24, 0
    %26 = vsyncpa [#allocation10], 0
    %s27 = scalar_lea.sflag [#allocation10], 1
    %28 = vsyncpa %s27, 0
    %29 = vsyncpa [#allocation13], 0
    %s30 = scalar_lea.sflag [#allocation13], 1
    %31 = vsyncpa %s30, 0
    %32 = vsyncpa [#allocation16], 0
    %s33 = scalar_lea.sflag [#allocation16], 1
    %34 = vsyncpa %s33, 0
    %35 = vsyncpa [#allocation19], 0
    %s36 = scalar_lea.sflag [#allocation19], 1
    %37 = vsyncpa %s36, 0
    %38 = vsyncpa [#allocation22], 0
    %39 = vsyncpa [#allocation25], 0
    %40 = vsyncpa [#allocation5], 0
    %s41 = scalar_lea.sflag [#allocation5], 1
    %42 = vsyncpa %s41, 0
    loop: start=0, step=1, limit=14
    $region2: #{tpu_custom_call.1} parent=1 // loop_pre_header
      _
    $region3: #{tpu_custom_call.1} parent=1 // loop_header
      %s44 = sphi 0, %s48
      %p45 = scmp.ge.s32.totalorder %s44, 14
      %s51 = sphi 0, %s63
      %s52 = sphi 0, %s59
      %s53 = sphi 0, %s51
      %s54 = sphi 0, %s52
      %s55 = sphi 0, %s53
      %s56 = sphi 0, %s54
      %s66 = sphi 0, %s68
      %s69 = sphi 0, %s66
      %s70 = sphi 0, %s69
      %s86 = sphi 0, %s70
      %s92 = sphi 0, %s94
      %s95 = sphi 0, %s92
      %s96 = sphi 0, %s95
      %s112 = sphi 0, %s96
      %s118 = sphi 0, %s120
      %s121 = sphi 0, %s118
      %s122 = sphi 0, %s121
      %s138 = sphi 0, %s122
      %s144 = sphi 0, %s146
      %s147 = sphi 0, %s144
      %s148 = sphi 0, %s147
      %s164 = sphi 0, %s148
      %s170 = sphi 0, %s172
      %s173 = sphi 0, %s170
      %s174 = sphi 0, %s173
      %s190 = sphi 0, %s174
      %s196 = sphi 0, %s198
      %s199 = sphi 0, %s196
      %s200 = sphi 0, %s199
      %s216 = sphi 0, %s200
      %s222 = sphi 0, %s224
      %s225 = sphi 0, %s222
      %s226 = sphi 0, %s225
      %s242 = sphi 0, %s226
      %s248 = sphi 0, %s250
      %s251 = sphi 0, %s248
      %s252 = sphi 0, %s251
      %s268 = sphi 0, %s252
      %s274 = sphi 0, %s276
      %s277 = sphi 0, %s274
      %s278 = sphi 0, %s277
      %s294 = sphi 0, %s278
      %s300 = sphi 0, %s302
      %s303 = sphi 0, %s300
      %s304 = sphi 0, %s303
      %s320 = sphi 0, %s304
      %s326 = sphi 0, %s328
      %s329 = sphi 0, %s326
      %s330 = sphi 0, %s329
      %s346 = sphi 0, %s330
      %s350 = sphi 0, %s350
      %s352 = sphi 0, %s350
      %s353 = sphi 0, %s352
      %s367 = sphi 0, %s353
      %s371 = sphi 0, %s371
      %s373 = sphi 0, %s371
      %s374 = sphi 0, %s373
      %s388 = sphi 0, %s374
      %s392 = sphi 0, %s392
      %s394 = sphi 0, %s392
      %s395 = sphi 0, %s394
      %s409 = sphi 0, %s395
      %s413 = sphi 0, %s413
      %s415 = sphi 0, %s413
      %s416 = sphi 0, %s415
      %s430 = sphi 0, %s416
      %s436 = sphi 0, %s438
      %s439 = sphi 0, %s436
      %s440 = sphi 0, %s439
      %s456 = sphi 0, %s440
    $region4: #{tpu_custom_call.1} parent=1 // loop_header_branch
      %47 = sbr.rel (%p45) target = $region8
    $region5: #{tpu_custom_call.1} parent=1 // loop_body
      %s49 = ssub.s32 %s44, 1
      %s50 = ssub.s32 %s44, 2
      %s57 = sadd.s32 1, %s52
      %p58 = scmp.ge.s32.totalorder %s57, 6
      %s59 = scalar_select %p58, 0, %s57
      %s60 = sadd.s32 1, %s51
      %s61 = scalar_select %p58, %s60, %s51
      %p62 = scmp.ge.s32.totalorder %s61, 2
      %s63 = scalar_select %p62, 0, %s61
      %s64 = ssub.s32 %s51, %s63
      %p65 = scmp.eq.s32.totalorder %s64, 0
      %s67 = sadd.s32 %s66, 1
      %s68 = scalar_select %p65, %s66, %s67
      %p71 = pneg %p65
      %p72 = scmp.eq.s32.totalorder %s44, 11
      %p73 = por %p71, %p72
      %p74 = scmp.ne.s32.totalorder %s66, %s69
      %p75 = scmp.eq.s32.totalorder %s44, 0
      %p76 = por %p74, %p75
      %p77 = scmp.ne.s32.totalorder %s66, %s69
      %p78 = scmp.eq.s32.totalorder %s49, 11
      %p79 = por %p77, %p78
      %p80 = scmp.ne.s32.totalorder %s69, %s70
      %p81 = scmp.eq.s32.totalorder %s49, 0
      %p82 = por %p80, %p81
      %p83 = scmp.ne.s32.totalorder %s69, %s70
      %p84 = scmp.eq.s32.totalorder %s50, 11
      %p85 = por %p83, %p84
      %p87 = scmp.ne.s32.totalorder %s70, %s86
      %p88 = scmp.eq.s32.totalorder %s50, 0
      %p89 = por %p87, %p88
      %s90 = ssub.s32 %s52, %s59
      %p91 = scmp.eq.s32.totalorder %s90, 0
      %s93 = sadd.s32 %s92, 1
      %s94 = scalar_select %p91, %s92, %s93
      %p97 = pneg %p91
      %p98 = scmp.eq.s32.totalorder %s44, 11
      %p99 = por %p97, %p98
      %p100 = scmp.ne.s32.totalorder %s92, %s95
      %p101 = scmp.eq.s32.totalorder %s44, 0
      %p102 = por %p100, %p101
      %p103 = scmp.ne.s32.totalorder %s92, %s95
      %p104 = scmp.eq.s32.totalorder %s49, 11
      %p105 = por %p103, %p104
      %p106 = scmp.ne.s32.totalorder %s95, %s96
      %p107 = scmp.eq.s32.totalorder %s49, 0
      %p108 = por %p106, %p107
      %p109 = scmp.ne.s32.totalorder %s95, %s96
      %p110 = scmp.eq.s32.totalorder %s50, 11
      %p111 = por %p109, %p110
      %p113 = scmp.ne.s32.totalorder %s96, %s112
      %p114 = scmp.eq.s32.totalorder %s50, 0
      %p115 = por %p113, %p114
      %s116 = ssub.s32 %s52, %s59
      %p117 = scmp.eq.s32.totalorder %s116, 0
      %s119 = sadd.s32 %s118, 1
      %s120 = scalar_select %p117, %s118, %s119
      %p123 = pneg %p117
      %p124 = scmp.eq.s32.totalorder %s44, 11
      %p125 = por %p123, %p124
      %p126 = scmp.ne.s32.totalorder %s118, %s121
      %p127 = scmp.eq.s32.totalorder %s44, 0
      %p128 = por %p126, %p127
      %p129 = scmp.ne.s32.totalorder %s118, %s121
      %p130 = scmp.eq.s32.totalorder %s49, 11
      %p131 = por %p129, %p130
      %p132 = scmp.ne.s32.totalorder %s121, %s122
      %p133 = scmp.eq.s32.totalorder %s49, 0
      %p134 = por %p132, %p133
      %p135 = scmp.ne.s32.totalorder %s121, %s122
      %p136 = scmp.eq.s32.totalorder %s50, 11
      %p137 = por %p135, %p136
      %p139 = scmp.ne.s32.totalorder %s122, %s138
      %p140 = scmp.eq.s32.totalorder %s50, 0
      %p141 = por %p139, %p140
      %s142 = ssub.s32 %s52, %s59
      %p143 = scmp.eq.s32.totalorder %s142, 0
      %s145 = sadd.s32 %s144, 1
      %s146 = scalar_select %p143, %s144, %s145
      %p149 = pneg %p143
      %p150 = scmp.eq.s32.totalorder %s44, 11
      %p151 = por %p149, %p150
      %p152 = scmp.ne.s32.totalorder %s144, %s147
      %p153 = scmp.eq.s32.totalorder %s44, 0
      %p154 = por %p152, %p153
      %p155 = scmp.ne.s32.totalorder %s144, %s147
      %p156 = scmp.eq.s32.totalorder %s49, 11
      %p157 = por %p155, %p156
      %p158 = scmp.ne.s32.totalorder %s147, %s148
      %p159 = scmp.eq.s32.totalorder %s49, 0
      %p160 = por %p158, %p159
      %p161 = scmp.ne.s32.totalorder %s147, %s148
      %p162 = scmp.eq.s32.totalorder %s50, 11
      %p163 = por %p161, %p162
      %p165 = scmp.ne.s32.totalorder %s148, %s164
      %p166 = scmp.eq.s32.totalorder %s50, 0
      %p167 = por %p165, %p166
      %s168 = ssub.s32 %s52, %s59
      %p169 = scmp.eq.s32.totalorder %s168, 0
      %s171 = sadd.s32 %s170, 1
      %s172 = scalar_select %p169, %s170, %s171
      %p175 = pneg %p169
      %p176 = scmp.eq.s32.totalorder %s44, 11
      %p177 = por %p175, %p176
      %p178 = scmp.ne.s32.totalorder %s170, %s173
      %p179 = scmp.eq.s32.totalorder %s44, 0
      %p180 = por %p178, %p179
      %p181 = scmp.ne.s32.totalorder %s170, %s173
      %p182 = scmp.eq.s32.totalorder %s49, 11
      %p183 = por %p181, %p182
      %p184 = scmp.ne.s32.totalorder %s173, %s174
      %p185 = scmp.eq.s32.totalorder %s49, 0
      %p186 = por %p184, %p185
      %p187 = scmp.ne.s32.totalorder %s173, %s174
      %p188 = scmp.eq.s32.totalorder %s50, 11
      %p189 = por %p187, %p188
      %p191 = scmp.ne.s32.totalorder %s174, %s190
      %p192 = scmp.eq.s32.totalorder %s50, 0
      %p193 = por %p191, %p192
      %s194 = ssub.s32 %s52, %s59
      %p195 = scmp.eq.s32.totalorder %s194, 0
      %s197 = sadd.s32 %s196, 1
      %s198 = scalar_select %p195, %s196, %s197
      %p201 = pneg %p195
      %p202 = scmp.eq.s32.totalorder %s44, 11
      %p203 = por %p201, %p202
      %p204 = scmp.ne.s32.totalorder %s196, %s199
      %p205 = scmp.eq.s32.totalorder %s44, 0
      %p206 = por %p204, %p205
      %p207 = scmp.ne.s32.totalorder %s196, %s199
      %p208 = scmp.eq.s32.totalorder %s49, 11
      %p209 = por %p207, %p208
      %p210 = scmp.ne.s32.totalorder %s199, %s200
      %p211 = scmp.eq.s32.totalorder %s49, 0
      %p212 = por %p210, %p211
      %p213 = scmp.ne.s32.totalorder %s199, %s200
      %p214 = scmp.eq.s32.totalorder %s50, 11
      %p215 = por %p213, %p214
      %p217 = scmp.ne.s32.totalorder %s200, %s216
      %p218 = scmp.eq.s32.totalorder %s50, 0
      %p219 = por %p217, %p218
      %s220 = ssub.s32 %s52, %s59
      %p221 = scmp.eq.s32.totalorder %s220, 0
      %s223 = sadd.s32 %s222, 1
      %s224 = scalar_select %p221, %s222, %s223
      %p227 = pneg %p221
      %p228 = scmp.eq.s32.totalorder %s44, 11
      %p229 = por %p227, %p228
      %p230 = scmp.ne.s32.totalorder %s222, %s225
      %p231 = scmp.eq.s32.totalorder %s44, 0
      %p232 = por %p230, %p231
      %p233 = scmp.ne.s32.totalorder %s222, %s225
      %p234 = scmp.eq.s32.totalorder %s49, 11
      %p235 = por %p233, %p234
      %p236 = scmp.ne.s32.totalorder %s225, %s226
      %p237 = scmp.eq.s32.totalorder %s49, 0
      %p238 = por %p236, %p237
      %p239 = scmp.ne.s32.totalorder %s225, %s226
      %p240 = scmp.eq.s32.totalorder %s50, 11
      %p241 = por %p239, %p240
      %p243 = scmp.ne.s32.totalorder %s226, %s242
      %p244 = scmp.eq.s32.totalorder %s50, 0
      %p245 = por %p243, %p244
      %s246 = ssub.s32 %s52, %s59
      %p247 = scmp.eq.s32.totalorder %s246, 0
      %s249 = sadd.s32 %s248, 1
      %s250 = scalar_select %p247, %s248, %s249
      %p253 = pneg %p247
      %p254 = scmp.eq.s32.totalorder %s44, 11
      %p255 = por %p253, %p254
      %p256 = scmp.ne.s32.totalorder %s248, %s251
      %p257 = scmp.eq.s32.totalorder %s44, 0
      %p258 = por %p256, %p257
      %p259 = scmp.ne.s32.totalorder %s248, %s251
      %p260 = scmp.eq.s32.totalorder %s49, 11
      %p261 = por %p259, %p260
      %p262 = scmp.ne.s32.totalorder %s251, %s252
      %p263 = scmp.eq.s32.totalorder %s49, 0
      %p264 = por %p262, %p263
      %p265 = scmp.ne.s32.totalorder %s251, %s252
      %p266 = scmp.eq.s32.totalorder %s50, 11
      %p267 = por %p265, %p266
      %p269 = scmp.ne.s32.totalorder %s252, %s268
      %p270 = scmp.eq.s32.totalorder %s50, 0
      %p271 = por %p269, %p270
      %s272 = ssub.s32 %s52, %s59
      %p273 = scmp.eq.s32.totalorder %s272, 0
      %s275 = sadd.s32 %s274, 1
      %s276 = scalar_select %p273, %s274, %s275
      %p279 = pneg %p273
      %p280 = scmp.eq.s32.totalorder %s44, 11
      %p281 = por %p279, %p280
      %p282 = scmp.ne.s32.totalorder %s274, %s277
      %p283 = scmp.eq.s32.totalorder %s44, 0
      %p284 = por %p282, %p283
      %p285 = scmp.ne.s32.totalorder %s274, %s277
      %p286 = scmp.eq.s32.totalorder %s49, 11
      %p287 = por %p285, %p286
      %p288 = scmp.ne.s32.totalorder %s277, %s278
      %p289 = scmp.eq.s32.totalorder %s49, 0
      %p290 = por %p288, %p289
      %p291 = scmp.ne.s32.totalorder %s277, %s278
      %p292 = scmp.eq.s32.totalorder %s50, 11
      %p293 = por %p291, %p292
      %p295 = scmp.ne.s32.totalorder %s278, %s294
      %p296 = scmp.eq.s32.totalorder %s50, 0
      %p297 = por %p295, %p296
      %s298 = ssub.s32 %s52, %s59
      %p299 = scmp.eq.s32.totalorder %s298, 0
      %s301 = sadd.s32 %s300, 1
      %s302 = scalar_select %p299, %s300, %s301
      %p305 = pneg %p299
      %p306 = scmp.eq.s32.totalorder %s44, 11
      %p307 = por %p305, %p306
      %p308 = scmp.ne.s32.totalorder %s300, %s303
      %p309 = scmp.eq.s32.totalorder %s44, 0
      %p310 = por %p308, %p309
      %p311 = scmp.ne.s32.totalorder %s300, %s303
      %p312 = scmp.eq.s32.totalorder %s49, 11
      %p313 = por %p311, %p312
      %p314 = scmp.ne.s32.totalorder %s303, %s304
      %p315 = scmp.eq.s32.totalorder %s49, 0
      %p316 = por %p314, %p315
      %p317 = scmp.ne.s32.totalorder %s303, %s304
      %p318 = scmp.eq.s32.totalorder %s50, 11
      %p319 = por %p317, %p318
      %p321 = scmp.ne.s32.totalorder %s304, %s320
      %p322 = scmp.eq.s32.totalorder %s50, 0
      %p323 = por %p321, %p322
      %s324 = ssub.s32 %s52, %s59
      %p325 = scmp.eq.s32.totalorder %s324, 0
      %s327 = sadd.s32 %s326, 1
      %s328 = scalar_select %p325, %s326, %s327
      %p331 = pneg %p325
      %p332 = scmp.eq.s32.totalorder %s44, 11
      %p333 = por %p331, %p332
      %p334 = scmp.ne.s32.totalorder %s326, %s329
      %p335 = scmp.eq.s32.totalorder %s44, 0
      %p336 = por %p334, %p335
      %p337 = scmp.ne.s32.totalorder %s326, %s329
      %p338 = scmp.eq.s32.totalorder %s49, 11
      %p339 = por %p337, %p338
      %p340 = scmp.ne.s32.totalorder %s329, %s330
      %p341 = scmp.eq.s32.totalorder %s49, 0
      %p342 = por %p340, %p341
      %p343 = scmp.ne.s32.totalorder %s329, %s330
      %p344 = scmp.eq.s32.totalorder %s50, 11
      %p345 = por %p343, %p344
      %p347 = scmp.ne.s32.totalorder %s330, %s346
      %p348 = scmp.eq.s32.totalorder %s50, 0
      %p349 = por %p347, %p348
      %s351 = sadd.s32 %s350, 1
      %p354 = scmp.eq.s32.totalorder %s44, 11
      %p355 = scmp.ne.s32.totalorder %s350, %s352
      %p356 = scmp.eq.s32.totalorder %s44, 0
      %p357 = por %p355, %p356
      %p358 = scmp.ne.s32.totalorder %s350, %s352
      %p359 = scmp.eq.s32.totalorder %s49, 11
      %p360 = por %p358, %p359
      %p361 = scmp.ne.s32.totalorder %s352, %s353
      %p362 = scmp.eq.s32.totalorder %s49, 0
      %p363 = por %p361, %p362
      %p364 = scmp.ne.s32.totalorder %s352, %s353
      %p365 = scmp.eq.s32.totalorder %s50, 11
      %p366 = por %p364, %p365
      %p368 = scmp.ne.s32.totalorder %s353, %s367
      %p369 = scmp.eq.s32.totalorder %s50, 0
      %p370 = por %p368, %p369
      %s372 = sadd.s32 %s371, 1
      %p375 = scmp.eq.s32.totalorder %s44, 11
      %p376 = scmp.ne.s32.totalorder %s371, %s373
      %p377 = scmp.eq.s32.totalorder %s44, 0
      %p378 = por %p376, %p377
      %p379 = scmp.ne.s32.totalorder %s371, %s373
      %p380 = scmp.eq.s32.totalorder %s49, 11
      %p381 = por %p379, %p380
      %p382 = scmp.ne.s32.totalorder %s373, %s374
      %p383 = scmp.eq.s32.totalorder %s49, 0
      %p384 = por %p382, %p383
      %p385 = scmp.ne.s32.totalorder %s373, %s374
      %p386 = scmp.eq.s32.totalorder %s50, 11
      %p387 = por %p385, %p386
      %p389 = scmp.ne.s32.totalorder %s374, %s388
      %p390 = scmp.eq.s32.totalorder %s50, 0
      %p391 = por %p389, %p390
      %s393 = sadd.s32 %s392, 1
      %p396 = scmp.eq.s32.totalorder %s44, 11
      %p397 = scmp.ne.s32.totalorder %s392, %s394
      %p398 = scmp.eq.s32.totalorder %s44, 0
      %p399 = por %p397, %p398
      %p400 = scmp.ne.s32.totalorder %s392, %s394
      %p401 = scmp.eq.s32.totalorder %s49, 11
      %p402 = por %p400, %p401
      %p403 = scmp.ne.s32.totalorder %s394, %s395
      %p404 = scmp.eq.s32.totalorder %s49, 0
      %p405 = por %p403, %p404
      %p406 = scmp.ne.s32.totalorder %s394, %s395
      %p407 = scmp.eq.s32.totalorder %s50, 11
      %p408 = por %p406, %p407
      %p410 = scmp.ne.s32.totalorder %s395, %s409
      %p411 = scmp.eq.s32.totalorder %s50, 0
      %p412 = por %p410, %p411
      %s414 = sadd.s32 %s413, 1
      %p417 = scmp.eq.s32.totalorder %s44, 11
      %p418 = scmp.ne.s32.totalorder %s413, %s415
      %p419 = scmp.eq.s32.totalorder %s44, 0
      %p420 = por %p418, %p419
      %p421 = scmp.ne.s32.totalorder %s413, %s415
      %p422 = scmp.eq.s32.totalorder %s49, 11
      %p423 = por %p421, %p422
      %p424 = scmp.ne.s32.totalorder %s415, %s416
      %p425 = scmp.eq.s32.totalorder %s49, 0
      %p426 = por %p424, %p425
      %p427 = scmp.ne.s32.totalorder %s415, %s416
      %p428 = scmp.eq.s32.totalorder %s50, 11
      %p429 = por %p427, %p428
      %p431 = scmp.ne.s32.totalorder %s416, %s430
      %p432 = scmp.eq.s32.totalorder %s50, 0
      %p433 = por %p431, %p432
      %s434 = ssub.s32 %s51, %s63
      %p435 = scmp.eq.s32.totalorder %s434, 0
      %s437 = sadd.s32 %s436, 1
      %s438 = scalar_select %p435, %s436, %s437
      %p441 = pneg %p435
      %p442 = scmp.eq.s32.totalorder %s44, 11
      %p443 = por %p441, %p442
      %p444 = scmp.ne.s32.totalorder %s436, %s439
      %p445 = scmp.eq.s32.totalorder %s44, 0
      %p446 = por %p444, %p445
      %p447 = scmp.ne.s32.totalorder %s436, %s439
      %p448 = scmp.eq.s32.totalorder %s49, 11
      %p449 = por %p447, %p448
      %p450 = scmp.ne.s32.totalorder %s439, %s440
      %p451 = scmp.eq.s32.totalorder %s49, 0
      %p452 = por %p450, %p451
      %p453 = scmp.ne.s32.totalorder %s439, %s440
      %p454 = scmp.eq.s32.totalorder %s50, 11
      %p455 = por %p453, %p454
      %p457 = scmp.ne.s32.totalorder %s440, %s456
      %p458 = scmp.eq.s32.totalorder %s50, 0
      %p459 = por %p457, %p458
      %p460 = scmp.le.s32.totalorder 1, %s44
      %p461 = scmp.lt.s32.totalorder %s44, 13
      %p462 = pnand %p460, %p461
      %p463 = pneg %p462
      // Predicated region
      $region9: #{tpu_custom_call.1} parent=5 // pred_check
        _
      $region10: #{tpu_custom_call.1} parent=5 // pred_check_branch
        %465 = sbr.rel (%p462) target = $region12
      $region11: #{tpu_custom_call.1} parent=5 // pred_region
        %s466 = ssub.s32 %s44, 1
        // Predicated region
        $region13: #{tpu_custom_call.1} parent=11 // pred_check
          %p467 = pneg %p363
        $region14: #{tpu_custom_call.1} parent=11 // pred_check_branch
          %469 = sbr.rel (%p467) target = $region16
        $region15: #{tpu_custom_call.1} parent=11 // pred_region
          %s471 = ssub.s32 16, 16
          %472 = vsyncadd [#allocation22], %s471
          %s474 = sshll.u32 [#allocation21], 4
          %s475 = int_to_ptr.vmem [resolvable:$true] %s474
          %477 = dma.hbm_to_vmem [thread:$0]  %s11, 16, %s475, [#allocation22]
        $region16: #{tpu_custom_call.1} parent=11 // pred_fallthru
          _
        // Predicated region
        $region17: #{tpu_custom_call.1} parent=11 // pred_check
          %p478 = pneg %p384
        $region18: #{tpu_custom_call.1} parent=11 // pred_check_branch
          %480 = sbr.rel (%p478) target = $region20
        $region19: #{tpu_custom_call.1} parent=11 // pred_region
          %s482 = ssub.s32 16, 16
          %483 = vsyncadd [#allocation22], %s482
          %s485 = sshll.u32 [#allocation23], 4
          %s486 = int_to_ptr.vmem [resolvable:$true] %s485
          %488 = dma.hbm_to_vmem [thread:$0]  %s12, 16, %s486, [#allocation22]
        $region20: #{tpu_custom_call.1} parent=11 // pred_fallthru
          _
        // Predicated region
        $region21: #{tpu_custom_call.1} parent=11 // pred_check
          %p489 = pneg %p405
        $region22: #{tpu_custom_call.1} parent=11 // pred_check_branch
          %491 = sbr.rel (%p489) target = $region24
        $region23: #{tpu_custom_call.1} parent=11 // pred_region
          %s493 = ssub.s32 1024, 1024
          %494 = vsyncadd [#allocation25], %s493
          %s495 = sshll.u32 [#allocation24], 4
          %s496 = int_to_ptr.vmem [resolvable:$true] %s495
          %501 = dma.hbm_to_vmem [thread:$0]  %s13, 1024, %s496, [#allocation25], 64, 64, 4
        $region24: #{tpu_custom_call.1} parent=11 // pred_fallthru
          _
        // Predicated region
        $region25: #{tpu_custom_call.1} parent=11 // pred_check
          %p502 = pneg %p426
        $region26: #{tpu_custom_call.1} parent=11 // pred_check_branch
          %504 = sbr.rel (%p502) target = $region28
        $region27: #{tpu_custom_call.1} parent=11 // pred_region
          %s506 = ssub.s32 16, 16
          %507 = vsyncadd [#allocation25], %s506
          %s509 = sshll.u32 [#allocation26], 4
          %s510 = int_to_ptr.vmem [resolvable:$true] %s509
          %512 = dma.hbm_to_vmem [thread:$0]  %s14, 16, %s510, [#allocation25]
        $region28: #{tpu_custom_call.1} parent=11 // pred_fallthru
          _
      $region12: #{tpu_custom_call.1} parent=5 // pred_fallthru
        _
      %p513 = scmp.lt.s32.totalorder %s44, 12
      // Predicated region
      $region29: #{tpu_custom_call.1} parent=5 // pred_check
        %p514 = pneg %p513
      $region30: #{tpu_custom_call.1} parent=5 // pred_check_branch
        %516 = sbr.rel (%p514) target = $region32
      $region31: #{tpu_custom_call.1} parent=5 // pred_region
        // Predicated region
        $region33: #{tpu_custom_call.1} parent=31 // pred_check
          %p517 = pneg %p76
        $region34: #{tpu_custom_call.1} parent=31 // pred_check_branch
          %519 = sbr.rel (%p517) target = $region36
        $region35: #{tpu_custom_call.1} parent=31 // pred_region
          %s520 = sand.u32 %s66, 1
          %s521 = scalar_lea.sflag [#allocation4], %s520
          %s522 = sand.u32 %s66, 1
          %s523 = smul.addr %s522, 256
          %s524 = scalar_lea.vmem [#allocation3], %s523
          %s525 = smul.u32 2, %s51
          %s527 = ssub.s32 4096, 4096
          %528 = vsyncadd %s521, %s527
          %s529 = smul.addr %s525, 16
          %s530 = smul.addr %s529, 128
          %s531 = scalar_lea.hbm %s0, %s530
          %s532 = sshll.u32 %s524, 4
          %s533 = int_to_ptr.vmem [resolvable:$true] %s532
          %538 = dma.hbm_to_vmem [thread:$0]  %s531, 4096, %s533, %s521, 128, 128, 8
        $region36: #{tpu_custom_call.1} parent=31 // pred_fallthru
          _
        // Predicated region
        $region37: #{tpu_custom_call.1} parent=31 // pred_check
          %p539 = pneg %p102
        $region38: #{tpu_custom_call.1} parent=31 // pred_check_branch
          %541 = sbr.rel (%p539) target = $region40
        $region39: #{tpu_custom_call.1} parent=31 // pred_region
          %s542 = sand.u32 %s44, 1
          %s543 = scalar_lea.sflag [#allocation7], %s542
          %s544 = sand.u32 %s92, 1
          %s545 = scalar_lea.vmem [#allocation6], %s544
          %s547 = ssub.s32 16, 16
          %548 = vsyncadd %s543, %s547
          %s549 = smul.addr %s52, 16
          %s550 = scalar_lea.hbm %s1, %s549
          %s552 = sshll.u32 %s545, 4
          %s553 = int_to_ptr.vmem [resolvable:$true] %s552
          %555 = dma.hbm_to_vmem [thread:$0]  %s550, 16, %s553, %s543
        $region40: #{tpu_custom_call.1} parent=31 // pred_fallthru
          _
        // Predicated region
        $region41: #{tpu_custom_call.1} parent=31 // pred_check
          %p556 = pneg %p128
        $region42: #{tpu_custom_call.1} parent=31 // pred_check_branch
          %558 = sbr.rel (%p556) target = $region44
        $region43: #{tpu_custom_call.1} parent=31 // pred_region
          %s559 = sand.u32 %s44, 1
          %s560 = scalar_lea.sflag [#allocation7], %s559
          %s561 = sand.u32 %s118, 1
          %s562 = scalar_lea.vmem [#allocation8], %s561
          %s564 = ssub.s32 16, 16
          %565 = vsyncadd %s560, %s564
          %s566 = smul.addr %s52, 16
          %s567 = scalar_lea.hbm %s2, %s566
          %s569 = sshll.u32 %s562, 4
          %s570 = int_to_ptr.vmem [resolvable:$true] %s569
          %572 = dma.hbm_to_vmem [thread:$0]  %s567, 16, %s570, %s560
        $region44: #{tpu_custom_call.1} parent=31 // pred_fallthru
          _
        // Predicated region
        $region45: #{tpu_custom_call.1} parent=31 // pred_check
          %p573 = pneg %p154
        $region46: #{tpu_custom_call.1} parent=31 // pred_check_branch
          %575 = sbr.rel (%p573) target = $region48
        $region47: #{tpu_custom_call.1} parent=31 // pred_region
          %s576 = sand.u32 %s44, 1
          %s577 = scalar_lea.sflag [#allocation10], %s576
          %s578 = sand.u32 %s144, 1
          %s579 = smul.addr %s578, 512
          %s580 = scalar_lea.vmem [#allocation9], %s579
          %s582 = ssub.s32 8192, 8192
          %583 = vsyncadd %s577, %s582
          %s584 = smul.addr %s52, 128
          %s585 = smul.addr %s584, 64
          %s586 = scalar_lea.hbm %s3, %s585
          %s587 = sshll.u32 %s580, 4
          %s588 = int_to_ptr.vmem [resolvable:$true] %s587
          %593 = dma.hbm_to_vmem [thread:$0]  %s586, 8192, %s588, %s577, 512, 512, 32
        $region48: #{tpu_custom_call.1} parent=31 // pred_fallthru
          _
        // Predicated region
        $region49: #{tpu_custom_call.1} parent=31 // pred_check
          %p594 = pneg %p180
        $region50: #{tpu_custom_call.1} parent=31 // pred_check_branch
          %596 = sbr.rel (%p594) target = $region52
        $region51: #{tpu_custom_call.1} parent=31 // pred_region
          %s597 = sand.u32 %s44, 1
          %s598 = scalar_lea.sflag [#allocation10], %s597
          %s599 = sand.u32 %s170, 1
          %s600 = scalar_lea.vmem [#allocation11], %s599
          %s602 = ssub.s32 16, 16
          %603 = vsyncadd %s598, %s602
          %s604 = smul.addr %s52, 16
          %s605 = scalar_lea.hbm %s4, %s604
          %s607 = sshll.u32 %s600, 4
          %s608 = int_to_ptr.vmem [resolvable:$true] %s607
          %610 = dma.hbm_to_vmem [thread:$0]  %s605, 16, %s608, %s598
        $region52: #{tpu_custom_call.1} parent=31 // pred_fallthru
          _
        // Predicated region
        $region53: #{tpu_custom_call.1} parent=31 // pred_check
          %p611 = pneg %p206
        $region54: #{tpu_custom_call.1} parent=31 // pred_check_branch
          %613 = sbr.rel (%p611) target = $region56
        $region55: #{tpu_custom_call.1} parent=31 // pred_region
          %s614 = sand.u32 %s44, 1
          %s615 = scalar_lea.sflag [#allocation13], %s614
          %s616 = sand.u32 %s196, 1
          %s617 = scalar_lea.vmem [#allocation12], %s616
          %s619 = ssub.s32 16, 16
          %620 = vsyncadd %s615, %s619
          %s621 = smul.addr %s52, 16
          %s622 = scalar_lea.hbm %s5, %s621
          %s624 = sshll.u32 %s617, 4
          %s625 = int_to_ptr.vmem [resolvable:$true] %s624
          %627 = dma.hbm_to_vmem [thread:$0]  %s622, 16, %s625, %s615
        $region56: #{tpu_custom_call.1} parent=31 // pred_fallthru
          _
        // Predicated region
        $region57: #{tpu_custom_call.1} parent=31 // pred_check
          %p628 = pneg %p232
        $region58: #{tpu_custom_call.1} parent=31 // pred_check_branch
          %630 = sbr.rel (%p628) target = $region60
        $region59: #{tpu_custom_call.1} parent=31 // pred_region
          %s631 = sand.u32 %s44, 1
          %s632 = scalar_lea.sflag [#allocation13], %s631
          %s633 = sand.u32 %s222, 1
          %s634 = scalar_lea.vmem [#allocation14], %s633
          %s636 = ssub.s32 16, 16
          %637 = vsyncadd %s632, %s636
          %s638 = smul.addr %s52, 16
          %s639 = scalar_lea.hbm %s6, %s638
          %s641 = sshll.u32 %s634, 4
          %s642 = int_to_ptr.vmem [resolvable:$true] %s641
          %644 = dma.hbm_to_vmem [thread:$0]  %s639, 16, %s642, %s632
        $region60: #{tpu_custom_call.1} parent=31 // pred_fallthru
          _
        // Predicated region
        $region61: #{tpu_custom_call.1} parent=31 // pred_check
          %p645 = pneg %p258
        $region62: #{tpu_custom_call.1} parent=31 // pred_check_branch
          %647 = sbr.rel (%p645) target = $region64
        $region63: #{tpu_custom_call.1} parent=31 // pred_region
          %s648 = sand.u32 %s44, 1
          %s649 = scalar_lea.sflag [#allocation16], %s648
          %s650 = sand.u32 %s248, 1
          %s651 = smul.addr %s650, 256
          %s652 = scalar_lea.vmem [#allocation15], %s651
          %s654 = ssub.s32 4096, 4096
          %655 = vsyncadd %s649, %s654
          %s656 = smul.addr %s52, 64
          %s657 = smul.addr %s656, 64
          %s658 = scalar_lea.hbm %s7, %s657
          %s659 = sshll.u32 %s652, 4
          %s660 = int_to_ptr.vmem [resolvable:$true] %s659
          %665 = dma.hbm_to_vmem [thread:$0]  %s658, 4096, %s660, %s649, 256, 256, 16
        $region64: #{tpu_custom_call.1} parent=31 // pred_fallthru
          _
        // Predicated region
        $region65: #{tpu_custom_call.1} parent=31 // pred_check
          %p666 = pneg %p284
        $region66: #{tpu_custom_call.1} parent=31 // pred_check_branch
          %668 = sbr.rel (%p666) target = $region68
        $region67: #{tpu_custom_call.1} parent=31 // pred_region
          %s669 = sand.u32 %s44, 1
          %s670 = scalar_lea.sflag [#allocation16], %s669
          %s671 = sand.u32 %s274, 1
          %s672 = smul.addr %s671, 4
          %s673 = scalar_lea.vmem [#allocation17], %s672
          %s675 = ssub.s32 64, 64
          %676 = vsyncadd %s670, %s675
          %s677 = smul.addr %s52, 4
          %s678 = smul.addr %s677, 16
          %s679 = scalar_lea.hbm %s8, %s678
          %s681 = sshll.u32 %s673, 4
          %s682 = int_to_ptr.vmem [resolvable:$true] %s681
          %684 = dma.hbm_to_vmem [thread:$0]  %s679, 64, %s682, %s670
        $region68: #{tpu_custom_call.1} parent=31 // pred_fallthru
          _
        // Predicated region
        $region69: #{tpu_custom_call.1} parent=31 // pred_check
          %p685 = pneg %p310
        $region70: #{tpu_custom_call.1} parent=31 // pred_check_branch
          %687 = sbr.rel (%p685) target = $region72
        $region71: #{tpu_custom_call.1} parent=31 // pred_region
          %s688 = sand.u32 %s44, 1
          %s689 = scalar_lea.sflag [#allocation19], %s688
          %s690 = sand.u32 %s300, 1
          %s691 = smul.addr %s690, 256
          %s692 = scalar_lea.vmem [#allocation18], %s691
          %s694 = ssub.s32 4096, 4096
          %695 = vsyncadd %s689, %s694
          %s696 = smul.addr %s52, 64
          %s697 = smul.addr %s696, 64
          %s698 = scalar_lea.hbm %s9, %s697
          %s699 = sshll.u32 %s692, 4
          %s700 = int_to_ptr.vmem [resolvable:$true] %s699
          %705 = dma.hbm_to_vmem [thread:$0]  %s698, 4096, %s700, %s689, 64, 64, 4
        $region72: #{tpu_custom_call.1} parent=31 // pred_fallthru
          _
        // Predicated region
        $region73: #{tpu_custom_call.1} parent=31 // pred_check
          %p706 = pneg %p336
        $region74: #{tpu_custom_call.1} parent=31 // pred_check_branch
          %708 = sbr.rel (%p706) target = $region76
        $region75: #{tpu_custom_call.1} parent=31 // pred_region
          %s709 = sand.u32 %s44, 1
          %s710 = scalar_lea.sflag [#allocation19], %s709
          %s711 = sand.u32 %s326, 1
          %s712 = scalar_lea.vmem [#allocation20], %s711
          %s714 = ssub.s32 16, 16
          %715 = vsyncadd %s710, %s714
          %s716 = smul.addr %s52, 16
          %s717 = scalar_lea.hbm %s10, %s716
          %s719 = sshll.u32 %s712, 4
          %s720 = int_to_ptr.vmem [resolvable:$true] %s719
          %722 = dma.hbm_to_vmem [thread:$0]  %s717, 16, %s720, %s710
        $region76: #{tpu_custom_call.1} parent=31 // pred_fallthru
          _
      $region32: #{tpu_custom_call.1} parent=5 // pred_fallthru
        _
      %p723 = scmp.le.s32.totalorder 1, %s44
      %p724 = scmp.lt.s32.totalorder %s44, 13
      %p725 = pnand %p723, %p724
      %p726 = pneg %p725
      // Predicated region
      $region77: #{tpu_custom_call.1} parent=5 // pred_check
        _
      $region78: #{tpu_custom_call.1} parent=5 // pred_check_branch
        %728 = sbr.rel (%p725) target = $region80
      $region79: #{tpu_custom_call.1} parent=5 // pred_region
        %s729 = ssub.s32 %s44, 1
        %s730 = sand.u32 %s69, 1
        %s731 = scalar_lea.sflag [#allocation4], %s730
        %s732 = sand.u32 %s69, 1
        %s733 = smul.addr %s732, 256
        %s734 = scalar_lea.vmem [#allocation3], %s733
        // Predicated region
        $region81: #{tpu_custom_call.1} parent=79 // pred_check
          %p735 = pneg %p82
        $region82: #{tpu_custom_call.1} parent=79 // pred_check_branch
          %737 = sbr.rel (%p735) target = $region84
        $region83: #{tpu_custom_call.1} parent=79 // pred_region
          %738 = dma.done %s731, 4096
        $region84: #{tpu_custom_call.1} parent=79 // pred_fallthru
          _
        %s739 = sand.u32 %s49, 1
        %s740 = scalar_lea.sflag [#allocation7], %s739
        %s741 = sand.u32 %s95, 1
        %s742 = scalar_lea.vmem [#allocation6], %s741
        // Predicated region
        $region85: #{tpu_custom_call.1} parent=79 // pred_check
          %p743 = pneg %p108
        $region86: #{tpu_custom_call.1} parent=79 // pred_check_branch
          %745 = sbr.rel (%p743) target = $region88
        $region87: #{tpu_custom_call.1} parent=79 // pred_region
          %746 = dma.done %s740, 16
        $region88: #{tpu_custom_call.1} parent=79 // pred_fallthru
          _
        %s747 = sand.u32 %s49, 1
        %s748 = scalar_lea.sflag [#allocation7], %s747
        %s749 = sand.u32 %s121, 1
        %s750 = scalar_lea.vmem [#allocation8], %s749
        // Predicated region
        $region89: #{tpu_custom_call.1} parent=79 // pred_check
          %p751 = pneg %p134
        $region90: #{tpu_custom_call.1} parent=79 // pred_check_branch
          %753 = sbr.rel (%p751) target = $region92
        $region91: #{tpu_custom_call.1} parent=79 // pred_region
          %754 = dma.done %s748, 16
        $region92: #{tpu_custom_call.1} parent=79 // pred_fallthru
          _
        %s755 = sand.u32 %s49, 1
        %s756 = scalar_lea.sflag [#allocation10], %s755
        %s757 = sand.u32 %s147, 1
        %s758 = smul.addr %s757, 512
        %s759 = scalar_lea.vmem [#allocation9], %s758
        // Predicated region
        $region93: #{tpu_custom_call.1} parent=79 // pred_check
          %p760 = pneg %p160
        $region94: #{tpu_custom_call.1} parent=79 // pred_check_branch
          %762 = sbr.rel (%p760) target = $region96
        $region95: #{tpu_custom_call.1} parent=79 // pred_region
          %763 = dma.done %s756, 8192
        $region96: #{tpu_custom_call.1} parent=79 // pred_fallthru
          _
        %s764 = sand.u32 %s49, 1
        %s765 = scalar_lea.sflag [#allocation10], %s764
        %s766 = sand.u32 %s173, 1
        %s767 = scalar_lea.vmem [#allocation11], %s766
        // Predicated region
        $region97: #{tpu_custom_call.1} parent=79 // pred_check
          %p768 = pneg %p186
        $region98: #{tpu_custom_call.1} parent=79 // pred_check_branch
          %770 = sbr.rel (%p768) target = $region100
        $region99: #{tpu_custom_call.1} parent=79 // pred_region
          %771 = dma.done %s765, 16
        $region100: #{tpu_custom_call.1} parent=79 // pred_fallthru
          _
        %s772 = sand.u32 %s49, 1
        %s773 = scalar_lea.sflag [#allocation13], %s772
        %s774 = sand.u32 %s199, 1
        %s775 = scalar_lea.vmem [#allocation12], %s774
        // Predicated region
        $region101: #{tpu_custom_call.1} parent=79 // pred_check
          %p776 = pneg %p212
        $region102: #{tpu_custom_call.1} parent=79 // pred_check_branch
          %778 = sbr.rel (%p776) target = $region104
        $region103: #{tpu_custom_call.1} parent=79 // pred_region
          %779 = dma.done %s773, 16
        $region104: #{tpu_custom_call.1} parent=79 // pred_fallthru
          _
        %s780 = sand.u32 %s49, 1
        %s781 = scalar_lea.sflag [#allocation13], %s780
        %s782 = sand.u32 %s225, 1
        %s783 = scalar_lea.vmem [#allocation14], %s782
        // Predicated region
        $region105: #{tpu_custom_call.1} parent=79 // pred_check
          %p784 = pneg %p238
        $region106: #{tpu_custom_call.1} parent=79 // pred_check_branch
          %786 = sbr.rel (%p784) target = $region108
        $region107: #{tpu_custom_call.1} parent=79 // pred_region
          %787 = dma.done %s781, 16
        $region108: #{tpu_custom_call.1} parent=79 // pred_fallthru
          _
        %s788 = sand.u32 %s49, 1
        %s789 = scalar_lea.sflag [#allocation16], %s788
        %s790 = sand.u32 %s251, 1
        %s791 = smul.addr %s790, 256
        %s792 = scalar_lea.vmem [#allocation15], %s791
        // Predicated region
        $region109: #{tpu_custom_call.1} parent=79 // pred_check
          %p793 = pneg %p264
        $region110: #{tpu_custom_call.1} parent=79 // pred_check_branch
          %795 = sbr.rel (%p793) target = $region112
        $region111: #{tpu_custom_call.1} parent=79 // pred_region
          %796 = dma.done %s789, 4096
        $region112: #{tpu_custom_call.1} parent=79 // pred_fallthru
          _
        %s797 = sand.u32 %s49, 1
        %s798 = scalar_lea.sflag [#allocation16], %s797
        %s799 = sand.u32 %s277, 1
        %s800 = smul.addr %s799, 4
        %s801 = scalar_lea.vmem [#allocation17], %s800
        // Predicated region
        $region113: #{tpu_custom_call.1} parent=79 // pred_check
          %p802 = pneg %p290
        $region114: #{tpu_custom_call.1} parent=79 // pred_check_branch
          %804 = sbr.rel (%p802) target = $region116
        $region115: #{tpu_custom_call.1} parent=79 // pred_region
          %805 = dma.done %s798, 64
        $region116: #{tpu_custom_call.1} parent=79 // pred_fallthru
          _
        %s806 = sand.u32 %s49, 1
        %s807 = scalar_lea.sflag [#allocation19], %s806
        %s808 = sand.u32 %s303, 1
        %s809 = smul.addr %s808, 256
        %s810 = scalar_lea.vmem [#allocation18], %s809
        // Predicated region
        $region117: #{tpu_custom_call.1} parent=79 // pred_check
          %p811 = pneg %p316
        $region118: #{tpu_custom_call.1} parent=79 // pred_check_branch
          %813 = sbr.rel (%p811) target = $region120
        $region119: #{tpu_custom_call.1} parent=79 // pred_region
          %814 = dma.done %s807, 4096
        $region120: #{tpu_custom_call.1} parent=79 // pred_fallthru
          _
        %s815 = sand.u32 %s49, 1
        %s816 = scalar_lea.sflag [#allocation19], %s815
        %s817 = sand.u32 %s329, 1
        %s818 = scalar_lea.vmem [#allocation20], %s817
        // Predicated region
        $region121: #{tpu_custom_call.1} parent=79 // pred_check
          %p819 = pneg %p342
        $region122: #{tpu_custom_call.1} parent=79 // pred_check_branch
          %821 = sbr.rel (%p819) target = $region124
        $region123: #{tpu_custom_call.1} parent=79 // pred_region
          %822 = dma.done %s816, 16
        $region124: #{tpu_custom_call.1} parent=79 // pred_fallthru
          _
        // Predicated region
        $region125: #{tpu_custom_call.1} parent=79 // pred_check
          %p823 = pneg %p363
        $region126: #{tpu_custom_call.1} parent=79 // pred_check_branch
          %825 = sbr.rel (%p823) target = $region128
        $region127: #{tpu_custom_call.1} parent=79 // pred_region
          %826 = dma.done [#allocation22], 16
        $region128: #{tpu_custom_call.1} parent=79 // pred_fallthru
          _
        // Predicated region
        $region129: #{tpu_custom_call.1} parent=79 // pred_check
          %p827 = pneg %p384
        $region130: #{tpu_custom_call.1} parent=79 // pred_check_branch
          %829 = sbr.rel (%p827) target = $region132
        $region131: #{tpu_custom_call.1} parent=79 // pred_region
          %830 = dma.done [#allocation22], 16
        $region132: #{tpu_custom_call.1} parent=79 // pred_fallthru
          _
        // Predicated region
        $region133: #{tpu_custom_call.1} parent=79 // pred_check
          %p831 = pneg %p405
        $region134: #{tpu_custom_call.1} parent=79 // pred_check_branch
          %833 = sbr.rel (%p831) target = $region136
        $region135: #{tpu_custom_call.1} parent=79 // pred_region
          %834 = dma.done [#allocation25], 1024
        $region136: #{tpu_custom_call.1} parent=79 // pred_fallthru
          _
        // Predicated region
        $region137: #{tpu_custom_call.1} parent=79 // pred_check
          %p835 = pneg %p426
        $region138: #{tpu_custom_call.1} parent=79 // pred_check_branch
          %837 = sbr.rel (%p835) target = $region140
        $region139: #{tpu_custom_call.1} parent=79 // pred_region
          %838 = dma.done [#allocation25], 16
        $region140: #{tpu_custom_call.1} parent=79 // pred_fallthru
          _
        %s839 = sand.u32 %s69, 1
        %s840 = scalar_lea.sflag [#allocation4], %s839
        %s841 = sand.u32 %s69, 1
        %s842 = smul.addr %s841, 256
        %s843 = scalar_lea.vmem [#allocation3], %s842
        %p844 = pneg %p82
        %p845 = pneg %p79
        %s846 = sand.u32 %s49, 1
        %s847 = scalar_lea.sflag [#allocation7], %s846
        %s848 = sand.u32 %s95, 1
        %s849 = scalar_lea.vmem [#allocation6], %s848
        %p850 = pneg %p108
        %p851 = pneg %p105
        %s852 = sand.u32 %s49, 1
        %s853 = scalar_lea.sflag [#allocation7], %s852
        %s854 = sand.u32 %s121, 1
        %s855 = scalar_lea.vmem [#allocation8], %s854
        %p856 = pneg %p134
        %p857 = pneg %p131
        %s858 = sand.u32 %s49, 1
        %s859 = scalar_lea.sflag [#allocation10], %s858
        %s860 = sand.u32 %s147, 1
        %s861 = smul.addr %s860, 512
        %s862 = scalar_lea.vmem [#allocation9], %s861
        %p863 = pneg %p160
        %p864 = pneg %p157
        %s865 = sand.u32 %s49, 1
        %s866 = scalar_lea.sflag [#allocation10], %s865
        %s867 = sand.u32 %s173, 1
        %s868 = scalar_lea.vmem [#allocation11], %s867
        %p869 = pneg %p186
        %p870 = pneg %p183
        %s871 = sand.u32 %s49, 1
        %s872 = scalar_lea.sflag [#allocation13], %s871
        %s873 = sand.u32 %s199, 1
        %s874 = scalar_lea.vmem [#allocation12], %s873
        %p875 = pneg %p212
        %p876 = pneg %p209
        %s877 = sand.u32 %s49, 1
        %s878 = scalar_lea.sflag [#allocation13], %s877
        %s879 = sand.u32 %s225, 1
        %s880 = scalar_lea.vmem [#allocation14], %s879
        %p881 = pneg %p238
        %p882 = pneg %p235
        %s883 = sand.u32 %s49, 1
        %s884 = scalar_lea.sflag [#allocation16], %s883
        %s885 = sand.u32 %s251, 1
        %s886 = smul.addr %s885, 256
        %s887 = scalar_lea.vmem [#allocation15], %s886
        %p888 = pneg %p264
        %p889 = pneg %p261
        %s890 = sand.u32 %s49, 1
        %s891 = scalar_lea.sflag [#allocation16], %s890
        %s892 = sand.u32 %s277, 1
        %s893 = smul.addr %s892, 4
        %s894 = scalar_lea.vmem [#allocation17], %s893
        %p895 = pneg %p290
        %p896 = pneg %p287
        %s897 = sand.u32 %s49, 1
        %s898 = scalar_lea.sflag [#allocation19], %s897
        %s899 = sand.u32 %s303, 1
        %s900 = smul.addr %s899, 256
        %s901 = scalar_lea.vmem [#allocation18], %s900
        %p902 = pneg %p316
        %p903 = pneg %p313
        %s904 = sand.u32 %s49, 1
        %s905 = scalar_lea.sflag [#allocation19], %s904
        %s906 = sand.u32 %s329, 1
        %s907 = scalar_lea.vmem [#allocation20], %s906
        %p908 = pneg %p342
        %p909 = pneg %p339
        %p910 = pneg %p363
        %p911 = pneg %p360
        %p912 = pneg %p384
        %p913 = pneg %p381
        %p914 = pneg %p405
        %p915 = pneg %p402
        %p916 = pneg %p426
        %p917 = pneg %p423
        %p918 = pneg %p452
        %p919 = pneg %p449
        %s920 = sand.u32 %s439, 1
        %s921 = scalar_lea.sflag [#allocation5], %s920
        %s922 = sand.u32 %s439, 1
        %s923 = smul.addr %s922, 256
        %s924 = scalar_lea.vmem [#allocation27], %s923
        %s925 = smul.u32 2, %s53
        %s926 = smul.u32 2, %s53
        %p928 = scmp.eq.s32.totalorder %s54, 0
        // Predicated region
        $region141: #{tpu_custom_call.1} parent=79 // pred_check
          %p929 = pneg %p928
        $region142: #{tpu_custom_call.1} parent=79 // pred_check_branch
          %931 = sbr.rel (%p929) target = $region144
        $region143: #{tpu_custom_call.1} parent=79 // pred_region
          %v932 = vld [vmem:[%s734] sm:$0xff]
          %v933 = vld [vmem:[%s734 + $0x8] sm:$0xff]
          %v934 = vld [vmem:[%s734 + $0x10] sm:$0xff]
          %v935 = vld [vmem:[%s734 + $0x18] sm:$0xff]
          %v936 = vld [vmem:[%s734 + $0x20] sm:$0xff]
          %v937 = vld [vmem:[%s734 + $0x28] sm:$0xff]
          %v938 = vld [vmem:[%s734 + $0x30] sm:$0xff]
          %v939 = vld [vmem:[%s734 + $0x38] sm:$0xff]
          %v940 = vld [vmem:[%s734 + $0x40] sm:$0xff]
          %v941 = vld [vmem:[%s734 + $0x48] sm:$0xff]
          %v942 = vld [vmem:[%s734 + $0x50] sm:$0xff]
          %v943 = vld [vmem:[%s734 + $0x58] sm:$0xff]
          %v944 = vld [vmem:[%s734 + $0x60] sm:$0xff]
          %v945 = vld [vmem:[%s734 + $0x68] sm:$0xff]
          %v946 = vld [vmem:[%s734 + $0x70] sm:$0xff]
          %v947 = vld [vmem:[%s734 + $0x78] sm:$0xff]
          %v948 = vld [vmem:[%s734 + $0x80] sm:$0xff]
          %v949 = vld [vmem:[%s734 + $0x88] sm:$0xff]
          %v950 = vld [vmem:[%s734 + $0x90] sm:$0xff]
          %v951 = vld [vmem:[%s734 + $0x98] sm:$0xff]
          %v952 = vld [vmem:[%s734 + $0xa0] sm:$0xff]
          %v953 = vld [vmem:[%s734 + $0xa8] sm:$0xff]
          %v954 = vld [vmem:[%s734 + $0xb0] sm:$0xff]
          %v955 = vld [vmem:[%s734 + $0xb8] sm:$0xff]
          %v956 = vld [vmem:[%s734 + $0xc0] sm:$0xff]
          %v957 = vld [vmem:[%s734 + $0xc8] sm:$0xff]
          %v958 = vld [vmem:[%s734 + $0xd0] sm:$0xff]
          %v959 = vld [vmem:[%s734 + $0xd8] sm:$0xff]
          %v960 = vld [vmem:[%s734 + $0xe0] sm:$0xff]
          %v961 = vld [vmem:[%s734 + $0xe8] sm:$0xff]
          %v962 = vld [vmem:[%s734 + $0xf0] sm:$0xff]
          %v963 = vld [vmem:[%s734 + $0xf8] sm:$0xff]
          %964 = vst [vmem:[#allocation2] sm:$0xff] %v932
          %965 = vst [vmem:[#allocation2 + $0x8] sm:$0xff] %v933
          %966 = vst [vmem:[#allocation2 + $0x10] sm:$0xff] %v934
          %967 = vst [vmem:[#allocation2 + $0x18] sm:$0xff] %v935
          %968 = vst [vmem:[#allocation2 + $0x20] sm:$0xff] %v936
          %969 = vst [vmem:[#allocation2 + $0x28] sm:$0xff] %v937
          %970 = vst [vmem:[#allocation2 + $0x30] sm:$0xff] %v938
          %971 = vst [vmem:[#allocation2 + $0x38] sm:$0xff] %v939
          %972 = vst [vmem:[#allocation2 + $0x40] sm:$0xff] %v940
          %973 = vst [vmem:[#allocation2 + $0x48] sm:$0xff] %v941
          %974 = vst [vmem:[#allocation2 + $0x50] sm:$0xff] %v942
          %975 = vst [vmem:[#allocation2 + $0x58] sm:$0xff] %v943
          %976 = vst [vmem:[#allocation2 + $0x60] sm:$0xff] %v944
          %977 = vst [vmem:[#allocation2 + $0x68] sm:$0xff] %v945
          %978 = vst [vmem:[#allocation2 + $0x70] sm:$0xff] %v946
          %979 = vst [vmem:[#allocation2 + $0x78] sm:$0xff] %v947
          %980 = vst [vmem:[#allocation2 + $0x80] sm:$0xff] %v948
          %981 = vst [vmem:[#allocation2 + $0x88] sm:$0xff] %v949
          %982 = vst [vmem:[#allocation2 + $0x90] sm:$0xff] %v950
          %983 = vst [vmem:[#allocation2 + $0x98] sm:$0xff] %v951
          %984 = vst [vmem:[#allocation2 + $0xa0] sm:$0xff] %v952
          %985 = vst [vmem:[#allocation2 + $0xa8] sm:$0xff] %v953
          %986 = vst [vmem:[#allocation2 + $0xb0] sm:$0xff] %v954
          %987 = vst [vmem:[#allocation2 + $0xb8] sm:$0xff] %v955
          %988 = vst [vmem:[#allocation2 + $0xc0] sm:$0xff] %v956
          %989 = vst [vmem:[#allocation2 + $0xc8] sm:$0xff] %v957
          %990 = vst [vmem:[#allocation2 + $0xd0] sm:$0xff] %v958
          %991 = vst [vmem:[#allocation2 + $0xd8] sm:$0xff] %v959
          %992 = vst [vmem:[#allocation2 + $0xe0] sm:$0xff] %v960
          %993 = vst [vmem:[#allocation2 + $0xe8] sm:$0xff] %v961
          %994 = vst [vmem:[#allocation2 + $0xf0] sm:$0xff] %v962
          %995 = vst [vmem:[#allocation2 + $0xf8] sm:$0xff] %v963
        $region144: #{tpu_custom_call.1} parent=79 // pred_fallthru
          _
        %v996 = vld [vmem:[#allocation2] sm:$0xff]
        %v997 = vld [vmem:[#allocation2 + $0x8] sm:$0xff]
        %v998 = vld [vmem:[#allocation2 + $0x10] sm:$0xff]
        %v999 = vld [vmem:[#allocation2 + $0x18] sm:$0xff]
        %v1000 = vld [vmem:[#allocation2 + $0x20] sm:$0xff]
        %v1001 = vld [vmem:[#allocation2 + $0x28] sm:$0xff]
        %v1002 = vld [vmem:[#allocation2 + $0x30] sm:$0xff]
        %v1003 = vld [vmem:[#allocation2 + $0x38] sm:$0xff]
        %v1004 = vld [vmem:[#allocation2 + $0x40] sm:$0xff]
        %v1005 = vld [vmem:[#allocation2 + $0x48] sm:$0xff]
        %v1006 = vld [vmem:[#allocation2 + $0x50] sm:$0xff]
        %v1007 = vld [vmem:[#allocation2 + $0x58] sm:$0xff]
        %v1008 = vld [vmem:[#allocation2 + $0x60] sm:$0xff]
        %v1009 = vld [vmem:[#allocation2 + $0x68] sm:$0xff]
        %v1010 = vld [vmem:[#allocation2 + $0x70] sm:$0xff]
        %v1011 = vld [vmem:[#allocation2 + $0x78] sm:$0xff]
        %v1012 = vld [vmem:[#allocation2 + $0x80] sm:$0xff]
        %v1013 = vld [vmem:[#allocation2 + $0x88] sm:$0xff]
        %v1014 = vld [vmem:[#allocation2 + $0x90] sm:$0xff]
        %v1015 = vld [vmem:[#allocation2 + $0x98] sm:$0xff]
        %v1016 = vld [vmem:[#allocation2 + $0xa0] sm:$0xff]
        %v1017 = vld [vmem:[#allocation2 + $0xa8] sm:$0xff]
        %v1018 = vld [vmem:[#allocation2 + $0xb0] sm:$0xff]
        %v1019 = vld [vmem:[#allocation2 + $0xb8] sm:$0xff]
        %v1020 = vld [vmem:[#allocation2 + $0xc0] sm:$0xff]
        %v1021 = vld [vmem:[#allocation2 + $0xc8] sm:$0xff]
        %v1022 = vld [vmem:[#allocation2 + $0xd0] sm:$0xff]
        %v1023 = vld [vmem:[#allocation2 + $0xd8] sm:$0xff]
        %v1024 = vld [vmem:[#allocation2 + $0xe0] sm:$0xff]
        %v1025 = vld [vmem:[#allocation2 + $0xe8] sm:$0xff]
        %v1026 = vld [vmem:[#allocation2 + $0xf0] sm:$0xff]
        %v1027 = vld [vmem:[#allocation2 + $0xf8] sm:$0xff]
        %v1028 = vlaneseq
        %v1029 = vshrl.u32 %v1028, 7
        %v1030 = vadd.s32 %v1029, 8
        %v1031 = vadd.s32 %v1029, 16
        %v1032 = vadd.s32 %v1029, 24
        %v1033 = vadd.s32 %v1029, 32
        %v1034 = vadd.s32 %v1029, 40
        %v1035 = vadd.s32 %v1029, 48
        %v1036 = vadd.s32 %v1029, 56
        %v1037 = vadd.s32 %v1029, 64
        %v1038 = vadd.s32 %v1029, 72
        %v1039 = vadd.s32 %v1029, 80
        %v1040 = vadd.s32 %v1029, 88
        %v1041 = vadd.s32 %v1029, 96
        %v1042 = vadd.s32 %v1029, 104
        %v1043 = vadd.s32 %v1029, 112
        %v1044 = vadd.s32 %v1029, 120
        %v1045 = vlaneseq
        %v1046 = vand.u32 %v1045, 127
        %vm1047 = vcmp.le.s32.totalorder %v1046, %v1029
        %vm1048 = vcmp.le.s32.totalorder %v1046, %v1030
        %vm1049 = vcmp.le.s32.totalorder %v1046, %v1031
        %vm1050 = vcmp.le.s32.totalorder %v1046, %v1032
        %vm1051 = vcmp.le.s32.totalorder %v1046, %v1033
        %vm1052 = vcmp.le.s32.totalorder %v1046, %v1034
        %vm1053 = vcmp.le.s32.totalorder %v1046, %v1035
        %vm1054 = vcmp.le.s32.totalorder %v1046, %v1036
        %vm1055 = vcmp.le.s32.totalorder %v1046, %v1037
        %vm1056 = vcmp.le.s32.totalorder %v1046, %v1038
        %vm1057 = vcmp.le.s32.totalorder %v1046, %v1039
        %vm1058 = vcmp.le.s32.totalorder %v1046, %v1040
        %vm1059 = vcmp.le.s32.totalorder %v1046, %v1041
        %vm1060 = vcmp.le.s32.totalorder %v1046, %v1042
        %vm1061 = vcmp.le.s32.totalorder %v1046, %v1043
        %vm1062 = vcmp.le.s32.totalorder %v1046, %v1044
        %v1063 = vld [vmem:[%s742] sm:$0x1]
        %v1064 = vld [vmem:[%s750] sm:$0x1]
        %1065 = vadd.xlane.f32.xlu0 %v996
        %v1066 = vpop.xlane.xlu0 %1065
        %1067 = vadd.xlane.f32.xlu0 %v997
        %v1068 = vpop.xlane.xlu0 %1067
        %1069 = vadd.xlane.f32.xlu0 %v998
        %v1070 = vpop.xlane.xlu0 %1069
        %1071 = vadd.xlane.f32.xlu0 %v999
        %v1072 = vpop.xlane.xlu0 %1071
        %1073 = vadd.xlane.f32.xlu0 %v1000
        %v1074 = vpop.xlane.xlu0 %1073
        %1075 = vadd.xlane.f32.xlu0 %v1001
        %v1076 = vpop.xlane.xlu0 %1075
        %1077 = vadd.xlane.f32.xlu0 %v1002
        %v1078 = vpop.xlane.xlu0 %1077
        %1079 = vadd.xlane.f32.xlu0 %v1003
        %v1080 = vpop.xlane.xlu0 %1079
        %1081 = vadd.xlane.f32.xlu0 %v1004
        %v1082 = vpop.xlane.xlu0 %1081
        %1083 = vadd.xlane.f32.xlu0 %v1005
        %v1084 = vpop.xlane.xlu0 %1083
        %1085 = vadd.xlane.f32.xlu0 %v1006
        %v1086 = vpop.xlane.xlu0 %1085
        %1087 = vadd.xlane.f32.xlu0 %v1007
        %v1088 = vpop.xlane.xlu0 %1087
        %1089 = vadd.xlane.f32.xlu0 %v1008
        %v1090 = vpop.xlane.xlu0 %1089
        %1091 = vadd.xlane.f32.xlu0 %v1009
        %v1092 = vpop.xlane.xlu0 %1091
        %1093 = vadd.xlane.f32.xlu0 %v1010
        %v1094 = vpop.xlane.xlu0 %1093
        %1095 = vadd.xlane.f32.xlu0 %v1011
        %v1096 = vpop.xlane.xlu0 %1095
        %1097 = vadd.xlane.f32.xlu0 %v1012
        %v1098 = vpop.xlane.xlu0 %1097
        %1099 = vadd.xlane.f32.xlu0 %v1013
        %v1100 = vpop.xlane.xlu0 %1099
        %1101 = vadd.xlane.f32.xlu0 %v1014
        %v1102 = vpop.xlane.xlu0 %1101
        %1103 = vadd.xlane.f32.xlu0 %v1015
        %v1104 = vpop.xlane.xlu0 %1103
        %1105 = vadd.xlane.f32.xlu0 %v1016
        %v1106 = vpop.xlane.xlu0 %1105
        %1107 = vadd.xlane.f32.xlu0 %v1017
        %v1108 = vpop.xlane.xlu0 %1107
        %1109 = vadd.xlane.f32.xlu0 %v1018
        %v1110 = vpop.xlane.xlu0 %1109
        %1111 = vadd.xlane.f32.xlu0 %v1019
        %v1112 = vpop.xlane.xlu0 %1111
        %1113 = vadd.xlane.f32.xlu0 %v1020
        %v1114 = vpop.xlane.xlu0 %1113
        %1115 = vadd.xlane.f32.xlu0 %v1021
        %v1116 = vpop.xlane.xlu0 %1115
        %1117 = vadd.xlane.f32.xlu0 %v1022
        %v1118 = vpop.xlane.xlu0 %1117
        %1119 = vadd.xlane.f32.xlu0 %v1023
        %v1120 = vpop.xlane.xlu0 %1119
        %1121 = vadd.xlane.f32.xlu0 %v1024
        %v1122 = vpop.xlane.xlu0 %1121
        %1123 = vadd.xlane.f32.xlu0 %v1025
        %v1124 = vpop.xlane.xlu0 %1123
        %1125 = vadd.xlane.f32.xlu0 %v1026
        %v1126 = vpop.xlane.xlu0 %1125
        %1127 = vadd.xlane.f32.xlu0 %v1027
        %v1128 = vpop.xlane.xlu0 %1127
        %v1129 = vrcp.pop 128.0
        %v1130 = vmul.f32 %v1066, %v1129
        %v1131 = vmul.f32 %v1068, %v1129
        %v1132 = vmul.f32 %v1070, %v1129
        %v1133 = vmul.f32 %v1072, %v1129
        %v1134 = vmul.f32 %v1074, %v1129
        %v1135 = vmul.f32 %v1076, %v1129
        %v1136 = vmul.f32 %v1078, %v1129
        %v1137 = vmul.f32 %v1080, %v1129
        %v1138 = vmul.f32 %v1082, %v1129
        %v1139 = vmul.f32 %v1084, %v1129
        %v1140 = vmul.f32 %v1086, %v1129
        %v1141 = vmul.f32 %v1088, %v1129
        %v1142 = vmul.f32 %v1090, %v1129
        %v1143 = vmul.f32 %v1092, %v1129
        %v1144 = vmul.f32 %v1094, %v1129
        %v1145 = vmul.f32 %v1096, %v1129
        %v1146 = vmul.f32 %v1098, %v1129
        %v1147 = vmul.f32 %v1100, %v1129
        %v1148 = vmul.f32 %v1102, %v1129
        %v1149 = vmul.f32 %v1104, %v1129
        %v1150 = vmul.f32 %v1106, %v1129
        %v1151 = vmul.f32 %v1108, %v1129
        %v1152 = vmul.f32 %v1110, %v1129
        %v1153 = vmul.f32 %v1112, %v1129
        %v1154 = vmul.f32 %v1114, %v1129
        %v1155 = vmul.f32 %v1116, %v1129
        %v1156 = vmul.f32 %v1118, %v1129
        %v1157 = vmul.f32 %v1120, %v1129
        %v1158 = vmul.f32 %v1122, %v1129
        %v1159 = vmul.f32 %v1124, %v1129
        %v1160 = vmul.f32 %v1126, %v1129
        %v1161 = vmul.f32 %v1128, %v1129
        %v1162 = vsub.f32 %v996, %v1130
        %v1163 = vsub.f32 %v997, %v1131
        %v1164 = vsub.f32 %v998, %v1132
        %v1165 = vsub.f32 %v999, %v1133
        %v1166 = vsub.f32 %v1000, %v1134
        %v1167 = vsub.f32 %v1001, %v1135
        %v1168 = vsub.f32 %v1002, %v1136
        %v1169 = vsub.f32 %v1003, %v1137
        %v1170 = vsub.f32 %v1004, %v1138
        %v1171 = vsub.f32 %v1005, %v1139
        %v1172 = vsub.f32 %v1006, %v1140
        %v1173 = vsub.f32 %v1007, %v1141
        %v1174 = vsub.f32 %v1008, %v1142
        %v1175 = vsub.f32 %v1009, %v1143
        %v1176 = vsub.f32 %v1010, %v1144
        %v1177 = vsub.f32 %v1011, %v1145
        %v1178 = vsub.f32 %v1012, %v1146
        %v1179 = vsub.f32 %v1013, %v1147
        %v1180 = vsub.f32 %v1014, %v1148
        %v1181 = vsub.f32 %v1015, %v1149
        %v1182 = vsub.f32 %v1016, %v1150
        %v1183 = vsub.f32 %v1017, %v1151
        %v1184 = vsub.f32 %v1018, %v1152
        %v1185 = vsub.f32 %v1019, %v1153
        %v1186 = vsub.f32 %v1020, %v1154
        %v1187 = vsub.f32 %v1021, %v1155
        %v1188 = vsub.f32 %v1022, %v1156
        %v1189 = vsub.f32 %v1023, %v1157
        %v1190 = vsub.f32 %v1024, %v1158
        %v1191 = vsub.f32 %v1025, %v1159
        %v1192 = vsub.f32 %v1026, %v1160
        %v1193 = vsub.f32 %v1027, %v1161
        %v1194 = vmul.f32 %v1162, %v1162
        %v1195 = vmul.f32 %v1163, %v1163
        %v1196 = vmul.f32 %v1164, %v1164
        %v1197 = vmul.f32 %v1165, %v1165
        %v1198 = vmul.f32 %v1166, %v1166
        %v1199 = vmul.f32 %v1167, %v1167
        %v1200 = vmul.f32 %v1168, %v1168
        %v1201 = vmul.f32 %v1169, %v1169
        %v1202 = vmul.f32 %v1170, %v1170
        %v1203 = vmul.f32 %v1171, %v1171
        %v1204 = vmul.f32 %v1172, %v1172
        %v1205 = vmul.f32 %v1173, %v1173
        %v1206 = vmul.f32 %v1174, %v1174
        %v1207 = vmul.f32 %v1175, %v1175
        %v1208 = vmul.f32 %v1176, %v1176
        %v1209 = vmul.f32 %v1177, %v1177
        %v1210 = vmul.f32 %v1178, %v1178
        %v1211 = vmul.f32 %v1179, %v1179
        %v1212 = vmul.f32 %v1180, %v1180
        %v1213 = vmul.f32 %v1181, %v1181
        %v1214 = vmul.f32 %v1182, %v1182
        %v1215 = vmul.f32 %v1183, %v1183
        %v1216 = vmul.f32 %v1184, %v1184
        %v1217 = vmul.f32 %v1185, %v1185
        %v1218 = vmul.f32 %v1186, %v1186
        %v1219 = vmul.f32 %v1187, %v1187
        %v1220 = vmul.f32 %v1188, %v1188
        %v1221 = vmul.f32 %v1189, %v1189
        %v1222 = vmul.f32 %v1190, %v1190
        %v1223 = vmul.f32 %v1191, %v1191
        %v1224 = vmul.f32 %v1192, %v1192
        %v1225 = vmul.f32 %v1193, %v1193
        %1226 = vadd.xlane.f32.xlu0 %v1194
        %v1227 = vpop.xlane.xlu0 %1226
        %1228 = vadd.xlane.f32.xlu0 %v1195
        %v1229 = vpop.xlane.xlu0 %1228
        %1230 = vadd.xlane.f32.xlu0 %v1196
        %v1231 = vpop.xlane.xlu0 %1230
        %1232 = vadd.xlane.f32.xlu0 %v1197
        %v1233 = vpop.xlane.xlu0 %1232
        %1234 = vadd.xlane.f32.xlu0 %v1198
        %v1235 = vpop.xlane.xlu0 %1234
        %1236 = vadd.xlane.f32.xlu0 %v1199
        %v1237 = vpop.xlane.xlu0 %1236
        %1238 = vadd.xlane.f32.xlu0 %v1200
        %v1239 = vpop.xlane.xlu0 %1238
        %1240 = vadd.xlane.f32.xlu0 %v1201
        %v1241 = vpop.xlane.xlu0 %1240
        %1242 = vadd.xlane.f32.xlu0 %v1202
        %v1243 = vpop.xlane.xlu0 %1242
        %1244 = vadd.xlane.f32.xlu0 %v1203
        %v1245 = vpop.xlane.xlu0 %1244
        %1246 = vadd.xlane.f32.xlu0 %v1204
        %v1247 = vpop.xlane.xlu0 %1246
        %1248 = vadd.xlane.f32.xlu0 %v1205
        %v1249 = vpop.xlane.xlu0 %1248
        %1250 = vadd.xlane.f32.xlu0 %v1206
        %v1251 = vpop.xlane.xlu0 %1250
        %1252 = vadd.xlane.f32.xlu0 %v1207
        %v1253 = vpop.xlane.xlu0 %1252
        %1254 = vadd.xlane.f32.xlu0 %v1208
        %v1255 = vpop.xlane.xlu0 %1254
        %1256 = vadd.xlane.f32.xlu0 %v1209
        %v1257 = vpop.xlane.xlu0 %1256
        %1258 = vadd.xlane.f32.xlu0 %v1210
        %v1259 = vpop.xlane.xlu0 %1258
        %1260 = vadd.xlane.f32.xlu0 %v1211
        %v1261 = vpop.xlane.xlu0 %1260
        %1262 = vadd.xlane.f32.xlu0 %v1212
        %v1263 = vpop.xlane.xlu0 %1262
        %1264 = vadd.xlane.f32.xlu0 %v1213
        %v1265 = vpop.xlane.xlu0 %1264
        %1266 = vadd.xlane.f32.xlu0 %v1214
        %v1267 = vpop.xlane.xlu0 %1266
        %1268 = vadd.xlane.f32.xlu0 %v1215
        %v1269 = vpop.xlane.xlu0 %1268
        %1270 = vadd.xlane.f32.xlu0 %v1216
        %v1271 = vpop.xlane.xlu0 %1270
        %1272 = vadd.xlane.f32.xlu0 %v1217
        %v1273 = vpop.xlane.xlu0 %1272
        %1274 = vadd.xlane.f32.xlu0 %v1218
        %v1275 = vpop.xlane.xlu0 %1274
        %1276 = vadd.xlane.f32.xlu0 %v1219
        %v1277 = vpop.xlane.xlu0 %1276
        %1278 = vadd.xlane.f32.xlu0 %v1220
        %v1279 = vpop.xlane.xlu0 %1278
        %1280 = vadd.xlane.f32.xlu0 %v1221
        %v1281 = vpop.xlane.xlu0 %1280
        %1282 = vadd.xlane.f32.xlu0 %v1222
        %v1283 = vpop.xlane.xlu0 %1282
        %1284 = vadd.xlane.f32.xlu0 %v1223
        %v1285 = vpop.xlane.xlu0 %1284
        %1286 = vadd.xlane.f32.xlu0 %v1224
        %v1287 = vpop.xlane.xlu0 %1286
        %1288 = vadd.xlane.f32.xlu0 %v1225
        %v1289 = vpop.xlane.xlu0 %1288
        %v1290 = vmul.f32 %v1227, %v1129
        %v1291 = vmul.f32 %v1229, %v1129
        %v1292 = vmul.f32 %v1231, %v1129
        %v1293 = vmul.f32 %v1233, %v1129
        %v1294 = vmul.f32 %v1235, %v1129
        %v1295 = vmul.f32 %v1237, %v1129
        %v1296 = vmul.f32 %v1239, %v1129
        %v1297 = vmul.f32 %v1241, %v1129
        %v1298 = vmul.f32 %v1243, %v1129
        %v1299 = vmul.f32 %v1245, %v1129
        %v1300 = vmul.f32 %v1247, %v1129
        %v1301 = vmul.f32 %v1249, %v1129
        %v1302 = vmul.f32 %v1251, %v1129
        %v1303 = vmul.f32 %v1253, %v1129
        %v1304 = vmul.f32 %v1255, %v1129
        %v1305 = vmul.f32 %v1257, %v1129
        %v1306 = vmul.f32 %v1259, %v1129
        %v1307 = vmul.f32 %v1261, %v1129
        %v1308 = vmul.f32 %v1263, %v1129
        %v1309 = vmul.f32 %v1265, %v1129
        %v1310 = vmul.f32 %v1267, %v1129
        %v1311 = vmul.f32 %v1269, %v1129
        %v1312 = vmul.f32 %v1271, %v1129
        %v1313 = vmul.f32 %v1273, %v1129
        %v1314 = vmul.f32 %v1275, %v1129
        %v1315 = vmul.f32 %v1277, %v1129
        %v1316 = vmul.f32 %v1279, %v1129
        %v1317 = vmul.f32 %v1281, %v1129
        %v1318 = vmul.f32 %v1283, %v1129
        %v1319 = vmul.f32 %v1285, %v1129
        %v1320 = vmul.f32 %v1287, %v1129
        %v1321 = vmul.f32 %v1289, %v1129
        %v1322 = vadd.f32 %v1290, 1e-05
        %v1323 = vadd.f32 %v1291, 1e-05
        %v1324 = vadd.f32 %v1292, 1e-05
        %v1325 = vadd.f32 %v1293, 1e-05
        %v1326 = vadd.f32 %v1294, 1e-05
        %v1327 = vadd.f32 %v1295, 1e-05
        %v1328 = vadd.f32 %v1296, 1e-05
        %v1329 = vadd.f32 %v1297, 1e-05
        %v1330 = vadd.f32 %v1298, 1e-05
        %v1331 = vadd.f32 %v1299, 1e-05
        %v1332 = vadd.f32 %v1300, 1e-05
        %v1333 = vadd.f32 %v1301, 1e-05
        %v1334 = vadd.f32 %v1302, 1e-05
        %v1335 = vadd.f32 %v1303, 1e-05
        %v1336 = vadd.f32 %v1304, 1e-05
        %v1337 = vadd.f32 %v1305, 1e-05
        %v1338 = vadd.f32 %v1306, 1e-05
        %v1339 = vadd.f32 %v1307, 1e-05
        %v1340 = vadd.f32 %v1308, 1e-05
        %v1341 = vadd.f32 %v1309, 1e-05
        %v1342 = vadd.f32 %v1310, 1e-05
        %v1343 = vadd.f32 %v1311, 1e-05
        %v1344 = vadd.f32 %v1312, 1e-05
        %v1345 = vadd.f32 %v1313, 1e-05
        %v1346 = vadd.f32 %v1314, 1e-05
        %v1347 = vadd.f32 %v1315, 1e-05
        %v1348 = vadd.f32 %v1316, 1e-05
        %v1349 = vadd.f32 %v1317, 1e-05
        %v1350 = vadd.f32 %v1318, 1e-05
        %v1351 = vadd.f32 %v1319, 1e-05
        %v1352 = vadd.f32 %v1320, 1e-05
        %v1353 = vadd.f32 %v1321, 1e-05
        %v1354 = vrsqrt.pop %v1322
        %v1355 = vrsqrt.pop %v1323
        %v1356 = vrsqrt.pop %v1324
        %v1357 = vrsqrt.pop %v1325
        %v1358 = vrsqrt.pop %v1326
        %v1359 = vrsqrt.pop %v1327
        %v1360 = vrsqrt.pop %v1328
        %v1361 = vrsqrt.pop %v1329
        %v1362 = vrsqrt.pop %v1330
        %v1363 = vrsqrt.pop %v1331
        %v1364 = vrsqrt.pop %v1332
        %v1365 = vrsqrt.pop %v1333
        %v1366 = vrsqrt.pop %v1334
        %v1367 = vrsqrt.pop %v1335
        %v1368 = vrsqrt.pop %v1336
        %v1369 = vrsqrt.pop %v1337
        %v1370 = vrsqrt.pop %v1338
        %v1371 = vrsqrt.pop %v1339
        %v1372 = vrsqrt.pop %v1340
        %v1373 = vrsqrt.pop %v1341
        %v1374 = vrsqrt.pop %v1342
        %v1375 = vrsqrt.pop %v1343
        %v1376 = vrsqrt.pop %v1344
        %v1377 = vrsqrt.pop %v1345
        %v1378 = vrsqrt.pop %v1346
        %v1379 = vrsqrt.pop %v1347
        %v1380 = vrsqrt.pop %v1348
        %v1381 = vrsqrt.pop %v1349
        %v1382 = vrsqrt.pop %v1350
        %v1383 = vrsqrt.pop %v1351
        %v1384 = vrsqrt.pop %v1352
        %v1385 = vrsqrt.pop %v1353
        %v1386 = vmul.f32 %v1162, %v1354
        %v1387 = vmul.f32 %v1163, %v1355
        %v1388 = vmul.f32 %v1164, %v1356
        %v1389 = vmul.f32 %v1165, %v1357
        %v1390 = vmul.f32 %v1166, %v1358
        %v1391 = vmul.f32 %v1167, %v1359
        %v1392 = vmul.f32 %v1168, %v1360
        %v1393 = vmul.f32 %v1169, %v1361
        %v1394 = vmul.f32 %v1170, %v1362
        %v1395 = vmul.f32 %v1171, %v1363
        %v1396 = vmul.f32 %v1172, %v1364
        %v1397 = vmul.f32 %v1173, %v1365
        %v1398 = vmul.f32 %v1174, %v1366
        %v1399 = vmul.f32 %v1175, %v1367
        %v1400 = vmul.f32 %v1176, %v1368
        %v1401 = vmul.f32 %v1177, %v1369
        %v1402 = vmul.f32 %v1178, %v1370
        %v1403 = vmul.f32 %v1179, %v1371
        %v1404 = vmul.f32 %v1180, %v1372
        %v1405 = vmul.f32 %v1181, %v1373
        %v1406 = vmul.f32 %v1182, %v1374
        %v1407 = vmul.f32 %v1183, %v1375
        %v1408 = vmul.f32 %v1184, %v1376
        %v1409 = vmul.f32 %v1185, %v1377
        %v1410 = vmul.f32 %v1186, %v1378
        %v1411 = vmul.f32 %v1187, %v1379
        %v1412 = vmul.f32 %v1188, %v1380
        %v1413 = vmul.f32 %v1189, %v1381
        %v1414 = vmul.f32 %v1190, %v1382
        %v1415 = vmul.f32 %v1191, %v1383
        %v1416 = vmul.f32 %v1192, %v1384
        %v1417 = vmul.f32 %v1193, %v1385
        %v1419 = vlaneseq
        %v1420 = vshrl.u32 %v1419, 7
        %v1421 = vsub.s32 0, %v1420
        %v1422 = vrot.slane %v1063, %v1421
        %v1424 = vmul.f32 %v1386, %v1422
        %v1425 = vmul.f32 %v1387, %v1422
        %v1426 = vmul.f32 %v1388, %v1422
        %v1427 = vmul.f32 %v1389, %v1422
        %v1428 = vmul.f32 %v1390, %v1422
        %v1429 = vmul.f32 %v1391, %v1422
        %v1430 = vmul.f32 %v1392, %v1422
        %v1431 = vmul.f32 %v1393, %v1422
        %v1432 = vmul.f32 %v1394, %v1422
        %v1433 = vmul.f32 %v1395, %v1422
        %v1434 = vmul.f32 %v1396, %v1422
        %v1435 = vmul.f32 %v1397, %v1422
        %v1436 = vmul.f32 %v1398, %v1422
        %v1437 = vmul.f32 %v1399, %v1422
        %v1438 = vmul.f32 %v1400, %v1422
        %v1439 = vmul.f32 %v1401, %v1422
        %v1440 = vmul.f32 %v1402, %v1422
        %v1441 = vmul.f32 %v1403, %v1422
        %v1442 = vmul.f32 %v1404, %v1422
        %v1443 = vmul.f32 %v1405, %v1422
        %v1444 = vmul.f32 %v1406, %v1422
        %v1445 = vmul.f32 %v1407, %v1422
        %v1446 = vmul.f32 %v1408, %v1422
        %v1447 = vmul.f32 %v1409, %v1422
        %v1448 = vmul.f32 %v1410, %v1422
        %v1449 = vmul.f32 %v1411, %v1422
        %v1450 = vmul.f32 %v1412, %v1422
        %v1451 = vmul.f32 %v1413, %v1422
        %v1452 = vmul.f32 %v1414, %v1422
        %v1453 = vmul.f32 %v1415, %v1422
        %v1454 = vmul.f32 %v1416, %v1422
        %v1455 = vmul.f32 %v1417, %v1422
        %v1457 = vlaneseq
        %v1458 = vshrl.u32 %v1457, 7
        %v1459 = vsub.s32 0, %v1458
        %v1460 = vrot.slane %v1064, %v1459
        %v1462 = vadd.f32 %v1424, %v1460
        %v1463 = vadd.f32 %v1425, %v1460
        %v1464 = vadd.f32 %v1426, %v1460
        %v1465 = vadd.f32 %v1427, %v1460
        %v1466 = vadd.f32 %v1428, %v1460
        %v1467 = vadd.f32 %v1429, %v1460
        %v1468 = vadd.f32 %v1430, %v1460
        %v1469 = vadd.f32 %v1431, %v1460
        %v1470 = vadd.f32 %v1432, %v1460
        %v1471 = vadd.f32 %v1433, %v1460
        %v1472 = vadd.f32 %v1434, %v1460
        %v1473 = vadd.f32 %v1435, %v1460
        %v1474 = vadd.f32 %v1436, %v1460
        %v1475 = vadd.f32 %v1437, %v1460
        %v1476 = vadd.f32 %v1438, %v1460
        %v1477 = vadd.f32 %v1439, %v1460
        %v1478 = vadd.f32 %v1440, %v1460
        %v1479 = vadd.f32 %v1441, %v1460
        %v1480 = vadd.f32 %v1442, %v1460
        %v1481 = vadd.f32 %v1443, %v1460
        %v1482 = vadd.f32 %v1444, %v1460
        %v1483 = vadd.f32 %v1445, %v1460
        %v1484 = vadd.f32 %v1446, %v1460
        %v1485 = vadd.f32 %v1447, %v1460
        %v1486 = vadd.f32 %v1448, %v1460
        %v1487 = vadd.f32 %v1449, %v1460
        %v1488 = vadd.f32 %v1450, %v1460
        %v1489 = vadd.f32 %v1451, %v1460
        %v1490 = vadd.f32 %v1452, %v1460
        %v1491 = vadd.f32 %v1453, %v1460
        %v1492 = vadd.f32 %v1454, %v1460
        %v1493 = vadd.f32 %v1455, %v1460
        %v1494 = vpack.c.bf16 %v1463, %v1462
        %v1495 = vpack.c.bf16 %v1465, %v1464
        %v1496 = vpack.c.bf16 %v1467, %v1466
        %v1497 = vpack.c.bf16 %v1469, %v1468
        %v1498 = vpack.c.bf16 %v1471, %v1470
        %v1499 = vpack.c.bf16 %v1473, %v1472
        %v1500 = vpack.c.bf16 %v1475, %v1474
        %v1501 = vpack.c.bf16 %v1477, %v1476
        %v1502 = vpack.c.bf16 %v1479, %v1478
        %v1503 = vpack.c.bf16 %v1481, %v1480
        %v1504 = vpack.c.bf16 %v1483, %v1482
        %v1505 = vpack.c.bf16 %v1485, %v1484
        %v1506 = vpack.c.bf16 %v1487, %v1486
        %v1507 = vpack.c.bf16 %v1489, %v1488
        %v1508 = vpack.c.bf16 %v1491, %v1490
        %v1509 = vpack.c.bf16 %v1493, %v1492
        %v1510 = vld [vmem:[%s759] sm:$0xff]
        %v1511 = vld [vmem:[%s759 + $0x8] sm:$0xff]
        %v1512 = vld [vmem:[%s759 + $0x10] sm:$0xff]
        %v1513 = vld [vmem:[%s759 + $0x18] sm:$0xff]
        %v1514 = vld [vmem:[%s759 + $0x20] sm:$0xff]
        %v1515 = vld [vmem:[%s759 + $0x28] sm:$0xff]
        %v1516 = vld [vmem:[%s759 + $0x30] sm:$0xff]
        %v1517 = vld [vmem:[%s759 + $0x38] sm:$0xff]
        %v1518 = vld [vmem:[%s759 + $0x40] sm:$0xff]
        %v1519 = vld [vmem:[%s759 + $0x48] sm:$0xff]
        %v1520 = vld [vmem:[%s759 + $0x50] sm:$0xff]
        %v1521 = vld [vmem:[%s759 + $0x58] sm:$0xff]
        %v1522 = vld [vmem:[%s759 + $0x60] sm:$0xff]
        %v1523 = vld [vmem:[%s759 + $0x68] sm:$0xff]
        %v1524 = vld [vmem:[%s759 + $0x70] sm:$0xff]
        %v1525 = vld [vmem:[%s759 + $0x78] sm:$0xff]
        %v1526 = vld [vmem:[%s759 + $0x80] sm:$0xff]
        %v1527 = vld [vmem:[%s759 + $0x88] sm:$0xff]
        %v1528 = vld [vmem:[%s759 + $0x90] sm:$0xff]
        %v1529 = vld [vmem:[%s759 + $0x98] sm:$0xff]
        %v1530 = vld [vmem:[%s759 + $0xa0] sm:$0xff]
        %v1531 = vld [vmem:[%s759 + $0xa8] sm:$0xff]
        %v1532 = vld [vmem:[%s759 + $0xb0] sm:$0xff]
        %v1533 = vld [vmem:[%s759 + $0xb8] sm:$0xff]
        %v1534 = vld [vmem:[%s759 + $0xc0] sm:$0xff]
        %v1535 = vld [vmem:[%s759 + $0xc8] sm:$0xff]
        %v1536 = vld [vmem:[%s759 + $0xd0] sm:$0xff]
        %v1537 = vld [vmem:[%s759 + $0xd8] sm:$0xff]
        %v1538 = vld [vmem:[%s759 + $0xe0] sm:$0xff]
        %v1539 = vld [vmem:[%s759 + $0xe8] sm:$0xff]
        %v1540 = vld [vmem:[%s759 + $0xf0] sm:$0xff]
        %v1541 = vld [vmem:[%s759 + $0xf8] sm:$0xff]
        %v1542 = vld [vmem:[%s759 + $0x100] sm:$0xff]
        %v1543 = vld [vmem:[%s759 + $0x108] sm:$0xff]
        %v1544 = vld [vmem:[%s759 + $0x110] sm:$0xff]
        %v1545 = vld [vmem:[%s759 + $0x118] sm:$0xff]
        %v1546 = vld [vmem:[%s759 + $0x120] sm:$0xff]
        %v1547 = vld [vmem:[%s759 + $0x128] sm:$0xff]
        %v1548 = vld [vmem:[%s759 + $0x130] sm:$0xff]
        %v1549 = vld [vmem:[%s759 + $0x138] sm:$0xff]
        %v1550 = vld [vmem:[%s759 + $0x140] sm:$0xff]
        %v1551 = vld [vmem:[%s759 + $0x148] sm:$0xff]
        %v1552 = vld [vmem:[%s759 + $0x150] sm:$0xff]
        %v1553 = vld [vmem:[%s759 + $0x158] sm:$0xff]
        %v1554 = vld [vmem:[%s759 + $0x160] sm:$0xff]
        %v1555 = vld [vmem:[%s759 + $0x168] sm:$0xff]
        %v1556 = vld [vmem:[%s759 + $0x170] sm:$0xff]
        %v1557 = vld [vmem:[%s759 + $0x178] sm:$0xff]
        %v1558 = vld [vmem:[%s759 + $0x180] sm:$0xff]
        %v1559 = vld [vmem:[%s759 + $0x188] sm:$0xff]
        %v1560 = vld [vmem:[%s759 + $0x190] sm:$0xff]
        %v1561 = vld [vmem:[%s759 + $0x198] sm:$0xff]
        %v1562 = vld [vmem:[%s759 + $0x1a0] sm:$0xff]
        %v1563 = vld [vmem:[%s759 + $0x1a8] sm:$0xff]
        %v1564 = vld [vmem:[%s759 + $0x1b0] sm:$0xff]
        %v1565 = vld [vmem:[%s759 + $0x1b8] sm:$0xff]
        %v1566 = vld [vmem:[%s759 + $0x1c0] sm:$0xff]
        %v1567 = vld [vmem:[%s759 + $0x1c8] sm:$0xff]
        %v1568 = vld [vmem:[%s759 + $0x1d0] sm:$0xff]
        %v1569 = vld [vmem:[%s759 + $0x1d8] sm:$0xff]
        %v1570 = vld [vmem:[%s759 + $0x1e0] sm:$0xff]
        %v1571 = vld [vmem:[%s759 + $0x1e8] sm:$0xff]
        %v1572 = vld [vmem:[%s759 + $0x1f0] sm:$0xff]
        %v1573 = vld [vmem:[%s759 + $0x1f8] sm:$0xff]
        %v1638 = vunpack.c.l.b16 %v1510
        %v1639 = vunpack.c.h.b16 %v1510
        %v1640 = vunpack.c.l.b16 %v1511
        %v1641 = vunpack.c.h.b16 %v1511
        %v1642 = vunpack.c.l.b16 %v1512
        %v1643 = vunpack.c.h.b16 %v1512
        %v1644 = vunpack.c.l.b16 %v1513
        %v1645 = vunpack.c.h.b16 %v1513
        %v1646 = vunpack.c.l.b16 %v1514
        %v1647 = vunpack.c.h.b16 %v1514
        %v1648 = vunpack.c.l.b16 %v1515
        %v1649 = vunpack.c.h.b16 %v1515
        %v1650 = vunpack.c.l.b16 %v1516
        %v1651 = vunpack.c.h.b16 %v1516
        %v1652 = vunpack.c.l.b16 %v1517
        %v1653 = vunpack.c.h.b16 %v1517
        %v1654 = vunpack.c.l.b16 %v1518
        %v1655 = vunpack.c.h.b16 %v1518
        %v1656 = vunpack.c.l.b16 %v1519
        %v1657 = vunpack.c.h.b16 %v1519
        %v1658 = vunpack.c.l.b16 %v1520
        %v1659 = vunpack.c.h.b16 %v1520
        %v1660 = vunpack.c.l.b16 %v1521
        %v1661 = vunpack.c.h.b16 %v1521
        %v1662 = vunpack.c.l.b16 %v1522
        %v1663 = vunpack.c.h.b16 %v1522
        %v1664 = vunpack.c.l.b16 %v1523
        %v1665 = vunpack.c.h.b16 %v1523
        %v1666 = vunpack.c.l.b16 %v1524
        %v1667 = vunpack.c.h.b16 %v1524
        %v1668 = vunpack.c.l.b16 %v1525
        %v1669 = vunpack.c.h.b16 %v1525
        %v1670 = vunpack.c.l.b16 %v1526
        %v1671 = vunpack.c.h.b16 %v1526
        %v1672 = vunpack.c.l.b16 %v1527
        %v1673 = vunpack.c.h.b16 %v1527
        %v1674 = vunpack.c.l.b16 %v1528
        %v1675 = vunpack.c.h.b16 %v1528
        %v1676 = vunpack.c.l.b16 %v1529
        %v1677 = vunpack.c.h.b16 %v1529
        %v1678 = vunpack.c.l.b16 %v1530
        %v1679 = vunpack.c.h.b16 %v1530
        %v1680 = vunpack.c.l.b16 %v1531
        %v1681 = vunpack.c.h.b16 %v1531
        %v1682 = vunpack.c.l.b16 %v1532
        %v1683 = vunpack.c.h.b16 %v1532
        %v1684 = vunpack.c.l.b16 %v1533
        %v1685 = vunpack.c.h.b16 %v1533
        %v1686 = vunpack.c.l.b16 %v1534
        %v1687 = vunpack.c.h.b16 %v1534
        %v1688 = vunpack.c.l.b16 %v1535
        %v1689 = vunpack.c.h.b16 %v1535
        %v1690 = vunpack.c.l.b16 %v1536
        %v1691 = vunpack.c.h.b16 %v1536
        %v1692 = vunpack.c.l.b16 %v1537
        %v1693 = vunpack.c.h.b16 %v1537
        %v1694 = vunpack.c.l.b16 %v1538
        %v1695 = vunpack.c.h.b16 %v1538
        %v1696 = vunpack.c.l.b16 %v1539
        %v1697 = vunpack.c.h.b16 %v1539
        %v1698 = vunpack.c.l.b16 %v1540
        %v1699 = vunpack.c.h.b16 %v1540
        %v1700 = vunpack.c.l.b16 %v1541
        %v1701 = vunpack.c.h.b16 %v1541
        %v1702 = vunpack.c.l.b16 %v1542
        %v1703 = vunpack.c.h.b16 %v1542
        %v1704 = vunpack.c.l.b16 %v1543
        %v1705 = vunpack.c.h.b16 %v1543
        %v1706 = vunpack.c.l.b16 %v1544
        %v1707 = vunpack.c.h.b16 %v1544
        %v1708 = vunpack.c.l.b16 %v1545
        %v1709 = vunpack.c.h.b16 %v1545
        %v1710 = vunpack.c.l.b16 %v1546
        %v1711 = vunpack.c.h.b16 %v1546
        %v1712 = vunpack.c.l.b16 %v1547
        %v1713 = vunpack.c.h.b16 %v1547
        %v1714 = vunpack.c.l.b16 %v1548
        %v1715 = vunpack.c.h.b16 %v1548
        %v1716 = vunpack.c.l.b16 %v1549
        %v1717 = vunpack.c.h.b16 %v1549
        %v1718 = vunpack.c.l.b16 %v1550
        %v1719 = vunpack.c.h.b16 %v1550
        %v1720 = vunpack.c.l.b16 %v1551
        %v1721 = vunpack.c.h.b16 %v1551
        %v1722 = vunpack.c.l.b16 %v1552
        %v1723 = vunpack.c.h.b16 %v1552
        %v1724 = vunpack.c.l.b16 %v1553
        %v1725 = vunpack.c.h.b16 %v1553
        %v1726 = vunpack.c.l.b16 %v1554
        %v1727 = vunpack.c.h.b16 %v1554
        %v1728 = vunpack.c.l.b16 %v1555
        %v1729 = vunpack.c.h.b16 %v1555
        %v1730 = vunpack.c.l.b16 %v1556
        %v1731 = vunpack.c.h.b16 %v1556
        %v1732 = vunpack.c.l.b16 %v1557
        %v1733 = vunpack.c.h.b16 %v1557
        %v1734 = vunpack.c.l.b16 %v1558
        %v1735 = vunpack.c.h.b16 %v1558
        %v1736 = vunpack.c.l.b16 %v1559
        %v1737 = vunpack.c.h.b16 %v1559
        %v1738 = vunpack.c.l.b16 %v1560
        %v1739 = vunpack.c.h.b16 %v1560
        %v1740 = vunpack.c.l.b16 %v1561
        %v1741 = vunpack.c.h.b16 %v1561
        %v1742 = vunpack.c.l.b16 %v1562
        %v1743 = vunpack.c.h.b16 %v1562
        %v1744 = vunpack.c.l.b16 %v1563
        %v1745 = vunpack.c.h.b16 %v1563
        %v1746 = vunpack.c.l.b16 %v1564
        %v1747 = vunpack.c.h.b16 %v1564
        %v1748 = vunpack.c.l.b16 %v1565
        %v1749 = vunpack.c.h.b16 %v1565
        %v1750 = vunpack.c.l.b16 %v1566
        %v1751 = vunpack.c.h.b16 %v1566
        %v1752 = vunpack.c.l.b16 %v1567
        %v1753 = vunpack.c.h.b16 %v1567
        %v1754 = vunpack.c.l.b16 %v1568
        %v1755 = vunpack.c.h.b16 %v1568
        %v1756 = vunpack.c.l.b16 %v1569
        %v1757 = vunpack.c.h.b16 %v1569
        %v1758 = vunpack.c.l.b16 %v1570
        %v1759 = vunpack.c.h.b16 %v1570
        %v1760 = vunpack.c.l.b16 %v1571
        %v1761 = vunpack.c.h.b16 %v1571
        %v1762 = vunpack.c.l.b16 %v1572
        %v1763 = vunpack.c.h.b16 %v1572
        %v1764 = vunpack.c.l.b16 %v1573
        %v1765 = vunpack.c.h.b16 %v1573
        %v1766 = vpack.c.b16 %v1646, %v1638
        %v1767 = vpack.c.b16 %v1647, %v1639
        %v1768 = vpack.c.b16 %v1648, %v1640
        %v1769 = vpack.c.b16 %v1649, %v1641
        %v1770 = vpack.c.b16 %v1650, %v1642
        %v1771 = vpack.c.b16 %v1651, %v1643
        %v1772 = vpack.c.b16 %v1652, %v1644
        %v1773 = vpack.c.b16 %v1653, %v1645
        %v1774 = vpack.c.b16 %v1662, %v1654
        %v1775 = vpack.c.b16 %v1663, %v1655
        %v1776 = vpack.c.b16 %v1664, %v1656
        %v1777 = vpack.c.b16 %v1665, %v1657
        %v1778 = vpack.c.b16 %v1666, %v1658
        %v1779 = vpack.c.b16 %v1667, %v1659
        %v1780 = vpack.c.b16 %v1668, %v1660
        %v1781 = vpack.c.b16 %v1669, %v1661
        %v1782 = vpack.c.b16 %v1678, %v1670
        %v1783 = vpack.c.b16 %v1679, %v1671
        %v1784 = vpack.c.b16 %v1680, %v1672
        %v1785 = vpack.c.b16 %v1681, %v1673
        %v1786 = vpack.c.b16 %v1682, %v1674
        %v1787 = vpack.c.b16 %v1683, %v1675
        %v1788 = vpack.c.b16 %v1684, %v1676
        %v1789 = vpack.c.b16 %v1685, %v1677
        %v1790 = vpack.c.b16 %v1694, %v1686
        %v1791 = vpack.c.b16 %v1695, %v1687
        %v1792 = vpack.c.b16 %v1696, %v1688
        %v1793 = vpack.c.b16 %v1697, %v1689
        %v1794 = vpack.c.b16 %v1698, %v1690
        %v1795 = vpack.c.b16 %v1699, %v1691
        %v1796 = vpack.c.b16 %v1700, %v1692
        %v1797 = vpack.c.b16 %v1701, %v1693
        %v1798 = vpack.c.b16 %v1710, %v1702
        %v1799 = vpack.c.b16 %v1711, %v1703
        %v1800 = vpack.c.b16 %v1712, %v1704
        %v1801 = vpack.c.b16 %v1713, %v1705
        %v1802 = vpack.c.b16 %v1714, %v1706
        %v1803 = vpack.c.b16 %v1715, %v1707
        %v1804 = vpack.c.b16 %v1716, %v1708
        %v1805 = vpack.c.b16 %v1717, %v1709
        %v1806 = vpack.c.b16 %v1726, %v1718
        %v1807 = vpack.c.b16 %v1727, %v1719
        %v1808 = vpack.c.b16 %v1728, %v1720
        %v1809 = vpack.c.b16 %v1729, %v1721
        %v1810 = vpack.c.b16 %v1730, %v1722
        %v1811 = vpack.c.b16 %v1731, %v1723
        %v1812 = vpack.c.b16 %v1732, %v1724
        %v1813 = vpack.c.b16 %v1733, %v1725
        %v1814 = vpack.c.b16 %v1742, %v1734
        %v1815 = vpack.c.b16 %v1743, %v1735
        %v1816 = vpack.c.b16 %v1744, %v1736
        %v1817 = vpack.c.b16 %v1745, %v1737
        %v1818 = vpack.c.b16 %v1746, %v1738
        %v1819 = vpack.c.b16 %v1747, %v1739
        %v1820 = vpack.c.b16 %v1748, %v1740
        %v1821 = vpack.c.b16 %v1749, %v1741
        %v1822 = vpack.c.b16 %v1758, %v1750
        %v1823 = vpack.c.b16 %v1759, %v1751
        %v1824 = vpack.c.b16 %v1760, %v1752
        %v1825 = vpack.c.b16 %v1761, %v1753
        %v1826 = vpack.c.b16 %v1762, %v1754
        %v1827 = vpack.c.b16 %v1763, %v1755
        %v1828 = vpack.c.b16 %v1764, %v1756
        %v1829 = vpack.c.b16 %v1765, %v1757
        %1894 = vmatprep.subr.bf16.mxu0 %v1767
        %1895 = vmatpush1.bf16.msra.mxu0 %v1766
        %1896 = vmatprep.subr.bf16.mxu0 %v1775
        %1897 = vmatpush1.bf16.msra.mxu0 %v1774
        %1898 = vmatprep.subr.bf16.mxu0 %v1783
        %1899 = vmatpush1.bf16.msra.mxu0 %v1782
        %1900 = vmatprep.subr.bf16.mxu0 %v1791
        %1901 = vmatpush1.bf16.msra.mxu0 %v1790
        %1902 = vmatprep.subr.bf16.mxu0 %v1799
        %1903 = vmatpush1.bf16.msra.mxu0 %v1798
        %1904 = vmatprep.subr.bf16.mxu0 %v1807
        %1905 = vmatpush1.bf16.msra.mxu0 %v1806
        %1906 = vmatprep.subr.bf16.mxu0 %v1815
        %1907 = vmatpush1.bf16.msra.mxu0 %v1814
        %1908 = vmatprep.subr.bf16.mxu0 %v1823
        %1909 = vmatpush1.bf16.msra.mxu0 %v1822
        %1910 = vmatprep.subr.bf16.mxu0 0
        %1911 = vmatpush1.bf16.msra.mxu0 0
        %1912 = vmatprep.subr.bf16.mxu0 0
        %1913 = vmatpush1.bf16.msra.mxu0 0
        %1914 = vmatprep.subr.bf16.mxu0 0
        %1915 = vmatpush1.bf16.msra.mxu0 0
        %1916 = vmatprep.subr.bf16.mxu0 0
        %1917 = vmatpush1.bf16.msra.mxu0 0
        %1918 = vmatprep.subr.bf16.mxu0 0
        %1919 = vmatpush1.bf16.msra.mxu0 0
        %1920 = vmatprep.subr.bf16.mxu0 0
        %1921 = vmatpush1.bf16.msra.mxu0 0
        %1922 = vmatprep.subr.bf16.mxu0 0
        %1923 = vmatpush1.bf16.msra.mxu0 0
        %1924 = vmatprep.subr.bf16.mxu0 0
        %1925 = vmatpush1.bf16.msra.mxu0 0
        %1926 = vmatprep.mubr.bf16.mxu0 0
        %1927 = vmatmul.mubr.bf16.gmra.mrb[0].mxu0 %v1494
        %v1928 = vpop.f32.mrb[0].mxu0
        %v1929 = vadd.f32 0.0, %v1928
        %v1930 = vpop.f32.mrb[0].mxu0
        %v1931 = vadd.f32 0.0, %v1930
        %v1932 = vpop.f32.mrb[0].mxu0
        %v1933 = vadd.f32 0.0, %v1932
        %v1934 = vpop.f32.mrb[0].mxu0
        %v1935 = vadd.f32 0.0, %v1934
        %1936 = vmatprep.mubr.bf16.mxu0 0
        %1937 = vmatmul.mubr.bf16.gmra.mrb[0].mxu0 %v1495
        %v1938 = vpop.f32.mrb[0].mxu0
        %v1939 = vadd.f32 0.0, %v1938
        %v1940 = vpop.f32.mrb[0].mxu0
        %v1941 = vadd.f32 0.0, %v1940
        %v1942 = vpop.f32.mrb[0].mxu0
        %v1943 = vadd.f32 0.0, %v1942
        %v1944 = vpop.f32.mrb[0].mxu0
        %v1945 = vadd.f32 0.0, %v1944
        %1946 = vmatprep.mubr.bf16.mxu0 0
        %1947 = vmatmul.mubr.bf16.gmra.mrb[0].mxu0 %v1496
        %v1948 = vpop.f32.mrb[0].mxu0
        %v1949 = vadd.f32 0.0, %v1948
        %v1950 = vpop.f32.mrb[0].mxu0
        %v1951 = vadd.f32 0.0, %v1950
        %v1952 = vpop.f32.mrb[0].mxu0
        %v1953 = vadd.f32 0.0, %v1952
        %v1954 = vpop.f32.mrb[0].mxu0
        %v1955 = vadd.f32 0.0, %v1954
        %1956 = vmatprep.mubr.bf16.mxu0 0
        %1957 = vmatmul.mubr.bf16.gmra.mrb[0].mxu0 %v1497
        %v1958 = vpop.f32.mrb[0].mxu0
        %v1959 = vadd.f32 0.0, %v1958
        %v1960 = vpop.f32.mrb[0].mxu0
        %v1961 = vadd.f32 0.0, %v1960
        %v1962 = vpop.f32.mrb[0].mxu0
        %v1963 = vadd.f32 0.0, %v1962
        %v1964 = vpop.f32.mrb[0].mxu0
        %v1965 = vadd.f32 0.0, %v1964
        %1966 = vmatprep.mubr.bf16.mxu0 0
        %1967 = vmatmul.mubr.bf16.gmra.mrb[0].mxu0 %v1498
        %v1968 = vpop.f32.mrb[0].mxu0
        %v1969 = vadd.f32 0.0, %v1968
        %v1970 = vpop.f32.mrb[0].mxu0
        %v1971 = vadd.f32 0.0, %v1970
        %v1972 = vpop.f32.mrb[0].mxu0
        %v1973 = vadd.f32 0.0, %v1972
        %v1974 = vpop.f32.mrb[0].mxu0
        %v1975 = vadd.f32 0.0, %v1974
        %1976 = vmatprep.mubr.bf16.mxu0 0
        %1977 = vmatmul.mubr.bf16.gmra.mrb[0].mxu0 %v1499
        %v1978 = vpop.f32.mrb[0].mxu0
        %v1979 = vadd.f32 0.0, %v1978
        %v1980 = vpop.f32.mrb[0].mxu0
        %v1981 = vadd.f32 0.0, %v1980
        %v1982 = vpop.f32.mrb[0].mxu0
        %v1983 = vadd.f32 0.0, %v1982
        %v1984 = vpop.f32.mrb[0].mxu0
        %v1985 = vadd.f32 0.0, %v1984
        %1986 = vmatprep.mubr.bf16.mxu0 0
        %1987 = vmatmul.mubr.bf16.gmra.mrb[0].mxu0 %v1500
        %v1988 = vpop.f32.mrb[0].mxu0
        %v1989 = vadd.f32 0.0, %v1988
        %v1990 = vpop.f32.mrb[0].mxu0
        %v1991 = vadd.f32 0.0, %v1990
        %v1992 = vpop.f32.mrb[0].mxu0
        %v1993 = vadd.f32 0.0, %v1992
        %v1994 = vpop.f32.mrb[0].mxu0
        %v1995 = vadd.f32 0.0, %v1994
        %1996 = vmatprep.mubr.bf16.mxu0 0
        %1997 = vmatmul.mubr.bf16.gmra.mrb[0].mxu0 %v1501
        %v1998 = vpop.f32.mrb[0].mxu0
        %v1999 = vadd.f32 0.0, %v1998
        %v2000 = vpop.f32.mrb[0].mxu0
        %v2001 = vadd.f32 0.0, %v2000
        %v2002 = vpop.f32.mrb[0].mxu0
        %v2003 = vadd.f32 0.0, %v2002
        %v2004 = vpop.f32.mrb[0].mxu0
        %v2005 = vadd.f32 0.0, %v2004
        %2006 = vmatprep.mubr.bf16.mxu0 0
        %2007 = vmatmul.mubr.bf16.gmra.mrb[0].mxu0 %v1502
        %v2008 = vpop.f32.mrb[0].mxu0
        %v2009 = vadd.f32 0.0, %v2008
        %v2010 = vpop.f32.mrb[0].mxu0
        %v2011 = vadd.f32 0.0, %v2010
        %v2012 = vpop.f32.mrb[0].mxu0
        %v2013 = vadd.f32 0.0, %v2012
        %v2014 = vpop.f32.mrb[0].mxu0
        %v2015 = vadd.f32 0.0, %v2014
        %2016 = vmatprep.mubr.bf16.mxu0 0
        %2017 = vmatmul.mubr.bf16.gmra.mrb[0].mxu0 %v1503
        %v2018 = vpop.f32.mrb[0].mxu0
        %v2019 = vadd.f32 0.0, %v2018
        %v2020 = vpop.f32.mrb[0].mxu0
        %v2021 = vadd.f32 0.0, %v2020
        %v2022 = vpop.f32.mrb[0].mxu0
        %v2023 = vadd.f32 0.0, %v2022
        %v2024 = vpop.f32.mrb[0].mxu0
        %v2025 = vadd.f32 0.0, %v2024
        %2026 = vmatprep.mubr.bf16.mxu0 0
        %2027 = vmatmul.mubr.bf16.gmra.mrb[0].mxu0 %v1504
        %v2028 = vpop.f32.mrb[0].mxu0
        %v2029 = vadd.f32 0.0, %v2028
        %v2030 = vpop.f32.mrb[0].mxu0
        %v2031 = vadd.f32 0.0, %v2030
        %v2032 = vpop.f32.mrb[0].mxu0
        %v2033 = vadd.f32 0.0, %v2032
        %v2034 = vpop.f32.mrb[0].mxu0
        %v2035 = vadd.f32 0.0, %v2034
        %2036 = vmatprep.mubr.bf16.mxu0 0
        %2037 = vmatmul.mubr.bf16.gmra.mrb[0].mxu0 %v1505
        %v2038 = vpop.f32.mrb[0].mxu0
        %v2039 = vadd.f32 0.0, %v2038
        %v2040 = vpop.f32.mrb[0].mxu0
        %v2041 = vadd.f32 0.0, %v2040
        %v2042 = vpop.f32.mrb[0].mxu0
        %v2043 = vadd.f32 0.0, %v2042
        %v2044 = vpop.f32.mrb[0].mxu0
        %v2045 = vadd.f32 0.0, %v2044
        %2046 = vmatprep.mubr.bf16.mxu0 0
        %2047 = vmatmul.mubr.bf16.gmra.mrb[0].mxu0 %v1506
        %v2048 = vpop.f32.mrb[0].mxu0
        %v2049 = vadd.f32 0.0, %v2048
        %v2050 = vpop.f32.mrb[0].mxu0
        %v2051 = vadd.f32 0.0, %v2050
        %v2052 = vpop.f32.mrb[0].mxu0
        %v2053 = vadd.f32 0.0, %v2052
        %v2054 = vpop.f32.mrb[0].mxu0
        %v2055 = vadd.f32 0.0, %v2054
        %2056 = vmatprep.mubr.bf16.mxu0 0
        %2057 = vmatmul.mubr.bf16.gmra.mrb[0].mxu0 %v1507
        %v2058 = vpop.f32.mrb[0].mxu0
        %v2059 = vadd.f32 0.0, %v2058
        %v2060 = vpop.f32.mrb[0].mxu0
        %v2061 = vadd.f32 0.0, %v2060
        %v2062 = vpop.f32.mrb[0].mxu0
        %v2063 = vadd.f32 0.0, %v2062
        %v2064 = vpop.f32.mrb[0].mxu0
        %v2065 = vadd.f32 0.0, %v2064
        %2066 = vmatprep.mubr.bf16.mxu0 0
        %2067 = vmatmul.mubr.bf16.gmra.mrb[0].mxu0 %v1508
        %v2068 = vpop.f32.mrb[0].mxu0
        %v2069 = vadd.f32 0.0, %v2068
        %v2070 = vpop.f32.mrb[0].mxu0
        %v2071 = vadd.f32 0.0, %v2070
        %v2072 = vpop.f32.mrb[0].mxu0
        %v2073 = vadd.f32 0.0, %v2072
        %v2074 = vpop.f32.mrb[0].mxu0
        %v2075 = vadd.f32 0.0, %v2074
        %2076 = vmatprep.mubr.bf16.mxu0 0
        %2077 = vmatmul.mubr.bf16.gmra.mrb[0].mxu0 %v1509
        %v2078 = vpop.f32.mrb[0].mxu0
        %v2079 = vadd.f32 0.0, %v2078
        %v2080 = vpop.f32.mrb[0].mxu0
        %v2081 = vadd.f32 0.0, %v2080
        %v2082 = vpop.f32.mrb[0].mxu0
        %v2083 = vadd.f32 0.0, %v2082
        %v2084 = vpop.f32.mrb[0].mxu0
        %v2085 = vadd.f32 0.0, %v2084
        %2086 = vdwg.mxu0
        %2087 = vmatprep.subr.bf16.mxu0 %v1769
        %2088 = vmatpush1.bf16.msra.mxu0 %v1768
        %2089 = vmatprep.subr.bf16.mxu0 %v1777
        %2090 = vmatpush1.bf16.msra.mxu0 %v1776
        %2091 = vmatprep.subr.bf16.mxu0 %v1785
        %2092 = vmatpush1.bf16.msra.mxu0 %v1784
        %2093 = vmatprep.subr.bf16.mxu0 %v1793
        %2094 = vmatpush1.bf16.msra.mxu0 %v1792
        %2095 = vmatprep.subr.bf16.mxu0 %v1801
        %2096 = vmatpush1.bf16.msra.mxu0 %v1800
        %2097 = vmatprep.subr.bf16.mxu0 %v1809
        %2098 = vmatpush1.bf16.msra.mxu0 %v1808
        %2099 = vmatprep.subr.bf16.mxu0 %v1817
        %2100 = vmatpush1.bf16.msra.mxu0 %v1816
        %2101 = vmatprep.subr.bf16.mxu0 %v1825
        %2102 = vmatpush1.bf16.msra.mxu0 %v1824
        %2103 = vmatprep.subr.bf16.mxu0 0
        %2104 = vmatpush1.bf16.msra.mxu0 0
        %2105 = vmatprep.subr.bf16.mxu0 0
        %2106 = vmatpush1.bf16.msra.mxu0 0
        %2107 = vmatprep.subr.bf16.mxu0 0
        %2108 = vmatpush1.bf16.msra.mxu0 0
        %2109 = vmatprep.subr.bf16.mxu0 0
        %2110 = vmatpush1.bf16.msra.mxu0 0
        %2111 = vmatprep.subr.bf16.mxu0 0
        %2112 = vmatpush1.bf16.msra.mxu0 0
        %2113 = vmatprep.subr.bf16.mxu0 0
        %2114 = vmatpush1.bf16.msra.mxu0 0
        %2115 = vmatprep.subr.bf16.mxu0 0
        %2116 = vmatpush1.bf16.msra.mxu0 0
        %2117 = vmatprep.subr.bf16.mxu0 0
        %2118 = vmatpush1.bf16.msra.mxu0 0
        %2119 = vmatprep.mubr.bf16.mxu0 0
        %2120 = vmatmul.mubr.bf16.gmra.mrb[0].mxu0 %v1494
        %v2121 = vpop.f32.mrb[0].mxu0
        %v2122 = vadd.f32 0.0, %v2121
        %v2123 = vpop.f32.mrb[0].mxu0
        %v2124 = vadd.f32 0.0, %v2123
        %v2125 = vpop.f32.mrb[0].mxu0
        %v2126 = vadd.f32 0.0, %v2125
        %v2127 = vpop.f32.mrb[0].mxu0
        %v2128 = vadd.f32 0.0, %v2127
        %2129 = vmatprep.mubr.bf16.mxu0 0
        %2130 = vmatmul.mubr.bf16.gmra.mrb[0].mxu0 %v1495
        %v2131 = vpop.f32.mrb[0].mxu0
        %v2132 = vadd.f32 0.0, %v2131
        %v2133 = vpop.f32.mrb[0].mxu0
        %v2134 = vadd.f32 0.0, %v2133
        %v2135 = vpop.f32.mrb[0].mxu0
        %v2136 = vadd.f32 0.0, %v2135
        %v2137 = vpop.f32.mrb[0].mxu0
        %v2138 = vadd.f32 0.0, %v2137
        %2139 = vmatprep.mubr.bf16.mxu0 0
        %2140 = vmatmul.mubr.bf16.gmra.mrb[0].mxu0 %v1496
        %v2141 = vpop.f32.mrb[0].mxu0
        %v2142 = vadd.f32 0.0, %v2141
        %v2143 = vpop.f32.mrb[0].mxu0
        %v2144 = vadd.f32 0.0, %v2143
        %v2145 = vpop.f32.mrb[0].mxu0
        %v2146 = vadd.f32 0.0, %v2145
        %v2147 = vpop.f32.mrb[0].mxu0
        %v2148 = vadd.f32 0.0, %v2147
        %2149 = vmatprep.mubr.bf16.mxu0 0
        %2150 = vmatmul.mubr.bf16.gmra.mrb[0].mxu0 %v1497
        %v2151 = vpop.f32.mrb[0].mxu0
        %v2152 = vadd.f32 0.0, %v2151
        %v2153 = vpop.f32.mrb[0].mxu0
        %v2154 = vadd.f32 0.0, %v2153
        %v2155 = vpop.f32.mrb[0].mxu0
        %v2156 = vadd.f32 0.0, %v2155
        %v2157 = vpop.f32.mrb[0].mxu0
        %v2158 = vadd.f32 0.0, %v2157
        %2159 = vmatprep.mubr.bf16.mxu0 0
        %2160 = vmatmul.mubr.bf16.gmra.mrb[0].mxu0 %v1498
        %v2161 = vpop.f32.mrb[0].mxu0
        %v2162 = vadd.f32 0.0, %v2161
        %v2163 = vpop.f32.mrb[0].mxu0
        %v2164 = vadd.f32 0.0, %v2163
        %v2165 = vpop.f32.mrb[0].mxu0
        %v2166 = vadd.f32 0.0, %v2165
        %v2167 = vpop.f32.mrb[0].mxu0
        %v2168 = vadd.f32 0.0, %v2167
        %2169 = vmatprep.mubr.bf16.mxu0 0
        %2170 = vmatmul.mubr.bf16.gmra.mrb[0].mxu0 %v1499
        %v2171 = vpop.f32.mrb[0].mxu0
        %v2172 = vadd.f32 0.0, %v2171
        %v2173 = vpop.f32.mrb[0].mxu0
        %v2174 = vadd.f32 0.0, %v2173
        %v2175 = vpop.f32.mrb[0].mxu0
        %v2176 = vadd.f32 0.0, %v2175
        %v2177 = vpop.f32.mrb[0].mxu0
        %v2178 = vadd.f32 0.0, %v2177
        %2179 = vmatprep.mubr.bf16.mxu0 0
        %2180 = vmatmul.mubr.bf16.gmra.mrb[0].mxu0 %v1500
        %v2181 = vpop.f32.mrb[0].mxu0
        %v2182 = vadd.f32 0.0, %v2181
        %v2183 = vpop.f32.mrb[0].mxu0
        %v2184 = vadd.f32 0.0, %v2183
        %v2185 = vpop.f32.mrb[0].mxu0
        %v2186 = vadd.f32 0.0, %v2185
        %v2187 = vpop.f32.mrb[0].mxu0
        %v2188 = vadd.f32 0.0, %v2187
        %2189 = vmatprep.mubr.bf16.mxu0 0
        %2190 = vmatmul.mubr.bf16.gmra.mrb[0].mxu0 %v1501
        %v2191 = vpop.f32.mrb[0].mxu0
        %v2192 = vadd.f32 0.0, %v2191
        %v2193 = vpop.f32.mrb[0].mxu0
        %v2194 = vadd.f32 0.0, %v2193
        %v2195 = vpop.f32.mrb[0].mxu0
        %v2196 = vadd.f32 0.0, %v2195
        %v2197 = vpop.f32.mrb[0].mxu0
        %v2198 = vadd.f32 0.0, %v2197
        %2199 = vmatprep.mubr.bf16.mxu0 0
        %2200 = vmatmul.mubr.bf16.gmra.mrb[0].mxu0 %v1502
        %v2201 = vpop.f32.mrb[0].mxu0
        %v2202 = vadd.f32 0.0, %v2201
        %v2203 = vpop.f32.mrb[0].mxu0
        %v2204 = vadd.f32 0.0, %v2203
        %v2205 = vpop.f32.mrb[0].mxu0
        %v2206 = vadd.f32 0.0, %v2205
        %v2207 = vpop.f32.mrb[0].mxu0
        %v2208 = vadd.f32 0.0, %v2207
        %2209 = vmatprep.mubr.bf16.mxu0 0
        %2210 = vmatmul.mubr.bf16.gmra.mrb[0].mxu0 %v1503
        %v2211 = vpop.f32.mrb[0].mxu0
        %v2212 = vadd.f32 0.0, %v2211
        %v2213 = vpop.f32.mrb[0].mxu0
        %v2214 = vadd.f32 0.0, %v2213
        %v2215 = vpop.f32.mrb[0].mxu0
        %v2216 = vadd.f32 0.0, %v2215
        %v2217 = vpop.f32.mrb[0].mxu0
        %v2218 = vadd.f32 0.0, %v2217
        %2219 = vmatprep.mubr.bf16.mxu0 0
        %2220 = vmatmul.mubr.bf16.gmra.mrb[0].mxu0 %v1504
        %v2221 = vpop.f32.mrb[0].mxu0
        %v2222 = vadd.f32 0.0, %v2221
        %v2223 = vpop.f32.mrb[0].mxu0
        %v2224 = vadd.f32 0.0, %v2223
        %v2225 = vpop.f32.mrb[0].mxu0
        %v2226 = vadd.f32 0.0, %v2225
        %v2227 = vpop.f32.mrb[0].mxu0
        %v2228 = vadd.f32 0.0, %v2227
        %2229 = vmatprep.mubr.bf16.mxu0 0
        %2230 = vmatmul.mubr.bf16.gmra.mrb[0].mxu0 %v1505
        %v2231 = vpop.f32.mrb[0].mxu0
        %v2232 = vadd.f32 0.0, %v2231
        %v2233 = vpop.f32.mrb[0].mxu0
        %v2234 = vadd.f32 0.0, %v2233
        %v2235 = vpop.f32.mrb[0].mxu0
        %v2236 = vadd.f32 0.0, %v2235
        %v2237 = vpop.f32.mrb[0].mxu0
        %v2238 = vadd.f32 0.0, %v2237
        %2239 = vmatprep.mubr.bf16.mxu0 0
        %2240 = vmatmul.mubr.bf16.gmra.mrb[0].mxu0 %v1506
        %v2241 = vpop.f32.mrb[0].mxu0
        %v2242 = vadd.f32 0.0, %v2241
        %v2243 = vpop.f32.mrb[0].mxu0
        %v2244 = vadd.f32 0.0, %v2243
        %v2245 = vpop.f32.mrb[0].mxu0
        %v2246 = vadd.f32 0.0, %v2245
        %v2247 = vpop.f32.mrb[0].mxu0
        %v2248 = vadd.f32 0.0, %v2247
        %2249 = vmatprep.mubr.bf16.mxu0 0
        %2250 = vmatmul.mubr.bf16.gmra.mrb[0].mxu0 %v1507
        %v2251 = vpop.f32.mrb[0].mxu0
        %v2252 = vadd.f32 0.0, %v2251
        %v2253 = vpop.f32.mrb[0].mxu0
        %v2254 = vadd.f32 0.0, %v2253
        %v2255 = vpop.f32.mrb[0].mxu0
        %v2256 = vadd.f32 0.0, %v2255
        %v2257 = vpop.f32.mrb[0].mxu0
        %v2258 = vadd.f32 0.0, %v2257
        %2259 = vmatprep.mubr.bf16.mxu0 0
        %2260 = vmatmul.mubr.bf16.gmra.mrb[0].mxu0 %v1508
        %v2261 = vpop.f32.mrb[0].mxu0
        %v2262 = vadd.f32 0.0, %v2261
        %v2263 = vpop.f32.mrb[0].mxu0
        %v2264 = vadd.f32 0.0, %v2263
        %v2265 = vpop.f32.mrb[0].mxu0
        %v2266 = vadd.f32 0.0, %v2265
        %v2267 = vpop.f32.mrb[0].mxu0
        %v2268 = vadd.f32 0.0, %v2267
        %2269 = vmatprep.mubr.bf16.mxu0 0
        %2270 = vmatmul.mubr.bf16.gmra.mrb[0].mxu0 %v1509
        %v2271 = vpop.f32.mrb[0].mxu0
        %v2272 = vadd.f32 0.0, %v2271
        %v2273 = vpop.f32.mrb[0].mxu0
        %v2274 = vadd.f32 0.0, %v2273
        %v2275 = vpop.f32.mrb[0].mxu0
        %v2276 = vadd.f32 0.0, %v2275
        %v2277 = vpop.f32.mrb[0].mxu0
        %v2278 = vadd.f32 0.0, %v2277
        %2279 = vdwg.mxu0
        %2280 = vmatprep.subr.bf16.mxu0 %v1771
        %2281 = vmatpush1.bf16.msra.mxu0 %v1770
        %2282 = vmatprep.subr.bf16.mxu0 %v1779
        %2283 = vmatpush1.bf16.msra.mxu0 %v1778
        %2284 = vmatprep.subr.bf16.mxu0 %v1787
        %2285 = vmatpush1.bf16.msra.mxu0 %v1786
        %2286 = vmatprep.subr.bf16.mxu0 %v1795
        %2287 = vmatpush1.bf16.msra.mxu0 %v1794
        %2288 = vmatprep.subr.bf16.mxu0 %v1803
        %2289 = vmatpush1.bf16.msra.mxu0 %v1802
        %2290 = vmatprep.subr.bf16.mxu0 %v1811
        %2291 = vmatpush1.bf16.msra.mxu0 %v1810
        %2292 = vmatprep.subr.bf16.mxu0 %v1819
        %2293 = vmatpush1.bf16.msra.mxu0 %v1818
        %2294 = vmatprep.subr.bf16.mxu0 %v1827
        %2295 = vmatpush1.bf16.msra.mxu0 %v1826
        %2296 = vmatprep.subr.bf16.mxu0 0
        %2297 = vmatpush1.bf16.msra.mxu0 0
        %2298 = vmatprep.subr.bf16.mxu0 0
        %2299 = vmatpush1.bf16.msra.mxu0 0
        %2300 = vmatprep.subr.bf16.mxu0 0
        %2301 = vmatpush1.bf16.msra.mxu0 0
        %2302 = vmatprep.subr.bf16.mxu0 0
        %2303 = vmatpush1.bf16.msra.mxu0 0
        %2304 = vmatprep.subr.bf16.mxu0 0
        %2305 = vmatpush1.bf16.msra.mxu0 0
        %2306 = vmatprep.subr.bf16.mxu0 0
        %2307 = vmatpush1.bf16.msra.mxu0 0
        %2308 = vmatprep.subr.bf16.mxu0 0
        %2309 = vmatpush1.bf16.msra.mxu0 0
        %2310 = vmatprep.subr.bf16.mxu0 0
        %2311 = vmatpush1.bf16.msra.mxu0 0
        %2312 = vmatprep.mubr.bf16.mxu0 0
        %2313 = vmatmul.mubr.bf16.gmra.mrb[0].mxu0 %v1494
        %v2314 = vpop.f32.mrb[0].mxu0
        %v2315 = vadd.f32 0.0, %v2314
        %v2316 = vpop.f32.mrb[0].mxu0
        %v2317 = vadd.f32 0.0, %v2316
        %v2318 = vpop.f32.mrb[0].mxu0
        %v2319 = vadd.f32 0.0, %v2318
        %v2320 = vpop.f32.mrb[0].mxu0
        %v2321 = vadd.f32 0.0, %v2320
        %2322 = vmatprep.mubr.bf16.mxu0 0
        %2323 = vmatmul.mubr.bf16.gmra.mrb[0].mxu0 %v1495
        %v2324 = vpop.f32.mrb[0].mxu0
        %v2325 = vadd.f32 0.0, %v2324
        %v2326 = vpop.f32.mrb[0].mxu0
        %v2327 = vadd.f32 0.0, %v2326
        %v2328 = vpop.f32.mrb[0].mxu0
        %v2329 = vadd.f32 0.0, %v2328
        %v2330 = vpop.f32.mrb[0].mxu0
        %v2331 = vadd.f32 0.0, %v2330
        %2332 = vmatprep.mubr.bf16.mxu0 0
        %2333 = vmatmul.mubr.bf16.gmra.mrb[0].mxu0 %v1496
        %v2334 = vpop.f32.mrb[0].mxu0
        %v2335 = vadd.f32 0.0, %v2334
        %v2336 = vpop.f32.mrb[0].mxu0
        %v2337 = vadd.f32 0.0, %v2336
        %v2338 = vpop.f32.mrb[0].mxu0
        %v2339 = vadd.f32 0.0, %v2338
        %v2340 = vpop.f32.mrb[0].mxu0
        %v2341 = vadd.f32 0.0, %v2340
        %2342 = vmatprep.mubr.bf16.mxu0 0
        %2343 = vmatmul.mubr.bf16.gmra.mrb[0].mxu0 %v1497
        %v2344 = vpop.f32.mrb[0].mxu0
        %v2345 = vadd.f32 0.0, %v2344
        %v2346 = vpop.f32.mrb[0].mxu0
        %v2347 = vadd.f32 0.0, %v2346
        %v2348 = vpop.f32.mrb[0].mxu0
        %v2349 = vadd.f32 0.0, %v2348
        %v2350 = vpop.f32.mrb[0].mxu0
        %v2351 = vadd.f32 0.0, %v2350
        %2352 = vmatprep.mubr.bf16.mxu0 0
        %2353 = vmatmul.mubr.bf16.gmra.mrb[0].mxu0 %v1498
        %v2354 = vpop.f32.mrb[0].mxu0
        %v2355 = vadd.f32 0.0, %v2354
        %v2356 = vpop.f32.mrb[0].mxu0
        %v2357 = vadd.f32 0.0, %v2356
        %v2358 = vpop.f32.mrb[0].mxu0
        %v2359 = vadd.f32 0.0, %v2358
        %v2360 = vpop.f32.mrb[0].mxu0
        %v2361 = vadd.f32 0.0, %v2360
        %2362 = vmatprep.mubr.bf16.mxu0 0
        %2363 = vmatmul.mubr.bf16.gmra.mrb[0].mxu0 %v1499
        %v2364 = vpop.f32.mrb[0].mxu0
        %v2365 = vadd.f32 0.0, %v2364
        %v2366 = vpop.f32.mrb[0].mxu0
        %v2367 = vadd.f32 0.0, %v2366
        %v2368 = vpop.f32.mrb[0].mxu0
        %v2369 = vadd.f32 0.0, %v2368
        %v2370 = vpop.f32.mrb[0].mxu0
        %v2371 = vadd.f32 0.0, %v2370
        %2372 = vmatprep.mubr.bf16.mxu0 0
        %2373 = vmatmul.mubr.bf16.gmra.mrb[0].mxu0 %v1500
        %v2374 = vpop.f32.mrb[0].mxu0
        %v2375 = vadd.f32 0.0, %v2374
        %v2376 = vpop.f32.mrb[0].mxu0
        %v2377 = vadd.f32 0.0, %v2376
        %v2378 = vpop.f32.mrb[0].mxu0
        %v2379 = vadd.f32 0.0, %v2378
        %v2380 = vpop.f32.mrb[0].mxu0
        %v2381 = vadd.f32 0.0, %v2380
        %2382 = vmatprep.mubr.bf16.mxu0 0
        %2383 = vmatmul.mubr.bf16.gmra.mrb[0].mxu0 %v1501
        %v2384 = vpop.f32.mrb[0].mxu0
        %v2385 = vadd.f32 0.0, %v2384
        %v2386 = vpop.f32.mrb[0].mxu0
        %v2387 = vadd.f32 0.0, %v2386
        %v2388 = vpop.f32.mrb[0].mxu0
        %v2389 = vadd.f32 0.0, %v2388
        %v2390 = vpop.f32.mrb[0].mxu0
        %v2391 = vadd.f32 0.0, %v2390
        %2392 = vmatprep.mubr.bf16.mxu0 0
        %2393 = vmatmul.mubr.bf16.gmra.mrb[0].mxu0 %v1502
        %v2394 = vpop.f32.mrb[0].mxu0
        %v2395 = vadd.f32 0.0, %v2394
        %v2396 = vpop.f32.mrb[0].mxu0
        %v2397 = vadd.f32 0.0, %v2396
        %v2398 = vpop.f32.mrb[0].mxu0
        %v2399 = vadd.f32 0.0, %v2398
        %v2400 = vpop.f32.mrb[0].mxu0
        %v2401 = vadd.f32 0.0, %v2400
        %2402 = vmatprep.mubr.bf16.mxu0 0
        %2403 = vmatmul.mubr.bf16.gmra.mrb[0].mxu0 %v1503
        %v2404 = vpop.f32.mrb[0].mxu0
        %v2405 = vadd.f32 0.0, %v2404
        %v2406 = vpop.f32.mrb[0].mxu0
        %v2407 = vadd.f32 0.0, %v2406
        %v2408 = vpop.f32.mrb[0].mxu0
        %v2409 = vadd.f32 0.0, %v2408
        %v2410 = vpop.f32.mrb[0].mxu0
        %v2411 = vadd.f32 0.0, %v2410
        %2412 = vmatprep.mubr.bf16.mxu0 0
        %2413 = vmatmul.mubr.bf16.gmra.mrb[0].mxu0 %v1504
        %v2414 = vpop.f32.mrb[0].mxu0
        %v2415 = vadd.f32 0.0, %v2414
        %v2416 = vpop.f32.mrb[0].mxu0
        %v2417 = vadd.f32 0.0, %v2416
        %v2418 = vpop.f32.mrb[0].mxu0
        %v2419 = vadd.f32 0.0, %v2418
        %v2420 = vpop.f32.mrb[0].mxu0
        %v2421 = vadd.f32 0.0, %v2420
        %2422 = vmatprep.mubr.bf16.mxu0 0
        %2423 = vmatmul.mubr.bf16.gmra.mrb[0].mxu0 %v1505
        %v2424 = vpop.f32.mrb[0].mxu0
        %v2425 = vadd.f32 0.0, %v2424
        %v2426 = vpop.f32.mrb[0].mxu0
        %v2427 = vadd.f32 0.0, %v2426
        %v2428 = vpop.f32.mrb[0].mxu0
        %v2429 = vadd.f32 0.0, %v2428
        %v2430 = vpop.f32.mrb[0].mxu0
        %v2431 = vadd.f32 0.0, %v2430
        %2432 = vmatprep.mubr.bf16.mxu0 0
        %2433 = vmatmul.mubr.bf16.gmra.mrb[0].mxu0 %v1506
        %v2434 = vpop.f32.mrb[0].mxu0
        %v2435 = vadd.f32 0.0, %v2434
        %v2436 = vpop.f32.mrb[0].mxu0
        %v2437 = vadd.f32 0.0, %v2436
        %v2438 = vpop.f32.mrb[0].mxu0
        %v2439 = vadd.f32 0.0, %v2438
        %v2440 = vpop.f32.mrb[0].mxu0
        %v2441 = vadd.f32 0.0, %v2440
        %2442 = vmatprep.mubr.bf16.mxu0 0
        %2443 = vmatmul.mubr.bf16.gmra.mrb[0].mxu0 %v1507
        %v2444 = vpop.f32.mrb[0].mxu0
        %v2445 = vadd.f32 0.0, %v2444
        %v2446 = vpop.f32.mrb[0].mxu0
        %v2447 = vadd.f32 0.0, %v2446
        %v2448 = vpop.f32.mrb[0].mxu0
        %v2449 = vadd.f32 0.0, %v2448
        %v2450 = vpop.f32.mrb[0].mxu0
        %v2451 = vadd.f32 0.0, %v2450
        %2452 = vmatprep.mubr.bf16.mxu0 0
        %2453 = vmatmul.mubr.bf16.gmra.mrb[0].mxu0 %v1508
        %v2454 = vpop.f32.mrb[0].mxu0
        %v2455 = vadd.f32 0.0, %v2454
        %v2456 = vpop.f32.mrb[0].mxu0
        %v2457 = vadd.f32 0.0, %v2456
        %v2458 = vpop.f32.mrb[0].mxu0
        %v2459 = vadd.f32 0.0, %v2458
        %v2460 = vpop.f32.mrb[0].mxu0
        %v2461 = vadd.f32 0.0, %v2460
        %2462 = vmatprep.mubr.bf16.mxu0 0
        %2463 = vmatmul.mubr.bf16.gmra.mrb[0].mxu0 %v1509
        %v2464 = vpop.f32.mrb[0].mxu0
        %v2465 = vadd.f32 0.0, %v2464
        %v2466 = vpop.f32.mrb[0].mxu0
        %v2467 = vadd.f32 0.0, %v2466
        %v2468 = vpop.f32.mrb[0].mxu0
        %v2469 = vadd.f32 0.0, %v2468
        %v2470 = vpop.f32.mrb[0].mxu0
        %v2471 = vadd.f32 0.0, %v2470
        %2472 = vdwg.mxu0
        %2473 = vmatprep.subr.bf16.mxu0 %v1773
        %2474 = vmatpush1.bf16.msra.mxu0 %v1772
        %2475 = vmatprep.subr.bf16.mxu0 %v1781
        %2476 = vmatpush1.bf16.msra.mxu0 %v1780
        %2477 = vmatprep.subr.bf16.mxu0 %v1789
        %2478 = vmatpush1.bf16.msra.mxu0 %v1788
        %2479 = vmatprep.subr.bf16.mxu0 %v1797
        %2480 = vmatpush1.bf16.msra.mxu0 %v1796
        %2481 = vmatprep.subr.bf16.mxu0 %v1805
        %2482 = vmatpush1.bf16.msra.mxu0 %v1804
        %2483 = vmatprep.subr.bf16.mxu0 %v1813
        %2484 = vmatpush1.bf16.msra.mxu0 %v1812
        %2485 = vmatprep.subr.bf16.mxu0 %v1821
        %2486 = vmatpush1.bf16.msra.mxu0 %v1820
        %2487 = vmatprep.subr.bf16.mxu0 %v1829
        %2488 = vmatpush1.bf16.msra.mxu0 %v1828
        %2489 = vmatprep.subr.bf16.mxu0 0
        %2490 = vmatpush1.bf16.msra.mxu0 0
        %2491 = vmatprep.subr.bf16.mxu0 0
        %2492 = vmatpush1.bf16.msra.mxu0 0
        %2493 = vmatprep.subr.bf16.mxu0 0
        %2494 = vmatpush1.bf16.msra.mxu0 0
        %2495 = vmatprep.subr.bf16.mxu0 0
        %2496 = vmatpush1.bf16.msra.mxu0 0
        %2497 = vmatprep.subr.bf16.mxu0 0
        %2498 = vmatpush1.bf16.msra.mxu0 0
        %2499 = vmatprep.subr.bf16.mxu0 0
        %2500 = vmatpush1.bf16.msra.mxu0 0
        %2501 = vmatprep.subr.bf16.mxu0 0
        %2502 = vmatpush1.bf16.msra.mxu0 0
        %2503 = vmatprep.subr.bf16.mxu0 0
        %2504 = vmatpush1.bf16.msra.mxu0 0
        %2505 = vmatprep.mubr.bf16.mxu0 0
        %2506 = vmatmul.mubr.bf16.gmra.mrb[0].mxu0 %v1494
        %v2507 = vpop.f32.mrb[0].mxu0
        %v2508 = vadd.f32 0.0, %v2507
        %v2509 = vpop.f32.mrb[0].mxu0
        %v2510 = vadd.f32 0.0, %v2509
        %v2511 = vpop.f32.mrb[0].mxu0
        %v2512 = vadd.f32 0.0, %v2511
        %v2513 = vpop.f32.mrb[0].mxu0
        %v2514 = vadd.f32 0.0, %v2513
        %2515 = vmatprep.mubr.bf16.mxu0 0
        %2516 = vmatmul.mubr.bf16.gmra.mrb[0].mxu0 %v1495
        %v2517 = vpop.f32.mrb[0].mxu0
        %v2518 = vadd.f32 0.0, %v2517
        %v2519 = vpop.f32.mrb[0].mxu0
        %v2520 = vadd.f32 0.0, %v2519
        %v2521 = vpop.f32.mrb[0].mxu0
        %v2522 = vadd.f32 0.0, %v2521
        %v2523 = vpop.f32.mrb[0].mxu0
        %v2524 = vadd.f32 0.0, %v2523
        %2525 = vmatprep.mubr.bf16.mxu0 0
        %2526 = vmatmul.mubr.bf16.gmra.mrb[0].mxu0 %v1496
        %v2527 = vpop.f32.mrb[0].mxu0
        %v2528 = vadd.f32 0.0, %v2527
        %v2529 = vpop.f32.mrb[0].mxu0
        %v2530 = vadd.f32 0.0, %v2529
        %v2531 = vpop.f32.mrb[0].mxu0
        %v2532 = vadd.f32 0.0, %v2531
        %v2533 = vpop.f32.mrb[0].mxu0
        %v2534 = vadd.f32 0.0, %v2533
        %2535 = vmatprep.mubr.bf16.mxu0 0
        %2536 = vmatmul.mubr.bf16.gmra.mrb[0].mxu0 %v1497
        %v2537 = vpop.f32.mrb[0].mxu0
        %v2538 = vadd.f32 0.0, %v2537
        %v2539 = vpop.f32.mrb[0].mxu0
        %v2540 = vadd.f32 0.0, %v2539
        %v2541 = vpop.f32.mrb[0].mxu0
        %v2542 = vadd.f32 0.0, %v2541
        %v2543 = vpop.f32.mrb[0].mxu0
        %v2544 = vadd.f32 0.0, %v2543
        %2545 = vmatprep.mubr.bf16.mxu0 0
        %2546 = vmatmul.mubr.bf16.gmra.mrb[0].mxu0 %v1498
        %v2547 = vpop.f32.mrb[0].mxu0
        %v2548 = vadd.f32 0.0, %v2547
        %v2549 = vpop.f32.mrb[0].mxu0
        %v2550 = vadd.f32 0.0, %v2549
        %v2551 = vpop.f32.mrb[0].mxu0
        %v2552 = vadd.f32 0.0, %v2551
        %v2553 = vpop.f32.mrb[0].mxu0
        %v2554 = vadd.f32 0.0, %v2553
        %2555 = vmatprep.mubr.bf16.mxu0 0
        %2556 = vmatmul.mubr.bf16.gmra.mrb[0].mxu0 %v1499
        %v2557 = vpop.f32.mrb[0].mxu0
        %v2558 = vadd.f32 0.0, %v2557
        %v2559 = vpop.f32.mrb[0].mxu0
        %v2560 = vadd.f32 0.0, %v2559
        %v2561 = vpop.f32.mrb[0].mxu0
        %v2562 = vadd.f32 0.0, %v2561
        %v2563 = vpop.f32.mrb[0].mxu0
        %v2564 = vadd.f32 0.0, %v2563
        %2565 = vmatprep.mubr.bf16.mxu0 0
        %2566 = vmatmul.mubr.bf16.gmra.mrb[0].mxu0 %v1500
        %v2567 = vpop.f32.mrb[0].mxu0
        %v2568 = vadd.f32 0.0, %v2567
        %v2569 = vpop.f32.mrb[0].mxu0
        %v2570 = vadd.f32 0.0, %v2569
        %v2571 = vpop.f32.mrb[0].mxu0
        %v2572 = vadd.f32 0.0, %v2571
        %v2573 = vpop.f32.mrb[0].mxu0
        %v2574 = vadd.f32 0.0, %v2573
        %2575 = vmatprep.mubr.bf16.mxu0 0
        %2576 = vmatmul.mubr.bf16.gmra.mrb[0].mxu0 %v1501
        %v2577 = vpop.f32.mrb[0].mxu0
        %v2578 = vadd.f32 0.0, %v2577
        %v2579 = vpop.f32.mrb[0].mxu0
        %v2580 = vadd.f32 0.0, %v2579
        %v2581 = vpop.f32.mrb[0].mxu0
        %v2582 = vadd.f32 0.0, %v2581
        %v2583 = vpop.f32.mrb[0].mxu0
        %v2584 = vadd.f32 0.0, %v2583
        %2585 = vmatprep.mubr.bf16.mxu0 0
        %2586 = vmatmul.mubr.bf16.gmra.mrb[0].mxu0 %v1502
        %v2587 = vpop.f32.mrb[0].mxu0
        %v2588 = vadd.f32 0.0, %v2587
        %v2589 = vpop.f32.mrb[0].mxu0
        %v2590 = vadd.f32 0.0, %v2589
        %v2591 = vpop.f32.mrb[0].mxu0
        %v2592 = vadd.f32 0.0, %v2591
        %v2593 = vpop.f32.mrb[0].mxu0
        %v2594 = vadd.f32 0.0, %v2593
        %2595 = vmatprep.mubr.bf16.mxu0 0
        %2596 = vmatmul.mubr.bf16.gmra.mrb[0].mxu0 %v1503
        %v2597 = vpop.f32.mrb[0].mxu0
        %v2598 = vadd.f32 0.0, %v2597
        %v2599 = vpop.f32.mrb[0].mxu0
        %v2600 = vadd.f32 0.0, %v2599
        %v2601 = vpop.f32.mrb[0].mxu0
        %v2602 = vadd.f32 0.0, %v2601
        %v2603 = vpop.f32.mrb[0].mxu0
        %v2604 = vadd.f32 0.0, %v2603
        %2605 = vmatprep.mubr.bf16.mxu0 0
        %2606 = vmatmul.mubr.bf16.gmra.mrb[0].mxu0 %v1504
        %v2607 = vpop.f32.mrb[0].mxu0
        %v2608 = vadd.f32 0.0, %v2607
        %v2609 = vpop.f32.mrb[0].mxu0
        %v2610 = vadd.f32 0.0, %v2609
        %v2611 = vpop.f32.mrb[0].mxu0
        %v2612 = vadd.f32 0.0, %v2611
        %v2613 = vpop.f32.mrb[0].mxu0
        %v2614 = vadd.f32 0.0, %v2613
        %2615 = vmatprep.mubr.bf16.mxu0 0
        %2616 = vmatmul.mubr.bf16.gmra.mrb[0].mxu0 %v1505
        %v2617 = vpop.f32.mrb[0].mxu0
        %v2618 = vadd.f32 0.0, %v2617
        %v2619 = vpop.f32.mrb[0].mxu0
        %v2620 = vadd.f32 0.0, %v2619
        %v2621 = vpop.f32.mrb[0].mxu0
        %v2622 = vadd.f32 0.0, %v2621
        %v2623 = vpop.f32.mrb[0].mxu0
        %v2624 = vadd.f32 0.0, %v2623
        %2625 = vmatprep.mubr.bf16.mxu0 0
        %2626 = vmatmul.mubr.bf16.gmra.mrb[0].mxu0 %v1506
        %v2627 = vpop.f32.mrb[0].mxu0
        %v2628 = vadd.f32 0.0, %v2627
        %v2629 = vpop.f32.mrb[0].mxu0
        %v2630 = vadd.f32 0.0, %v2629
        %v2631 = vpop.f32.mrb[0].mxu0
        %v2632 = vadd.f32 0.0, %v2631
        %v2633 = vpop.f32.mrb[0].mxu0
        %v2634 = vadd.f32 0.0, %v2633
        %2635 = vmatprep.mubr.bf16.mxu0 0
        %2636 = vmatmul.mubr.bf16.gmra.mrb[0].mxu0 %v1507
        %v2637 = vpop.f32.mrb[0].mxu0
        %v2638 = vadd.f32 0.0, %v2637
        %v2639 = vpop.f32.mrb[0].mxu0
        %v2640 = vadd.f32 0.0, %v2639
        %v2641 = vpop.f32.mrb[0].mxu0
        %v2642 = vadd.f32 0.0, %v2641
        %v2643 = vpop.f32.mrb[0].mxu0
        %v2644 = vadd.f32 0.0, %v2643
        %2645 = vmatprep.mubr.bf16.mxu0 0
        %2646 = vmatmul.mubr.bf16.gmra.mrb[0].mxu0 %v1508
        %v2647 = vpop.f32.mrb[0].mxu0
        %v2648 = vadd.f32 0.0, %v2647
        %v2649 = vpop.f32.mrb[0].mxu0
        %v2650 = vadd.f32 0.0, %v2649
        %v2651 = vpop.f32.mrb[0].mxu0
        %v2652 = vadd.f32 0.0, %v2651
        %v2653 = vpop.f32.mrb[0].mxu0
        %v2654 = vadd.f32 0.0, %v2653
        %2655 = vmatprep.mubr.bf16.mxu0 0
        %2656 = vmatmul.mubr.bf16.gmra.mrb[0].mxu0 %v1509
        %v2657 = vpop.f32.mrb[0].mxu0
        %v2658 = vadd.f32 0.0, %v2657
        %v2659 = vpop.f32.mrb[0].mxu0
        %v2660 = vadd.f32 0.0, %v2659
        %v2661 = vpop.f32.mrb[0].mxu0
        %v2662 = vadd.f32 0.0, %v2661
        %v2663 = vpop.f32.mrb[0].mxu0
        %v2664 = vadd.f32 0.0, %v2663
        %2665 = vdwg.mxu0
        %v2666 = vpack.c.bf16 %v1933, %v1929
        %v2667 = vpack.c.bf16 %v1935, %v1931
        %v2668 = vpack.c.bf16 %v2126, %v2122
        %v2669 = vpack.c.bf16 %v2128, %v2124
        %v2670 = vpack.c.bf16 %v2319, %v2315
        %v2671 = vpack.c.bf16 %v2321, %v2317
        %v2672 = vpack.c.bf16 %v2512, %v2508
        %v2673 = vpack.c.bf16 %v2514, %v2510
        %v2674 = vpack.c.bf16 %v1943, %v1939
        %v2675 = vpack.c.bf16 %v1945, %v1941
        %v2676 = vpack.c.bf16 %v2136, %v2132
        %v2677 = vpack.c.bf16 %v2138, %v2134
        %v2678 = vpack.c.bf16 %v2329, %v2325
        %v2679 = vpack.c.bf16 %v2331, %v2327
        %v2680 = vpack.c.bf16 %v2522, %v2518
        %v2681 = vpack.c.bf16 %v2524, %v2520
        %v2682 = vpack.c.bf16 %v1953, %v1949
        %v2683 = vpack.c.bf16 %v1955, %v1951
        %v2684 = vpack.c.bf16 %v2146, %v2142
        %v2685 = vpack.c.bf16 %v2148, %v2144
        %v2686 = vpack.c.bf16 %v2339, %v2335
        %v2687 = vpack.c.bf16 %v2341, %v2337
        %v2688 = vpack.c.bf16 %v2532, %v2528
        %v2689 = vpack.c.bf16 %v2534, %v2530
        %v2690 = vpack.c.bf16 %v1963, %v1959
        %v2691 = vpack.c.bf16 %v1965, %v1961
        %v2692 = vpack.c.bf16 %v2156, %v2152
        %v2693 = vpack.c.bf16 %v2158, %v2154
        %v2694 = vpack.c.bf16 %v2349, %v2345
        %v2695 = vpack.c.bf16 %v2351, %v2347
        %v2696 = vpack.c.bf16 %v2542, %v2538
        %v2697 = vpack.c.bf16 %v2544, %v2540
        %v2698 = vpack.c.bf16 %v1973, %v1969
        %v2699 = vpack.c.bf16 %v1975, %v1971
        %v2700 = vpack.c.bf16 %v2166, %v2162
        %v2701 = vpack.c.bf16 %v2168, %v2164
        %v2702 = vpack.c.bf16 %v2359, %v2355
        %v2703 = vpack.c.bf16 %v2361, %v2357
        %v2704 = vpack.c.bf16 %v2552, %v2548
        %v2705 = vpack.c.bf16 %v2554, %v2550
        %v2706 = vpack.c.bf16 %v1983, %v1979
        %v2707 = vpack.c.bf16 %v1985, %v1981
        %v2708 = vpack.c.bf16 %v2176, %v2172
        %v2709 = vpack.c.bf16 %v2178, %v2174
        %v2710 = vpack.c.bf16 %v2369, %v2365
        %v2711 = vpack.c.bf16 %v2371, %v2367
        %v2712 = vpack.c.bf16 %v2562, %v2558
        %v2713 = vpack.c.bf16 %v2564, %v2560
        %v2714 = vpack.c.bf16 %v1993, %v1989
        %v2715 = vpack.c.bf16 %v1995, %v1991
        %v2716 = vpack.c.bf16 %v2186, %v2182
        %v2717 = vpack.c.bf16 %v2188, %v2184
        %v2718 = vpack.c.bf16 %v2379, %v2375
        %v2719 = vpack.c.bf16 %v2381, %v2377
        %v2720 = vpack.c.bf16 %v2572, %v2568
        %v2721 = vpack.c.bf16 %v2574, %v2570
        %v2722 = vpack.c.bf16 %v2003, %v1999
        %v2723 = vpack.c.bf16 %v2005, %v2001
        %v2724 = vpack.c.bf16 %v2196, %v2192
        %v2725 = vpack.c.bf16 %v2198, %v2194
        %v2726 = vpack.c.bf16 %v2389, %v2385
        %v2727 = vpack.c.bf16 %v2391, %v2387
        %v2728 = vpack.c.bf16 %v2582, %v2578
        %v2729 = vpack.c.bf16 %v2584, %v2580
        %v2730 = vpack.c.bf16 %v2013, %v2009
        %v2731 = vpack.c.bf16 %v2015, %v2011
        %v2732 = vpack.c.bf16 %v2206, %v2202
        %v2733 = vpack.c.bf16 %v2208, %v2204
        %v2734 = vpack.c.bf16 %v2399, %v2395
        %v2735 = vpack.c.bf16 %v2401, %v2397
        %v2736 = vpack.c.bf16 %v2592, %v2588
        %v2737 = vpack.c.bf16 %v2594, %v2590
        %v2738 = vpack.c.bf16 %v2023, %v2019
        %v2739 = vpack.c.bf16 %v2025, %v2021
        %v2740 = vpack.c.bf16 %v2216, %v2212
        %v2741 = vpack.c.bf16 %v2218, %v2214
        %v2742 = vpack.c.bf16 %v2409, %v2405
        %v2743 = vpack.c.bf16 %v2411, %v2407
        %v2744 = vpack.c.bf16 %v2602, %v2598
        %v2745 = vpack.c.bf16 %v2604, %v2600
        %v2746 = vpack.c.bf16 %v2033, %v2029
        %v2747 = vpack.c.bf16 %v2035, %v2031
        %v2748 = vpack.c.bf16 %v2226, %v2222
        %v2749 = vpack.c.bf16 %v2228, %v2224
        %v2750 = vpack.c.bf16 %v2419, %v2415
        %v2751 = vpack.c.bf16 %v2421, %v2417
        %v2752 = vpack.c.bf16 %v2612, %v2608
        %v2753 = vpack.c.bf16 %v2614, %v2610
        %v2754 = vpack.c.bf16 %v2043, %v2039
        %v2755 = vpack.c.bf16 %v2045, %v2041
        %v2756 = vpack.c.bf16 %v2236, %v2232
        %v2757 = vpack.c.bf16 %v2238, %v2234
        %v2758 = vpack.c.bf16 %v2429, %v2425
        %v2759 = vpack.c.bf16 %v2431, %v2427
        %v2760 = vpack.c.bf16 %v2622, %v2618
        %v2761 = vpack.c.bf16 %v2624, %v2620
        %v2762 = vpack.c.bf16 %v2053, %v2049
        %v2763 = vpack.c.bf16 %v2055, %v2051
        %v2764 = vpack.c.bf16 %v2246, %v2242
        %v2765 = vpack.c.bf16 %v2248, %v2244
        %v2766 = vpack.c.bf16 %v2439, %v2435
        %v2767 = vpack.c.bf16 %v2441, %v2437
        %v2768 = vpack.c.bf16 %v2632, %v2628
        %v2769 = vpack.c.bf16 %v2634, %v2630
        %v2770 = vpack.c.bf16 %v2063, %v2059
        %v2771 = vpack.c.bf16 %v2065, %v2061
        %v2772 = vpack.c.bf16 %v2256, %v2252
        %v2773 = vpack.c.bf16 %v2258, %v2254
        %v2774 = vpack.c.bf16 %v2449, %v2445
        %v2775 = vpack.c.bf16 %v2451, %v2447
        %v2776 = vpack.c.bf16 %v2642, %v2638
        %v2777 = vpack.c.bf16 %v2644, %v2640
        %v2778 = vpack.c.bf16 %v2073, %v2069
        %v2779 = vpack.c.bf16 %v2075, %v2071
        %v2780 = vpack.c.bf16 %v2266, %v2262
        %v2781 = vpack.c.bf16 %v2268, %v2264
        %v2782 = vpack.c.bf16 %v2459, %v2455
        %v2783 = vpack.c.bf16 %v2461, %v2457
        %v2784 = vpack.c.bf16 %v2652, %v2648
        %v2785 = vpack.c.bf16 %v2654, %v2650
        %v2786 = vpack.c.bf16 %v2083, %v2079
        %v2787 = vpack.c.bf16 %v2085, %v2081
        %v2788 = vpack.c.bf16 %v2276, %v2272
        %v2789 = vpack.c.bf16 %v2278, %v2274
        %v2790 = vpack.c.bf16 %v2469, %v2465
        %v2791 = vpack.c.bf16 %v2471, %v2467
        %v2792 = vpack.c.bf16 %v2662, %v2658
        %v2793 = vpack.c.bf16 %v2664, %v2660
        %2794 = vmatprep.subr.bf16.mxu0 0
        %2795 = vmatpush1.bf16.xpose.msra.mxu0 %v1494
        %2796 = vmatprep.subr.bf16.mxu0 0
        %2797 = vmatpush1.bf16.xpose.msra.mxu0 %v1495
        %2798 = vmatprep.subr.bf16.mxu0 0
        %2799 = vmatpush1.bf16.xpose.msra.mxu0 %v1496
        %2800 = vmatprep.subr.bf16.mxu0 0
        %2801 = vmatpush1.bf16.xpose.msra.mxu0 %v1497
        %2802 = vmatprep.subr.bf16.mxu0 0
        %2803 = vmatpush1.bf16.xpose.msra.mxu0 %v1498
        %2804 = vmatprep.subr.bf16.mxu0 0
        %2805 = vmatpush1.bf16.xpose.msra.mxu0 %v1499
        %2806 = vmatprep.subr.bf16.mxu0 0
        %2807 = vmatpush1.bf16.xpose.msra.mxu0 %v1500
        %2808 = vmatprep.subr.bf16.mxu0 0
        %2809 = vmatpush1.bf16.xpose.msra.mxu0 %v1501
        %2810 = vmatprep.subr.bf16.mxu0 0
        %2811 = vmatpush1.bf16.xpose.msra.mxu0 0
        %2812 = vmatprep.subr.bf16.mxu0 0
        %2813 = vmatpush1.bf16.xpose.msra.mxu0 0
        %2814 = vmatprep.subr.bf16.mxu0 0
        %2815 = vmatpush1.bf16.xpose.msra.mxu0 0
        %2816 = vmatprep.subr.bf16.mxu0 0
        %2817 = vmatpush1.bf16.xpose.msra.mxu0 0
        %2818 = vmatprep.subr.bf16.mxu0 0
        %2819 = vmatpush1.bf16.xpose.msra.mxu0 0
        %2820 = vmatprep.subr.bf16.mxu0 0
        %2821 = vmatpush1.bf16.xpose.msra.mxu0 0
        %2822 = vmatprep.subr.bf16.mxu0 0
        %2823 = vmatpush1.bf16.xpose.msra.mxu0 0
        %2824 = vmatprep.subr.bf16.mxu0 0
        %2825 = vmatpush1.bf16.xpose.msra.mxu0 0
        %2826 = vmatprep.mubr.bf16.mxu0 0
        %2827 = vmatmul.mubr.bf16.gmra.mrb[0].mxu0 %v2666
        %v2828 = vpop.f32.mrb[0].mxu0
        %v2829 = vadd.f32 0.0, %v2828
        %v2830 = vpop.f32.mrb[0].mxu0
        %v2831 = vpop.f32.mrb[0].mxu0
        %v2832 = vadd.f32 0.0, %v2831
        %v2833 = vpop.f32.mrb[0].mxu0
        %2834 = vmatprep.mubr.bf16.mxu0 0
        %2835 = vmatmul.mubr.bf16.gmra.mrb[0].mxu0 %v2674
        %v2836 = vpop.f32.mrb[0].mxu0
        %v2837 = vadd.f32 0.0, %v2836
        %v2838 = vpop.f32.mrb[0].mxu0
        %v2839 = vpop.f32.mrb[0].mxu0
        %v2840 = vadd.f32 0.0, %v2839
        %v2841 = vpop.f32.mrb[0].mxu0
        %2842 = vmatprep.mubr.bf16.mxu0 0
        %2843 = vmatmul.mubr.bf16.gmra.mrb[0].mxu0 %v2682
        %v2844 = vpop.f32.mrb[0].mxu0
        %v2845 = vadd.f32 0.0, %v2844
        %v2846 = vpop.f32.mrb[0].mxu0
        %v2847 = vpop.f32.mrb[0].mxu0
        %v2848 = vadd.f32 0.0, %v2847
        %v2849 = vpop.f32.mrb[0].mxu0
        %2850 = vmatprep.mubr.bf16.mxu0 0
        %2851 = vmatmul.mubr.bf16.gmra.mrb[0].mxu0 %v2690
        %v2852 = vpop.f32.mrb[0].mxu0
        %v2853 = vadd.f32 0.0, %v2852
        %v2854 = vpop.f32.mrb[0].mxu0
        %v2855 = vpop.f32.mrb[0].mxu0
        %v2856 = vadd.f32 0.0, %v2855
        %v2857 = vpop.f32.mrb[0].mxu0
        %2858 = vmatprep.mubr.bf16.mxu0 0
        %2859 = vmatmul.mubr.bf16.gmra.mrb[0].mxu0 %v2698
        %v2860 = vpop.f32.mrb[0].mxu0
        %v2861 = vadd.f32 0.0, %v2860
        %v2862 = vpop.f32.mrb[0].mxu0
        %v2863 = vpop.f32.mrb[0].mxu0
        %v2864 = vadd.f32 0.0, %v2863
        %v2865 = vpop.f32.mrb[0].mxu0
        %2866 = vmatprep.mubr.bf16.mxu0 0
        %2867 = vmatmul.mubr.bf16.gmra.mrb[0].mxu0 %v2706
        %v2868 = vpop.f32.mrb[0].mxu0
        %v2869 = vadd.f32 0.0, %v2868
        %v2870 = vpop.f32.mrb[0].mxu0
        %v2871 = vpop.f32.mrb[0].mxu0
        %v2872 = vadd.f32 0.0, %v2871
        %v2873 = vpop.f32.mrb[0].mxu0
        %2874 = vmatprep.mubr.bf16.mxu0 0
        %2875 = vmatmul.mubr.bf16.gmra.mrb[0].mxu0 %v2714
        %v2876 = vpop.f32.mrb[0].mxu0
        %v2877 = vadd.f32 0.0, %v2876
        %v2878 = vpop.f32.mrb[0].mxu0
        %v2879 = vpop.f32.mrb[0].mxu0
        %v2880 = vadd.f32 0.0, %v2879
        %v2881 = vpop.f32.mrb[0].mxu0
        %2882 = vmatprep.mubr.bf16.mxu0 0
        %2883 = vmatmul.mubr.bf16.gmra.mrb[0].mxu0 %v2722
        %v2884 = vpop.f32.mrb[0].mxu0
        %v2885 = vadd.f32 0.0, %v2884
        %v2886 = vpop.f32.mrb[0].mxu0
        %v2887 = vpop.f32.mrb[0].mxu0
        %v2888 = vadd.f32 0.0, %v2887
        %v2889 = vpop.f32.mrb[0].mxu0
        %2890 = vdwg.mxu0
        %2891 = vmatprep.subr.bf16.mxu0 0
        %2892 = vmatpush1.bf16.xpose.msra.mxu0 %v1502
        %2893 = vmatprep.subr.bf16.mxu0 0
        %2894 = vmatpush1.bf16.xpose.msra.mxu0 %v1503
        %2895 = vmatprep.subr.bf16.mxu0 0
        %2896 = vmatpush1.bf16.xpose.msra.mxu0 %v1504
        %2897 = vmatprep.subr.bf16.mxu0 0
        %2898 = vmatpush1.bf16.xpose.msra.mxu0 %v1505
        %2899 = vmatprep.subr.bf16.mxu0 0
        %2900 = vmatpush1.bf16.xpose.msra.mxu0 %v1506
        %2901 = vmatprep.subr.bf16.mxu0 0
        %2902 = vmatpush1.bf16.xpose.msra.mxu0 %v1507
        %2903 = vmatprep.subr.bf16.mxu0 0
        %2904 = vmatpush1.bf16.xpose.msra.mxu0 %v1508
        %2905 = vmatprep.subr.bf16.mxu0 0
        %2906 = vmatpush1.bf16.xpose.msra.mxu0 %v1509
        %2907 = vmatprep.subr.bf16.mxu0 0
        %2908 = vmatpush1.bf16.xpose.msra.mxu0 0
        %2909 = vmatprep.subr.bf16.mxu0 0
        %2910 = vmatpush1.bf16.xpose.msra.mxu0 0
        %2911 = vmatprep.subr.bf16.mxu0 0
        %2912 = vmatpush1.bf16.xpose.msra.mxu0 0
        %2913 = vmatprep.subr.bf16.mxu0 0
        %2914 = vmatpush1.bf16.xpose.msra.mxu0 0
        %2915 = vmatprep.subr.bf16.mxu0 0
        %2916 = vmatpush1.bf16.xpose.msra.mxu0 0
        %2917 = vmatprep.subr.bf16.mxu0 0
        %2918 = vmatpush1.bf16.xpose.msra.mxu0 0
        %2919 = vmatprep.subr.bf16.mxu0 0
        %2920 = vmatpush1.bf16.xpose.msra.mxu0 0
        %2921 = vmatprep.subr.bf16.mxu0 0
        %2922 = vmatpush1.bf16.xpose.msra.mxu0 0
        %2923 = vmatprep.mubr.bf16.mxu0 0
        %2924 = vmatmul.mubr.bf16.gmra.mrb[0].mxu0 %v2730
        %v2925 = vpop.f32.mrb[0].mxu0
        %v2926 = vadd.f32 0.0, %v2925
        %v2927 = vpop.f32.mrb[0].mxu0
        %v2928 = vpop.f32.mrb[0].mxu0
        %v2929 = vadd.f32 0.0, %v2928
        %v2930 = vpop.f32.mrb[0].mxu0
        %2931 = vmatprep.mubr.bf16.mxu0 0
        %2932 = vmatmul.mubr.bf16.gmra.mrb[0].mxu0 %v2738
        %v2933 = vpop.f32.mrb[0].mxu0
        %v2934 = vadd.f32 0.0, %v2933
        %v2935 = vpop.f32.mrb[0].mxu0
        %v2936 = vpop.f32.mrb[0].mxu0
        %v2937 = vadd.f32 0.0, %v2936
        %v2938 = vpop.f32.mrb[0].mxu0
        %2939 = vmatprep.mubr.bf16.mxu0 0
        %2940 = vmatmul.mubr.bf16.gmra.mrb[0].mxu0 %v2746
        %v2941 = vpop.f32.mrb[0].mxu0
        %v2942 = vadd.f32 0.0, %v2941
        %v2943 = vpop.f32.mrb[0].mxu0
        %v2944 = vpop.f32.mrb[0].mxu0
        %v2945 = vadd.f32 0.0, %v2944
        %v2946 = vpop.f32.mrb[0].mxu0
        %2947 = vmatprep.mubr.bf16.mxu0 0
        %2948 = vmatmul.mubr.bf16.gmra.mrb[0].mxu0 %v2754
        %v2949 = vpop.f32.mrb[0].mxu0
        %v2950 = vadd.f32 0.0, %v2949
        %v2951 = vpop.f32.mrb[0].mxu0
        %v2952 = vpop.f32.mrb[0].mxu0
        %v2953 = vadd.f32 0.0, %v2952
        %v2954 = vpop.f32.mrb[0].mxu0
        %2955 = vmatprep.mubr.bf16.mxu0 0
        %2956 = vmatmul.mubr.bf16.gmra.mrb[0].mxu0 %v2762
        %v2957 = vpop.f32.mrb[0].mxu0
        %v2958 = vadd.f32 0.0, %v2957
        %v2959 = vpop.f32.mrb[0].mxu0
        %v2960 = vpop.f32.mrb[0].mxu0
        %v2961 = vadd.f32 0.0, %v2960
        %v2962 = vpop.f32.mrb[0].mxu0
        %2963 = vmatprep.mubr.bf16.mxu0 0
        %2964 = vmatmul.mubr.bf16.gmra.mrb[0].mxu0 %v2770
        %v2965 = vpop.f32.mrb[0].mxu0
        %v2966 = vadd.f32 0.0, %v2965
        %v2967 = vpop.f32.mrb[0].mxu0
        %v2968 = vpop.f32.mrb[0].mxu0
        %v2969 = vadd.f32 0.0, %v2968
        %v2970 = vpop.f32.mrb[0].mxu0
        %2971 = vmatprep.mubr.bf16.mxu0 0
        %2972 = vmatmul.mubr.bf16.gmra.mrb[0].mxu0 %v2778
        %v2973 = vpop.f32.mrb[0].mxu0
        %v2974 = vadd.f32 0.0, %v2973
        %v2975 = vpop.f32.mrb[0].mxu0
        %v2976 = vpop.f32.mrb[0].mxu0
        %v2977 = vadd.f32 0.0, %v2976
        %v2978 = vpop.f32.mrb[0].mxu0
        %2979 = vmatprep.mubr.bf16.mxu0 0
        %2980 = vmatmul.mubr.bf16.gmra.mrb[0].mxu0 %v2786
        %v2981 = vpop.f32.mrb[0].mxu0
        %v2982 = vadd.f32 0.0, %v2981
        %v2983 = vpop.f32.mrb[0].mxu0
        %v2984 = vpop.f32.mrb[0].mxu0
        %v2985 = vadd.f32 0.0, %v2984
        %v2986 = vpop.f32.mrb[0].mxu0
        %2987 = vdwg.mxu0
        %v2988 = vsel %vm1047, 1, 0
        %v2989 = vsel %vm1048, 1, 0
        %v2990 = vsel %vm1049, 1, 0
        %v2991 = vsel %vm1050, 1, 0
        %v2992 = vsel %vm1051, 1, 0
        %v2993 = vsel %vm1052, 1, 0
        %v2994 = vsel %vm1053, 1, 0
        %v2995 = vsel %vm1054, 1, 0
        %v2996 = vsel %vm1055, 1, 0
        %v2997 = vsel %vm1056, 1, 0
        %v2998 = vsel %vm1057, 1, 0
        %v2999 = vsel %vm1058, 1, 0
        %v3000 = vsel %vm1059, 1, 0
        %v3001 = vsel %vm1060, 1, 0
        %v3002 = vsel %vm1061, 1, 0
        %v3003 = vsel %vm1062, 1, 0
        %vm3004 = vcmp.eq.s32.totalorder %v2988, 1
        %vm3005 = vcmp.eq.s32.totalorder %v2989, 1
        %vm3006 = vcmp.eq.s32.totalorder %v2990, 1
        %vm3007 = vcmp.eq.s32.totalorder %v2991, 1
        %vm3008 = vcmp.eq.s32.totalorder %v2992, 1
        %vm3009 = vcmp.eq.s32.totalorder %v2993, 1
        %vm3010 = vcmp.eq.s32.totalorder %v2994, 1
        %vm3011 = vcmp.eq.s32.totalorder %v2995, 1
        %vm3012 = vcmp.eq.s32.totalorder %v2996, 1
        %vm3013 = vcmp.eq.s32.totalorder %v2997, 1
        %vm3014 = vcmp.eq.s32.totalorder %v2998, 1
        %vm3015 = vcmp.eq.s32.totalorder %v2999, 1
        %vm3016 = vcmp.eq.s32.totalorder %v3000, 1
        %vm3017 = vcmp.eq.s32.totalorder %v3001, 1
        %vm3018 = vcmp.eq.s32.totalorder %v3002, 1
        %vm3019 = vcmp.eq.s32.totalorder %v3003, 1
        %v3020 = vsel %vm3004, %v2829, -1e+30
        %v3021 = vsel %vm3005, %v2832, -1e+30
        %v3022 = vsel %vm3006, %v2837, -1e+30
        %v3023 = vsel %vm3007, %v2840, -1e+30
        %v3024 = vsel %vm3008, %v2845, -1e+30
        %v3025 = vsel %vm3009, %v2848, -1e+30
        %v3026 = vsel %vm3010, %v2853, -1e+30
        %v3027 = vsel %vm3011, %v2856, -1e+30
        %v3028 = vsel %vm3012, %v2861, -1e+30
        %v3029 = vsel %vm3013, %v2864, -1e+30
        %v3030 = vsel %vm3014, %v2869, -1e+30
        %v3031 = vsel %vm3015, %v2872, -1e+30
        %v3032 = vsel %vm3016, %v2877, -1e+30
        %v3033 = vsel %vm3017, %v2880, -1e+30
        %v3034 = vsel %vm3018, %v2885, -1e+30
        %v3035 = vsel %vm3019, %v2888, -1e+30
        %v3036 = vsel %vm3004, %v2926, -1e+30
        %v3037 = vsel %vm3005, %v2929, -1e+30
        %v3038 = vsel %vm3006, %v2934, -1e+30
        %v3039 = vsel %vm3007, %v2937, -1e+30
        %v3040 = vsel %vm3008, %v2942, -1e+30
        %v3041 = vsel %vm3009, %v2945, -1e+30
        %v3042 = vsel %vm3010, %v2950, -1e+30
        %v3043 = vsel %vm3011, %v2953, -1e+30
        %v3044 = vsel %vm3012, %v2958, -1e+30
        %v3045 = vsel %vm3013, %v2961, -1e+30
        %v3046 = vsel %vm3014, %v2966, -1e+30
        %v3047 = vsel %vm3015, %v2969, -1e+30
        %v3048 = vsel %vm3016, %v2974, -1e+30
        %v3049 = vsel %vm3017, %v2977, -1e+30
        %v3050 = vsel %vm3018, %v2982, -1e+30
        %v3051 = vsel %vm3019, %v2985, -1e+30
        %3052 = vmax.xlane.f32.xlu0 %v3020
        %v3053 = vpop.xlane.xlu0 %3052
        %3054 = vmax.xlane.f32.xlu0 %v3021
        %v3055 = vpop.xlane.xlu0 %3054
        %3056 = vmax.xlane.f32.xlu0 %v3022
        %v3057 = vpop.xlane.xlu0 %3056
        %3058 = vmax.xlane.f32.xlu0 %v3023
        %v3059 = vpop.xlane.xlu0 %3058
        %3060 = vmax.xlane.f32.xlu0 %v3024
        %v3061 = vpop.xlane.xlu0 %3060
        %3062 = vmax.xlane.f32.xlu0 %v3025
        %v3063 = vpop.xlane.xlu0 %3062
        %3064 = vmax.xlane.f32.xlu0 %v3026
        %v3065 = vpop.xlane.xlu0 %3064
        %3066 = vmax.xlane.f32.xlu0 %v3027
        %v3067 = vpop.xlane.xlu0 %3066
        %3068 = vmax.xlane.f32.xlu0 %v3028
        %v3069 = vpop.xlane.xlu0 %3068
        %3070 = vmax.xlane.f32.xlu0 %v3029
        %v3071 = vpop.xlane.xlu0 %3070
        %3072 = vmax.xlane.f32.xlu0 %v3030
        %v3073 = vpop.xlane.xlu0 %3072
        %3074 = vmax.xlane.f32.xlu0 %v3031
        %v3075 = vpop.xlane.xlu0 %3074
        %3076 = vmax.xlane.f32.xlu0 %v3032
        %v3077 = vpop.xlane.xlu0 %3076
        %3078 = vmax.xlane.f32.xlu0 %v3033
        %v3079 = vpop.xlane.xlu0 %3078
        %3080 = vmax.xlane.f32.xlu0 %v3034
        %v3081 = vpop.xlane.xlu0 %3080
        %3082 = vmax.xlane.f32.xlu0 %v3035
        %v3083 = vpop.xlane.xlu0 %3082
        %3084 = vmax.xlane.f32.xlu0 %v3036
        %v3085 = vpop.xlane.xlu0 %3084
        %3086 = vmax.xlane.f32.xlu0 %v3037
        %v3087 = vpop.xlane.xlu0 %3086
        %3088 = vmax.xlane.f32.xlu0 %v3038
        %v3089 = vpop.xlane.xlu0 %3088
        %3090 = vmax.xlane.f32.xlu0 %v3039
        %v3091 = vpop.xlane.xlu0 %3090
        %3092 = vmax.xlane.f32.xlu0 %v3040
        %v3093 = vpop.xlane.xlu0 %3092
        %3094 = vmax.xlane.f32.xlu0 %v3041
        %v3095 = vpop.xlane.xlu0 %3094
        %3096 = vmax.xlane.f32.xlu0 %v3042
        %v3097 = vpop.xlane.xlu0 %3096
        %3098 = vmax.xlane.f32.xlu0 %v3043
        %v3099 = vpop.xlane.xlu0 %3098
        %3100 = vmax.xlane.f32.xlu0 %v3044
        %v3101 = vpop.xlane.xlu0 %3100
        %3102 = vmax.xlane.f32.xlu0 %v3045
        %v3103 = vpop.xlane.xlu0 %3102
        %3104 = vmax.xlane.f32.xlu0 %v3046
        %v3105 = vpop.xlane.xlu0 %3104
        %3106 = vmax.xlane.f32.xlu0 %v3047
        %v3107 = vpop.xlane.xlu0 %3106
        %3108 = vmax.xlane.f32.xlu0 %v3048
        %v3109 = vpop.xlane.xlu0 %3108
        %3110 = vmax.xlane.f32.xlu0 %v3049
        %v3111 = vpop.xlane.xlu0 %3110
        %3112 = vmax.xlane.f32.xlu0 %v3050
        %v3113 = vpop.xlane.xlu0 %3112
        %3114 = vmax.xlane.f32.xlu0 %v3051
        %v3115 = vpop.xlane.xlu0 %3114
        %v3116 = vsub.f32 %v3020, %v3053
        %v3117 = vsub.f32 %v3021, %v3055
        %v3118 = vsub.f32 %v3022, %v3057
        %v3119 = vsub.f32 %v3023, %v3059
        %v3120 = vsub.f32 %v3024, %v3061
        %v3121 = vsub.f32 %v3025, %v3063
        %v3122 = vsub.f32 %v3026, %v3065
        %v3123 = vsub.f32 %v3027, %v3067
        %v3124 = vsub.f32 %v3028, %v3069
        %v3125 = vsub.f32 %v3029, %v3071
        %v3126 = vsub.f32 %v3030, %v3073
        %v3127 = vsub.f32 %v3031, %v3075
        %v3128 = vsub.f32 %v3032, %v3077
        %v3129 = vsub.f32 %v3033, %v3079
        %v3130 = vsub.f32 %v3034, %v3081
        %v3131 = vsub.f32 %v3035, %v3083
        %v3132 = vsub.f32 %v3036, %v3085
        %v3133 = vsub.f32 %v3037, %v3087
        %v3134 = vsub.f32 %v3038, %v3089
        %v3135 = vsub.f32 %v3039, %v3091
        %v3136 = vsub.f32 %v3040, %v3093
        %v3137 = vsub.f32 %v3041, %v3095
        %v3138 = vsub.f32 %v3042, %v3097
        %v3139 = vsub.f32 %v3043, %v3099
        %v3140 = vsub.f32 %v3044, %v3101
        %v3141 = vsub.f32 %v3045, %v3103
        %v3142 = vsub.f32 %v3046, %v3105
        %v3143 = vsub.f32 %v3047, %v3107
        %v3144 = vsub.f32 %v3048, %v3109
        %v3145 = vsub.f32 %v3049, %v3111
        %v3146 = vsub.f32 %v3050, %v3113
        %v3147 = vsub.f32 %v3051, %v3115
        %v3148 = vmul.f32 %v3116, 1.442695
        %v3149 = vpow.pop %v3148
        %v3150 = vmul.f32 %v3117, 1.442695
        %v3151 = vpow.pop %v3150
        %v3152 = vmul.f32 %v3118, 1.442695
        %v3153 = vpow.pop %v3152
        %v3154 = vmul.f32 %v3119, 1.442695
        %v3155 = vpow.pop %v3154
        %v3156 = vmul.f32 %v3120, 1.442695
        %v3157 = vpow.pop %v3156
        %v3158 = vmul.f32 %v3121, 1.442695
        %v3159 = vpow.pop %v3158
        %v3160 = vmul.f32 %v3122, 1.442695
        %v3161 = vpow.pop %v3160
        %v3162 = vmul.f32 %v3123, 1.442695
        %v3163 = vpow.pop %v3162
        %v3164 = vmul.f32 %v3124, 1.442695
        %v3165 = vpow.pop %v3164
        %v3166 = vmul.f32 %v3125, 1.442695
        %v3167 = vpow.pop %v3166
        %v3168 = vmul.f32 %v3126, 1.442695
        %v3169 = vpow.pop %v3168
        %v3170 = vmul.f32 %v3127, 1.442695
        %v3171 = vpow.pop %v3170
        %v3172 = vmul.f32 %v3128, 1.442695
        %v3173 = vpow.pop %v3172
        %v3174 = vmul.f32 %v3129, 1.442695
        %v3175 = vpow.pop %v3174
        %v3176 = vmul.f32 %v3130, 1.442695
        %v3177 = vpow.pop %v3176
        %v3178 = vmul.f32 %v3131, 1.442695
        %v3179 = vpow.pop %v3178
        %v3180 = vmul.f32 %v3132, 1.442695
        %v3181 = vpow.pop %v3180
        %v3182 = vmul.f32 %v3133, 1.442695
        %v3183 = vpow.pop %v3182
        %v3184 = vmul.f32 %v3134, 1.442695
        %v3185 = vpow.pop %v3184
        %v3186 = vmul.f32 %v3135, 1.442695
        %v3187 = vpow.pop %v3186
        %v3188 = vmul.f32 %v3136, 1.442695
        %v3189 = vpow.pop %v3188
        %v3190 = vmul.f32 %v3137, 1.442695
        %v3191 = vpow.pop %v3190
        %v3192 = vmul.f32 %v3138, 1.442695
        %v3193 = vpow.pop %v3192
        %v3194 = vmul.f32 %v3139, 1.442695
        %v3195 = vpow.pop %v3194
        %v3196 = vmul.f32 %v3140, 1.442695
        %v3197 = vpow.pop %v3196
        %v3198 = vmul.f32 %v3141, 1.442695
        %v3199 = vpow.pop %v3198
        %v3200 = vmul.f32 %v3142, 1.442695
        %v3201 = vpow.pop %v3200
        %v3202 = vmul.f32 %v3143, 1.442695
        %v3203 = vpow.pop %v3202
        %v3204 = vmul.f32 %v3144, 1.442695
        %v3205 = vpow.pop %v3204
        %v3206 = vmul.f32 %v3145, 1.442695
        %v3207 = vpow.pop %v3206
        %v3208 = vmul.f32 %v3146, 1.442695
        %v3209 = vpow.pop %v3208
        %v3210 = vmul.f32 %v3147, 1.442695
        %v3211 = vpow.pop %v3210
        %3212 = vadd.xlane.f32.xlu0 %v3149
        %v3213 = vpop.xlane.xlu0 %3212
        %3214 = vadd.xlane.f32.xlu0 %v3151
        %v3215 = vpop.xlane.xlu0 %3214
        %3216 = vadd.xlane.f32.xlu0 %v3153
        %v3217 = vpop.xlane.xlu0 %3216
        %3218 = vadd.xlane.f32.xlu0 %v3155
        %v3219 = vpop.xlane.xlu0 %3218
        %3220 = vadd.xlane.f32.xlu0 %v3157
        %v3221 = vpop.xlane.xlu0 %3220
        %3222 = vadd.xlane.f32.xlu0 %v3159
        %v3223 = vpop.xlane.xlu0 %3222
        %3224 = vadd.xlane.f32.xlu0 %v3161
        %v3225 = vpop.xlane.xlu0 %3224
        %3226 = vadd.xlane.f32.xlu0 %v3163
        %v3227 = vpop.xlane.xlu0 %3226
        %3228 = vadd.xlane.f32.xlu0 %v3165
        %v3229 = vpop.xlane.xlu0 %3228
        %3230 = vadd.xlane.f32.xlu0 %v3167
        %v3231 = vpop.xlane.xlu0 %3230
        %3232 = vadd.xlane.f32.xlu0 %v3169
        %v3233 = vpop.xlane.xlu0 %3232
        %3234 = vadd.xlane.f32.xlu0 %v3171
        %v3235 = vpop.xlane.xlu0 %3234
        %3236 = vadd.xlane.f32.xlu0 %v3173
        %v3237 = vpop.xlane.xlu0 %3236
        %3238 = vadd.xlane.f32.xlu0 %v3175
        %v3239 = vpop.xlane.xlu0 %3238
        %3240 = vadd.xlane.f32.xlu0 %v3177
        %v3241 = vpop.xlane.xlu0 %3240
        %3242 = vadd.xlane.f32.xlu0 %v3179
        %v3243 = vpop.xlane.xlu0 %3242
        %3244 = vadd.xlane.f32.xlu0 %v3181
        %v3245 = vpop.xlane.xlu0 %3244
        %3246 = vadd.xlane.f32.xlu0 %v3183
        %v3247 = vpop.xlane.xlu0 %3246
        %3248 = vadd.xlane.f32.xlu0 %v3185
        %v3249 = vpop.xlane.xlu0 %3248
        %3250 = vadd.xlane.f32.xlu0 %v3187
        %v3251 = vpop.xlane.xlu0 %3250
        %3252 = vadd.xlane.f32.xlu0 %v3189
        %v3253 = vpop.xlane.xlu0 %3252
        %3254 = vadd.xlane.f32.xlu0 %v3191
        %v3255 = vpop.xlane.xlu0 %3254
        %3256 = vadd.xlane.f32.xlu0 %v3193
        %v3257 = vpop.xlane.xlu0 %3256
        %3258 = vadd.xlane.f32.xlu0 %v3195
        %v3259 = vpop.xlane.xlu0 %3258
        %3260 = vadd.xlane.f32.xlu0 %v3197
        %v3261 = vpop.xlane.xlu0 %3260
        %3262 = vadd.xlane.f32.xlu0 %v3199
        %v3263 = vpop.xlane.xlu0 %3262
        %3264 = vadd.xlane.f32.xlu0 %v3201
        %v3265 = vpop.xlane.xlu0 %3264
        %3266 = vadd.xlane.f32.xlu0 %v3203
        %v3267 = vpop.xlane.xlu0 %3266
        %3268 = vadd.xlane.f32.xlu0 %v3205
        %v3269 = vpop.xlane.xlu0 %3268
        %3270 = vadd.xlane.f32.xlu0 %v3207
        %v3271 = vpop.xlane.xlu0 %3270
        %3272 = vadd.xlane.f32.xlu0 %v3209
        %v3273 = vpop.xlane.xlu0 %3272
        %3274 = vadd.xlane.f32.xlu0 %v3211
        %v3275 = vpop.xlane.xlu0 %3274
        %v3276 = vrcp.pop %v3213
        %v3277 = vrcp.pop %v3215
        %v3278 = vrcp.pop %v3217
        %v3279 = vrcp.pop %v3219
        %v3280 = vrcp.pop %v3221
        %v3281 = vrcp.pop %v3223
        %v3282 = vrcp.pop %v3225
        %v3283 = vrcp.pop %v3227
        %v3284 = vrcp.pop %v3229
        %v3285 = vrcp.pop %v3231
        %v3286 = vrcp.pop %v3233
        %v3287 = vrcp.pop %v3235
        %v3288 = vrcp.pop %v3237
        %v3289 = vrcp.pop %v3239
        %v3290 = vrcp.pop %v3241
        %v3291 = vrcp.pop %v3243
        %v3292 = vrcp.pop %v3245
        %v3293 = vrcp.pop %v3247
        %v3294 = vrcp.pop %v3249
        %v3295 = vrcp.pop %v3251
        %v3296 = vrcp.pop %v3253
        %v3297 = vrcp.pop %v3255
        %v3298 = vrcp.pop %v3257
        %v3299 = vrcp.pop %v3259
        %v3300 = vrcp.pop %v3261
        %v3301 = vrcp.pop %v3263
        %v3302 = vrcp.pop %v3265
        %v3303 = vrcp.pop %v3267
        %v3304 = vrcp.pop %v3269
        %v3305 = vrcp.pop %v3271
        %v3306 = vrcp.pop %v3273
        %v3307 = vrcp.pop %v3275
        %v3308 = vmul.f32 %v3149, %v3276
        %v3309 = vmul.f32 %v3151, %v3277
        %v3310 = vmul.f32 %v3153, %v3278
        %v3311 = vmul.f32 %v3155, %v3279
        %v3312 = vmul.f32 %v3157, %v3280
        %v3313 = vmul.f32 %v3159, %v3281
        %v3314 = vmul.f32 %v3161, %v3282
        %v3315 = vmul.f32 %v3163, %v3283
        %v3316 = vmul.f32 %v3165, %v3284
        %v3317 = vmul.f32 %v3167, %v3285
        %v3318 = vmul.f32 %v3169, %v3286
        %v3319 = vmul.f32 %v3171, %v3287
        %v3320 = vmul.f32 %v3173, %v3288
        %v3321 = vmul.f32 %v3175, %v3289
        %v3322 = vmul.f32 %v3177, %v3290
        %v3323 = vmul.f32 %v3179, %v3291
        %v3324 = vmul.f32 %v3181, %v3292
        %v3325 = vmul.f32 %v3183, %v3293
        %v3326 = vmul.f32 %v3185, %v3294
        %v3327 = vmul.f32 %v3187, %v3295
        %v3328 = vmul.f32 %v3189, %v3296
        %v3329 = vmul.f32 %v3191, %v3297
        %v3330 = vmul.f32 %v3193, %v3298
        %v3331 = vmul.f32 %v3195, %v3299
        %v3332 = vmul.f32 %v3197, %v3300
        %v3333 = vmul.f32 %v3199, %v3301
        %v3334 = vmul.f32 %v3201, %v3302
        %v3335 = vmul.f32 %v3203, %v3303
        %v3336 = vmul.f32 %v3205, %v3304
        %v3337 = vmul.f32 %v3207, %v3305
        %v3338 = vmul.f32 %v3209, %v3306
        %v3339 = vmul.f32 %v3211, %v3307
        %v3340 = vpack.c.bf16 %v3309, %v3308
        %v3341 = vpack.c.bf16 %v3311, %v3310
        %v3342 = vpack.c.bf16 %v3313, %v3312
        %v3343 = vpack.c.bf16 %v3315, %v3314
        %v3344 = vpack.c.bf16 %v3317, %v3316
        %v3345 = vpack.c.bf16 %v3319, %v3318
        %v3346 = vpack.c.bf16 %v3321, %v3320
        %v3347 = vpack.c.bf16 %v3323, %v3322
        %v3348 = vpack.c.bf16 %v3325, %v3324
        %v3349 = vpack.c.bf16 %v3327, %v3326
        %v3350 = vpack.c.bf16 %v3329, %v3328
        %v3351 = vpack.c.bf16 %v3331, %v3330
        %v3352 = vpack.c.bf16 %v3333, %v3332
        %v3353 = vpack.c.bf16 %v3335, %v3334
        %v3354 = vpack.c.bf16 %v3337, %v3336
        %v3355 = vpack.c.bf16 %v3339, %v3338
        %3356 = vmatprep.subr.bf16.mxu0 0
        %3357 = vmatpush1.bf16.xpose.msra.mxu0 %v1494
        %3358 = vmatprep.subr.bf16.mxu0 0
        %3359 = vmatpush1.bf16.xpose.msra.mxu0 %v1495
        %3360 = vmatprep.subr.bf16.mxu0 0
        %3361 = vmatpush1.bf16.xpose.msra.mxu0 %v1496
        %3362 = vmatprep.subr.bf16.mxu0 0
        %3363 = vmatpush1.bf16.xpose.msra.mxu0 %v1497
        %3364 = vmatprep.subr.bf16.mxu0 0
        %3365 = vmatpush1.bf16.xpose.msra.mxu0 %v1498
        %3366 = vmatprep.subr.bf16.mxu0 0
        %3367 = vmatpush1.bf16.xpose.msra.mxu0 %v1499
        %3368 = vmatprep.subr.bf16.mxu0 0
        %3369 = vmatpush1.bf16.xpose.msra.mxu0 %v1500
        %3370 = vmatprep.subr.bf16.mxu0 0
        %3371 = vmatpush1.bf16.xpose.msra.mxu0 %v1501
        %3372 = vmatprep.subr.bf16.mxu0 0
        %3373 = vmatpush1.bf16.xpose.msra.mxu0 0
        %3374 = vmatprep.subr.bf16.mxu0 0
        %3375 = vmatpush1.bf16.xpose.msra.mxu0 0
        %3376 = vmatprep.subr.bf16.mxu0 0
        %3377 = vmatpush1.bf16.xpose.msra.mxu0 0
        %3378 = vmatprep.subr.bf16.mxu0 0
        %3379 = vmatpush1.bf16.xpose.msra.mxu0 0
        %3380 = vmatprep.subr.bf16.mxu0 0
        %3381 = vmatpush1.bf16.xpose.msra.mxu0 0
        %3382 = vmatprep.subr.bf16.mxu0 0
        %3383 = vmatpush1.bf16.xpose.msra.mxu0 0
        %3384 = vmatprep.subr.bf16.mxu0 0
        %3385 = vmatpush1.bf16.xpose.msra.mxu0 0
        %3386 = vmatprep.subr.bf16.mxu0 0
        %3387 = vmatpush1.bf16.xpose.msra.mxu0 0
        %3388 = vmatprep.mubr.bf16.mxu0 0
        %3389 = vmatmul.mubr.bf16.gmra.mrb[0].mxu0 %v2667
        %v3390 = vpop.f32.mrb[0].mxu0
        %v3391 = vadd.f32 0.0, %v3390
        %v3392 = vpop.f32.mrb[0].mxu0
        %v3393 = vpop.f32.mrb[0].mxu0
        %v3394 = vadd.f32 0.0, %v3393
        %v3395 = vpop.f32.mrb[0].mxu0
        %3396 = vmatprep.mubr.bf16.mxu0 0
        %3397 = vmatmul.mubr.bf16.gmra.mrb[0].mxu0 %v2675
        %v3398 = vpop.f32.mrb[0].mxu0
        %v3399 = vadd.f32 0.0, %v3398
        %v3400 = vpop.f32.mrb[0].mxu0
        %v3401 = vpop.f32.mrb[0].mxu0
        %v3402 = vadd.f32 0.0, %v3401
        %v3403 = vpop.f32.mrb[0].mxu0
        %3404 = vmatprep.mubr.bf16.mxu0 0
        %3405 = vmatmul.mubr.bf16.gmra.mrb[0].mxu0 %v2683
        %v3406 = vpop.f32.mrb[0].mxu0
        %v3407 = vadd.f32 0.0, %v3406
        %v3408 = vpop.f32.mrb[0].mxu0
        %v3409 = vpop.f32.mrb[0].mxu0
        %v3410 = vadd.f32 0.0, %v3409
        %v3411 = vpop.f32.mrb[0].mxu0
        %3412 = vmatprep.mubr.bf16.mxu0 0
        %3413 = vmatmul.mubr.bf16.gmra.mrb[0].mxu0 %v2691
        %v3414 = vpop.f32.mrb[0].mxu0
        %v3415 = vadd.f32 0.0, %v3414
        %v3416 = vpop.f32.mrb[0].mxu0
        %v3417 = vpop.f32.mrb[0].mxu0
        %v3418 = vadd.f32 0.0, %v3417
        %v3419 = vpop.f32.mrb[0].mxu0
        %3420 = vmatprep.mubr.bf16.mxu0 0
        %3421 = vmatmul.mubr.bf16.gmra.mrb[0].mxu0 %v2699
        %v3422 = vpop.f32.mrb[0].mxu0
        %v3423 = vadd.f32 0.0, %v3422
        %v3424 = vpop.f32.mrb[0].mxu0
        %v3425 = vpop.f32.mrb[0].mxu0
        %v3426 = vadd.f32 0.0, %v3425
        %v3427 = vpop.f32.mrb[0].mxu0
        %3428 = vmatprep.mubr.bf16.mxu0 0
        %3429 = vmatmul.mubr.bf16.gmra.mrb[0].mxu0 %v2707
        %v3430 = vpop.f32.mrb[0].mxu0
        %v3431 = vadd.f32 0.0, %v3430
        %v3432 = vpop.f32.mrb[0].mxu0
        %v3433 = vpop.f32.mrb[0].mxu0
        %v3434 = vadd.f32 0.0, %v3433
        %v3435 = vpop.f32.mrb[0].mxu0
        %3436 = vmatprep.mubr.bf16.mxu0 0
        %3437 = vmatmul.mubr.bf16.gmra.mrb[0].mxu0 %v2715
        %v3438 = vpop.f32.mrb[0].mxu0
        %v3439 = vadd.f32 0.0, %v3438
        %v3440 = vpop.f32.mrb[0].mxu0
        %v3441 = vpop.f32.mrb[0].mxu0
        %v3442 = vadd.f32 0.0, %v3441
        %v3443 = vpop.f32.mrb[0].mxu0
        %3444 = vmatprep.mubr.bf16.mxu0 0
        %3445 = vmatmul.mubr.bf16.gmra.mrb[0].mxu0 %v2723
        %v3446 = vpop.f32.mrb[0].mxu0
        %v3447 = vadd.f32 0.0, %v3446
        %v3448 = vpop.f32.mrb[0].mxu0
        %v3449 = vpop.f32.mrb[0].mxu0
        %v3450 = vadd.f32 0.0, %v3449
        %v3451 = vpop.f32.mrb[0].mxu0
        %3452 = vdwg.mxu0
        %3453 = vmatprep.subr.bf16.mxu0 0
        %3454 = vmatpush1.bf16.xpose.msra.mxu0 %v1502
        %3455 = vmatprep.subr.bf16.mxu0 0
        %3456 = vmatpush1.bf16.xpose.msra.mxu0 %v1503
        %3457 = vmatprep.subr.bf16.mxu0 0
        %3458 = vmatpush1.bf16.xpose.msra.mxu0 %v1504
        %3459 = vmatprep.subr.bf16.mxu0 0
        %3460 = vmatpush1.bf16.xpose.msra.mxu0 %v1505
        %3461 = vmatprep.subr.bf16.mxu0 0
        %3462 = vmatpush1.bf16.xpose.msra.mxu0 %v1506
        %3463 = vmatprep.subr.bf16.mxu0 0
        %3464 = vmatpush1.bf16.xpose.msra.mxu0 %v1507
        %3465 = vmatprep.subr.bf16.mxu0 0
        %3466 = vmatpush1.bf16.xpose.msra.mxu0 %v1508
        %3467 = vmatprep.subr.bf16.mxu0 0
        %3468 = vmatpush1.bf16.xpose.msra.mxu0 %v1509
        %3469 = vmatprep.subr.bf16.mxu0 0
        %3470 = vmatpush1.bf16.xpose.msra.mxu0 0
        %3471 = vmatprep.subr.bf16.mxu0 0
        %3472 = vmatpush1.bf16.xpose.msra.mxu0 0
        %3473 = vmatprep.subr.bf16.mxu0 0
        %3474 = vmatpush1.bf16.xpose.msra.mxu0 0
        %3475 = vmatprep.subr.bf16.mxu0 0
        %3476 = vmatpush1.bf16.xpose.msra.mxu0 0
        %3477 = vmatprep.subr.bf16.mxu0 0
        %3478 = vmatpush1.bf16.xpose.msra.mxu0 0
        %3479 = vmatprep.subr.bf16.mxu0 0
        %3480 = vmatpush1.bf16.xpose.msra.mxu0 0
        %3481 = vmatprep.subr.bf16.mxu0 0
        %3482 = vmatpush1.bf16.xpose.msra.mxu0 0
        %3483 = vmatprep.subr.bf16.mxu0 0
        %3484 = vmatpush1.bf16.xpose.msra.mxu0 0
        %3485 = vmatprep.mubr.bf16.mxu0 0
        %3486 = vmatmul.mubr.bf16.gmra.mrb[0].mxu0 %v2731
        %v3487 = vpop.f32.mrb[0].mxu0
        %v3488 = vadd.f32 0.0, %v3487
        %v3489 = vpop.f32.mrb[0].mxu0
        %v3490 = vpop.f32.mrb[0].mxu0
        %v3491 = vadd.f32 0.0, %v3490
        %v3492 = vpop.f32.mrb[0].mxu0
        %3493 = vmatprep.mubr.bf16.mxu0 0
        %3494 = vmatmul.mubr.bf16.gmra.mrb[0].mxu0 %v2739
        %v3495 = vpop.f32.mrb[0].mxu0
        %v3496 = vadd.f32 0.0, %v3495
        %v3497 = vpop.f32.mrb[0].mxu0
        %v3498 = vpop.f32.mrb[0].mxu0
        %v3499 = vadd.f32 0.0, %v3498
        %v3500 = vpop.f32.mrb[0].mxu0
        %3501 = vmatprep.mubr.bf16.mxu0 0
        %3502 = vmatmul.mubr.bf16.gmra.mrb[0].mxu0 %v2747
        %v3503 = vpop.f32.mrb[0].mxu0
        %v3504 = vadd.f32 0.0, %v3503
        %v3505 = vpop.f32.mrb[0].mxu0
        %v3506 = vpop.f32.mrb[0].mxu0
        %v3507 = vadd.f32 0.0, %v3506
        %v3508 = vpop.f32.mrb[0].mxu0
        %3509 = vmatprep.mubr.bf16.mxu0 0
        %3510 = vmatmul.mubr.bf16.gmra.mrb[0].mxu0 %v2755
        %v3511 = vpop.f32.mrb[0].mxu0
        %v3512 = vadd.f32 0.0, %v3511
        %v3513 = vpop.f32.mrb[0].mxu0
        %v3514 = vpop.f32.mrb[0].mxu0
        %v3515 = vadd.f32 0.0, %v3514
        %v3516 = vpop.f32.mrb[0].mxu0
        %3517 = vmatprep.mubr.bf16.mxu0 0
        %3518 = vmatmul.mubr.bf16.gmra.mrb[0].mxu0 %v2763
        %v3519 = vpop.f32.mrb[0].mxu0
        %v3520 = vadd.f32 0.0, %v3519
        %v3521 = vpop.f32.mrb[0].mxu0
        %v3522 = vpop.f32.mrb[0].mxu0
        %v3523 = vadd.f32 0.0, %v3522
        %v3524 = vpop.f32.mrb[0].mxu0
        %3525 = vmatprep.mubr.bf16.mxu0 0
        %3526 = vmatmul.mubr.bf16.gmra.mrb[0].mxu0 %v2771
        %v3527 = vpop.f32.mrb[0].mxu0
        %v3528 = vadd.f32 0.0, %v3527
        %v3529 = vpop.f32.mrb[0].mxu0
        %v3530 = vpop.f32.mrb[0].mxu0
        %v3531 = vadd.f32 0.0, %v3530
        %v3532 = vpop.f32.mrb[0].mxu0
        %3533 = vmatprep.mubr.bf16.mxu0 0
        %3534 = vmatmul.mubr.bf16.gmra.mrb[0].mxu0 %v2779
        %v3535 = vpop.f32.mrb[0].mxu0
        %v3536 = vadd.f32 0.0, %v3535
        %v3537 = vpop.f32.mrb[0].mxu0
        %v3538 = vpop.f32.mrb[0].mxu0
        %v3539 = vadd.f32 0.0, %v3538
        %v3540 = vpop.f32.mrb[0].mxu0
        %3541 = vmatprep.mubr.bf16.mxu0 0
        %3542 = vmatmul.mubr.bf16.gmra.mrb[0].mxu0 %v2787
        %v3543 = vpop.f32.mrb[0].mxu0
        %v3544 = vadd.f32 0.0, %v3543
        %v3545 = vpop.f32.mrb[0].mxu0
        %v3546 = vpop.f32.mrb[0].mxu0
        %v3547 = vadd.f32 0.0, %v3546
        %v3548 = vpop.f32.mrb[0].mxu0
        %3549 = vdwg.mxu0
        %v3550 = vsel %vm3004, %v3391, -1e+30
        %v3551 = vsel %vm3005, %v3394, -1e+30
        %v3552 = vsel %vm3006, %v3399, -1e+30
        %v3553 = vsel %vm3007, %v3402, -1e+30
        %v3554 = vsel %vm3008, %v3407, -1e+30
        %v3555 = vsel %vm3009, %v3410, -1e+30
        %v3556 = vsel %vm3010, %v3415, -1e+30
        %v3557 = vsel %vm3011, %v3418, -1e+30
        %v3558 = vsel %vm3012, %v3423, -1e+30
        %v3559 = vsel %vm3013, %v3426, -1e+30
        %v3560 = vsel %vm3014, %v3431, -1e+30
        %v3561 = vsel %vm3015, %v3434, -1e+30
        %v3562 = vsel %vm3016, %v3439, -1e+30
        %v3563 = vsel %vm3017, %v3442, -1e+30
        %v3564 = vsel %vm3018, %v3447, -1e+30
        %v3565 = vsel %vm3019, %v3450, -1e+30
        %v3566 = vsel %vm3004, %v3488, -1e+30
        %v3567 = vsel %vm3005, %v3491, -1e+30
        %v3568 = vsel %vm3006, %v3496, -1e+30
        %v3569 = vsel %vm3007, %v3499, -1e+30
        %v3570 = vsel %vm3008, %v3504, -1e+30
        %v3571 = vsel %vm3009, %v3507, -1e+30
        %v3572 = vsel %vm3010, %v3512, -1e+30
        %v3573 = vsel %vm3011, %v3515, -1e+30
        %v3574 = vsel %vm3012, %v3520, -1e+30
        %v3575 = vsel %vm3013, %v3523, -1e+30
        %v3576 = vsel %vm3014, %v3528, -1e+30
        %v3577 = vsel %vm3015, %v3531, -1e+30
        %v3578 = vsel %vm3016, %v3536, -1e+30
        %v3579 = vsel %vm3017, %v3539, -1e+30
        %v3580 = vsel %vm3018, %v3544, -1e+30
        %v3581 = vsel %vm3019, %v3547, -1e+30
        %3582 = vmax.xlane.f32.xlu0 %v3550
        %v3583 = vpop.xlane.xlu0 %3582
        %3584 = vmax.xlane.f32.xlu0 %v3551
        %v3585 = vpop.xlane.xlu0 %3584
        %3586 = vmax.xlane.f32.xlu0 %v3552
        %v3587 = vpop.xlane.xlu0 %3586
        %3588 = vmax.xlane.f32.xlu0 %v3553
        %v3589 = vpop.xlane.xlu0 %3588
        %3590 = vmax.xlane.f32.xlu0 %v3554
        %v3591 = vpop.xlane.xlu0 %3590
        %3592 = vmax.xlane.f32.xlu0 %v3555
        %v3593 = vpop.xlane.xlu0 %3592
        %3594 = vmax.xlane.f32.xlu0 %v3556
        %v3595 = vpop.xlane.xlu0 %3594
        %3596 = vmax.xlane.f32.xlu0 %v3557
        %v3597 = vpop.xlane.xlu0 %3596
        %3598 = vmax.xlane.f32.xlu0 %v3558
        %v3599 = vpop.xlane.xlu0 %3598
        %3600 = vmax.xlane.f32.xlu0 %v3559
        %v3601 = vpop.xlane.xlu0 %3600
        %3602 = vmax.xlane.f32.xlu0 %v3560
        %v3603 = vpop.xlane.xlu0 %3602
        %3604 = vmax.xlane.f32.xlu0 %v3561
        %v3605 = vpop.xlane.xlu0 %3604
        %3606 = vmax.xlane.f32.xlu0 %v3562
        %v3607 = vpop.xlane.xlu0 %3606
        %3608 = vmax.xlane.f32.xlu0 %v3563
        %v3609 = vpop.xlane.xlu0 %3608
        %3610 = vmax.xlane.f32.xlu0 %v3564
        %v3611 = vpop.xlane.xlu0 %3610
        %3612 = vmax.xlane.f32.xlu0 %v3565
        %v3613 = vpop.xlane.xlu0 %3612
        %3614 = vmax.xlane.f32.xlu0 %v3566
        %v3615 = vpop.xlane.xlu0 %3614
        %3616 = vmax.xlane.f32.xlu0 %v3567
        %v3617 = vpop.xlane.xlu0 %3616
        %3618 = vmax.xlane.f32.xlu0 %v3568
        %v3619 = vpop.xlane.xlu0 %3618
        %3620 = vmax.xlane.f32.xlu0 %v3569
        %v3621 = vpop.xlane.xlu0 %3620
        %3622 = vmax.xlane.f32.xlu0 %v3570
        %v3623 = vpop.xlane.xlu0 %3622
        %3624 = vmax.xlane.f32.xlu0 %v3571
        %v3625 = vpop.xlane.xlu0 %3624
        %3626 = vmax.xlane.f32.xlu0 %v3572
        %v3627 = vpop.xlane.xlu0 %3626
        %3628 = vmax.xlane.f32.xlu0 %v3573
        %v3629 = vpop.xlane.xlu0 %3628
        %3630 = vmax.xlane.f32.xlu0 %v3574
        %v3631 = vpop.xlane.xlu0 %3630
        %3632 = vmax.xlane.f32.xlu0 %v3575
        %v3633 = vpop.xlane.xlu0 %3632
        %3634 = vmax.xlane.f32.xlu0 %v3576
        %v3635 = vpop.xlane.xlu0 %3634
        %3636 = vmax.xlane.f32.xlu0 %v3577
        %v3637 = vpop.xlane.xlu0 %3636
        %3638 = vmax.xlane.f32.xlu0 %v3578
        %v3639 = vpop.xlane.xlu0 %3638
        %3640 = vmax.xlane.f32.xlu0 %v3579
        %v3641 = vpop.xlane.xlu0 %3640
        %3642 = vmax.xlane.f32.xlu0 %v3580
        %v3643 = vpop.xlane.xlu0 %3642
        %3644 = vmax.xlane.f32.xlu0 %v3581
        %v3645 = vpop.xlane.xlu0 %3644
        %v3646 = vsub.f32 %v3550, %v3583
        %v3647 = vsub.f32 %v3551, %v3585
        %v3648 = vsub.f32 %v3552, %v3587
        %v3649 = vsub.f32 %v3553, %v3589
        %v3650 = vsub.f32 %v3554, %v3591
        %v3651 = vsub.f32 %v3555, %v3593
        %v3652 = vsub.f32 %v3556, %v3595
        %v3653 = vsub.f32 %v3557, %v3597
        %v3654 = vsub.f32 %v3558, %v3599
        %v3655 = vsub.f32 %v3559, %v3601
        %v3656 = vsub.f32 %v3560, %v3603
        %v3657 = vsub.f32 %v3561, %v3605
        %v3658 = vsub.f32 %v3562, %v3607
        %v3659 = vsub.f32 %v3563, %v3609
        %v3660 = vsub.f32 %v3564, %v3611
        %v3661 = vsub.f32 %v3565, %v3613
        %v3662 = vsub.f32 %v3566, %v3615
        %v3663 = vsub.f32 %v3567, %v3617
        %v3664 = vsub.f32 %v3568, %v3619
        %v3665 = vsub.f32 %v3569, %v3621
        %v3666 = vsub.f32 %v3570, %v3623
        %v3667 = vsub.f32 %v3571, %v3625
        %v3668 = vsub.f32 %v3572, %v3627
        %v3669 = vsub.f32 %v3573, %v3629
        %v3670 = vsub.f32 %v3574, %v3631
        %v3671 = vsub.f32 %v3575, %v3633
        %v3672 = vsub.f32 %v3576, %v3635
        %v3673 = vsub.f32 %v3577, %v3637
        %v3674 = vsub.f32 %v3578, %v3639
        %v3675 = vsub.f32 %v3579, %v3641
        %v3676 = vsub.f32 %v3580, %v3643
        %v3677 = vsub.f32 %v3581, %v3645
        %v3678 = vmul.f32 %v3646, 1.442695
        %v3679 = vpow.pop %v3678
        %v3680 = vmul.f32 %v3647, 1.442695
        %v3681 = vpow.pop %v3680
        %v3682 = vmul.f32 %v3648, 1.442695
        %v3683 = vpow.pop %v3682
        %v3684 = vmul.f32 %v3649, 1.442695
        %v3685 = vpow.pop %v3684
        %v3686 = vmul.f32 %v3650, 1.442695
        %v3687 = vpow.pop %v3686
        %v3688 = vmul.f32 %v3651, 1.442695
        %v3689 = vpow.pop %v3688
        %v3690 = vmul.f32 %v3652, 1.442695
        %v3691 = vpow.pop %v3690
        %v3692 = vmul.f32 %v3653, 1.442695
        %v3693 = vpow.pop %v3692
        %v3694 = vmul.f32 %v3654, 1.442695
        %v3695 = vpow.pop %v3694
        %v3696 = vmul.f32 %v3655, 1.442695
        %v3697 = vpow.pop %v3696
        %v3698 = vmul.f32 %v3656, 1.442695
        %v3699 = vpow.pop %v3698
        %v3700 = vmul.f32 %v3657, 1.442695
        %v3701 = vpow.pop %v3700
        %v3702 = vmul.f32 %v3658, 1.442695
        %v3703 = vpow.pop %v3702
        %v3704 = vmul.f32 %v3659, 1.442695
        %v3705 = vpow.pop %v3704
        %v3706 = vmul.f32 %v3660, 1.442695
        %v3707 = vpow.pop %v3706
        %v3708 = vmul.f32 %v3661, 1.442695
        %v3709 = vpow.pop %v3708
        %v3710 = vmul.f32 %v3662, 1.442695
        %v3711 = vpow.pop %v3710
        %v3712 = vmul.f32 %v3663, 1.442695
        %v3713 = vpow.pop %v3712
        %v3714 = vmul.f32 %v3664, 1.442695
        %v3715 = vpow.pop %v3714
        %v3716 = vmul.f32 %v3665, 1.442695
        %v3717 = vpow.pop %v3716
        %v3718 = vmul.f32 %v3666, 1.442695
        %v3719 = vpow.pop %v3718
        %v3720 = vmul.f32 %v3667, 1.442695
        %v3721 = vpow.pop %v3720
        %v3722 = vmul.f32 %v3668, 1.442695
        %v3723 = vpow.pop %v3722
        %v3724 = vmul.f32 %v3669, 1.442695
        %v3725 = vpow.pop %v3724
        %v3726 = vmul.f32 %v3670, 1.442695
        %v3727 = vpow.pop %v3726
        %v3728 = vmul.f32 %v3671, 1.442695
        %v3729 = vpow.pop %v3728
        %v3730 = vmul.f32 %v3672, 1.442695
        %v3731 = vpow.pop %v3730
        %v3732 = vmul.f32 %v3673, 1.442695
        %v3733 = vpow.pop %v3732
        %v3734 = vmul.f32 %v3674, 1.442695
        %v3735 = vpow.pop %v3734
        %v3736 = vmul.f32 %v3675, 1.442695
        %v3737 = vpow.pop %v3736
        %v3738 = vmul.f32 %v3676, 1.442695
        %v3739 = vpow.pop %v3738
        %v3740 = vmul.f32 %v3677, 1.442695
        %v3741 = vpow.pop %v3740
        %3742 = vadd.xlane.f32.xlu0 %v3679
        %v3743 = vpop.xlane.xlu0 %3742
        %3744 = vadd.xlane.f32.xlu0 %v3681
        %v3745 = vpop.xlane.xlu0 %3744
        %3746 = vadd.xlane.f32.xlu0 %v3683
        %v3747 = vpop.xlane.xlu0 %3746
        %3748 = vadd.xlane.f32.xlu0 %v3685
        %v3749 = vpop.xlane.xlu0 %3748
        %3750 = vadd.xlane.f32.xlu0 %v3687
        %v3751 = vpop.xlane.xlu0 %3750
        %3752 = vadd.xlane.f32.xlu0 %v3689
        %v3753 = vpop.xlane.xlu0 %3752
        %3754 = vadd.xlane.f32.xlu0 %v3691
        %v3755 = vpop.xlane.xlu0 %3754
        %3756 = vadd.xlane.f32.xlu0 %v3693
        %v3757 = vpop.xlane.xlu0 %3756
        %3758 = vadd.xlane.f32.xlu0 %v3695
        %v3759 = vpop.xlane.xlu0 %3758
        %3760 = vadd.xlane.f32.xlu0 %v3697
        %v3761 = vpop.xlane.xlu0 %3760
        %3762 = vadd.xlane.f32.xlu0 %v3699
        %v3763 = vpop.xlane.xlu0 %3762
        %3764 = vadd.xlane.f32.xlu0 %v3701
        %v3765 = vpop.xlane.xlu0 %3764
        %3766 = vadd.xlane.f32.xlu0 %v3703
        %v3767 = vpop.xlane.xlu0 %3766
        %3768 = vadd.xlane.f32.xlu0 %v3705
        %v3769 = vpop.xlane.xlu0 %3768
        %3770 = vadd.xlane.f32.xlu0 %v3707
        %v3771 = vpop.xlane.xlu0 %3770
        %3772 = vadd.xlane.f32.xlu0 %v3709
        %v3773 = vpop.xlane.xlu0 %3772
        %3774 = vadd.xlane.f32.xlu0 %v3711
        %v3775 = vpop.xlane.xlu0 %3774
        %3776 = vadd.xlane.f32.xlu0 %v3713
        %v3777 = vpop.xlane.xlu0 %3776
        %3778 = vadd.xlane.f32.xlu0 %v3715
        %v3779 = vpop.xlane.xlu0 %3778
        %3780 = vadd.xlane.f32.xlu0 %v3717
        %v3781 = vpop.xlane.xlu0 %3780
        %3782 = vadd.xlane.f32.xlu0 %v3719
        %v3783 = vpop.xlane.xlu0 %3782
        %3784 = vadd.xlane.f32.xlu0 %v3721
        %v3785 = vpop.xlane.xlu0 %3784
        %3786 = vadd.xlane.f32.xlu0 %v3723
        %v3787 = vpop.xlane.xlu0 %3786
        %3788 = vadd.xlane.f32.xlu0 %v3725
        %v3789 = vpop.xlane.xlu0 %3788
        %3790 = vadd.xlane.f32.xlu0 %v3727
        %v3791 = vpop.xlane.xlu0 %3790
        %3792 = vadd.xlane.f32.xlu0 %v3729
        %v3793 = vpop.xlane.xlu0 %3792
        %3794 = vadd.xlane.f32.xlu0 %v3731
        %v3795 = vpop.xlane.xlu0 %3794
        %3796 = vadd.xlane.f32.xlu0 %v3733
        %v3797 = vpop.xlane.xlu0 %3796
        %3798 = vadd.xlane.f32.xlu0 %v3735
        %v3799 = vpop.xlane.xlu0 %3798
        %3800 = vadd.xlane.f32.xlu0 %v3737
        %v3801 = vpop.xlane.xlu0 %3800
        %3802 = vadd.xlane.f32.xlu0 %v3739
        %v3803 = vpop.xlane.xlu0 %3802
        %3804 = vadd.xlane.f32.xlu0 %v3741
        %v3805 = vpop.xlane.xlu0 %3804
        %v3806 = vrcp.pop %v3743
        %v3807 = vrcp.pop %v3745
        %v3808 = vrcp.pop %v3747
        %v3809 = vrcp.pop %v3749
        %v3810 = vrcp.pop %v3751
        %v3811 = vrcp.pop %v3753
        %v3812 = vrcp.pop %v3755
        %v3813 = vrcp.pop %v3757
        %v3814 = vrcp.pop %v3759
        %v3815 = vrcp.pop %v3761
        %v3816 = vrcp.pop %v3763
        %v3817 = vrcp.pop %v3765
        %v3818 = vrcp.pop %v3767
        %v3819 = vrcp.pop %v3769
        %v3820 = vrcp.pop %v3771
        %v3821 = vrcp.pop %v3773
        %v3822 = vrcp.pop %v3775
        %v3823 = vrcp.pop %v3777
        %v3824 = vrcp.pop %v3779
        %v3825 = vrcp.pop %v3781
        %v3826 = vrcp.pop %v3783
        %v3827 = vrcp.pop %v3785
        %v3828 = vrcp.pop %v3787
        %v3829 = vrcp.pop %v3789
        %v3830 = vrcp.pop %v3791
        %v3831 = vrcp.pop %v3793
        %v3832 = vrcp.pop %v3795
        %v3833 = vrcp.pop %v3797
        %v3834 = vrcp.pop %v3799
        %v3835 = vrcp.pop %v3801
        %v3836 = vrcp.pop %v3803
        %v3837 = vrcp.pop %v3805
        %v3838 = vmul.f32 %v3679, %v3806
        %v3839 = vmul.f32 %v3681, %v3807
        %v3840 = vmul.f32 %v3683, %v3808
        %v3841 = vmul.f32 %v3685, %v3809
        %v3842 = vmul.f32 %v3687, %v3810
        %v3843 = vmul.f32 %v3689, %v3811
        %v3844 = vmul.f32 %v3691, %v3812
        %v3845 = vmul.f32 %v3693, %v3813
        %v3846 = vmul.f32 %v3695, %v3814
        %v3847 = vmul.f32 %v3697, %v3815
        %v3848 = vmul.f32 %v3699, %v3816
        %v3849 = vmul.f32 %v3701, %v3817
        %v3850 = vmul.f32 %v3703, %v3818
        %v3851 = vmul.f32 %v3705, %v3819
        %v3852 = vmul.f32 %v3707, %v3820
        %v3853 = vmul.f32 %v3709, %v3821
        %v3854 = vmul.f32 %v3711, %v3822
        %v3855 = vmul.f32 %v3713, %v3823
        %v3856 = vmul.f32 %v3715, %v3824
        %v3857 = vmul.f32 %v3717, %v3825
        %v3858 = vmul.f32 %v3719, %v3826
        %v3859 = vmul.f32 %v3721, %v3827
        %v3860 = vmul.f32 %v3723, %v3828
        %v3861 = vmul.f32 %v3725, %v3829
        %v3862 = vmul.f32 %v3727, %v3830
        %v3863 = vmul.f32 %v3729, %v3831
        %v3864 = vmul.f32 %v3731, %v3832
        %v3865 = vmul.f32 %v3733, %v3833
        %v3866 = vmul.f32 %v3735, %v3834
        %v3867 = vmul.f32 %v3737, %v3835
        %v3868 = vmul.f32 %v3739, %v3836
        %v3869 = vmul.f32 %v3741, %v3837
        %v3870 = vpack.c.bf16 %v3839, %v3838
        %v3871 = vpack.c.bf16 %v3841, %v3840
        %v3872 = vpack.c.bf16 %v3843, %v3842
        %v3873 = vpack.c.bf16 %v3845, %v3844
        %v3874 = vpack.c.bf16 %v3847, %v3846
        %v3875 = vpack.c.bf16 %v3849, %v3848
        %v3876 = vpack.c.bf16 %v3851, %v3850
        %v3877 = vpack.c.bf16 %v3853, %v3852
        %v3878 = vpack.c.bf16 %v3855, %v3854
        %v3879 = vpack.c.bf16 %v3857, %v3856
        %v3880 = vpack.c.bf16 %v3859, %v3858
        %v3881 = vpack.c.bf16 %v3861, %v3860
        %v3882 = vpack.c.bf16 %v3863, %v3862
        %v3883 = vpack.c.bf16 %v3865, %v3864
        %v3884 = vpack.c.bf16 %v3867, %v3866
        %v3885 = vpack.c.bf16 %v3869, %v3868
        %3886 = vmatprep.subr.bf16.mxu0 0
        %3887 = vmatpush1.bf16.msra.mxu0 %v2671
        %3888 = vmatprep.subr.bf16.mxu0 0
        %3889 = vmatpush1.bf16.msra.mxu0 %v2679
        %3890 = vmatprep.subr.bf16.mxu0 0
        %3891 = vmatpush1.bf16.msra.mxu0 %v2687
        %3892 = vmatprep.subr.bf16.mxu0 0
        %3893 = vmatpush1.bf16.msra.mxu0 %v2695
        %3894 = vmatprep.subr.bf16.mxu0 0
        %3895 = vmatpush1.bf16.msra.mxu0 %v2703
        %3896 = vmatprep.subr.bf16.mxu0 0
        %3897 = vmatpush1.bf16.msra.mxu0 %v2711
        %3898 = vmatprep.subr.bf16.mxu0 0
        %3899 = vmatpush1.bf16.msra.mxu0 %v2719
        %3900 = vmatprep.subr.bf16.mxu0 0
        %3901 = vmatpush1.bf16.msra.mxu0 %v2727
        %3902 = vmatprep.subr.bf16.mxu0 0
        %3903 = vmatpush1.bf16.msra.mxu0 0
        %3904 = vmatprep.subr.bf16.mxu0 0
        %3905 = vmatpush1.bf16.msra.mxu0 0
        %3906 = vmatprep.subr.bf16.mxu0 0
        %3907 = vmatpush1.bf16.msra.mxu0 0
        %3908 = vmatprep.subr.bf16.mxu0 0
        %3909 = vmatpush1.bf16.msra.mxu0 0
        %3910 = vmatprep.subr.bf16.mxu0 0
        %3911 = vmatpush1.bf16.msra.mxu0 0
        %3912 = vmatprep.subr.bf16.mxu0 0
        %3913 = vmatpush1.bf16.msra.mxu0 0
        %3914 = vmatprep.subr.bf16.mxu0 0
        %3915 = vmatpush1.bf16.msra.mxu0 0
        %3916 = vmatprep.subr.bf16.mxu0 0
        %3917 = vmatpush1.bf16.msra.mxu0 0
        %3918 = vmatprep.mubr.bf16.mxu0 0
        %3919 = vmatmul.mubr.bf16.gmra.mrb[0].mxu0 %v3870
        %v3920 = vpop.f32.mrb[0].mxu0
        %v3921 = vadd.f32 0.0, %v3920
        %v3922 = vpop.f32.mrb[0].mxu0
        %v3923 = vpop.f32.mrb[0].mxu0
        %v3924 = vadd.f32 0.0, %v3923
        %v3925 = vpop.f32.mrb[0].mxu0
        %3926 = vmatprep.mubr.bf16.mxu0 0
        %3927 = vmatmul.mubr.bf16.gmra.mrb[0].mxu0 %v3871
        %v3928 = vpop.f32.mrb[0].mxu0
        %v3929 = vadd.f32 0.0, %v3928
        %v3930 = vpop.f32.mrb[0].mxu0
        %v3931 = vpop.f32.mrb[0].mxu0
        %v3932 = vadd.f32 0.0, %v3931
        %v3933 = vpop.f32.mrb[0].mxu0
        %3934 = vmatprep.mubr.bf16.mxu0 0
        %3935 = vmatmul.mubr.bf16.gmra.mrb[0].mxu0 %v3872
        %v3936 = vpop.f32.mrb[0].mxu0
        %v3937 = vadd.f32 0.0, %v3936
        %v3938 = vpop.f32.mrb[0].mxu0
        %v3939 = vpop.f32.mrb[0].mxu0
        %v3940 = vadd.f32 0.0, %v3939
        %v3941 = vpop.f32.mrb[0].mxu0
        %3942 = vmatprep.mubr.bf16.mxu0 0
        %3943 = vmatmul.mubr.bf16.gmra.mrb[0].mxu0 %v3873
        %v3944 = vpop.f32.mrb[0].mxu0
        %v3945 = vadd.f32 0.0, %v3944
        %v3946 = vpop.f32.mrb[0].mxu0
        %v3947 = vpop.f32.mrb[0].mxu0
        %v3948 = vadd.f32 0.0, %v3947
        %v3949 = vpop.f32.mrb[0].mxu0
        %3950 = vmatprep.mubr.bf16.mxu0 0
        %3951 = vmatmul.mubr.bf16.gmra.mrb[0].mxu0 %v3874
        %v3952 = vpop.f32.mrb[0].mxu0
        %v3953 = vadd.f32 0.0, %v3952
        %v3954 = vpop.f32.mrb[0].mxu0
        %v3955 = vpop.f32.mrb[0].mxu0
        %v3956 = vadd.f32 0.0, %v3955
        %v3957 = vpop.f32.mrb[0].mxu0
        %3958 = vmatprep.mubr.bf16.mxu0 0
        %3959 = vmatmul.mubr.bf16.gmra.mrb[0].mxu0 %v3875
        %v3960 = vpop.f32.mrb[0].mxu0
        %v3961 = vadd.f32 0.0, %v3960
        %v3962 = vpop.f32.mrb[0].mxu0
        %v3963 = vpop.f32.mrb[0].mxu0
        %v3964 = vadd.f32 0.0, %v3963
        %v3965 = vpop.f32.mrb[0].mxu0
        %3966 = vmatprep.mubr.bf16.mxu0 0
        %3967 = vmatmul.mubr.bf16.gmra.mrb[0].mxu0 %v3876
        %v3968 = vpop.f32.mrb[0].mxu0
        %v3969 = vadd.f32 0.0, %v3968
        %v3970 = vpop.f32.mrb[0].mxu0
        %v3971 = vpop.f32.mrb[0].mxu0
        %v3972 = vadd.f32 0.0, %v3971
        %v3973 = vpop.f32.mrb[0].mxu0
        %3974 = vmatprep.mubr.bf16.mxu0 0
        %3975 = vmatmul.mubr.bf16.gmra.mrb[0].mxu0 %v3877
        %v3976 = vpop.f32.mrb[0].mxu0
        %v3977 = vadd.f32 0.0, %v3976
        %v3978 = vpop.f32.mrb[0].mxu0
        %v3979 = vpop.f32.mrb[0].mxu0
        %v3980 = vadd.f32 0.0, %v3979
        %v3981 = vpop.f32.mrb[0].mxu0
        %3982 = vdwg.mxu0
        %3983 = vmatprep.subr.bf16.mxu0 0
        %3984 = vmatpush1.bf16.msra.mxu0 %v2735
        %3985 = vmatprep.subr.bf16.mxu0 0
        %3986 = vmatpush1.bf16.msra.mxu0 %v2743
        %3987 = vmatprep.subr.bf16.mxu0 0
        %3988 = vmatpush1.bf16.msra.mxu0 %v2751
        %3989 = vmatprep.subr.bf16.mxu0 0
        %3990 = vmatpush1.bf16.msra.mxu0 %v2759
        %3991 = vmatprep.subr.bf16.mxu0 0
        %3992 = vmatpush1.bf16.msra.mxu0 %v2767
        %3993 = vmatprep.subr.bf16.mxu0 0
        %3994 = vmatpush1.bf16.msra.mxu0 %v2775
        %3995 = vmatprep.subr.bf16.mxu0 0
        %3996 = vmatpush1.bf16.msra.mxu0 %v2783
        %3997 = vmatprep.subr.bf16.mxu0 0
        %3998 = vmatpush1.bf16.msra.mxu0 %v2791
        %3999 = vmatprep.subr.bf16.mxu0 0
        %4000 = vmatpush1.bf16.msra.mxu0 0
        %4001 = vmatprep.subr.bf16.mxu0 0
        %4002 = vmatpush1.bf16.msra.mxu0 0
        %4003 = vmatprep.subr.bf16.mxu0 0
        %4004 = vmatpush1.bf16.msra.mxu0 0
        %4005 = vmatprep.subr.bf16.mxu0 0
        %4006 = vmatpush1.bf16.msra.mxu0 0
        %4007 = vmatprep.subr.bf16.mxu0 0
        %4008 = vmatpush1.bf16.msra.mxu0 0
        %4009 = vmatprep.subr.bf16.mxu0 0
        %4010 = vmatpush1.bf16.msra.mxu0 0
        %4011 = vmatprep.subr.bf16.mxu0 0
        %4012 = vmatpush1.bf16.msra.mxu0 0
        %4013 = vmatprep.subr.bf16.mxu0 0
        %4014 = vmatpush1.bf16.msra.mxu0 0
        %4015 = vmatprep.mubr.bf16.mxu0 0
        %4016 = vmatmul.mubr.bf16.gmra.mrb[0].mxu0 %v3878
        %v4017 = vpop.f32.mrb[0].mxu0
        %v4018 = vadd.f32 0.0, %v4017
        %v4019 = vpop.f32.mrb[0].mxu0
        %v4020 = vpop.f32.mrb[0].mxu0
        %v4021 = vadd.f32 0.0, %v4020
        %v4022 = vpop.f32.mrb[0].mxu0
        %4023 = vmatprep.mubr.bf16.mxu0 0
        %4024 = vmatmul.mubr.bf16.gmra.mrb[0].mxu0 %v3879
        %v4025 = vpop.f32.mrb[0].mxu0
        %v4026 = vadd.f32 0.0, %v4025
        %v4027 = vpop.f32.mrb[0].mxu0
        %v4028 = vpop.f32.mrb[0].mxu0
        %v4029 = vadd.f32 0.0, %v4028
        %v4030 = vpop.f32.mrb[0].mxu0
        %4031 = vmatprep.mubr.bf16.mxu0 0
        %4032 = vmatmul.mubr.bf16.gmra.mrb[0].mxu0 %v3880
        %v4033 = vpop.f32.mrb[0].mxu0
        %v4034 = vadd.f32 0.0, %v4033
        %v4035 = vpop.f32.mrb[0].mxu0
        %v4036 = vpop.f32.mrb[0].mxu0
        %v4037 = vadd.f32 0.0, %v4036
        %v4038 = vpop.f32.mrb[0].mxu0
        %4039 = vmatprep.mubr.bf16.mxu0 0
        %4040 = vmatmul.mubr.bf16.gmra.mrb[0].mxu0 %v3881
        %v4041 = vpop.f32.mrb[0].mxu0
        %v4042 = vadd.f32 0.0, %v4041
        %v4043 = vpop.f32.mrb[0].mxu0
        %v4044 = vpop.f32.mrb[0].mxu0
        %v4045 = vadd.f32 0.0, %v4044
        %v4046 = vpop.f32.mrb[0].mxu0
        %4047 = vmatprep.mubr.bf16.mxu0 0
        %4048 = vmatmul.mubr.bf16.gmra.mrb[0].mxu0 %v3882
        %v4049 = vpop.f32.mrb[0].mxu0
        %v4050 = vadd.f32 0.0, %v4049
        %v4051 = vpop.f32.mrb[0].mxu0
        %v4052 = vpop.f32.mrb[0].mxu0
        %v4053 = vadd.f32 0.0, %v4052
        %v4054 = vpop.f32.mrb[0].mxu0
        %4055 = vmatprep.mubr.bf16.mxu0 0
        %4056 = vmatmul.mubr.bf16.gmra.mrb[0].mxu0 %v3883
        %v4057 = vpop.f32.mrb[0].mxu0
        %v4058 = vadd.f32 0.0, %v4057
        %v4059 = vpop.f32.mrb[0].mxu0
        %v4060 = vpop.f32.mrb[0].mxu0
        %v4061 = vadd.f32 0.0, %v4060
        %v4062 = vpop.f32.mrb[0].mxu0
        %4063 = vmatprep.mubr.bf16.mxu0 0
        %4064 = vmatmul.mubr.bf16.gmra.mrb[0].mxu0 %v3884
        %v4065 = vpop.f32.mrb[0].mxu0
        %v4066 = vadd.f32 0.0, %v4065
        %v4067 = vpop.f32.mrb[0].mxu0
        %v4068 = vpop.f32.mrb[0].mxu0
        %v4069 = vadd.f32 0.0, %v4068
        %v4070 = vpop.f32.mrb[0].mxu0
        %4071 = vmatprep.mubr.bf16.mxu0 0
        %4072 = vmatmul.mubr.bf16.gmra.mrb[0].mxu0 %v3885
        %v4073 = vpop.f32.mrb[0].mxu0
        %v4074 = vadd.f32 0.0, %v4073
        %v4075 = vpop.f32.mrb[0].mxu0
        %v4076 = vpop.f32.mrb[0].mxu0
        %v4077 = vadd.f32 0.0, %v4076
        %v4078 = vpop.f32.mrb[0].mxu0
        %4079 = vdwg.mxu0
        %4080 = vmatprep.subr.bf16.mxu0 0
        %4081 = vmatpush1.bf16.msra.mxu0 %v2670
        %4082 = vmatprep.subr.bf16.mxu0 0
        %4083 = vmatpush1.bf16.msra.mxu0 %v2678
        %4084 = vmatprep.subr.bf16.mxu0 0
        %4085 = vmatpush1.bf16.msra.mxu0 %v2686
        %4086 = vmatprep.subr.bf16.mxu0 0
        %4087 = vmatpush1.bf16.msra.mxu0 %v2694
        %4088 = vmatprep.subr.bf16.mxu0 0
        %4089 = vmatpush1.bf16.msra.mxu0 %v2702
        %4090 = vmatprep.subr.bf16.mxu0 0
        %4091 = vmatpush1.bf16.msra.mxu0 %v2710
        %4092 = vmatprep.subr.bf16.mxu0 0
        %4093 = vmatpush1.bf16.msra.mxu0 %v2718
        %4094 = vmatprep.subr.bf16.mxu0 0
        %4095 = vmatpush1.bf16.msra.mxu0 %v2726
        %4096 = vmatprep.subr.bf16.mxu0 0
        %4097 = vmatpush1.bf16.msra.mxu0 0
        %4098 = vmatprep.subr.bf16.mxu0 0
        %4099 = vmatpush1.bf16.msra.mxu0 0
        %4100 = vmatprep.subr.bf16.mxu0 0
        %4101 = vmatpush1.bf16.msra.mxu0 0
        %4102 = vmatprep.subr.bf16.mxu0 0
        %4103 = vmatpush1.bf16.msra.mxu0 0
        %4104 = vmatprep.subr.bf16.mxu0 0
        %4105 = vmatpush1.bf16.msra.mxu0 0
        %4106 = vmatprep.subr.bf16.mxu0 0
        %4107 = vmatpush1.bf16.msra.mxu0 0
        %4108 = vmatprep.subr.bf16.mxu0 0
        %4109 = vmatpush1.bf16.msra.mxu0 0
        %4110 = vmatprep.subr.bf16.mxu0 0
        %4111 = vmatpush1.bf16.msra.mxu0 0
        %4112 = vmatprep.mubr.bf16.mxu0 0
        %4113 = vmatmul.mubr.bf16.gmra.mrb[0].mxu0 %v3340
        %v4114 = vpop.f32.mrb[0].mxu0
        %v4115 = vadd.f32 %v3921, %v4114
        %v4116 = vpop.f32.mrb[0].mxu0
        %v4117 = vpop.f32.mrb[0].mxu0
        %v4118 = vadd.f32 %v3924, %v4117
        %v4119 = vpop.f32.mrb[0].mxu0
        %4120 = vmatprep.mubr.bf16.mxu0 0
        %4121 = vmatmul.mubr.bf16.gmra.mrb[0].mxu0 %v3341
        %v4122 = vpop.f32.mrb[0].mxu0
        %v4123 = vadd.f32 %v3929, %v4122
        %v4124 = vpop.f32.mrb[0].mxu0
        %v4125 = vpop.f32.mrb[0].mxu0
        %v4126 = vadd.f32 %v3932, %v4125
        %v4127 = vpop.f32.mrb[0].mxu0
        %4128 = vmatprep.mubr.bf16.mxu0 0
        %4129 = vmatmul.mubr.bf16.gmra.mrb[0].mxu0 %v3342
        %v4130 = vpop.f32.mrb[0].mxu0
        %v4131 = vadd.f32 %v3937, %v4130
        %v4132 = vpop.f32.mrb[0].mxu0
        %v4133 = vpop.f32.mrb[0].mxu0
        %v4134 = vadd.f32 %v3940, %v4133
        %v4135 = vpop.f32.mrb[0].mxu0
        %4136 = vmatprep.mubr.bf16.mxu0 0
        %4137 = vmatmul.mubr.bf16.gmra.mrb[0].mxu0 %v3343
        %v4138 = vpop.f32.mrb[0].mxu0
        %v4139 = vadd.f32 %v3945, %v4138
        %v4140 = vpop.f32.mrb[0].mxu0
        %v4141 = vpop.f32.mrb[0].mxu0
        %v4142 = vadd.f32 %v3948, %v4141
        %v4143 = vpop.f32.mrb[0].mxu0
        %4144 = vmatprep.mubr.bf16.mxu0 0
        %4145 = vmatmul.mubr.bf16.gmra.mrb[0].mxu0 %v3344
        %v4146 = vpop.f32.mrb[0].mxu0
        %v4147 = vadd.f32 %v3953, %v4146
        %v4148 = vpop.f32.mrb[0].mxu0
        %v4149 = vpop.f32.mrb[0].mxu0
        %v4150 = vadd.f32 %v3956, %v4149
        %v4151 = vpop.f32.mrb[0].mxu0
        %4152 = vmatprep.mubr.bf16.mxu0 0
        %4153 = vmatmul.mubr.bf16.gmra.mrb[0].mxu0 %v3345
        %v4154 = vpop.f32.mrb[0].mxu0
        %v4155 = vadd.f32 %v3961, %v4154
        %v4156 = vpop.f32.mrb[0].mxu0
        %v4157 = vpop.f32.mrb[0].mxu0
        %v4158 = vadd.f32 %v3964, %v4157
        %v4159 = vpop.f32.mrb[0].mxu0
        %4160 = vmatprep.mubr.bf16.mxu0 0
        %4161 = vmatmul.mubr.bf16.gmra.mrb[0].mxu0 %v3346
        %v4162 = vpop.f32.mrb[0].mxu0
        %v4163 = vadd.f32 %v3969, %v4162
        %v4164 = vpop.f32.mrb[0].mxu0
        %v4165 = vpop.f32.mrb[0].mxu0
        %v4166 = vadd.f32 %v3972, %v4165
        %v4167 = vpop.f32.mrb[0].mxu0
        %4168 = vmatprep.mubr.bf16.mxu0 0
        %4169 = vmatmul.mubr.bf16.gmra.mrb[0].mxu0 %v3347
        %v4170 = vpop.f32.mrb[0].mxu0
        %v4171 = vadd.f32 %v3977, %v4170
        %v4172 = vpop.f32.mrb[0].mxu0
        %v4173 = vpop.f32.mrb[0].mxu0
        %v4174 = vadd.f32 %v3980, %v4173
        %v4175 = vpop.f32.mrb[0].mxu0
        %4176 = vdwg.mxu0
        %4177 = vmatprep.subr.bf16.mxu0 0
        %4178 = vmatpush1.bf16.msra.mxu0 %v2734
        %4179 = vmatprep.subr.bf16.mxu0 0
        %4180 = vmatpush1.bf16.msra.mxu0 %v2742
        %4181 = vmatprep.subr.bf16.mxu0 0
        %4182 = vmatpush1.bf16.msra.mxu0 %v2750
        %4183 = vmatprep.subr.bf16.mxu0 0
        %4184 = vmatpush1.bf16.msra.mxu0 %v2758
        %4185 = vmatprep.subr.bf16.mxu0 0
        %4186 = vmatpush1.bf16.msra.mxu0 %v2766
        %4187 = vmatprep.subr.bf16.mxu0 0
        %4188 = vmatpush1.bf16.msra.mxu0 %v2774
        %4189 = vmatprep.subr.bf16.mxu0 0
        %4190 = vmatpush1.bf16.msra.mxu0 %v2782
        %4191 = vmatprep.subr.bf16.mxu0 0
        %4192 = vmatpush1.bf16.msra.mxu0 %v2790
        %4193 = vmatprep.subr.bf16.mxu0 0
        %4194 = vmatpush1.bf16.msra.mxu0 0
        %4195 = vmatprep.subr.bf16.mxu0 0
        %4196 = vmatpush1.bf16.msra.mxu0 0
        %4197 = vmatprep.subr.bf16.mxu0 0
        %4198 = vmatpush1.bf16.msra.mxu0 0
        %4199 = vmatprep.subr.bf16.mxu0 0
        %4200 = vmatpush1.bf16.msra.mxu0 0
        %4201 = vmatprep.subr.bf16.mxu0 0
        %4202 = vmatpush1.bf16.msra.mxu0 0
        %4203 = vmatprep.subr.bf16.mxu0 0
        %4204 = vmatpush1.bf16.msra.mxu0 0
        %4205 = vmatprep.subr.bf16.mxu0 0
        %4206 = vmatpush1.bf16.msra.mxu0 0
        %4207 = vmatprep.subr.bf16.mxu0 0
        %4208 = vmatpush1.bf16.msra.mxu0 0
        %4209 = vmatprep.mubr.bf16.mxu0 0
        %4210 = vmatmul.mubr.bf16.gmra.mrb[0].mxu0 %v3348
        %v4211 = vpop.f32.mrb[0].mxu0
        %v4212 = vadd.f32 %v4018, %v4211
        %v4213 = vpop.f32.mrb[0].mxu0
        %v4214 = vpop.f32.mrb[0].mxu0
        %v4215 = vadd.f32 %v4021, %v4214
        %v4216 = vpop.f32.mrb[0].mxu0
        %4217 = vmatprep.mubr.bf16.mxu0 0
        %4218 = vmatmul.mubr.bf16.gmra.mrb[0].mxu0 %v3349
        %v4219 = vpop.f32.mrb[0].mxu0
        %v4220 = vadd.f32 %v4026, %v4219
        %v4221 = vpop.f32.mrb[0].mxu0
        %v4222 = vpop.f32.mrb[0].mxu0
        %v4223 = vadd.f32 %v4029, %v4222
        %v4224 = vpop.f32.mrb[0].mxu0
        %4225 = vmatprep.mubr.bf16.mxu0 0
        %4226 = vmatmul.mubr.bf16.gmra.mrb[0].mxu0 %v3350
        %v4227 = vpop.f32.mrb[0].mxu0
        %v4228 = vadd.f32 %v4034, %v4227
        %v4229 = vpop.f32.mrb[0].mxu0
        %v4230 = vpop.f32.mrb[0].mxu0
        %v4231 = vadd.f32 %v4037, %v4230
        %v4232 = vpop.f32.mrb[0].mxu0
        %4233 = vmatprep.mubr.bf16.mxu0 0
        %4234 = vmatmul.mubr.bf16.gmra.mrb[0].mxu0 %v3351
        %v4235 = vpop.f32.mrb[0].mxu0
        %v4236 = vadd.f32 %v4042, %v4235
        %v4237 = vpop.f32.mrb[0].mxu0
        %v4238 = vpop.f32.mrb[0].mxu0
        %v4239 = vadd.f32 %v4045, %v4238
        %v4240 = vpop.f32.mrb[0].mxu0
        %4241 = vmatprep.mubr.bf16.mxu0 0
        %4242 = vmatmul.mubr.bf16.gmra.mrb[0].mxu0 %v3352
        %v4243 = vpop.f32.mrb[0].mxu0
        %v4244 = vadd.f32 %v4050, %v4243
        %v4245 = vpop.f32.mrb[0].mxu0
        %v4246 = vpop.f32.mrb[0].mxu0
        %v4247 = vadd.f32 %v4053, %v4246
        %v4248 = vpop.f32.mrb[0].mxu0
        %4249 = vmatprep.mubr.bf16.mxu0 0
        %4250 = vmatmul.mubr.bf16.gmra.mrb[0].mxu0 %v3353
        %v4251 = vpop.f32.mrb[0].mxu0
        %v4252 = vadd.f32 %v4058, %v4251
        %v4253 = vpop.f32.mrb[0].mxu0
        %v4254 = vpop.f32.mrb[0].mxu0
        %v4255 = vadd.f32 %v4061, %v4254
        %v4256 = vpop.f32.mrb[0].mxu0
        %4257 = vmatprep.mubr.bf16.mxu0 0
        %4258 = vmatmul.mubr.bf16.gmra.mrb[0].mxu0 %v3354
        %v4259 = vpop.f32.mrb[0].mxu0
        %v4260 = vadd.f32 %v4066, %v4259
        %v4261 = vpop.f32.mrb[0].mxu0
        %v4262 = vpop.f32.mrb[0].mxu0
        %v4263 = vadd.f32 %v4069, %v4262
        %v4264 = vpop.f32.mrb[0].mxu0
        %4265 = vmatprep.mubr.bf16.mxu0 0
        %4266 = vmatmul.mubr.bf16.gmra.mrb[0].mxu0 %v3355
        %v4267 = vpop.f32.mrb[0].mxu0
        %v4268 = vadd.f32 %v4074, %v4267
        %v4269 = vpop.f32.mrb[0].mxu0
        %v4270 = vpop.f32.mrb[0].mxu0
        %v4271 = vadd.f32 %v4077, %v4270
        %v4272 = vpop.f32.mrb[0].mxu0
        %4273 = vdwg.mxu0
        %4274 = vmatprep.subr.bf16.mxu0 0
        %4275 = vmatpush1.bf16.xpose.msra.mxu0 %v1494
        %4276 = vmatprep.subr.bf16.mxu0 0
        %4277 = vmatpush1.bf16.xpose.msra.mxu0 %v1495
        %4278 = vmatprep.subr.bf16.mxu0 0
        %4279 = vmatpush1.bf16.xpose.msra.mxu0 %v1496
        %4280 = vmatprep.subr.bf16.mxu0 0
        %4281 = vmatpush1.bf16.xpose.msra.mxu0 %v1497
        %4282 = vmatprep.subr.bf16.mxu0 0
        %4283 = vmatpush1.bf16.xpose.msra.mxu0 %v1498
        %4284 = vmatprep.subr.bf16.mxu0 0
        %4285 = vmatpush1.bf16.xpose.msra.mxu0 %v1499
        %4286 = vmatprep.subr.bf16.mxu0 0
        %4287 = vmatpush1.bf16.xpose.msra.mxu0 %v1500
        %4288 = vmatprep.subr.bf16.mxu0 0
        %4289 = vmatpush1.bf16.xpose.msra.mxu0 %v1501
        %4290 = vmatprep.subr.bf16.mxu0 0
        %4291 = vmatpush1.bf16.xpose.msra.mxu0 0
        %4292 = vmatprep.subr.bf16.mxu0 0
        %4293 = vmatpush1.bf16.xpose.msra.mxu0 0
        %4294 = vmatprep.subr.bf16.mxu0 0
        %4295 = vmatpush1.bf16.xpose.msra.mxu0 0
        %4296 = vmatprep.subr.bf16.mxu0 0
        %4297 = vmatpush1.bf16.xpose.msra.mxu0 0
        %4298 = vmatprep.subr.bf16.mxu0 0
        %4299 = vmatpush1.bf16.xpose.msra.mxu0 0
        %4300 = vmatprep.subr.bf16.mxu0 0
        %4301 = vmatpush1.bf16.xpose.msra.mxu0 0
        %4302 = vmatprep.subr.bf16.mxu0 0
        %4303 = vmatpush1.bf16.xpose.msra.mxu0 0
        %4304 = vmatprep.subr.bf16.mxu0 0
        %4305 = vmatpush1.bf16.xpose.msra.mxu0 0
        %4306 = vmatprep.mubr.bf16.mxu0 0
        %4307 = vmatmul.mubr.bf16.gmra.mrb[0].mxu0 %v2668
        %v4308 = vpop.f32.mrb[0].mxu0
        %v4309 = vadd.f32 0.0, %v4308
        %v4310 = vpop.f32.mrb[0].mxu0
        %v4311 = vpop.f32.mrb[0].mxu0
        %v4312 = vadd.f32 0.0, %v4311
        %v4313 = vpop.f32.mrb[0].mxu0
        %4314 = vmatprep.mubr.bf16.mxu0 0
        %4315 = vmatmul.mubr.bf16.gmra.mrb[0].mxu0 %v2676
        %v4316 = vpop.f32.mrb[0].mxu0
        %v4317 = vadd.f32 0.0, %v4316
        %v4318 = vpop.f32.mrb[0].mxu0
        %v4319 = vpop.f32.mrb[0].mxu0
        %v4320 = vadd.f32 0.0, %v4319
        %v4321 = vpop.f32.mrb[0].mxu0
        %4322 = vmatprep.mubr.bf16.mxu0 0
        %4323 = vmatmul.mubr.bf16.gmra.mrb[0].mxu0 %v2684
        %v4324 = vpop.f32.mrb[0].mxu0
        %v4325 = vadd.f32 0.0, %v4324
        %v4326 = vpop.f32.mrb[0].mxu0
        %v4327 = vpop.f32.mrb[0].mxu0
        %v4328 = vadd.f32 0.0, %v4327
        %v4329 = vpop.f32.mrb[0].mxu0
        %4330 = vmatprep.mubr.bf16.mxu0 0
        %4331 = vmatmul.mubr.bf16.gmra.mrb[0].mxu0 %v2692
        %v4332 = vpop.f32.mrb[0].mxu0
        %v4333 = vadd.f32 0.0, %v4332
        %v4334 = vpop.f32.mrb[0].mxu0
        %v4335 = vpop.f32.mrb[0].mxu0
        %v4336 = vadd.f32 0.0, %v4335
        %v4337 = vpop.f32.mrb[0].mxu0
        %4338 = vmatprep.mubr.bf16.mxu0 0
        %4339 = vmatmul.mubr.bf16.gmra.mrb[0].mxu0 %v2700
        %v4340 = vpop.f32.mrb[0].mxu0
        %v4341 = vadd.f32 0.0, %v4340
        %v4342 = vpop.f32.mrb[0].mxu0
        %v4343 = vpop.f32.mrb[0].mxu0
        %v4344 = vadd.f32 0.0, %v4343
        %v4345 = vpop.f32.mrb[0].mxu0
        %4346 = vmatprep.mubr.bf16.mxu0 0
        %4347 = vmatmul.mubr.bf16.gmra.mrb[0].mxu0 %v2708
        %v4348 = vpop.f32.mrb[0].mxu0
        %v4349 = vadd.f32 0.0, %v4348
        %v4350 = vpop.f32.mrb[0].mxu0
        %v4351 = vpop.f32.mrb[0].mxu0
        %v4352 = vadd.f32 0.0, %v4351
        %v4353 = vpop.f32.mrb[0].mxu0
        %4354 = vmatprep.mubr.bf16.mxu0 0
        %4355 = vmatmul.mubr.bf16.gmra.mrb[0].mxu0 %v2716
        %v4356 = vpop.f32.mrb[0].mxu0
        %v4357 = vadd.f32 0.0, %v4356
        %v4358 = vpop.f32.mrb[0].mxu0
        %v4359 = vpop.f32.mrb[0].mxu0
        %v4360 = vadd.f32 0.0, %v4359
        %v4361 = vpop.f32.mrb[0].mxu0
        %4362 = vmatprep.mubr.bf16.mxu0 0
        %4363 = vmatmul.mubr.bf16.gmra.mrb[0].mxu0 %v2724
        %v4364 = vpop.f32.mrb[0].mxu0
        %v4365 = vadd.f32 0.0, %v4364
        %v4366 = vpop.f32.mrb[0].mxu0
        %v4367 = vpop.f32.mrb[0].mxu0
        %v4368 = vadd.f32 0.0, %v4367
        %v4369 = vpop.f32.mrb[0].mxu0
        %4370 = vdwg.mxu0
        %4371 = vmatprep.subr.bf16.mxu0 0
        %4372 = vmatpush1.bf16.xpose.msra.mxu0 %v1502
        %4373 = vmatprep.subr.bf16.mxu0 0
        %4374 = vmatpush1.bf16.xpose.msra.mxu0 %v1503
        %4375 = vmatprep.subr.bf16.mxu0 0
        %4376 = vmatpush1.bf16.xpose.msra.mxu0 %v1504
        %4377 = vmatprep.subr.bf16.mxu0 0
        %4378 = vmatpush1.bf16.xpose.msra.mxu0 %v1505
        %4379 = vmatprep.subr.bf16.mxu0 0
        %4380 = vmatpush1.bf16.xpose.msra.mxu0 %v1506
        %4381 = vmatprep.subr.bf16.mxu0 0
        %4382 = vmatpush1.bf16.xpose.msra.mxu0 %v1507
        %4383 = vmatprep.subr.bf16.mxu0 0
        %4384 = vmatpush1.bf16.xpose.msra.mxu0 %v1508
        %4385 = vmatprep.subr.bf16.mxu0 0
        %4386 = vmatpush1.bf16.xpose.msra.mxu0 %v1509
        %4387 = vmatprep.subr.bf16.mxu0 0
        %4388 = vmatpush1.bf16.xpose.msra.mxu0 0
        %4389 = vmatprep.subr.bf16.mxu0 0
        %4390 = vmatpush1.bf16.xpose.msra.mxu0 0
        %4391 = vmatprep.subr.bf16.mxu0 0
        %4392 = vmatpush1.bf16.xpose.msra.mxu0 0
        %4393 = vmatprep.subr.bf16.mxu0 0
        %4394 = vmatpush1.bf16.xpose.msra.mxu0 0
        %4395 = vmatprep.subr.bf16.mxu0 0
        %4396 = vmatpush1.bf16.xpose.msra.mxu0 0
        %4397 = vmatprep.subr.bf16.mxu0 0
        %4398 = vmatpush1.bf16.xpose.msra.mxu0 0
        %4399 = vmatprep.subr.bf16.mxu0 0
        %4400 = vmatpush1.bf16.xpose.msra.mxu0 0
        %4401 = vmatprep.subr.bf16.mxu0 0
        %4402 = vmatpush1.bf16.xpose.msra.mxu0 0
        %4403 = vmatprep.mubr.bf16.mxu0 0
        %4404 = vmatmul.mubr.bf16.gmra.mrb[0].mxu0 %v2732
        %v4405 = vpop.f32.mrb[0].mxu0
        %v4406 = vadd.f32 0.0, %v4405
        %v4407 = vpop.f32.mrb[0].mxu0
        %v4408 = vpop.f32.mrb[0].mxu0
        %v4409 = vadd.f32 0.0, %v4408
        %v4410 = vpop.f32.mrb[0].mxu0
        %4411 = vmatprep.mubr.bf16.mxu0 0
        %4412 = vmatmul.mubr.bf16.gmra.mrb[0].mxu0 %v2740
        %v4413 = vpop.f32.mrb[0].mxu0
        %v4414 = vadd.f32 0.0, %v4413
        %v4415 = vpop.f32.mrb[0].mxu0
        %v4416 = vpop.f32.mrb[0].mxu0
        %v4417 = vadd.f32 0.0, %v4416
        %v4418 = vpop.f32.mrb[0].mxu0
        %4419 = vmatprep.mubr.bf16.mxu0 0
        %4420 = vmatmul.mubr.bf16.gmra.mrb[0].mxu0 %v2748
        %v4421 = vpop.f32.mrb[0].mxu0
        %v4422 = vadd.f32 0.0, %v4421
        %v4423 = vpop.f32.mrb[0].mxu0
        %v4424 = vpop.f32.mrb[0].mxu0
        %v4425 = vadd.f32 0.0, %v4424
        %v4426 = vpop.f32.mrb[0].mxu0
        %4427 = vmatprep.mubr.bf16.mxu0 0
        %4428 = vmatmul.mubr.bf16.gmra.mrb[0].mxu0 %v2756
        %v4429 = vpop.f32.mrb[0].mxu0
        %v4430 = vadd.f32 0.0, %v4429
        %v4431 = vpop.f32.mrb[0].mxu0
        %v4432 = vpop.f32.mrb[0].mxu0
        %v4433 = vadd.f32 0.0, %v4432
        %v4434 = vpop.f32.mrb[0].mxu0
        %4435 = vmatprep.mubr.bf16.mxu0 0
        %4436 = vmatmul.mubr.bf16.gmra.mrb[0].mxu0 %v2764
        %v4437 = vpop.f32.mrb[0].mxu0
        %v4438 = vadd.f32 0.0, %v4437
        %v4439 = vpop.f32.mrb[0].mxu0
        %v4440 = vpop.f32.mrb[0].mxu0
        %v4441 = vadd.f32 0.0, %v4440
        %v4442 = vpop.f32.mrb[0].mxu0
        %4443 = vmatprep.mubr.bf16.mxu0 0
        %4444 = vmatmul.mubr.bf16.gmra.mrb[0].mxu0 %v2772
        %v4445 = vpop.f32.mrb[0].mxu0
        %v4446 = vadd.f32 0.0, %v4445
        %v4447 = vpop.f32.mrb[0].mxu0
        %v4448 = vpop.f32.mrb[0].mxu0
        %v4449 = vadd.f32 0.0, %v4448
        %v4450 = vpop.f32.mrb[0].mxu0
        %4451 = vmatprep.mubr.bf16.mxu0 0
        %4452 = vmatmul.mubr.bf16.gmra.mrb[0].mxu0 %v2780
        %v4453 = vpop.f32.mrb[0].mxu0
        %v4454 = vadd.f32 0.0, %v4453
        %v4455 = vpop.f32.mrb[0].mxu0
        %v4456 = vpop.f32.mrb[0].mxu0
        %v4457 = vadd.f32 0.0, %v4456
        %v4458 = vpop.f32.mrb[0].mxu0
        %4459 = vmatprep.mubr.bf16.mxu0 0
        %4460 = vmatmul.mubr.bf16.gmra.mrb[0].mxu0 %v2788
        %v4461 = vpop.f32.mrb[0].mxu0
        %v4462 = vadd.f32 0.0, %v4461
        %v4463 = vpop.f32.mrb[0].mxu0
        %v4464 = vpop.f32.mrb[0].mxu0
        %v4465 = vadd.f32 0.0, %v4464
        %v4466 = vpop.f32.mrb[0].mxu0
        %4467 = vdwg.mxu0
        %v4468 = vsel %vm3004, %v4309, -1e+30
        %v4469 = vsel %vm3005, %v4312, -1e+30
        %v4470 = vsel %vm3006, %v4317, -1e+30
        %v4471 = vsel %vm3007, %v4320, -1e+30
        %v4472 = vsel %vm3008, %v4325, -1e+30
        %v4473 = vsel %vm3009, %v4328, -1e+30
        %v4474 = vsel %vm3010, %v4333, -1e+30
        %v4475 = vsel %vm3011, %v4336, -1e+30
        %v4476 = vsel %vm3012, %v4341, -1e+30
        %v4477 = vsel %vm3013, %v4344, -1e+30
        %v4478 = vsel %vm3014, %v4349, -1e+30
        %v4479 = vsel %vm3015, %v4352, -1e+30
        %v4480 = vsel %vm3016, %v4357, -1e+30
        %v4481 = vsel %vm3017, %v4360, -1e+30
        %v4482 = vsel %vm3018, %v4365, -1e+30
        %v4483 = vsel %vm3019, %v4368, -1e+30
        %v4484 = vsel %vm3004, %v4406, -1e+30
        %v4485 = vsel %vm3005, %v4409, -1e+30
        %v4486 = vsel %vm3006, %v4414, -1e+30
        %v4487 = vsel %vm3007, %v4417, -1e+30
        %v4488 = vsel %vm3008, %v4422, -1e+30
        %v4489 = vsel %vm3009, %v4425, -1e+30
        %v4490 = vsel %vm3010, %v4430, -1e+30
        %v4491 = vsel %vm3011, %v4433, -1e+30
        %v4492 = vsel %vm3012, %v4438, -1e+30
        %v4493 = vsel %vm3013, %v4441, -1e+30
        %v4494 = vsel %vm3014, %v4446, -1e+30
        %v4495 = vsel %vm3015, %v4449, -1e+30
        %v4496 = vsel %vm3016, %v4454, -1e+30
        %v4497 = vsel %vm3017, %v4457, -1e+30
        %v4498 = vsel %vm3018, %v4462, -1e+30
        %v4499 = vsel %vm3019, %v4465, -1e+30
        %4500 = vmax.xlane.f32.xlu0 %v4468
        %v4501 = vpop.xlane.xlu0 %4500
        %4502 = vmax.xlane.f32.xlu0 %v4469
        %v4503 = vpop.xlane.xlu0 %4502
        %4504 = vmax.xlane.f32.xlu0 %v4470
        %v4505 = vpop.xlane.xlu0 %4504
        %4506 = vmax.xlane.f32.xlu0 %v4471
        %v4507 = vpop.xlane.xlu0 %4506
        %4508 = vmax.xlane.f32.xlu0 %v4472
        %v4509 = vpop.xlane.xlu0 %4508
        %4510 = vmax.xlane.f32.xlu0 %v4473
        %v4511 = vpop.xlane.xlu0 %4510
        %4512 = vmax.xlane.f32.xlu0 %v4474
        %v4513 = vpop.xlane.xlu0 %4512
        %4514 = vmax.xlane.f32.xlu0 %v4475
        %v4515 = vpop.xlane.xlu0 %4514
        %4516 = vmax.xlane.f32.xlu0 %v4476
        %v4517 = vpop.xlane.xlu0 %4516
        %4518 = vmax.xlane.f32.xlu0 %v4477
        %v4519 = vpop.xlane.xlu0 %4518
        %4520 = vmax.xlane.f32.xlu0 %v4478
        %v4521 = vpop.xlane.xlu0 %4520
        %4522 = vmax.xlane.f32.xlu0 %v4479
        %v4523 = vpop.xlane.xlu0 %4522
        %4524 = vmax.xlane.f32.xlu0 %v4480
        %v4525 = vpop.xlane.xlu0 %4524
        %4526 = vmax.xlane.f32.xlu0 %v4481
        %v4527 = vpop.xlane.xlu0 %4526
        %4528 = vmax.xlane.f32.xlu0 %v4482
        %v4529 = vpop.xlane.xlu0 %4528
        %4530 = vmax.xlane.f32.xlu0 %v4483
        %v4531 = vpop.xlane.xlu0 %4530
        %4532 = vmax.xlane.f32.xlu0 %v4484
        %v4533 = vpop.xlane.xlu0 %4532
        %4534 = vmax.xlane.f32.xlu0 %v4485
        %v4535 = vpop.xlane.xlu0 %4534
        %4536 = vmax.xlane.f32.xlu0 %v4486
        %v4537 = vpop.xlane.xlu0 %4536
        %4538 = vmax.xlane.f32.xlu0 %v4487
        %v4539 = vpop.xlane.xlu0 %4538
        %4540 = vmax.xlane.f32.xlu0 %v4488
        %v4541 = vpop.xlane.xlu0 %4540
        %4542 = vmax.xlane.f32.xlu0 %v4489
        %v4543 = vpop.xlane.xlu0 %4542
        %4544 = vmax.xlane.f32.xlu0 %v4490
        %v4545 = vpop.xlane.xlu0 %4544
        %4546 = vmax.xlane.f32.xlu0 %v4491
        %v4547 = vpop.xlane.xlu0 %4546
        %4548 = vmax.xlane.f32.xlu0 %v4492
        %v4549 = vpop.xlane.xlu0 %4548
        %4550 = vmax.xlane.f32.xlu0 %v4493
        %v4551 = vpop.xlane.xlu0 %4550
        %4552 = vmax.xlane.f32.xlu0 %v4494
        %v4553 = vpop.xlane.xlu0 %4552
        %4554 = vmax.xlane.f32.xlu0 %v4495
        %v4555 = vpop.xlane.xlu0 %4554
        %4556 = vmax.xlane.f32.xlu0 %v4496
        %v4557 = vpop.xlane.xlu0 %4556
        %4558 = vmax.xlane.f32.xlu0 %v4497
        %v4559 = vpop.xlane.xlu0 %4558
        %4560 = vmax.xlane.f32.xlu0 %v4498
        %v4561 = vpop.xlane.xlu0 %4560
        %4562 = vmax.xlane.f32.xlu0 %v4499
        %v4563 = vpop.xlane.xlu0 %4562
        %v4564 = vsub.f32 %v4468, %v4501
        %v4565 = vsub.f32 %v4469, %v4503
        %v4566 = vsub.f32 %v4470, %v4505
        %v4567 = vsub.f32 %v4471, %v4507
        %v4568 = vsub.f32 %v4472, %v4509
        %v4569 = vsub.f32 %v4473, %v4511
        %v4570 = vsub.f32 %v4474, %v4513
        %v4571 = vsub.f32 %v4475, %v4515
        %v4572 = vsub.f32 %v4476, %v4517
        %v4573 = vsub.f32 %v4477, %v4519
        %v4574 = vsub.f32 %v4478, %v4521
        %v4575 = vsub.f32 %v4479, %v4523
        %v4576 = vsub.f32 %v4480, %v4525
        %v4577 = vsub.f32 %v4481, %v4527
        %v4578 = vsub.f32 %v4482, %v4529
        %v4579 = vsub.f32 %v4483, %v4531
        %v4580 = vsub.f32 %v4484, %v4533
        %v4581 = vsub.f32 %v4485, %v4535
        %v4582 = vsub.f32 %v4486, %v4537
        %v4583 = vsub.f32 %v4487, %v4539
        %v4584 = vsub.f32 %v4488, %v4541
        %v4585 = vsub.f32 %v4489, %v4543
        %v4586 = vsub.f32 %v4490, %v4545
        %v4587 = vsub.f32 %v4491, %v4547
        %v4588 = vsub.f32 %v4492, %v4549
        %v4589 = vsub.f32 %v4493, %v4551
        %v4590 = vsub.f32 %v4494, %v4553
        %v4591 = vsub.f32 %v4495, %v4555
        %v4592 = vsub.f32 %v4496, %v4557
        %v4593 = vsub.f32 %v4497, %v4559
        %v4594 = vsub.f32 %v4498, %v4561
        %v4595 = vsub.f32 %v4499, %v4563
        %v4596 = vmul.f32 %v4564, 1.442695
        %v4597 = vpow.pop %v4596
        %v4598 = vmul.f32 %v4565, 1.442695
        %v4599 = vpow.pop %v4598
        %v4600 = vmul.f32 %v4566, 1.442695
        %v4601 = vpow.pop %v4600
        %v4602 = vmul.f32 %v4567, 1.442695
        %v4603 = vpow.pop %v4602
        %v4604 = vmul.f32 %v4568, 1.442695
        %v4605 = vpow.pop %v4604
        %v4606 = vmul.f32 %v4569, 1.442695
        %v4607 = vpow.pop %v4606
        %v4608 = vmul.f32 %v4570, 1.442695
        %v4609 = vpow.pop %v4608
        %v4610 = vmul.f32 %v4571, 1.442695
        %v4611 = vpow.pop %v4610
        %v4612 = vmul.f32 %v4572, 1.442695
        %v4613 = vpow.pop %v4612
        %v4614 = vmul.f32 %v4573, 1.442695
        %v4615 = vpow.pop %v4614
        %v4616 = vmul.f32 %v4574, 1.442695
        %v4617 = vpow.pop %v4616
        %v4618 = vmul.f32 %v4575, 1.442695
        %v4619 = vpow.pop %v4618
        %v4620 = vmul.f32 %v4576, 1.442695
        %v4621 = vpow.pop %v4620
        %v4622 = vmul.f32 %v4577, 1.442695
        %v4623 = vpow.pop %v4622
        %v4624 = vmul.f32 %v4578, 1.442695
        %v4625 = vpow.pop %v4624
        %v4626 = vmul.f32 %v4579, 1.442695
        %v4627 = vpow.pop %v4626
        %v4628 = vmul.f32 %v4580, 1.442695
        %v4629 = vpow.pop %v4628
        %v4630 = vmul.f32 %v4581, 1.442695
        %v4631 = vpow.pop %v4630
        %v4632 = vmul.f32 %v4582, 1.442695
        %v4633 = vpow.pop %v4632
        %v4634 = vmul.f32 %v4583, 1.442695
        %v4635 = vpow.pop %v4634
        %v4636 = vmul.f32 %v4584, 1.442695
        %v4637 = vpow.pop %v4636
        %v4638 = vmul.f32 %v4585, 1.442695
        %v4639 = vpow.pop %v4638
        %v4640 = vmul.f32 %v4586, 1.442695
        %v4641 = vpow.pop %v4640
        %v4642 = vmul.f32 %v4587, 1.442695
        %v4643 = vpow.pop %v4642
        %v4644 = vmul.f32 %v4588, 1.442695
        %v4645 = vpow.pop %v4644
        %v4646 = vmul.f32 %v4589, 1.442695
        %v4647 = vpow.pop %v4646
        %v4648 = vmul.f32 %v4590, 1.442695
        %v4649 = vpow.pop %v4648
        %v4650 = vmul.f32 %v4591, 1.442695
        %v4651 = vpow.pop %v4650
        %v4652 = vmul.f32 %v4592, 1.442695
        %v4653 = vpow.pop %v4652
        %v4654 = vmul.f32 %v4593, 1.442695
        %v4655 = vpow.pop %v4654
        %v4656 = vmul.f32 %v4594, 1.442695
        %v4657 = vpow.pop %v4656
        %v4658 = vmul.f32 %v4595, 1.442695
        %v4659 = vpow.pop %v4658
        %4660 = vadd.xlane.f32.xlu0 %v4597
        %v4661 = vpop.xlane.xlu0 %4660
        %4662 = vadd.xlane.f32.xlu0 %v4599
        %v4663 = vpop.xlane.xlu0 %4662
        %4664 = vadd.xlane.f32.xlu0 %v4601
        %v4665 = vpop.xlane.xlu0 %4664
        %4666 = vadd.xlane.f32.xlu0 %v4603
        %v4667 = vpop.xlane.xlu0 %4666
        %4668 = vadd.xlane.f32.xlu0 %v4605
        %v4669 = vpop.xlane.xlu0 %4668
        %4670 = vadd.xlane.f32.xlu0 %v4607
        %v4671 = vpop.xlane.xlu0 %4670
        %4672 = vadd.xlane.f32.xlu0 %v4609
        %v4673 = vpop.xlane.xlu0 %4672
        %4674 = vadd.xlane.f32.xlu0 %v4611
        %v4675 = vpop.xlane.xlu0 %4674
        %4676 = vadd.xlane.f32.xlu0 %v4613
        %v4677 = vpop.xlane.xlu0 %4676
        %4678 = vadd.xlane.f32.xlu0 %v4615
        %v4679 = vpop.xlane.xlu0 %4678
        %4680 = vadd.xlane.f32.xlu0 %v4617
        %v4681 = vpop.xlane.xlu0 %4680
        %4682 = vadd.xlane.f32.xlu0 %v4619
        %v4683 = vpop.xlane.xlu0 %4682
        %4684 = vadd.xlane.f32.xlu0 %v4621
        %v4685 = vpop.xlane.xlu0 %4684
        %4686 = vadd.xlane.f32.xlu0 %v4623
        %v4687 = vpop.xlane.xlu0 %4686
        %4688 = vadd.xlane.f32.xlu0 %v4625
        %v4689 = vpop.xlane.xlu0 %4688
        %4690 = vadd.xlane.f32.xlu0 %v4627
        %v4691 = vpop.xlane.xlu0 %4690
        %4692 = vadd.xlane.f32.xlu0 %v4629
        %v4693 = vpop.xlane.xlu0 %4692
        %4694 = vadd.xlane.f32.xlu0 %v4631
        %v4695 = vpop.xlane.xlu0 %4694
        %4696 = vadd.xlane.f32.xlu0 %v4633
        %v4697 = vpop.xlane.xlu0 %4696
        %4698 = vadd.xlane.f32.xlu0 %v4635
        %v4699 = vpop.xlane.xlu0 %4698
        %4700 = vadd.xlane.f32.xlu0 %v4637
        %v4701 = vpop.xlane.xlu0 %4700
        %4702 = vadd.xlane.f32.xlu0 %v4639
        %v4703 = vpop.xlane.xlu0 %4702
        %4704 = vadd.xlane.f32.xlu0 %v4641
        %v4705 = vpop.xlane.xlu0 %4704
        %4706 = vadd.xlane.f32.xlu0 %v4643
        %v4707 = vpop.xlane.xlu0 %4706
        %4708 = vadd.xlane.f32.xlu0 %v4645
        %v4709 = vpop.xlane.xlu0 %4708
        %4710 = vadd.xlane.f32.xlu0 %v4647
        %v4711 = vpop.xlane.xlu0 %4710
        %4712 = vadd.xlane.f32.xlu0 %v4649
        %v4713 = vpop.xlane.xlu0 %4712
        %4714 = vadd.xlane.f32.xlu0 %v4651
        %v4715 = vpop.xlane.xlu0 %4714
        %4716 = vadd.xlane.f32.xlu0 %v4653
        %v4717 = vpop.xlane.xlu0 %4716
        %4718 = vadd.xlane.f32.xlu0 %v4655
        %v4719 = vpop.xlane.xlu0 %4718
        %4720 = vadd.xlane.f32.xlu0 %v4657
        %v4721 = vpop.xlane.xlu0 %4720
        %4722 = vadd.xlane.f32.xlu0 %v4659
        %v4723 = vpop.xlane.xlu0 %4722
        %v4724 = vrcp.pop %v4661
        %v4725 = vrcp.pop %v4663
        %v4726 = vrcp.pop %v4665
        %v4727 = vrcp.pop %v4667
        %v4728 = vrcp.pop %v4669
        %v4729 = vrcp.pop %v4671
        %v4730 = vrcp.pop %v4673
        %v4731 = vrcp.pop %v4675
        %v4732 = vrcp.pop %v4677
        %v4733 = vrcp.pop %v4679
        %v4734 = vrcp.pop %v4681
        %v4735 = vrcp.pop %v4683
        %v4736 = vrcp.pop %v4685
        %v4737 = vrcp.pop %v4687
        %v4738 = vrcp.pop %v4689
        %v4739 = vrcp.pop %v4691
        %v4740 = vrcp.pop %v4693
        %v4741 = vrcp.pop %v4695
        %v4742 = vrcp.pop %v4697
        %v4743 = vrcp.pop %v4699
        %v4744 = vrcp.pop %v4701
        %v4745 = vrcp.pop %v4703
        %v4746 = vrcp.pop %v4705
        %v4747 = vrcp.pop %v4707
        %v4748 = vrcp.pop %v4709
        %v4749 = vrcp.pop %v4711
        %v4750 = vrcp.pop %v4713
        %v4751 = vrcp.pop %v4715
        %v4752 = vrcp.pop %v4717
        %v4753 = vrcp.pop %v4719
        %v4754 = vrcp.pop %v4721
        %v4755 = vrcp.pop %v4723
        %v4756 = vmul.f32 %v4597, %v4724
        %v4757 = vmul.f32 %v4599, %v4725
        %v4758 = vmul.f32 %v4601, %v4726
        %v4759 = vmul.f32 %v4603, %v4727
        %v4760 = vmul.f32 %v4605, %v4728
        %v4761 = vmul.f32 %v4607, %v4729
        %v4762 = vmul.f32 %v4609, %v4730
        %v4763 = vmul.f32 %v4611, %v4731
        %v4764 = vmul.f32 %v4613, %v4732
        %v4765 = vmul.f32 %v4615, %v4733
        %v4766 = vmul.f32 %v4617, %v4734
        %v4767 = vmul.f32 %v4619, %v4735
        %v4768 = vmul.f32 %v4621, %v4736
        %v4769 = vmul.f32 %v4623, %v4737
        %v4770 = vmul.f32 %v4625, %v4738
        %v4771 = vmul.f32 %v4627, %v4739
        %v4772 = vmul.f32 %v4629, %v4740
        %v4773 = vmul.f32 %v4631, %v4741
        %v4774 = vmul.f32 %v4633, %v4742
        %v4775 = vmul.f32 %v4635, %v4743
        %v4776 = vmul.f32 %v4637, %v4744
        %v4777 = vmul.f32 %v4639, %v4745
        %v4778 = vmul.f32 %v4641, %v4746
        %v4779 = vmul.f32 %v4643, %v4747
        %v4780 = vmul.f32 %v4645, %v4748
        %v4781 = vmul.f32 %v4647, %v4749
        %v4782 = vmul.f32 %v4649, %v4750
        %v4783 = vmul.f32 %v4651, %v4751
        %v4784 = vmul.f32 %v4653, %v4752
        %v4785 = vmul.f32 %v4655, %v4753
        %v4786 = vmul.f32 %v4657, %v4754
        %v4787 = vmul.f32 %v4659, %v4755
        %v4788 = vpack.c.bf16 %v4757, %v4756
        %v4789 = vpack.c.bf16 %v4759, %v4758
        %v4790 = vpack.c.bf16 %v4761, %v4760
        %v4791 = vpack.c.bf16 %v4763, %v4762
        %v4792 = vpack.c.bf16 %v4765, %v4764
        %v4793 = vpack.c.bf16 %v4767, %v4766
        %v4794 = vpack.c.bf16 %v4769, %v4768
        %v4795 = vpack.c.bf16 %v4771, %v4770
        %v4796 = vpack.c.bf16 %v4773, %v4772
        %v4797 = vpack.c.bf16 %v4775, %v4774
        %v4798 = vpack.c.bf16 %v4777, %v4776
        %v4799 = vpack.c.bf16 %v4779, %v4778
        %v4800 = vpack.c.bf16 %v4781, %v4780
        %v4801 = vpack.c.bf16 %v4783, %v4782
        %v4802 = vpack.c.bf16 %v4785, %v4784
        %v4803 = vpack.c.bf16 %v4787, %v4786
        %4804 = vmatprep.subr.bf16.mxu0 0
        %4805 = vmatpush1.bf16.msra.mxu0 %v2672
        %4806 = vmatprep.subr.bf16.mxu0 0
        %4807 = vmatpush1.bf16.msra.mxu0 %v2680
        %4808 = vmatprep.subr.bf16.mxu0 0
        %4809 = vmatpush1.bf16.msra.mxu0 %v2688
        %4810 = vmatprep.subr.bf16.mxu0 0
        %4811 = vmatpush1.bf16.msra.mxu0 %v2696
        %4812 = vmatprep.subr.bf16.mxu0 0
        %4813 = vmatpush1.bf16.msra.mxu0 %v2704
        %4814 = vmatprep.subr.bf16.mxu0 0
        %4815 = vmatpush1.bf16.msra.mxu0 %v2712
        %4816 = vmatprep.subr.bf16.mxu0 0
        %4817 = vmatpush1.bf16.msra.mxu0 %v2720
        %4818 = vmatprep.subr.bf16.mxu0 0
        %4819 = vmatpush1.bf16.msra.mxu0 %v2728
        %4820 = vmatprep.subr.bf16.mxu0 0
        %4821 = vmatpush1.bf16.msra.mxu0 0
        %4822 = vmatprep.subr.bf16.mxu0 0
        %4823 = vmatpush1.bf16.msra.mxu0 0
        %4824 = vmatprep.subr.bf16.mxu0 0
        %4825 = vmatpush1.bf16.msra.mxu0 0
        %4826 = vmatprep.subr.bf16.mxu0 0
        %4827 = vmatpush1.bf16.msra.mxu0 0
        %4828 = vmatprep.subr.bf16.mxu0 0
        %4829 = vmatpush1.bf16.msra.mxu0 0
        %4830 = vmatprep.subr.bf16.mxu0 0
        %4831 = vmatpush1.bf16.msra.mxu0 0
        %4832 = vmatprep.subr.bf16.mxu0 0
        %4833 = vmatpush1.bf16.msra.mxu0 0
        %4834 = vmatprep.subr.bf16.mxu0 0
        %4835 = vmatpush1.bf16.msra.mxu0 0
        %4836 = vmatprep.mubr.bf16.mxu0 0
        %4837 = vmatmul.mubr.bf16.gmra.mrb[0].mxu0 %v4788
        %v4838 = vpop.f32.mrb[0].mxu0
        %v4839 = vadd.f32 0.0, %v4838
        %v4840 = vpop.f32.mrb[0].mxu0
        %v4841 = vpop.f32.mrb[0].mxu0
        %v4842 = vadd.f32 0.0, %v4841
        %v4843 = vpop.f32.mrb[0].mxu0
        %4844 = vmatprep.mubr.bf16.mxu0 0
        %4845 = vmatmul.mubr.bf16.gmra.mrb[0].mxu0 %v4789
        %v4846 = vpop.f32.mrb[0].mxu0
        %v4847 = vadd.f32 0.0, %v4846
        %v4848 = vpop.f32.mrb[0].mxu0
        %v4849 = vpop.f32.mrb[0].mxu0
        %v4850 = vadd.f32 0.0, %v4849
        %v4851 = vpop.f32.mrb[0].mxu0
        %4852 = vmatprep.mubr.bf16.mxu0 0
        %4853 = vmatmul.mubr.bf16.gmra.mrb[0].mxu0 %v4790
        %v4854 = vpop.f32.mrb[0].mxu0
        %v4855 = vadd.f32 0.0, %v4854
        %v4856 = vpop.f32.mrb[0].mxu0
        %v4857 = vpop.f32.mrb[0].mxu0
        %v4858 = vadd.f32 0.0, %v4857
        %v4859 = vpop.f32.mrb[0].mxu0
        %4860 = vmatprep.mubr.bf16.mxu0 0
        %4861 = vmatmul.mubr.bf16.gmra.mrb[0].mxu0 %v4791
        %v4862 = vpop.f32.mrb[0].mxu0
        %v4863 = vadd.f32 0.0, %v4862
        %v4864 = vpop.f32.mrb[0].mxu0
        %v4865 = vpop.f32.mrb[0].mxu0
        %v4866 = vadd.f32 0.0, %v4865
        %v4867 = vpop.f32.mrb[0].mxu0
        %4868 = vmatprep.mubr.bf16.mxu0 0
        %4869 = vmatmul.mubr.bf16.gmra.mrb[0].mxu0 %v4792
        %v4870 = vpop.f32.mrb[0].mxu0
        %v4871 = vadd.f32 0.0, %v4870
        %v4872 = vpop.f32.mrb[0].mxu0
        %v4873 = vpop.f32.mrb[0].mxu0
        %v4874 = vadd.f32 0.0, %v4873
        %v4875 = vpop.f32.mrb[0].mxu0
        %4876 = vmatprep.mubr.bf16.mxu0 0
        %4877 = vmatmul.mubr.bf16.gmra.mrb[0].mxu0 %v4793
        %v4878 = vpop.f32.mrb[0].mxu0
        %v4879 = vadd.f32 0.0, %v4878
        %v4880 = vpop.f32.mrb[0].mxu0
        %v4881 = vpop.f32.mrb[0].mxu0
        %v4882 = vadd.f32 0.0, %v4881
        %v4883 = vpop.f32.mrb[0].mxu0
        %4884 = vmatprep.mubr.bf16.mxu0 0
        %4885 = vmatmul.mubr.bf16.gmra.mrb[0].mxu0 %v4794
        %v4886 = vpop.f32.mrb[0].mxu0
        %v4887 = vadd.f32 0.0, %v4886
        %v4888 = vpop.f32.mrb[0].mxu0
        %v4889 = vpop.f32.mrb[0].mxu0
        %v4890 = vadd.f32 0.0, %v4889
        %v4891 = vpop.f32.mrb[0].mxu0
        %4892 = vmatprep.mubr.bf16.mxu0 0
        %4893 = vmatmul.mubr.bf16.gmra.mrb[0].mxu0 %v4795
        %v4894 = vpop.f32.mrb[0].mxu0
        %v4895 = vadd.f32 0.0, %v4894
        %v4896 = vpop.f32.mrb[0].mxu0
        %v4897 = vpop.f32.mrb[0].mxu0
        %v4898 = vadd.f32 0.0, %v4897
        %v4899 = vpop.f32.mrb[0].mxu0
        %4900 = vdwg.mxu0
        %4901 = vmatprep.subr.bf16.mxu0 0
        %4902 = vmatpush1.bf16.msra.mxu0 %v2736
        %4903 = vmatprep.subr.bf16.mxu0 0
        %4904 = vmatpush1.bf16.msra.mxu0 %v2744
        %4905 = vmatprep.subr.bf16.mxu0 0
        %4906 = vmatpush1.bf16.msra.mxu0 %v2752
        %4907 = vmatprep.subr.bf16.mxu0 0
        %4908 = vmatpush1.bf16.msra.mxu0 %v2760
        %4909 = vmatprep.subr.bf16.mxu0 0
        %4910 = vmatpush1.bf16.msra.mxu0 %v2768
        %4911 = vmatprep.subr.bf16.mxu0 0
        %4912 = vmatpush1.bf16.msra.mxu0 %v2776
        %4913 = vmatprep.subr.bf16.mxu0 0
        %4914 = vmatpush1.bf16.msra.mxu0 %v2784
        %4915 = vmatprep.subr.bf16.mxu0 0
        %4916 = vmatpush1.bf16.msra.mxu0 %v2792
        %4917 = vmatprep.subr.bf16.mxu0 0
        %4918 = vmatpush1.bf16.msra.mxu0 0
        %4919 = vmatprep.subr.bf16.mxu0 0
        %4920 = vmatpush1.bf16.msra.mxu0 0
        %4921 = vmatprep.subr.bf16.mxu0 0
        %4922 = vmatpush1.bf16.msra.mxu0 0
        %4923 = vmatprep.subr.bf16.mxu0 0
        %4924 = vmatpush1.bf16.msra.mxu0 0
        %4925 = vmatprep.subr.bf16.mxu0 0
        %4926 = vmatpush1.bf16.msra.mxu0 0
        %4927 = vmatprep.subr.bf16.mxu0 0
        %4928 = vmatpush1.bf16.msra.mxu0 0
        %4929 = vmatprep.subr.bf16.mxu0 0
        %4930 = vmatpush1.bf16.msra.mxu0 0
        %4931 = vmatprep.subr.bf16.mxu0 0
        %4932 = vmatpush1.bf16.msra.mxu0 0
        %4933 = vmatprep.mubr.bf16.mxu0 0
        %4934 = vmatmul.mubr.bf16.gmra.mrb[0].mxu0 %v4796
        %v4935 = vpop.f32.mrb[0].mxu0
        %v4936 = vadd.f32 0.0, %v4935
        %v4937 = vpop.f32.mrb[0].mxu0
        %v4938 = vpop.f32.mrb[0].mxu0
        %v4939 = vadd.f32 0.0, %v4938
        %v4940 = vpop.f32.mrb[0].mxu0
        %4941 = vmatprep.mubr.bf16.mxu0 0
        %4942 = vmatmul.mubr.bf16.gmra.mrb[0].mxu0 %v4797
        %v4943 = vpop.f32.mrb[0].mxu0
        %v4944 = vadd.f32 0.0, %v4943
        %v4945 = vpop.f32.mrb[0].mxu0
        %v4946 = vpop.f32.mrb[0].mxu0
        %v4947 = vadd.f32 0.0, %v4946
        %v4948 = vpop.f32.mrb[0].mxu0
        %4949 = vmatprep.mubr.bf16.mxu0 0
        %4950 = vmatmul.mubr.bf16.gmra.mrb[0].mxu0 %v4798
        %v4951 = vpop.f32.mrb[0].mxu0
        %v4952 = vadd.f32 0.0, %v4951
        %v4953 = vpop.f32.mrb[0].mxu0
        %v4954 = vpop.f32.mrb[0].mxu0
        %v4955 = vadd.f32 0.0, %v4954
        %v4956 = vpop.f32.mrb[0].mxu0
        %4957 = vmatprep.mubr.bf16.mxu0 0
        %4958 = vmatmul.mubr.bf16.gmra.mrb[0].mxu0 %v4799
        %v4959 = vpop.f32.mrb[0].mxu0
        %v4960 = vadd.f32 0.0, %v4959
        %v4961 = vpop.f32.mrb[0].mxu0
        %v4962 = vpop.f32.mrb[0].mxu0
        %v4963 = vadd.f32 0.0, %v4962
        %v4964 = vpop.f32.mrb[0].mxu0
        %4965 = vmatprep.mubr.bf16.mxu0 0
        %4966 = vmatmul.mubr.bf16.gmra.mrb[0].mxu0 %v4800
        %v4967 = vpop.f32.mrb[0].mxu0
        %v4968 = vadd.f32 0.0, %v4967
        %v4969 = vpop.f32.mrb[0].mxu0
        %v4970 = vpop.f32.mrb[0].mxu0
        %v4971 = vadd.f32 0.0, %v4970
        %v4972 = vpop.f32.mrb[0].mxu0
        %4973 = vmatprep.mubr.bf16.mxu0 0
        %4974 = vmatmul.mubr.bf16.gmra.mrb[0].mxu0 %v4801
        %v4975 = vpop.f32.mrb[0].mxu0
        %v4976 = vadd.f32 0.0, %v4975
        %v4977 = vpop.f32.mrb[0].mxu0
        %v4978 = vpop.f32.mrb[0].mxu0
        %v4979 = vadd.f32 0.0, %v4978
        %v4980 = vpop.f32.mrb[0].mxu0
        %4981 = vmatprep.mubr.bf16.mxu0 0
        %4982 = vmatmul.mubr.bf16.gmra.mrb[0].mxu0 %v4802
        %v4983 = vpop.f32.mrb[0].mxu0
        %v4984 = vadd.f32 0.0, %v4983
        %v4985 = vpop.f32.mrb[0].mxu0
        %v4986 = vpop.f32.mrb[0].mxu0
        %v4987 = vadd.f32 0.0, %v4986
        %v4988 = vpop.f32.mrb[0].mxu0
        %4989 = vmatprep.mubr.bf16.mxu0 0
        %4990 = vmatmul.mubr.bf16.gmra.mrb[0].mxu0 %v4803
        %v4991 = vpop.f32.mrb[0].mxu0
        %v4992 = vadd.f32 0.0, %v4991
        %v4993 = vpop.f32.mrb[0].mxu0
        %v4994 = vpop.f32.mrb[0].mxu0
        %v4995 = vadd.f32 0.0, %v4994
        %v4996 = vpop.f32.mrb[0].mxu0
        %4997 = vdwg.mxu0
        %v4998 = vadd.f32 %v4115, %v4839
        %v4999 = vadd.f32 %v4118, %v4842
        %v5000 = vadd.f32 %v4123, %v4847
        %v5001 = vadd.f32 %v4126, %v4850
        %v5002 = vadd.f32 %v4131, %v4855
        %v5003 = vadd.f32 %v4134, %v4858
        %v5004 = vadd.f32 %v4139, %v4863
        %v5005 = vadd.f32 %v4142, %v4866
        %v5006 = vadd.f32 %v4147, %v4871
        %v5007 = vadd.f32 %v4150, %v4874
        %v5008 = vadd.f32 %v4155, %v4879
        %v5009 = vadd.f32 %v4158, %v4882
        %v5010 = vadd.f32 %v4163, %v4887
        %v5011 = vadd.f32 %v4166, %v4890
        %v5012 = vadd.f32 %v4171, %v4895
        %v5013 = vadd.f32 %v4174, %v4898
        %v5014 = vadd.f32 %v4212, %v4936
        %v5015 = vadd.f32 %v4215, %v4939
        %v5016 = vadd.f32 %v4220, %v4944
        %v5017 = vadd.f32 %v4223, %v4947
        %v5018 = vadd.f32 %v4228, %v4952
        %v5019 = vadd.f32 %v4231, %v4955
        %v5020 = vadd.f32 %v4236, %v4960
        %v5021 = vadd.f32 %v4239, %v4963
        %v5022 = vadd.f32 %v4244, %v4968
        %v5023 = vadd.f32 %v4247, %v4971
        %v5024 = vadd.f32 %v4252, %v4976
        %v5025 = vadd.f32 %v4255, %v4979
        %v5026 = vadd.f32 %v4260, %v4984
        %v5027 = vadd.f32 %v4263, %v4987
        %v5028 = vadd.f32 %v4268, %v4992
        %v5029 = vadd.f32 %v4271, %v4995
        %5030 = vmatprep.subr.bf16.mxu0 0
        %5031 = vmatpush1.bf16.xpose.msra.mxu0 %v1494
        %5032 = vmatprep.subr.bf16.mxu0 0
        %5033 = vmatpush1.bf16.xpose.msra.mxu0 %v1495
        %5034 = vmatprep.subr.bf16.mxu0 0
        %5035 = vmatpush1.bf16.xpose.msra.mxu0 %v1496
        %5036 = vmatprep.subr.bf16.mxu0 0
        %5037 = vmatpush1.bf16.xpose.msra.mxu0 %v1497
        %5038 = vmatprep.subr.bf16.mxu0 0
        %5039 = vmatpush1.bf16.xpose.msra.mxu0 %v1498
        %5040 = vmatprep.subr.bf16.mxu0 0
        %5041 = vmatpush1.bf16.xpose.msra.mxu0 %v1499
        %5042 = vmatprep.subr.bf16.mxu0 0
        %5043 = vmatpush1.bf16.xpose.msra.mxu0 %v1500
        %5044 = vmatprep.subr.bf16.mxu0 0
        %5045 = vmatpush1.bf16.xpose.msra.mxu0 %v1501
        %5046 = vmatprep.subr.bf16.mxu0 0
        %5047 = vmatpush1.bf16.xpose.msra.mxu0 0
        %5048 = vmatprep.subr.bf16.mxu0 0
        %5049 = vmatpush1.bf16.xpose.msra.mxu0 0
        %5050 = vmatprep.subr.bf16.mxu0 0
        %5051 = vmatpush1.bf16.xpose.msra.mxu0 0
        %5052 = vmatprep.subr.bf16.mxu0 0
        %5053 = vmatpush1.bf16.xpose.msra.mxu0 0
        %5054 = vmatprep.subr.bf16.mxu0 0
        %5055 = vmatpush1.bf16.xpose.msra.mxu0 0
        %5056 = vmatprep.subr.bf16.mxu0 0
        %5057 = vmatpush1.bf16.xpose.msra.mxu0 0
        %5058 = vmatprep.subr.bf16.mxu0 0
        %5059 = vmatpush1.bf16.xpose.msra.mxu0 0
        %5060 = vmatprep.subr.bf16.mxu0 0
        %5061 = vmatpush1.bf16.xpose.msra.mxu0 0
        %5062 = vmatprep.mubr.bf16.mxu0 0
        %5063 = vmatmul.mubr.bf16.gmra.mrb[0].mxu0 %v2669
        %v5064 = vpop.f32.mrb[0].mxu0
        %v5065 = vadd.f32 0.0, %v5064
        %v5066 = vpop.f32.mrb[0].mxu0
        %v5067 = vpop.f32.mrb[0].mxu0
        %v5068 = vadd.f32 0.0, %v5067
        %v5069 = vpop.f32.mrb[0].mxu0
        %5070 = vmatprep.mubr.bf16.mxu0 0
        %5071 = vmatmul.mubr.bf16.gmra.mrb[0].mxu0 %v2677
        %v5072 = vpop.f32.mrb[0].mxu0
        %v5073 = vadd.f32 0.0, %v5072
        %v5074 = vpop.f32.mrb[0].mxu0
        %v5075 = vpop.f32.mrb[0].mxu0
        %v5076 = vadd.f32 0.0, %v5075
        %v5077 = vpop.f32.mrb[0].mxu0
        %5078 = vmatprep.mubr.bf16.mxu0 0
        %5079 = vmatmul.mubr.bf16.gmra.mrb[0].mxu0 %v2685
        %v5080 = vpop.f32.mrb[0].mxu0
        %v5081 = vadd.f32 0.0, %v5080
        %v5082 = vpop.f32.mrb[0].mxu0
        %v5083 = vpop.f32.mrb[0].mxu0
        %v5084 = vadd.f32 0.0, %v5083
        %v5085 = vpop.f32.mrb[0].mxu0
        %5086 = vmatprep.mubr.bf16.mxu0 0
        %5087 = vmatmul.mubr.bf16.gmra.mrb[0].mxu0 %v2693
        %v5088 = vpop.f32.mrb[0].mxu0
        %v5089 = vadd.f32 0.0, %v5088
        %v5090 = vpop.f32.mrb[0].mxu0
        %v5091 = vpop.f32.mrb[0].mxu0
        %v5092 = vadd.f32 0.0, %v5091
        %v5093 = vpop.f32.mrb[0].mxu0
        %5094 = vmatprep.mubr.bf16.mxu0 0
        %5095 = vmatmul.mubr.bf16.gmra.mrb[0].mxu0 %v2701
        %v5096 = vpop.f32.mrb[0].mxu0
        %v5097 = vadd.f32 0.0, %v5096
        %v5098 = vpop.f32.mrb[0].mxu0
        %v5099 = vpop.f32.mrb[0].mxu0
        %v5100 = vadd.f32 0.0, %v5099
        %v5101 = vpop.f32.mrb[0].mxu0
        %5102 = vmatprep.mubr.bf16.mxu0 0
        %5103 = vmatmul.mubr.bf16.gmra.mrb[0].mxu0 %v2709
        %v5104 = vpop.f32.mrb[0].mxu0
        %v5105 = vadd.f32 0.0, %v5104
        %v5106 = vpop.f32.mrb[0].mxu0
        %v5107 = vpop.f32.mrb[0].mxu0
        %v5108 = vadd.f32 0.0, %v5107
        %v5109 = vpop.f32.mrb[0].mxu0
        %5110 = vmatprep.mubr.bf16.mxu0 0
        %5111 = vmatmul.mubr.bf16.gmra.mrb[0].mxu0 %v2717
        %v5112 = vpop.f32.mrb[0].mxu0
        %v5113 = vadd.f32 0.0, %v5112
        %v5114 = vpop.f32.mrb[0].mxu0
        %v5115 = vpop.f32.mrb[0].mxu0
        %v5116 = vadd.f32 0.0, %v5115
        %v5117 = vpop.f32.mrb[0].mxu0
        %5118 = vmatprep.mubr.bf16.mxu0 0
        %5119 = vmatmul.mubr.bf16.gmra.mrb[0].mxu0 %v2725
        %v5120 = vpop.f32.mrb[0].mxu0
        %v5121 = vadd.f32 0.0, %v5120
        %v5122 = vpop.f32.mrb[0].mxu0
        %v5123 = vpop.f32.mrb[0].mxu0
        %v5124 = vadd.f32 0.0, %v5123
        %v5125 = vpop.f32.mrb[0].mxu0
        %5126 = vdwg.mxu0
        %5127 = vmatprep.subr.bf16.mxu0 0
        %5128 = vmatpush1.bf16.xpose.msra.mxu0 %v1502
        %5129 = vmatprep.subr.bf16.mxu0 0
        %5130 = vmatpush1.bf16.xpose.msra.mxu0 %v1503
        %5131 = vmatprep.subr.bf16.mxu0 0
        %5132 = vmatpush1.bf16.xpose.msra.mxu0 %v1504
        %5133 = vmatprep.subr.bf16.mxu0 0
        %5134 = vmatpush1.bf16.xpose.msra.mxu0 %v1505
        %5135 = vmatprep.subr.bf16.mxu0 0
        %5136 = vmatpush1.bf16.xpose.msra.mxu0 %v1506
        %5137 = vmatprep.subr.bf16.mxu0 0
        %5138 = vmatpush1.bf16.xpose.msra.mxu0 %v1507
        %5139 = vmatprep.subr.bf16.mxu0 0
        %5140 = vmatpush1.bf16.xpose.msra.mxu0 %v1508
        %5141 = vmatprep.subr.bf16.mxu0 0
        %5142 = vmatpush1.bf16.xpose.msra.mxu0 %v1509
        %5143 = vmatprep.subr.bf16.mxu0 0
        %5144 = vmatpush1.bf16.xpose.msra.mxu0 0
        %5145 = vmatprep.subr.bf16.mxu0 0
        %5146 = vmatpush1.bf16.xpose.msra.mxu0 0
        %5147 = vmatprep.subr.bf16.mxu0 0
        %5148 = vmatpush1.bf16.xpose.msra.mxu0 0
        %5149 = vmatprep.subr.bf16.mxu0 0
        %5150 = vmatpush1.bf16.xpose.msra.mxu0 0
        %5151 = vmatprep.subr.bf16.mxu0 0
        %5152 = vmatpush1.bf16.xpose.msra.mxu0 0
        %5153 = vmatprep.subr.bf16.mxu0 0
        %5154 = vmatpush1.bf16.xpose.msra.mxu0 0
        %5155 = vmatprep.subr.bf16.mxu0 0
        %5156 = vmatpush1.bf16.xpose.msra.mxu0 0
        %5157 = vmatprep.subr.bf16.mxu0 0
        %5158 = vmatpush1.bf16.xpose.msra.mxu0 0
        %5159 = vmatprep.mubr.bf16.mxu0 0
        %5160 = vmatmul.mubr.bf16.gmra.mrb[0].mxu0 %v2733
        %v5161 = vpop.f32.mrb[0].mxu0
        %v5162 = vadd.f32 0.0, %v5161
        %v5163 = vpop.f32.mrb[0].mxu0
        %v5164 = vpop.f32.mrb[0].mxu0
        %v5165 = vadd.f32 0.0, %v5164
        %v5166 = vpop.f32.mrb[0].mxu0
        %5167 = vmatprep.mubr.bf16.mxu0 0
        %5168 = vmatmul.mubr.bf16.gmra.mrb[0].mxu0 %v2741
        %v5169 = vpop.f32.mrb[0].mxu0
        %v5170 = vadd.f32 0.0, %v5169
        %v5171 = vpop.f32.mrb[0].mxu0
        %v5172 = vpop.f32.mrb[0].mxu0
        %v5173 = vadd.f32 0.0, %v5172
        %v5174 = vpop.f32.mrb[0].mxu0
        %5175 = vmatprep.mubr.bf16.mxu0 0
        %5176 = vmatmul.mubr.bf16.gmra.mrb[0].mxu0 %v2749
        %v5177 = vpop.f32.mrb[0].mxu0
        %v5178 = vadd.f32 0.0, %v5177
        %v5179 = vpop.f32.mrb[0].mxu0
        %v5180 = vpop.f32.mrb[0].mxu0
        %v5181 = vadd.f32 0.0, %v5180
        %v5182 = vpop.f32.mrb[0].mxu0
        %5183 = vmatprep.mubr.bf16.mxu0 0
        %5184 = vmatmul.mubr.bf16.gmra.mrb[0].mxu0 %v2757
        %v5185 = vpop.f32.mrb[0].mxu0
        %v5186 = vadd.f32 0.0, %v5185
        %v5187 = vpop.f32.mrb[0].mxu0
        %v5188 = vpop.f32.mrb[0].mxu0
        %v5189 = vadd.f32 0.0, %v5188
        %v5190 = vpop.f32.mrb[0].mxu0
        %5191 = vmatprep.mubr.bf16.mxu0 0
        %5192 = vmatmul.mubr.bf16.gmra.mrb[0].mxu0 %v2765
        %v5193 = vpop.f32.mrb[0].mxu0
        %v5194 = vadd.f32 0.0, %v5193
        %v5195 = vpop.f32.mrb[0].mxu0
        %v5196 = vpop.f32.mrb[0].mxu0
        %v5197 = vadd.f32 0.0, %v5196
        %v5198 = vpop.f32.mrb[0].mxu0
        %5199 = vmatprep.mubr.bf16.mxu0 0
        %5200 = vmatmul.mubr.bf16.gmra.mrb[0].mxu0 %v2773
        %v5201 = vpop.f32.mrb[0].mxu0
        %v5202 = vadd.f32 0.0, %v5201
        %v5203 = vpop.f32.mrb[0].mxu0
        %v5204 = vpop.f32.mrb[0].mxu0
        %v5205 = vadd.f32 0.0, %v5204
        %v5206 = vpop.f32.mrb[0].mxu0
        %5207 = vmatprep.mubr.bf16.mxu0 0
        %5208 = vmatmul.mubr.bf16.gmra.mrb[0].mxu0 %v2781
        %v5209 = vpop.f32.mrb[0].mxu0
        %v5210 = vadd.f32 0.0, %v5209
        %v5211 = vpop.f32.mrb[0].mxu0
        %v5212 = vpop.f32.mrb[0].mxu0
        %v5213 = vadd.f32 0.0, %v5212
        %v5214 = vpop.f32.mrb[0].mxu0
        %5215 = vmatprep.mubr.bf16.mxu0 0
        %5216 = vmatmul.mubr.bf16.gmra.mrb[0].mxu0 %v2789
        %v5217 = vpop.f32.mrb[0].mxu0
        %v5218 = vadd.f32 0.0, %v5217
        %v5219 = vpop.f32.mrb[0].mxu0
        %v5220 = vpop.f32.mrb[0].mxu0
        %v5221 = vadd.f32 0.0, %v5220
        %v5222 = vpop.f32.mrb[0].mxu0
        %5223 = vdwg.mxu0
        %v5224 = vsel %vm3004, %v5065, -1e+30
        %v5225 = vsel %vm3005, %v5068, -1e+30
        %v5226 = vsel %vm3006, %v5073, -1e+30
        %v5227 = vsel %vm3007, %v5076, -1e+30
        %v5228 = vsel %vm3008, %v5081, -1e+30
        %v5229 = vsel %vm3009, %v5084, -1e+30
        %v5230 = vsel %vm3010, %v5089, -1e+30
        %v5231 = vsel %vm3011, %v5092, -1e+30
        %v5232 = vsel %vm3012, %v5097, -1e+30
        %v5233 = vsel %vm3013, %v5100, -1e+30
        %v5234 = vsel %vm3014, %v5105, -1e+30
        %v5235 = vsel %vm3015, %v5108, -1e+30
        %v5236 = vsel %vm3016, %v5113, -1e+30
        %v5237 = vsel %vm3017, %v5116, -1e+30
        %v5238 = vsel %vm3018, %v5121, -1e+30
        %v5239 = vsel %vm3019, %v5124, -1e+30
        %v5240 = vsel %vm3004, %v5162, -1e+30
        %v5241 = vsel %vm3005, %v5165, -1e+30
        %v5242 = vsel %vm3006, %v5170, -1e+30
        %v5243 = vsel %vm3007, %v5173, -1e+30
        %v5244 = vsel %vm3008, %v5178, -1e+30
        %v5245 = vsel %vm3009, %v5181, -1e+30
        %v5246 = vsel %vm3010, %v5186, -1e+30
        %v5247 = vsel %vm3011, %v5189, -1e+30
        %v5248 = vsel %vm3012, %v5194, -1e+30
        %v5249 = vsel %vm3013, %v5197, -1e+30
        %v5250 = vsel %vm3014, %v5202, -1e+30
        %v5251 = vsel %vm3015, %v5205, -1e+30
        %v5252 = vsel %vm3016, %v5210, -1e+30
        %v5253 = vsel %vm3017, %v5213, -1e+30
        %v5254 = vsel %vm3018, %v5218, -1e+30
        %v5255 = vsel %vm3019, %v5221, -1e+30
        %5256 = vmax.xlane.f32.xlu0 %v5224
        %v5257 = vpop.xlane.xlu0 %5256
        %5258 = vmax.xlane.f32.xlu0 %v5225
        %v5259 = vpop.xlane.xlu0 %5258
        %5260 = vmax.xlane.f32.xlu0 %v5226
        %v5261 = vpop.xlane.xlu0 %5260
        %5262 = vmax.xlane.f32.xlu0 %v5227
        %v5263 = vpop.xlane.xlu0 %5262
        %5264 = vmax.xlane.f32.xlu0 %v5228
        %v5265 = vpop.xlane.xlu0 %5264
        %5266 = vmax.xlane.f32.xlu0 %v5229
        %v5267 = vpop.xlane.xlu0 %5266
        %5268 = vmax.xlane.f32.xlu0 %v5230
        %v5269 = vpop.xlane.xlu0 %5268
        %5270 = vmax.xlane.f32.xlu0 %v5231
        %v5271 = vpop.xlane.xlu0 %5270
        %5272 = vmax.xlane.f32.xlu0 %v5232
        %v5273 = vpop.xlane.xlu0 %5272
        %5274 = vmax.xlane.f32.xlu0 %v5233
        %v5275 = vpop.xlane.xlu0 %5274
        %5276 = vmax.xlane.f32.xlu0 %v5234
        %v5277 = vpop.xlane.xlu0 %5276
        %5278 = vmax.xlane.f32.xlu0 %v5235
        %v5279 = vpop.xlane.xlu0 %5278
        %5280 = vmax.xlane.f32.xlu0 %v5236
        %v5281 = vpop.xlane.xlu0 %5280
        %5282 = vmax.xlane.f32.xlu0 %v5237
        %v5283 = vpop.xlane.xlu0 %5282
        %5284 = vmax.xlane.f32.xlu0 %v5238
        %v5285 = vpop.xlane.xlu0 %5284
        %5286 = vmax.xlane.f32.xlu0 %v5239
        %v5287 = vpop.xlane.xlu0 %5286
        %5288 = vmax.xlane.f32.xlu0 %v5240
        %v5289 = vpop.xlane.xlu0 %5288
        %5290 = vmax.xlane.f32.xlu0 %v5241
        %v5291 = vpop.xlane.xlu0 %5290
        %5292 = vmax.xlane.f32.xlu0 %v5242
        %v5293 = vpop.xlane.xlu0 %5292
        %5294 = vmax.xlane.f32.xlu0 %v5243
        %v5295 = vpop.xlane.xlu0 %5294
        %5296 = vmax.xlane.f32.xlu0 %v5244
        %v5297 = vpop.xlane.xlu0 %5296
        %5298 = vmax.xlane.f32.xlu0 %v5245
        %v5299 = vpop.xlane.xlu0 %5298
        %5300 = vmax.xlane.f32.xlu0 %v5246
        %v5301 = vpop.xlane.xlu0 %5300
        %5302 = vmax.xlane.f32.xlu0 %v5247
        %v5303 = vpop.xlane.xlu0 %5302
        %5304 = vmax.xlane.f32.xlu0 %v5248
        %v5305 = vpop.xlane.xlu0 %5304
        %5306 = vmax.xlane.f32.xlu0 %v5249
        %v5307 = vpop.xlane.xlu0 %5306
        %5308 = vmax.xlane.f32.xlu0 %v5250
        %v5309 = vpop.xlane.xlu0 %5308
        %5310 = vmax.xlane.f32.xlu0 %v5251
        %v5311 = vpop.xlane.xlu0 %5310
        %5312 = vmax.xlane.f32.xlu0 %v5252
        %v5313 = vpop.xlane.xlu0 %5312
        %5314 = vmax.xlane.f32.xlu0 %v5253
        %v5315 = vpop.xlane.xlu0 %5314
        %5316 = vmax.xlane.f32.xlu0 %v5254
        %v5317 = vpop.xlane.xlu0 %5316
        %5318 = vmax.xlane.f32.xlu0 %v5255
        %v5319 = vpop.xlane.xlu0 %5318
        %v5320 = vsub.f32 %v5224, %v5257
        %v5321 = vsub.f32 %v5225, %v5259
        %v5322 = vsub.f32 %v5226, %v5261
        %v5323 = vsub.f32 %v5227, %v5263
        %v5324 = vsub.f32 %v5228, %v5265
        %v5325 = vsub.f32 %v5229, %v5267
        %v5326 = vsub.f32 %v5230, %v5269
        %v5327 = vsub.f32 %v5231, %v5271
        %v5328 = vsub.f32 %v5232, %v5273
        %v5329 = vsub.f32 %v5233, %v5275
        %v5330 = vsub.f32 %v5234, %v5277
        %v5331 = vsub.f32 %v5235, %v5279
        %v5332 = vsub.f32 %v5236, %v5281
        %v5333 = vsub.f32 %v5237, %v5283
        %v5334 = vsub.f32 %v5238, %v5285
        %v5335 = vsub.f32 %v5239, %v5287
        %v5336 = vsub.f32 %v5240, %v5289
        %v5337 = vsub.f32 %v5241, %v5291
        %v5338 = vsub.f32 %v5242, %v5293
        %v5339 = vsub.f32 %v5243, %v5295
        %v5340 = vsub.f32 %v5244, %v5297
        %v5341 = vsub.f32 %v5245, %v5299
        %v5342 = vsub.f32 %v5246, %v5301
        %v5343 = vsub.f32 %v5247, %v5303
        %v5344 = vsub.f32 %v5248, %v5305
        %v5345 = vsub.f32 %v5249, %v5307
        %v5346 = vsub.f32 %v5250, %v5309
        %v5347 = vsub.f32 %v5251, %v5311
        %v5348 = vsub.f32 %v5252, %v5313
        %v5349 = vsub.f32 %v5253, %v5315
        %v5350 = vsub.f32 %v5254, %v5317
        %v5351 = vsub.f32 %v5255, %v5319
        %v5352 = vmul.f32 %v5320, 1.442695
        %v5353 = vpow.pop %v5352
        %v5354 = vmul.f32 %v5321, 1.442695
        %v5355 = vpow.pop %v5354
        %v5356 = vmul.f32 %v5322, 1.442695
        %v5357 = vpow.pop %v5356
        %v5358 = vmul.f32 %v5323, 1.442695
        %v5359 = vpow.pop %v5358
        %v5360 = vmul.f32 %v5324, 1.442695
        %v5361 = vpow.pop %v5360
        %v5362 = vmul.f32 %v5325, 1.442695
        %v5363 = vpow.pop %v5362
        %v5364 = vmul.f32 %v5326, 1.442695
        %v5365 = vpow.pop %v5364
        %v5366 = vmul.f32 %v5327, 1.442695
        %v5367 = vpow.pop %v5366
        %v5368 = vmul.f32 %v5328, 1.442695
        %v5369 = vpow.pop %v5368
        %v5370 = vmul.f32 %v5329, 1.442695
        %v5371 = vpow.pop %v5370
        %v5372 = vmul.f32 %v5330, 1.442695
        %v5373 = vpow.pop %v5372
        %v5374 = vmul.f32 %v5331, 1.442695
        %v5375 = vpow.pop %v5374
        %v5376 = vmul.f32 %v5332, 1.442695
        %v5377 = vpow.pop %v5376
        %v5378 = vmul.f32 %v5333, 1.442695
        %v5379 = vpow.pop %v5378
        %v5380 = vmul.f32 %v5334, 1.442695
        %v5381 = vpow.pop %v5380
        %v5382 = vmul.f32 %v5335, 1.442695
        %v5383 = vpow.pop %v5382
        %v5384 = vmul.f32 %v5336, 1.442695
        %v5385 = vpow.pop %v5384
        %v5386 = vmul.f32 %v5337, 1.442695
        %v5387 = vpow.pop %v5386
        %v5388 = vmul.f32 %v5338, 1.442695
        %v5389 = vpow.pop %v5388
        %v5390 = vmul.f32 %v5339, 1.442695
        %v5391 = vpow.pop %v5390
        %v5392 = vmul.f32 %v5340, 1.442695
        %v5393 = vpow.pop %v5392
        %v5394 = vmul.f32 %v5341, 1.442695
        %v5395 = vpow.pop %v5394
        %v5396 = vmul.f32 %v5342, 1.442695
        %v5397 = vpow.pop %v5396
        %v5398 = vmul.f32 %v5343, 1.442695
        %v5399 = vpow.pop %v5398
        %v5400 = vmul.f32 %v5344, 1.442695
        %v5401 = vpow.pop %v5400
        %v5402 = vmul.f32 %v5345, 1.442695
        %v5403 = vpow.pop %v5402
        %v5404 = vmul.f32 %v5346, 1.442695
        %v5405 = vpow.pop %v5404
        %v5406 = vmul.f32 %v5347, 1.442695
        %v5407 = vpow.pop %v5406
        %v5408 = vmul.f32 %v5348, 1.442695
        %v5409 = vpow.pop %v5408
        %v5410 = vmul.f32 %v5349, 1.442695
        %v5411 = vpow.pop %v5410
        %v5412 = vmul.f32 %v5350, 1.442695
        %v5413 = vpow.pop %v5412
        %v5414 = vmul.f32 %v5351, 1.442695
        %v5415 = vpow.pop %v5414
        %5416 = vadd.xlane.f32.xlu0 %v5353
        %v5417 = vpop.xlane.xlu0 %5416
        %5418 = vadd.xlane.f32.xlu0 %v5355
        %v5419 = vpop.xlane.xlu0 %5418
        %5420 = vadd.xlane.f32.xlu0 %v5357
        %v5421 = vpop.xlane.xlu0 %5420
        %5422 = vadd.xlane.f32.xlu0 %v5359
        %v5423 = vpop.xlane.xlu0 %5422
        %5424 = vadd.xlane.f32.xlu0 %v5361
        %v5425 = vpop.xlane.xlu0 %5424
        %5426 = vadd.xlane.f32.xlu0 %v5363
        %v5427 = vpop.xlane.xlu0 %5426
        %5428 = vadd.xlane.f32.xlu0 %v5365
        %v5429 = vpop.xlane.xlu0 %5428
        %5430 = vadd.xlane.f32.xlu0 %v5367
        %v5431 = vpop.xlane.xlu0 %5430
        %5432 = vadd.xlane.f32.xlu0 %v5369
        %v5433 = vpop.xlane.xlu0 %5432
        %5434 = vadd.xlane.f32.xlu0 %v5371
        %v5435 = vpop.xlane.xlu0 %5434
        %5436 = vadd.xlane.f32.xlu0 %v5373
        %v5437 = vpop.xlane.xlu0 %5436
        %5438 = vadd.xlane.f32.xlu0 %v5375
        %v5439 = vpop.xlane.xlu0 %5438
        %5440 = vadd.xlane.f32.xlu0 %v5377
        %v5441 = vpop.xlane.xlu0 %5440
        %5442 = vadd.xlane.f32.xlu0 %v5379
        %v5443 = vpop.xlane.xlu0 %5442
        %5444 = vadd.xlane.f32.xlu0 %v5381
        %v5445 = vpop.xlane.xlu0 %5444
        %5446 = vadd.xlane.f32.xlu0 %v5383
        %v5447 = vpop.xlane.xlu0 %5446
        %5448 = vadd.xlane.f32.xlu0 %v5385
        %v5449 = vpop.xlane.xlu0 %5448
        %5450 = vadd.xlane.f32.xlu0 %v5387
        %v5451 = vpop.xlane.xlu0 %5450
        %5452 = vadd.xlane.f32.xlu0 %v5389
        %v5453 = vpop.xlane.xlu0 %5452
        %5454 = vadd.xlane.f32.xlu0 %v5391
        %v5455 = vpop.xlane.xlu0 %5454
        %5456 = vadd.xlane.f32.xlu0 %v5393
        %v5457 = vpop.xlane.xlu0 %5456
        %5458 = vadd.xlane.f32.xlu0 %v5395
        %v5459 = vpop.xlane.xlu0 %5458
        %5460 = vadd.xlane.f32.xlu0 %v5397
        %v5461 = vpop.xlane.xlu0 %5460
        %5462 = vadd.xlane.f32.xlu0 %v5399
        %v5463 = vpop.xlane.xlu0 %5462
        %5464 = vadd.xlane.f32.xlu0 %v5401
        %v5465 = vpop.xlane.xlu0 %5464
        %5466 = vadd.xlane.f32.xlu0 %v5403
        %v5467 = vpop.xlane.xlu0 %5466
        %5468 = vadd.xlane.f32.xlu0 %v5405
        %v5469 = vpop.xlane.xlu0 %5468
        %5470 = vadd.xlane.f32.xlu0 %v5407
        %v5471 = vpop.xlane.xlu0 %5470
        %5472 = vadd.xlane.f32.xlu0 %v5409
        %v5473 = vpop.xlane.xlu0 %5472
        %5474 = vadd.xlane.f32.xlu0 %v5411
        %v5475 = vpop.xlane.xlu0 %5474
        %5476 = vadd.xlane.f32.xlu0 %v5413
        %v5477 = vpop.xlane.xlu0 %5476
        %5478 = vadd.xlane.f32.xlu0 %v5415
        %v5479 = vpop.xlane.xlu0 %5478
        %v5480 = vrcp.pop %v5417
        %v5481 = vrcp.pop %v5419
        %v5482 = vrcp.pop %v5421
        %v5483 = vrcp.pop %v5423
        %v5484 = vrcp.pop %v5425
        %v5485 = vrcp.pop %v5427
        %v5486 = vrcp.pop %v5429
        %v5487 = vrcp.pop %v5431
        %v5488 = vrcp.pop %v5433
        %v5489 = vrcp.pop %v5435
        %v5490 = vrcp.pop %v5437
        %v5491 = vrcp.pop %v5439
        %v5492 = vrcp.pop %v5441
        %v5493 = vrcp.pop %v5443
        %v5494 = vrcp.pop %v5445
        %v5495 = vrcp.pop %v5447
        %v5496 = vrcp.pop %v5449
        %v5497 = vrcp.pop %v5451
        %v5498 = vrcp.pop %v5453
        %v5499 = vrcp.pop %v5455
        %v5500 = vrcp.pop %v5457
        %v5501 = vrcp.pop %v5459
        %v5502 = vrcp.pop %v5461
        %v5503 = vrcp.pop %v5463
        %v5504 = vrcp.pop %v5465
        %v5505 = vrcp.pop %v5467
        %v5506 = vrcp.pop %v5469
        %v5507 = vrcp.pop %v5471
        %v5508 = vrcp.pop %v5473
        %v5509 = vrcp.pop %v5475
        %v5510 = vrcp.pop %v5477
        %v5511 = vrcp.pop %v5479
        %v5512 = vmul.f32 %v5353, %v5480
        %v5513 = vmul.f32 %v5355, %v5481
        %v5514 = vmul.f32 %v5357, %v5482
        %v5515 = vmul.f32 %v5359, %v5483
        %v5516 = vmul.f32 %v5361, %v5484
        %v5517 = vmul.f32 %v5363, %v5485
        %v5518 = vmul.f32 %v5365, %v5486
        %v5519 = vmul.f32 %v5367, %v5487
        %v5520 = vmul.f32 %v5369, %v5488
        %v5521 = vmul.f32 %v5371, %v5489
        %v5522 = vmul.f32 %v5373, %v5490
        %v5523 = vmul.f32 %v5375, %v5491
        %v5524 = vmul.f32 %v5377, %v5492
        %v5525 = vmul.f32 %v5379, %v5493
        %v5526 = vmul.f32 %v5381, %v5494
        %v5527 = vmul.f32 %v5383, %v5495
        %v5528 = vmul.f32 %v5385, %v5496
        %v5529 = vmul.f32 %v5387, %v5497
        %v5530 = vmul.f32 %v5389, %v5498
        %v5531 = vmul.f32 %v5391, %v5499
        %v5532 = vmul.f32 %v5393, %v5500
        %v5533 = vmul.f32 %v5395, %v5501
        %v5534 = vmul.f32 %v5397, %v5502
        %v5535 = vmul.f32 %v5399, %v5503
        %v5536 = vmul.f32 %v5401, %v5504
        %v5537 = vmul.f32 %v5403, %v5505
        %v5538 = vmul.f32 %v5405, %v5506
        %v5539 = vmul.f32 %v5407, %v5507
        %v5540 = vmul.f32 %v5409, %v5508
        %v5541 = vmul.f32 %v5411, %v5509
        %v5542 = vmul.f32 %v5413, %v5510
        %v5543 = vmul.f32 %v5415, %v5511
        %v5544 = vpack.c.bf16 %v5513, %v5512
        %v5545 = vpack.c.bf16 %v5515, %v5514
        %v5546 = vpack.c.bf16 %v5517, %v5516
        %v5547 = vpack.c.bf16 %v5519, %v5518
        %v5548 = vpack.c.bf16 %v5521, %v5520
        %v5549 = vpack.c.bf16 %v5523, %v5522
        %v5550 = vpack.c.bf16 %v5525, %v5524
        %v5551 = vpack.c.bf16 %v5527, %v5526
        %v5552 = vpack.c.bf16 %v5529, %v5528
        %v5553 = vpack.c.bf16 %v5531, %v5530
        %v5554 = vpack.c.bf16 %v5533, %v5532
        %v5555 = vpack.c.bf16 %v5535, %v5534
        %v5556 = vpack.c.bf16 %v5537, %v5536
        %v5557 = vpack.c.bf16 %v5539, %v5538
        %v5558 = vpack.c.bf16 %v5541, %v5540
        %v5559 = vpack.c.bf16 %v5543, %v5542
        %5560 = vmatprep.subr.bf16.mxu0 0
        %5561 = vmatpush1.bf16.msra.mxu0 %v2673
        %5562 = vmatprep.subr.bf16.mxu0 0
        %5563 = vmatpush1.bf16.msra.mxu0 %v2681
        %5564 = vmatprep.subr.bf16.mxu0 0
        %5565 = vmatpush1.bf16.msra.mxu0 %v2689
        %5566 = vmatprep.subr.bf16.mxu0 0
        %5567 = vmatpush1.bf16.msra.mxu0 %v2697
        %5568 = vmatprep.subr.bf16.mxu0 0
        %5569 = vmatpush1.bf16.msra.mxu0 %v2705
        %5570 = vmatprep.subr.bf16.mxu0 0
        %5571 = vmatpush1.bf16.msra.mxu0 %v2713
        %5572 = vmatprep.subr.bf16.mxu0 0
        %5573 = vmatpush1.bf16.msra.mxu0 %v2721
        %5574 = vmatprep.subr.bf16.mxu0 0
        %5575 = vmatpush1.bf16.msra.mxu0 %v2729
        %5576 = vmatprep.subr.bf16.mxu0 0
        %5577 = vmatpush1.bf16.msra.mxu0 0
        %5578 = vmatprep.subr.bf16.mxu0 0
        %5579 = vmatpush1.bf16.msra.mxu0 0
        %5580 = vmatprep.subr.bf16.mxu0 0
        %5581 = vmatpush1.bf16.msra.mxu0 0
        %5582 = vmatprep.subr.bf16.mxu0 0
        %5583 = vmatpush1.bf16.msra.mxu0 0
        %5584 = vmatprep.subr.bf16.mxu0 0
        %5585 = vmatpush1.bf16.msra.mxu0 0
        %5586 = vmatprep.subr.bf16.mxu0 0
        %5587 = vmatpush1.bf16.msra.mxu0 0
        %5588 = vmatprep.subr.bf16.mxu0 0
        %5589 = vmatpush1.bf16.msra.mxu0 0
        %5590 = vmatprep.subr.bf16.mxu0 0
        %5591 = vmatpush1.bf16.msra.mxu0 0
        %5592 = vmatprep.mubr.bf16.mxu0 0
        %5593 = vmatmul.mubr.bf16.gmra.mrb[0].mxu0 %v5544
        %v5594 = vpop.f32.mrb[0].mxu0
        %v5595 = vadd.f32 0.0, %v5594
        %v5596 = vpop.f32.mrb[0].mxu0
        %v5597 = vpop.f32.mrb[0].mxu0
        %v5598 = vadd.f32 0.0, %v5597
        %v5599 = vpop.f32.mrb[0].mxu0
        %5600 = vmatprep.mubr.bf16.mxu0 0
        %5601 = vmatmul.mubr.bf16.gmra.mrb[0].mxu0 %v5545
        %v5602 = vpop.f32.mrb[0].mxu0
        %v5603 = vadd.f32 0.0, %v5602
        %v5604 = vpop.f32.mrb[0].mxu0
        %v5605 = vpop.f32.mrb[0].mxu0
        %v5606 = vadd.f32 0.0, %v5605
        %v5607 = vpop.f32.mrb[0].mxu0
        %5608 = vmatprep.mubr.bf16.mxu0 0
        %5609 = vmatmul.mubr.bf16.gmra.mrb[0].mxu0 %v5546
        %v5610 = vpop.f32.mrb[0].mxu0
        %v5611 = vadd.f32 0.0, %v5610
        %v5612 = vpop.f32.mrb[0].mxu0
        %v5613 = vpop.f32.mrb[0].mxu0
        %v5614 = vadd.f32 0.0, %v5613
        %v5615 = vpop.f32.mrb[0].mxu0
        %5616 = vmatprep.mubr.bf16.mxu0 0
        %5617 = vmatmul.mubr.bf16.gmra.mrb[0].mxu0 %v5547
        %v5618 = vpop.f32.mrb[0].mxu0
        %v5619 = vadd.f32 0.0, %v5618
        %v5620 = vpop.f32.mrb[0].mxu0
        %v5621 = vpop.f32.mrb[0].mxu0
        %v5622 = vadd.f32 0.0, %v5621
        %v5623 = vpop.f32.mrb[0].mxu0
        %5624 = vmatprep.mubr.bf16.mxu0 0
        %5625 = vmatmul.mubr.bf16.gmra.mrb[0].mxu0 %v5548
        %v5626 = vpop.f32.mrb[0].mxu0
        %v5627 = vadd.f32 0.0, %v5626
        %v5628 = vpop.f32.mrb[0].mxu0
        %v5629 = vpop.f32.mrb[0].mxu0
        %v5630 = vadd.f32 0.0, %v5629
        %v5631 = vpop.f32.mrb[0].mxu0
        %5632 = vmatprep.mubr.bf16.mxu0 0
        %5633 = vmatmul.mubr.bf16.gmra.mrb[0].mxu0 %v5549
        %v5634 = vpop.f32.mrb[0].mxu0
        %v5635 = vadd.f32 0.0, %v5634
        %v5636 = vpop.f32.mrb[0].mxu0
        %v5637 = vpop.f32.mrb[0].mxu0
        %v5638 = vadd.f32 0.0, %v5637
        %v5639 = vpop.f32.mrb[0].mxu0
        %5640 = vmatprep.mubr.bf16.mxu0 0
        %5641 = vmatmul.mubr.bf16.gmra.mrb[0].mxu0 %v5550
        %v5642 = vpop.f32.mrb[0].mxu0
        %v5643 = vadd.f32 0.0, %v5642
        %v5644 = vpop.f32.mrb[0].mxu0
        %v5645 = vpop.f32.mrb[0].mxu0
        %v5646 = vadd.f32 0.0, %v5645
        %v5647 = vpop.f32.mrb[0].mxu0
        %5648 = vmatprep.mubr.bf16.mxu0 0
        %5649 = vmatmul.mubr.bf16.gmra.mrb[0].mxu0 %v5551
        %v5650 = vpop.f32.mrb[0].mxu0
        %v5651 = vadd.f32 0.0, %v5650
        %v5652 = vpop.f32.mrb[0].mxu0
        %v5653 = vpop.f32.mrb[0].mxu0
        %v5654 = vadd.f32 0.0, %v5653
        %v5655 = vpop.f32.mrb[0].mxu0
        %5656 = vdwg.mxu0
        %5657 = vmatprep.subr.bf16.mxu0 0
        %5658 = vmatpush1.bf16.msra.mxu0 %v2737
        %5659 = vmatprep.subr.bf16.mxu0 0
        %5660 = vmatpush1.bf16.msra.mxu0 %v2745
        %5661 = vmatprep.subr.bf16.mxu0 0
        %5662 = vmatpush1.bf16.msra.mxu0 %v2753
        %5663 = vmatprep.subr.bf16.mxu0 0
        %5664 = vmatpush1.bf16.msra.mxu0 %v2761
        %5665 = vmatprep.subr.bf16.mxu0 0
        %5666 = vmatpush1.bf16.msra.mxu0 %v2769
        %5667 = vmatprep.subr.bf16.mxu0 0
        %5668 = vmatpush1.bf16.msra.mxu0 %v2777
        %5669 = vmatprep.subr.bf16.mxu0 0
        %5670 = vmatpush1.bf16.msra.mxu0 %v2785
        %5671 = vmatprep.subr.bf16.mxu0 0
        %5672 = vmatpush1.bf16.msra.mxu0 %v2793
        %5673 = vmatprep.subr.bf16.mxu0 0
        %5674 = vmatpush1.bf16.msra.mxu0 0
        %5675 = vmatprep.subr.bf16.mxu0 0
        %5676 = vmatpush1.bf16.msra.mxu0 0
        %5677 = vmatprep.subr.bf16.mxu0 0
        %5678 = vmatpush1.bf16.msra.mxu0 0
        %5679 = vmatprep.subr.bf16.mxu0 0
        %5680 = vmatpush1.bf16.msra.mxu0 0
        %5681 = vmatprep.subr.bf16.mxu0 0
        %5682 = vmatpush1.bf16.msra.mxu0 0
        %5683 = vmatprep.subr.bf16.mxu0 0
        %5684 = vmatpush1.bf16.msra.mxu0 0
        %5685 = vmatprep.subr.bf16.mxu0 0
        %5686 = vmatpush1.bf16.msra.mxu0 0
        %5687 = vmatprep.subr.bf16.mxu0 0
        %5688 = vmatpush1.bf16.msra.mxu0 0
        %5689 = vmatprep.mubr.bf16.mxu0 0
        %5690 = vmatmul.mubr.bf16.gmra.mrb[0].mxu0 %v5552
        %v5691 = vpop.f32.mrb[0].mxu0
        %v5692 = vadd.f32 0.0, %v5691
        %v5693 = vpop.f32.mrb[0].mxu0
        %v5694 = vpop.f32.mrb[0].mxu0
        %v5695 = vadd.f32 0.0, %v5694
        %v5696 = vpop.f32.mrb[0].mxu0
        %5697 = vmatprep.mubr.bf16.mxu0 0
        %5698 = vmatmul.mubr.bf16.gmra.mrb[0].mxu0 %v5553
        %v5699 = vpop.f32.mrb[0].mxu0
        %v5700 = vadd.f32 0.0, %v5699
        %v5701 = vpop.f32.mrb[0].mxu0
        %v5702 = vpop.f32.mrb[0].mxu0
        %v5703 = vadd.f32 0.0, %v5702
        %v5704 = vpop.f32.mrb[0].mxu0
        %5705 = vmatprep.mubr.bf16.mxu0 0
        %5706 = vmatmul.mubr.bf16.gmra.mrb[0].mxu0 %v5554
        %v5707 = vpop.f32.mrb[0].mxu0
        %v5708 = vadd.f32 0.0, %v5707
        %v5709 = vpop.f32.mrb[0].mxu0
        %v5710 = vpop.f32.mrb[0].mxu0
        %v5711 = vadd.f32 0.0, %v5710
        %v5712 = vpop.f32.mrb[0].mxu0
        %5713 = vmatprep.mubr.bf16.mxu0 0
        %5714 = vmatmul.mubr.bf16.gmra.mrb[0].mxu0 %v5555
        %v5715 = vpop.f32.mrb[0].mxu0
        %v5716 = vadd.f32 0.0, %v5715
        %v5717 = vpop.f32.mrb[0].mxu0
        %v5718 = vpop.f32.mrb[0].mxu0
        %v5719 = vadd.f32 0.0, %v5718
        %v5720 = vpop.f32.mrb[0].mxu0
        %5721 = vmatprep.mubr.bf16.mxu0 0
        %5722 = vmatmul.mubr.bf16.gmra.mrb[0].mxu0 %v5556
        %v5723 = vpop.f32.mrb[0].mxu0
        %v5724 = vadd.f32 0.0, %v5723
        %v5725 = vpop.f32.mrb[0].mxu0
        %v5726 = vpop.f32.mrb[0].mxu0
        %v5727 = vadd.f32 0.0, %v5726
        %v5728 = vpop.f32.mrb[0].mxu0
        %5729 = vmatprep.mubr.bf16.mxu0 0
        %5730 = vmatmul.mubr.bf16.gmra.mrb[0].mxu0 %v5557
        %v5731 = vpop.f32.mrb[0].mxu0
        %v5732 = vadd.f32 0.0, %v5731
        %v5733 = vpop.f32.mrb[0].mxu0
        %v5734 = vpop.f32.mrb[0].mxu0
        %v5735 = vadd.f32 0.0, %v5734
        %v5736 = vpop.f32.mrb[0].mxu0
        %5737 = vmatprep.mubr.bf16.mxu0 0
        %5738 = vmatmul.mubr.bf16.gmra.mrb[0].mxu0 %v5558
        %v5739 = vpop.f32.mrb[0].mxu0
        %v5740 = vadd.f32 0.0, %v5739
        %v5741 = vpop.f32.mrb[0].mxu0
        %v5742 = vpop.f32.mrb[0].mxu0
        %v5743 = vadd.f32 0.0, %v5742
        %v5744 = vpop.f32.mrb[0].mxu0
        %5745 = vmatprep.mubr.bf16.mxu0 0
        %5746 = vmatmul.mubr.bf16.gmra.mrb[0].mxu0 %v5559
        %v5747 = vpop.f32.mrb[0].mxu0
        %v5748 = vadd.f32 0.0, %v5747
        %v5749 = vpop.f32.mrb[0].mxu0
        %v5750 = vpop.f32.mrb[0].mxu0
        %v5751 = vadd.f32 0.0, %v5750
        %v5752 = vpop.f32.mrb[0].mxu0
        %5753 = vdwg.mxu0
        %v5754 = vadd.f32 %v4998, %v5595
        %v5755 = vadd.f32 %v4999, %v5598
        %v5756 = vadd.f32 %v5000, %v5603
        %v5757 = vadd.f32 %v5001, %v5606
        %v5758 = vadd.f32 %v5002, %v5611
        %v5759 = vadd.f32 %v5003, %v5614
        %v5760 = vadd.f32 %v5004, %v5619
        %v5761 = vadd.f32 %v5005, %v5622
        %v5762 = vadd.f32 %v5006, %v5627
        %v5763 = vadd.f32 %v5007, %v5630
        %v5764 = vadd.f32 %v5008, %v5635
        %v5765 = vadd.f32 %v5009, %v5638
        %v5766 = vadd.f32 %v5010, %v5643
        %v5767 = vadd.f32 %v5011, %v5646
        %v5768 = vadd.f32 %v5012, %v5651
        %v5769 = vadd.f32 %v5013, %v5654
        %v5770 = vadd.f32 %v5014, %v5692
        %v5771 = vadd.f32 %v5015, %v5695
        %v5772 = vadd.f32 %v5016, %v5700
        %v5773 = vadd.f32 %v5017, %v5703
        %v5774 = vadd.f32 %v5018, %v5708
        %v5775 = vadd.f32 %v5019, %v5711
        %v5776 = vadd.f32 %v5020, %v5716
        %v5777 = vadd.f32 %v5021, %v5719
        %v5778 = vadd.f32 %v5022, %v5724
        %v5779 = vadd.f32 %v5023, %v5727
        %v5780 = vadd.f32 %v5024, %v5732
        %v5781 = vadd.f32 %v5025, %v5735
        %v5782 = vadd.f32 %v5026, %v5740
        %v5783 = vadd.f32 %v5027, %v5743
        %v5784 = vadd.f32 %v5028, %v5748
        %v5785 = vadd.f32 %v5029, %v5751
        %v5786 = vadd.f32 %v996, %v5754
        %v5787 = vadd.f32 %v997, %v5755
        %v5788 = vadd.f32 %v998, %v5756
        %v5789 = vadd.f32 %v999, %v5757
        %v5790 = vadd.f32 %v1000, %v5758
        %v5791 = vadd.f32 %v1001, %v5759
        %v5792 = vadd.f32 %v1002, %v5760
        %v5793 = vadd.f32 %v1003, %v5761
        %v5794 = vadd.f32 %v1004, %v5762
        %v5795 = vadd.f32 %v1005, %v5763
        %v5796 = vadd.f32 %v1006, %v5764
        %v5797 = vadd.f32 %v1007, %v5765
        %v5798 = vadd.f32 %v1008, %v5766
        %v5799 = vadd.f32 %v1009, %v5767
        %v5800 = vadd.f32 %v1010, %v5768
        %v5801 = vadd.f32 %v1011, %v5769
        %v5802 = vadd.f32 %v1012, %v5770
        %v5803 = vadd.f32 %v1013, %v5771
        %v5804 = vadd.f32 %v1014, %v5772
        %v5805 = vadd.f32 %v1015, %v5773
        %v5806 = vadd.f32 %v1016, %v5774
        %v5807 = vadd.f32 %v1017, %v5775
        %v5808 = vadd.f32 %v1018, %v5776
        %v5809 = vadd.f32 %v1019, %v5777
        %v5810 = vadd.f32 %v1020, %v5778
        %v5811 = vadd.f32 %v1021, %v5779
        %v5812 = vadd.f32 %v1022, %v5780
        %v5813 = vadd.f32 %v1023, %v5781
        %v5814 = vadd.f32 %v1024, %v5782
        %v5815 = vadd.f32 %v1025, %v5783
        %v5816 = vadd.f32 %v1026, %v5784
        %v5817 = vadd.f32 %v1027, %v5785
        %v5818 = vld [vmem:[%s767] sm:$0x1]
        %v5820 = vlaneseq
        %v5821 = vshrl.u32 %v5820, 7
        %v5822 = vsub.s32 0, %v5821
        %v5823 = vrot.slane %v5818, %v5822
        %v5825 = vadd.f32 %v5786, %v5823
        %v5826 = vadd.f32 %v5787, %v5823
        %v5827 = vadd.f32 %v5788, %v5823
        %v5828 = vadd.f32 %v5789, %v5823
        %v5829 = vadd.f32 %v5790, %v5823
        %v5830 = vadd.f32 %v5791, %v5823
        %v5831 = vadd.f32 %v5792, %v5823
        %v5832 = vadd.f32 %v5793, %v5823
        %v5833 = vadd.f32 %v5794, %v5823
        %v5834 = vadd.f32 %v5795, %v5823
        %v5835 = vadd.f32 %v5796, %v5823
        %v5836 = vadd.f32 %v5797, %v5823
        %v5837 = vadd.f32 %v5798, %v5823
        %v5838 = vadd.f32 %v5799, %v5823
        %v5839 = vadd.f32 %v5800, %v5823
        %v5840 = vadd.f32 %v5801, %v5823
        %v5841 = vadd.f32 %v5802, %v5823
        %v5842 = vadd.f32 %v5803, %v5823
        %v5843 = vadd.f32 %v5804, %v5823
        %v5844 = vadd.f32 %v5805, %v5823
        %v5845 = vadd.f32 %v5806, %v5823
        %v5846 = vadd.f32 %v5807, %v5823
        %v5847 = vadd.f32 %v5808, %v5823
        %v5848 = vadd.f32 %v5809, %v5823
        %v5849 = vadd.f32 %v5810, %v5823
        %v5850 = vadd.f32 %v5811, %v5823
        %v5851 = vadd.f32 %v5812, %v5823
        %v5852 = vadd.f32 %v5813, %v5823
        %v5853 = vadd.f32 %v5814, %v5823
        %v5854 = vadd.f32 %v5815, %v5823
        %v5855 = vadd.f32 %v5816, %v5823
        %v5856 = vadd.f32 %v5817, %v5823
        %v5857 = vld [vmem:[%s775] sm:$0x1]
        %v5858 = vld [vmem:[%s783] sm:$0x1]
        %5859 = vadd.xlane.f32.xlu0 %v5825
        %v5860 = vpop.xlane.xlu0 %5859
        %5861 = vadd.xlane.f32.xlu0 %v5826
        %v5862 = vpop.xlane.xlu0 %5861
        %5863 = vadd.xlane.f32.xlu0 %v5827
        %v5864 = vpop.xlane.xlu0 %5863
        %5865 = vadd.xlane.f32.xlu0 %v5828
        %v5866 = vpop.xlane.xlu0 %5865
        %5867 = vadd.xlane.f32.xlu0 %v5829
        %v5868 = vpop.xlane.xlu0 %5867
        %5869 = vadd.xlane.f32.xlu0 %v5830
        %v5870 = vpop.xlane.xlu0 %5869
        %5871 = vadd.xlane.f32.xlu0 %v5831
        %v5872 = vpop.xlane.xlu0 %5871
        %5873 = vadd.xlane.f32.xlu0 %v5832
        %v5874 = vpop.xlane.xlu0 %5873
        %5875 = vadd.xlane.f32.xlu0 %v5833
        %v5876 = vpop.xlane.xlu0 %5875
        %5877 = vadd.xlane.f32.xlu0 %v5834
        %v5878 = vpop.xlane.xlu0 %5877
        %5879 = vadd.xlane.f32.xlu0 %v5835
        %v5880 = vpop.xlane.xlu0 %5879
        %5881 = vadd.xlane.f32.xlu0 %v5836
        %v5882 = vpop.xlane.xlu0 %5881
        %5883 = vadd.xlane.f32.xlu0 %v5837
        %v5884 = vpop.xlane.xlu0 %5883
        %5885 = vadd.xlane.f32.xlu0 %v5838
        %v5886 = vpop.xlane.xlu0 %5885
        %5887 = vadd.xlane.f32.xlu0 %v5839
        %v5888 = vpop.xlane.xlu0 %5887
        %5889 = vadd.xlane.f32.xlu0 %v5840
        %v5890 = vpop.xlane.xlu0 %5889
        %5891 = vadd.xlane.f32.xlu0 %v5841
        %v5892 = vpop.xlane.xlu0 %5891
        %5893 = vadd.xlane.f32.xlu0 %v5842
        %v5894 = vpop.xlane.xlu0 %5893
        %5895 = vadd.xlane.f32.xlu0 %v5843
        %v5896 = vpop.xlane.xlu0 %5895
        %5897 = vadd.xlane.f32.xlu0 %v5844
        %v5898 = vpop.xlane.xlu0 %5897
        %5899 = vadd.xlane.f32.xlu0 %v5845
        %v5900 = vpop.xlane.xlu0 %5899
        %5901 = vadd.xlane.f32.xlu0 %v5846
        %v5902 = vpop.xlane.xlu0 %5901
        %5903 = vadd.xlane.f32.xlu0 %v5847
        %v5904 = vpop.xlane.xlu0 %5903
        %5905 = vadd.xlane.f32.xlu0 %v5848
        %v5906 = vpop.xlane.xlu0 %5905
        %5907 = vadd.xlane.f32.xlu0 %v5849
        %v5908 = vpop.xlane.xlu0 %5907
        %5909 = vadd.xlane.f32.xlu0 %v5850
        %v5910 = vpop.xlane.xlu0 %5909
        %5911 = vadd.xlane.f32.xlu0 %v5851
        %v5912 = vpop.xlane.xlu0 %5911
        %5913 = vadd.xlane.f32.xlu0 %v5852
        %v5914 = vpop.xlane.xlu0 %5913
        %5915 = vadd.xlane.f32.xlu0 %v5853
        %v5916 = vpop.xlane.xlu0 %5915
        %5917 = vadd.xlane.f32.xlu0 %v5854
        %v5918 = vpop.xlane.xlu0 %5917
        %5919 = vadd.xlane.f32.xlu0 %v5855
        %v5920 = vpop.xlane.xlu0 %5919
        %5921 = vadd.xlane.f32.xlu0 %v5856
        %v5922 = vpop.xlane.xlu0 %5921
        %v5923 = vmul.f32 %v5860, %v1129
        %v5924 = vmul.f32 %v5862, %v1129
        %v5925 = vmul.f32 %v5864, %v1129
        %v5926 = vmul.f32 %v5866, %v1129
        %v5927 = vmul.f32 %v5868, %v1129
        %v5928 = vmul.f32 %v5870, %v1129
        %v5929 = vmul.f32 %v5872, %v1129
        %v5930 = vmul.f32 %v5874, %v1129
        %v5931 = vmul.f32 %v5876, %v1129
        %v5932 = vmul.f32 %v5878, %v1129
        %v5933 = vmul.f32 %v5880, %v1129
        %v5934 = vmul.f32 %v5882, %v1129
        %v5935 = vmul.f32 %v5884, %v1129
        %v5936 = vmul.f32 %v5886, %v1129
        %v5937 = vmul.f32 %v5888, %v1129
        %v5938 = vmul.f32 %v5890, %v1129
        %v5939 = vmul.f32 %v5892, %v1129
        %v5940 = vmul.f32 %v5894, %v1129
        %v5941 = vmul.f32 %v5896, %v1129
        %v5942 = vmul.f32 %v5898, %v1129
        %v5943 = vmul.f32 %v5900, %v1129
        %v5944 = vmul.f32 %v5902, %v1129
        %v5945 = vmul.f32 %v5904, %v1129
        %v5946 = vmul.f32 %v5906, %v1129
        %v5947 = vmul.f32 %v5908, %v1129
        %v5948 = vmul.f32 %v5910, %v1129
        %v5949 = vmul.f32 %v5912, %v1129
        %v5950 = vmul.f32 %v5914, %v1129
        %v5951 = vmul.f32 %v5916, %v1129
        %v5952 = vmul.f32 %v5918, %v1129
        %v5953 = vmul.f32 %v5920, %v1129
        %v5954 = vmul.f32 %v5922, %v1129
        %v5955 = vsub.f32 %v5825, %v5923
        %v5956 = vsub.f32 %v5826, %v5924
        %v5957 = vsub.f32 %v5827, %v5925
        %v5958 = vsub.f32 %v5828, %v5926
        %v5959 = vsub.f32 %v5829, %v5927
        %v5960 = vsub.f32 %v5830, %v5928
        %v5961 = vsub.f32 %v5831, %v5929
        %v5962 = vsub.f32 %v5832, %v5930
        %v5963 = vsub.f32 %v5833, %v5931
        %v5964 = vsub.f32 %v5834, %v5932
        %v5965 = vsub.f32 %v5835, %v5933
        %v5966 = vsub.f32 %v5836, %v5934
        %v5967 = vsub.f32 %v5837, %v5935
        %v5968 = vsub.f32 %v5838, %v5936
        %v5969 = vsub.f32 %v5839, %v5937
        %v5970 = vsub.f32 %v5840, %v5938
        %v5971 = vsub.f32 %v5841, %v5939
        %v5972 = vsub.f32 %v5842, %v5940
        %v5973 = vsub.f32 %v5843, %v5941
        %v5974 = vsub.f32 %v5844, %v5942
        %v5975 = vsub.f32 %v5845, %v5943
        %v5976 = vsub.f32 %v5846, %v5944
        %v5977 = vsub.f32 %v5847, %v5945
        %v5978 = vsub.f32 %v5848, %v5946
        %v5979 = vsub.f32 %v5849, %v5947
        %v5980 = vsub.f32 %v5850, %v5948
        %v5981 = vsub.f32 %v5851, %v5949
        %v5982 = vsub.f32 %v5852, %v5950
        %v5983 = vsub.f32 %v5853, %v5951
        %v5984 = vsub.f32 %v5854, %v5952
        %v5985 = vsub.f32 %v5855, %v5953
        %v5986 = vsub.f32 %v5856, %v5954
        %v5987 = vmul.f32 %v5955, %v5955
        %v5988 = vmul.f32 %v5956, %v5956
        %v5989 = vmul.f32 %v5957, %v5957
        %v5990 = vmul.f32 %v5958, %v5958
        %v5991 = vmul.f32 %v5959, %v5959
        %v5992 = vmul.f32 %v5960, %v5960
        %v5993 = vmul.f32 %v5961, %v5961
        %v5994 = vmul.f32 %v5962, %v5962
        %v5995 = vmul.f32 %v5963, %v5963
        %v5996 = vmul.f32 %v5964, %v5964
        %v5997 = vmul.f32 %v5965, %v5965
        %v5998 = vmul.f32 %v5966, %v5966
        %v5999 = vmul.f32 %v5967, %v5967
        %v6000 = vmul.f32 %v5968, %v5968
        %v6001 = vmul.f32 %v5969, %v5969
        %v6002 = vmul.f32 %v5970, %v5970
        %v6003 = vmul.f32 %v5971, %v5971
        %v6004 = vmul.f32 %v5972, %v5972
        %v6005 = vmul.f32 %v5973, %v5973
        %v6006 = vmul.f32 %v5974, %v5974
        %v6007 = vmul.f32 %v5975, %v5975
        %v6008 = vmul.f32 %v5976, %v5976
        %v6009 = vmul.f32 %v5977, %v5977
        %v6010 = vmul.f32 %v5978, %v5978
        %v6011 = vmul.f32 %v5979, %v5979
        %v6012 = vmul.f32 %v5980, %v5980
        %v6013 = vmul.f32 %v5981, %v5981
        %v6014 = vmul.f32 %v5982, %v5982
        %v6015 = vmul.f32 %v5983, %v5983
        %v6016 = vmul.f32 %v5984, %v5984
        %v6017 = vmul.f32 %v5985, %v5985
        %v6018 = vmul.f32 %v5986, %v5986
        %6019 = vadd.xlane.f32.xlu0 %v5987
        %v6020 = vpop.xlane.xlu0 %6019
        %6021 = vadd.xlane.f32.xlu0 %v5988
        %v6022 = vpop.xlane.xlu0 %6021
        %6023 = vadd.xlane.f32.xlu0 %v5989
        %v6024 = vpop.xlane.xlu0 %6023
        %6025 = vadd.xlane.f32.xlu0 %v5990
        %v6026 = vpop.xlane.xlu0 %6025
        %6027 = vadd.xlane.f32.xlu0 %v5991
        %v6028 = vpop.xlane.xlu0 %6027
        %6029 = vadd.xlane.f32.xlu0 %v5992
        %v6030 = vpop.xlane.xlu0 %6029
        %6031 = vadd.xlane.f32.xlu0 %v5993
        %v6032 = vpop.xlane.xlu0 %6031
        %6033 = vadd.xlane.f32.xlu0 %v5994
        %v6034 = vpop.xlane.xlu0 %6033
        %6035 = vadd.xlane.f32.xlu0 %v5995
        %v6036 = vpop.xlane.xlu0 %6035
        %6037 = vadd.xlane.f32.xlu0 %v5996
        %v6038 = vpop.xlane.xlu0 %6037
        %6039 = vadd.xlane.f32.xlu0 %v5997
        %v6040 = vpop.xlane.xlu0 %6039
        %6041 = vadd.xlane.f32.xlu0 %v5998
        %v6042 = vpop.xlane.xlu0 %6041
        %6043 = vadd.xlane.f32.xlu0 %v5999
        %v6044 = vpop.xlane.xlu0 %6043
        %6045 = vadd.xlane.f32.xlu0 %v6000
        %v6046 = vpop.xlane.xlu0 %6045
        %6047 = vadd.xlane.f32.xlu0 %v6001
        %v6048 = vpop.xlane.xlu0 %6047
        %6049 = vadd.xlane.f32.xlu0 %v6002
        %v6050 = vpop.xlane.xlu0 %6049
        %6051 = vadd.xlane.f32.xlu0 %v6003
        %v6052 = vpop.xlane.xlu0 %6051
        %6053 = vadd.xlane.f32.xlu0 %v6004
        %v6054 = vpop.xlane.xlu0 %6053
        %6055 = vadd.xlane.f32.xlu0 %v6005
        %v6056 = vpop.xlane.xlu0 %6055
        %6057 = vadd.xlane.f32.xlu0 %v6006
        %v6058 = vpop.xlane.xlu0 %6057
        %6059 = vadd.xlane.f32.xlu0 %v6007
        %v6060 = vpop.xlane.xlu0 %6059
        %6061 = vadd.xlane.f32.xlu0 %v6008
        %v6062 = vpop.xlane.xlu0 %6061
        %6063 = vadd.xlane.f32.xlu0 %v6009
        %v6064 = vpop.xlane.xlu0 %6063
        %6065 = vadd.xlane.f32.xlu0 %v6010
        %v6066 = vpop.xlane.xlu0 %6065
        %6067 = vadd.xlane.f32.xlu0 %v6011
        %v6068 = vpop.xlane.xlu0 %6067
        %6069 = vadd.xlane.f32.xlu0 %v6012
        %v6070 = vpop.xlane.xlu0 %6069
        %6071 = vadd.xlane.f32.xlu0 %v6013
        %v6072 = vpop.xlane.xlu0 %6071
        %6073 = vadd.xlane.f32.xlu0 %v6014
        %v6074 = vpop.xlane.xlu0 %6073
        %6075 = vadd.xlane.f32.xlu0 %v6015
        %v6076 = vpop.xlane.xlu0 %6075
        %6077 = vadd.xlane.f32.xlu0 %v6016
        %v6078 = vpop.xlane.xlu0 %6077
        %6079 = vadd.xlane.f32.xlu0 %v6017
        %v6080 = vpop.xlane.xlu0 %6079
        %6081 = vadd.xlane.f32.xlu0 %v6018
        %v6082 = vpop.xlane.xlu0 %6081
        %v6083 = vmul.f32 %v6020, %v1129
        %v6084 = vmul.f32 %v6022, %v1129
        %v6085 = vmul.f32 %v6024, %v1129
        %v6086 = vmul.f32 %v6026, %v1129
        %v6087 = vmul.f32 %v6028, %v1129
        %v6088 = vmul.f32 %v6030, %v1129
        %v6089 = vmul.f32 %v6032, %v1129
        %v6090 = vmul.f32 %v6034, %v1129
        %v6091 = vmul.f32 %v6036, %v1129
        %v6092 = vmul.f32 %v6038, %v1129
        %v6093 = vmul.f32 %v6040, %v1129
        %v6094 = vmul.f32 %v6042, %v1129
        %v6095 = vmul.f32 %v6044, %v1129
        %v6096 = vmul.f32 %v6046, %v1129
        %v6097 = vmul.f32 %v6048, %v1129
        %v6098 = vmul.f32 %v6050, %v1129
        %v6099 = vmul.f32 %v6052, %v1129
        %v6100 = vmul.f32 %v6054, %v1129
        %v6101 = vmul.f32 %v6056, %v1129
        %v6102 = vmul.f32 %v6058, %v1129
        %v6103 = vmul.f32 %v6060, %v1129
        %v6104 = vmul.f32 %v6062, %v1129
        %v6105 = vmul.f32 %v6064, %v1129
        %v6106 = vmul.f32 %v6066, %v1129
        %v6107 = vmul.f32 %v6068, %v1129
        %v6108 = vmul.f32 %v6070, %v1129
        %v6109 = vmul.f32 %v6072, %v1129
        %v6110 = vmul.f32 %v6074, %v1129
        %v6111 = vmul.f32 %v6076, %v1129
        %v6112 = vmul.f32 %v6078, %v1129
        %v6113 = vmul.f32 %v6080, %v1129
        %v6114 = vmul.f32 %v6082, %v1129
        %v6115 = vadd.f32 %v6083, 1e-05
        %v6116 = vadd.f32 %v6084, 1e-05
        %v6117 = vadd.f32 %v6085, 1e-05
        %v6118 = vadd.f32 %v6086, 1e-05
        %v6119 = vadd.f32 %v6087, 1e-05
        %v6120 = vadd.f32 %v6088, 1e-05
        %v6121 = vadd.f32 %v6089, 1e-05
        %v6122 = vadd.f32 %v6090, 1e-05
        %v6123 = vadd.f32 %v6091, 1e-05
        %v6124 = vadd.f32 %v6092, 1e-05
        %v6125 = vadd.f32 %v6093, 1e-05
        %v6126 = vadd.f32 %v6094, 1e-05
        %v6127 = vadd.f32 %v6095, 1e-05
        %v6128 = vadd.f32 %v6096, 1e-05
        %v6129 = vadd.f32 %v6097, 1e-05
        %v6130 = vadd.f32 %v6098, 1e-05
        %v6131 = vadd.f32 %v6099, 1e-05
        %v6132 = vadd.f32 %v6100, 1e-05
        %v6133 = vadd.f32 %v6101, 1e-05
        %v6134 = vadd.f32 %v6102, 1e-05
        %v6135 = vadd.f32 %v6103, 1e-05
        %v6136 = vadd.f32 %v6104, 1e-05
        %v6137 = vadd.f32 %v6105, 1e-05
        %v6138 = vadd.f32 %v6106, 1e-05
        %v6139 = vadd.f32 %v6107, 1e-05
        %v6140 = vadd.f32 %v6108, 1e-05
        %v6141 = vadd.f32 %v6109, 1e-05
        %v6142 = vadd.f32 %v6110, 1e-05
        %v6143 = vadd.f32 %v6111, 1e-05
        %v6144 = vadd.f32 %v6112, 1e-05
        %v6145 = vadd.f32 %v6113, 1e-05
        %v6146 = vadd.f32 %v6114, 1e-05
        %v6147 = vrsqrt.pop %v6115
        %v6148 = vrsqrt.pop %v6116
        %v6149 = vrsqrt.pop %v6117
        %v6150 = vrsqrt.pop %v6118
        %v6151 = vrsqrt.pop %v6119
        %v6152 = vrsqrt.pop %v6120
        %v6153 = vrsqrt.pop %v6121
        %v6154 = vrsqrt.pop %v6122
        %v6155 = vrsqrt.pop %v6123
        %v6156 = vrsqrt.pop %v6124
        %v6157 = vrsqrt.pop %v6125
        %v6158 = vrsqrt.pop %v6126
        %v6159 = vrsqrt.pop %v6127
        %v6160 = vrsqrt.pop %v6128
        %v6161 = vrsqrt.pop %v6129
        %v6162 = vrsqrt.pop %v6130
        %v6163 = vrsqrt.pop %v6131
        %v6164 = vrsqrt.pop %v6132
        %v6165 = vrsqrt.pop %v6133
        %v6166 = vrsqrt.pop %v6134
        %v6167 = vrsqrt.pop %v6135
        %v6168 = vrsqrt.pop %v6136
        %v6169 = vrsqrt.pop %v6137
        %v6170 = vrsqrt.pop %v6138
        %v6171 = vrsqrt.pop %v6139
        %v6172 = vrsqrt.pop %v6140
        %v6173 = vrsqrt.pop %v6141
        %v6174 = vrsqrt.pop %v6142
        %v6175 = vrsqrt.pop %v6143
        %v6176 = vrsqrt.pop %v6144
        %v6177 = vrsqrt.pop %v6145
        %v6178 = vrsqrt.pop %v6146
        %v6179 = vmul.f32 %v5955, %v6147
        %v6180 = vmul.f32 %v5956, %v6148
        %v6181 = vmul.f32 %v5957, %v6149
        %v6182 = vmul.f32 %v5958, %v6150
        %v6183 = vmul.f32 %v5959, %v6151
        %v6184 = vmul.f32 %v5960, %v6152
        %v6185 = vmul.f32 %v5961, %v6153
        %v6186 = vmul.f32 %v5962, %v6154
        %v6187 = vmul.f32 %v5963, %v6155
        %v6188 = vmul.f32 %v5964, %v6156
        %v6189 = vmul.f32 %v5965, %v6157
        %v6190 = vmul.f32 %v5966, %v6158
        %v6191 = vmul.f32 %v5967, %v6159
        %v6192 = vmul.f32 %v5968, %v6160
        %v6193 = vmul.f32 %v5969, %v6161
        %v6194 = vmul.f32 %v5970, %v6162
        %v6195 = vmul.f32 %v5971, %v6163
        %v6196 = vmul.f32 %v5972, %v6164
        %v6197 = vmul.f32 %v5973, %v6165
        %v6198 = vmul.f32 %v5974, %v6166
        %v6199 = vmul.f32 %v5975, %v6167
        %v6200 = vmul.f32 %v5976, %v6168
        %v6201 = vmul.f32 %v5977, %v6169
        %v6202 = vmul.f32 %v5978, %v6170
        %v6203 = vmul.f32 %v5979, %v6171
        %v6204 = vmul.f32 %v5980, %v6172
        %v6205 = vmul.f32 %v5981, %v6173
        %v6206 = vmul.f32 %v5982, %v6174
        %v6207 = vmul.f32 %v5983, %v6175
        %v6208 = vmul.f32 %v5984, %v6176
        %v6209 = vmul.f32 %v5985, %v6177
        %v6210 = vmul.f32 %v5986, %v6178
        %v6212 = vlaneseq
        %v6213 = vshrl.u32 %v6212, 7
        %v6214 = vsub.s32 0, %v6213
        %v6215 = vrot.slane %v5857, %v6214
        %v6217 = vmul.f32 %v6179, %v6215
        %v6218 = vmul.f32 %v6180, %v6215
        %v6219 = vmul.f32 %v6181, %v6215
        %v6220 = vmul.f32 %v6182, %v6215
        %v6221 = vmul.f32 %v6183, %v6215
        %v6222 = vmul.f32 %v6184, %v6215
        %v6223 = vmul.f32 %v6185, %v6215
        %v6224 = vmul.f32 %v6186, %v6215
        %v6225 = vmul.f32 %v6187, %v6215
        %v6226 = vmul.f32 %v6188, %v6215
        %v6227 = vmul.f32 %v6189, %v6215
        %v6228 = vmul.f32 %v6190, %v6215
        %v6229 = vmul.f32 %v6191, %v6215
        %v6230 = vmul.f32 %v6192, %v6215
        %v6231 = vmul.f32 %v6193, %v6215
        %v6232 = vmul.f32 %v6194, %v6215
        %v6233 = vmul.f32 %v6195, %v6215
        %v6234 = vmul.f32 %v6196, %v6215
        %v6235 = vmul.f32 %v6197, %v6215
        %v6236 = vmul.f32 %v6198, %v6215
        %v6237 = vmul.f32 %v6199, %v6215
        %v6238 = vmul.f32 %v6200, %v6215
        %v6239 = vmul.f32 %v6201, %v6215
        %v6240 = vmul.f32 %v6202, %v6215
        %v6241 = vmul.f32 %v6203, %v6215
        %v6242 = vmul.f32 %v6204, %v6215
        %v6243 = vmul.f32 %v6205, %v6215
        %v6244 = vmul.f32 %v6206, %v6215
        %v6245 = vmul.f32 %v6207, %v6215
        %v6246 = vmul.f32 %v6208, %v6215
        %v6247 = vmul.f32 %v6209, %v6215
        %v6248 = vmul.f32 %v6210, %v6215
        %v6250 = vlaneseq
        %v6251 = vshrl.u32 %v6250, 7
        %v6252 = vsub.s32 0, %v6251
        %v6253 = vrot.slane %v5858, %v6252
        %v6255 = vadd.f32 %v6217, %v6253
        %v6256 = vadd.f32 %v6218, %v6253
        %v6257 = vadd.f32 %v6219, %v6253
        %v6258 = vadd.f32 %v6220, %v6253
        %v6259 = vadd.f32 %v6221, %v6253
        %v6260 = vadd.f32 %v6222, %v6253
        %v6261 = vadd.f32 %v6223, %v6253
        %v6262 = vadd.f32 %v6224, %v6253
        %v6263 = vadd.f32 %v6225, %v6253
        %v6264 = vadd.f32 %v6226, %v6253
        %v6265 = vadd.f32 %v6227, %v6253
        %v6266 = vadd.f32 %v6228, %v6253
        %v6267 = vadd.f32 %v6229, %v6253
        %v6268 = vadd.f32 %v6230, %v6253
        %v6269 = vadd.f32 %v6231, %v6253
        %v6270 = vadd.f32 %v6232, %v6253
        %v6271 = vadd.f32 %v6233, %v6253
        %v6272 = vadd.f32 %v6234, %v6253
        %v6273 = vadd.f32 %v6235, %v6253
        %v6274 = vadd.f32 %v6236, %v6253
        %v6275 = vadd.f32 %v6237, %v6253
        %v6276 = vadd.f32 %v6238, %v6253
        %v6277 = vadd.f32 %v6239, %v6253
        %v6278 = vadd.f32 %v6240, %v6253
        %v6279 = vadd.f32 %v6241, %v6253
        %v6280 = vadd.f32 %v6242, %v6253
        %v6281 = vadd.f32 %v6243, %v6253
        %v6282 = vadd.f32 %v6244, %v6253
        %v6283 = vadd.f32 %v6245, %v6253
        %v6284 = vadd.f32 %v6246, %v6253
        %v6285 = vadd.f32 %v6247, %v6253
        %v6286 = vadd.f32 %v6248, %v6253
        %v6287 = vpack.c.bf16 %v6256, %v6255
        %v6288 = vpack.c.bf16 %v6258, %v6257
        %v6289 = vpack.c.bf16 %v6260, %v6259
        %v6290 = vpack.c.bf16 %v6262, %v6261
        %v6291 = vpack.c.bf16 %v6264, %v6263
        %v6292 = vpack.c.bf16 %v6266, %v6265
        %v6293 = vpack.c.bf16 %v6268, %v6267
        %v6294 = vpack.c.bf16 %v6270, %v6269
        %v6295 = vpack.c.bf16 %v6272, %v6271
        %v6296 = vpack.c.bf16 %v6274, %v6273
        %v6297 = vpack.c.bf16 %v6276, %v6275
        %v6298 = vpack.c.bf16 %v6278, %v6277
        %v6299 = vpack.c.bf16 %v6280, %v6279
        %v6300 = vpack.c.bf16 %v6282, %v6281
        %v6301 = vpack.c.bf16 %v6284, %v6283
        %v6302 = vpack.c.bf16 %v6286, %v6285
        %v6303 = vld [vmem:[%s792] sm:$0xff]
        %v6304 = vld [vmem:[%s792 + $0x8] sm:$0xff]
        %v6305 = vld [vmem:[%s792 + $0x10] sm:$0xff]
        %v6306 = vld [vmem:[%s792 + $0x18] sm:$0xff]
        %v6307 = vld [vmem:[%s792 + $0x20] sm:$0xff]
        %v6308 = vld [vmem:[%s792 + $0x28] sm:$0xff]
        %v6309 = vld [vmem:[%s792 + $0x30] sm:$0xff]
        %v6310 = vld [vmem:[%s792 + $0x38] sm:$0xff]
        %v6311 = vld [vmem:[%s792 + $0x40] sm:$0xff]
        %v6312 = vld [vmem:[%s792 + $0x48] sm:$0xff]
        %v6313 = vld [vmem:[%s792 + $0x50] sm:$0xff]
        %v6314 = vld [vmem:[%s792 + $0x58] sm:$0xff]
        %v6315 = vld [vmem:[%s792 + $0x60] sm:$0xff]
        %v6316 = vld [vmem:[%s792 + $0x68] sm:$0xff]
        %v6317 = vld [vmem:[%s792 + $0x70] sm:$0xff]
        %v6318 = vld [vmem:[%s792 + $0x78] sm:$0xff]
        %v6319 = vld [vmem:[%s792 + $0x80] sm:$0xff]
        %v6320 = vld [vmem:[%s792 + $0x88] sm:$0xff]
        %v6321 = vld [vmem:[%s792 + $0x90] sm:$0xff]
        %v6322 = vld [vmem:[%s792 + $0x98] sm:$0xff]
        %v6323 = vld [vmem:[%s792 + $0xa0] sm:$0xff]
        %v6324 = vld [vmem:[%s792 + $0xa8] sm:$0xff]
        %v6325 = vld [vmem:[%s792 + $0xb0] sm:$0xff]
        %v6326 = vld [vmem:[%s792 + $0xb8] sm:$0xff]
        %v6327 = vld [vmem:[%s792 + $0xc0] sm:$0xff]
        %v6328 = vld [vmem:[%s792 + $0xc8] sm:$0xff]
        %v6329 = vld [vmem:[%s792 + $0xd0] sm:$0xff]
        %v6330 = vld [vmem:[%s792 + $0xd8] sm:$0xff]
        %v6331 = vld [vmem:[%s792 + $0xe0] sm:$0xff]
        %v6332 = vld [vmem:[%s792 + $0xe8] sm:$0xff]
        %v6333 = vld [vmem:[%s792 + $0xf0] sm:$0xff]
        %v6334 = vld [vmem:[%s792 + $0xf8] sm:$0xff]
        %v6335 = vld [vmem:[%s801] sm:$0xf]
        %v6337 = vlaneseq
        %v6338 = vshrl.u32 %v6337, 7
        %v6339 = vsub.s32 0, %v6338
        %v6340 = vrot.slane %v6335, %v6339
        %v6341 = vlaneseq
        %v6342 = vshrl.u32 %v6341, 7
        %v6343 = vsub.s32 1, %v6342
        %v6344 = vrot.slane %v6335, %v6343
        %v6345 = vlaneseq
        %v6346 = vshrl.u32 %v6345, 7
        %v6347 = vsub.s32 2, %v6346
        %v6348 = vrot.slane %v6335, %v6347
        %v6349 = vlaneseq
        %v6350 = vshrl.u32 %v6349, 7
        %v6351 = vsub.s32 3, %v6350
        %v6352 = vrot.slane %v6335, %v6351
        %v6389 = vunpack.c.l.b16 %v6303
        %v6390 = vunpack.c.h.b16 %v6303
        %v6391 = vunpack.c.l.b16 %v6304
        %v6392 = vunpack.c.h.b16 %v6304
        %v6393 = vunpack.c.l.b16 %v6305
        %v6394 = vunpack.c.h.b16 %v6305
        %v6395 = vunpack.c.l.b16 %v6306
        %v6396 = vunpack.c.h.b16 %v6306
        %v6397 = vunpack.c.l.b16 %v6307
        %v6398 = vunpack.c.h.b16 %v6307
        %v6399 = vunpack.c.l.b16 %v6308
        %v6400 = vunpack.c.h.b16 %v6308
        %v6401 = vunpack.c.l.b16 %v6309
        %v6402 = vunpack.c.h.b16 %v6309
        %v6403 = vunpack.c.l.b16 %v6310
        %v6404 = vunpack.c.h.b16 %v6310
        %v6405 = vunpack.c.l.b16 %v6311
        %v6406 = vunpack.c.h.b16 %v6311
        %v6407 = vunpack.c.l.b16 %v6312
        %v6408 = vunpack.c.h.b16 %v6312
        %v6409 = vunpack.c.l.b16 %v6313
        %v6410 = vunpack.c.h.b16 %v6313
        %v6411 = vunpack.c.l.b16 %v6314
        %v6412 = vunpack.c.h.b16 %v6314
        %v6413 = vunpack.c.l.b16 %v6315
        %v6414 = vunpack.c.h.b16 %v6315
        %v6415 = vunpack.c.l.b16 %v6316
        %v6416 = vunpack.c.h.b16 %v6316
        %v6417 = vunpack.c.l.b16 %v6317
        %v6418 = vunpack.c.h.b16 %v6317
        %v6419 = vunpack.c.l.b16 %v6318
        %v6420 = vunpack.c.h.b16 %v6318
        %v6421 = vunpack.c.l.b16 %v6319
        %v6422 = vunpack.c.h.b16 %v6319
        %v6423 = vunpack.c.l.b16 %v6320
        %v6424 = vunpack.c.h.b16 %v6320
        %v6425 = vunpack.c.l.b16 %v6321
        %v6426 = vunpack.c.h.b16 %v6321
        %v6427 = vunpack.c.l.b16 %v6322
        %v6428 = vunpack.c.h.b16 %v6322
        %v6429 = vunpack.c.l.b16 %v6323
        %v6430 = vunpack.c.h.b16 %v6323
        %v6431 = vunpack.c.l.b16 %v6324
        %v6432 = vunpack.c.h.b16 %v6324
        %v6433 = vunpack.c.l.b16 %v6325
        %v6434 = vunpack.c.h.b16 %v6325
        %v6435 = vunpack.c.l.b16 %v6326
        %v6436 = vunpack.c.h.b16 %v6326
        %v6437 = vunpack.c.l.b16 %v6327
        %v6438 = vunpack.c.h.b16 %v6327
        %v6439 = vunpack.c.l.b16 %v6328
        %v6440 = vunpack.c.h.b16 %v6328
        %v6441 = vunpack.c.l.b16 %v6329
        %v6442 = vunpack.c.h.b16 %v6329
        %v6443 = vunpack.c.l.b16 %v6330
        %v6444 = vunpack.c.h.b16 %v6330
        %v6445 = vunpack.c.l.b16 %v6331
        %v6446 = vunpack.c.h.b16 %v6331
        %v6447 = vunpack.c.l.b16 %v6332
        %v6448 = vunpack.c.h.b16 %v6332
        %v6449 = vunpack.c.l.b16 %v6333
        %v6450 = vunpack.c.h.b16 %v6333
        %v6451 = vunpack.c.l.b16 %v6334
        %v6452 = vunpack.c.h.b16 %v6334
        %v6453 = vpack.c.b16 %v6393, %v6389
        %v6454 = vpack.c.b16 %v6394, %v6390
        %v6455 = vpack.c.b16 %v6395, %v6391
        %v6456 = vpack.c.b16 %v6396, %v6392
        %v6457 = vpack.c.b16 %v6401, %v6397
        %v6458 = vpack.c.b16 %v6402, %v6398
        %v6459 = vpack.c.b16 %v6403, %v6399
        %v6460 = vpack.c.b16 %v6404, %v6400
        %v6461 = vpack.c.b16 %v6409, %v6405
        %v6462 = vpack.c.b16 %v6410, %v6406
        %v6463 = vpack.c.b16 %v6411, %v6407
        %v6464 = vpack.c.b16 %v6412, %v6408
        %v6465 = vpack.c.b16 %v6417, %v6413
        %v6466 = vpack.c.b16 %v6418, %v6414
        %v6467 = vpack.c.b16 %v6419, %v6415
        %v6468 = vpack.c.b16 %v6420, %v6416
        %v6469 = vpack.c.b16 %v6425, %v6421
        %v6470 = vpack.c.b16 %v6426, %v6422
        %v6471 = vpack.c.b16 %v6427, %v6423
        %v6472 = vpack.c.b16 %v6428, %v6424
        %v6473 = vpack.c.b16 %v6433, %v6429
        %v6474 = vpack.c.b16 %v6434, %v6430
        %v6475 = vpack.c.b16 %v6435, %v6431
        %v6476 = vpack.c.b16 %v6436, %v6432
        %v6477 = vpack.c.b16 %v6441, %v6437
        %v6478 = vpack.c.b16 %v6442, %v6438
        %v6479 = vpack.c.b16 %v6443, %v6439
        %v6480 = vpack.c.b16 %v6444, %v6440
        %v6481 = vpack.c.b16 %v6449, %v6445
        %v6482 = vpack.c.b16 %v6450, %v6446
        %v6483 = vpack.c.b16 %v6451, %v6447
        %v6484 = vpack.c.b16 %v6452, %v6448
        %6517 = vmatprep.subr.bf16.mxu0 %v6454
        %6518 = vmatpush1.bf16.msra.mxu0 %v6453
        %6519 = vmatprep.subr.bf16.mxu0 %v6458
        %6520 = vmatpush1.bf16.msra.mxu0 %v6457
        %6521 = vmatprep.subr.bf16.mxu0 %v6462
        %6522 = vmatpush1.bf16.msra.mxu0 %v6461
        %6523 = vmatprep.subr.bf16.mxu0 %v6466
        %6524 = vmatpush1.bf16.msra.mxu0 %v6465
        %6525 = vmatprep.subr.bf16.mxu0 %v6470
        %6526 = vmatpush1.bf16.msra.mxu0 %v6469
        %6527 = vmatprep.subr.bf16.mxu0 %v6474
        %6528 = vmatpush1.bf16.msra.mxu0 %v6473
        %6529 = vmatprep.subr.bf16.mxu0 %v6478
        %6530 = vmatpush1.bf16.msra.mxu0 %v6477
        %6531 = vmatprep.subr.bf16.mxu0 %v6482
        %6532 = vmatpush1.bf16.msra.mxu0 %v6481
        %6533 = vmatprep.subr.bf16.mxu0 0
        %6534 = vmatpush1.bf16.msra.mxu0 0
        %6535 = vmatprep.subr.bf16.mxu0 0
        %6536 = vmatpush1.bf16.msra.mxu0 0
        %6537 = vmatprep.subr.bf16.mxu0 0
        %6538 = vmatpush1.bf16.msra.mxu0 0
        %6539 = vmatprep.subr.bf16.mxu0 0
        %6540 = vmatpush1.bf16.msra.mxu0 0
        %6541 = vmatprep.subr.bf16.mxu0 0
        %6542 = vmatpush1.bf16.msra.mxu0 0
        %6543 = vmatprep.subr.bf16.mxu0 0
        %6544 = vmatpush1.bf16.msra.mxu0 0
        %6545 = vmatprep.subr.bf16.mxu0 0
        %6546 = vmatpush1.bf16.msra.mxu0 0
        %6547 = vmatprep.subr.bf16.mxu0 0
        %6548 = vmatpush1.bf16.msra.mxu0 0
        %6549 = vmatprep.mubr.bf16.mxu0 0
        %6550 = vmatmul.mubr.bf16.gmra.mrb[0].mxu0 %v6287
        %v6551 = vpop.f32.mrb[0].mxu0
        %v6552 = vadd.f32 %v6340, %v6551
        %v6553 = vpop.f32.mrb[0].mxu0
        %v6554 = vadd.f32 %v6344, %v6553
        %v6555 = vpop.f32.mrb[0].mxu0
        %v6556 = vadd.f32 %v6340, %v6555
        %v6557 = vpop.f32.mrb[0].mxu0
        %v6558 = vadd.f32 %v6344, %v6557
        %6559 = vmatprep.mubr.bf16.mxu0 0
        %6560 = vmatmul.mubr.bf16.gmra.mrb[0].mxu0 %v6288
        %v6561 = vpop.f32.mrb[0].mxu0
        %v6562 = vadd.f32 %v6340, %v6561
        %v6563 = vpop.f32.mrb[0].mxu0
        %v6564 = vadd.f32 %v6344, %v6563
        %v6565 = vpop.f32.mrb[0].mxu0
        %v6566 = vadd.f32 %v6340, %v6565
        %v6567 = vpop.f32.mrb[0].mxu0
        %v6568 = vadd.f32 %v6344, %v6567
        %6569 = vmatprep.mubr.bf16.mxu0 0
        %6570 = vmatmul.mubr.bf16.gmra.mrb[0].mxu0 %v6289
        %v6571 = vpop.f32.mrb[0].mxu0
        %v6572 = vadd.f32 %v6340, %v6571
        %v6573 = vpop.f32.mrb[0].mxu0
        %v6574 = vadd.f32 %v6344, %v6573
        %v6575 = vpop.f32.mrb[0].mxu0
        %v6576 = vadd.f32 %v6340, %v6575
        %v6577 = vpop.f32.mrb[0].mxu0
        %v6578 = vadd.f32 %v6344, %v6577
        %6579 = vmatprep.mubr.bf16.mxu0 0
        %6580 = vmatmul.mubr.bf16.gmra.mrb[0].mxu0 %v6290
        %v6581 = vpop.f32.mrb[0].mxu0
        %v6582 = vadd.f32 %v6340, %v6581
        %v6583 = vpop.f32.mrb[0].mxu0
        %v6584 = vadd.f32 %v6344, %v6583
        %v6585 = vpop.f32.mrb[0].mxu0
        %v6586 = vadd.f32 %v6340, %v6585
        %v6587 = vpop.f32.mrb[0].mxu0
        %v6588 = vadd.f32 %v6344, %v6587
        %6589 = vmatprep.mubr.bf16.mxu0 0
        %6590 = vmatmul.mubr.bf16.gmra.mrb[0].mxu0 %v6291
        %v6591 = vpop.f32.mrb[0].mxu0
        %v6592 = vadd.f32 %v6340, %v6591
        %v6593 = vpop.f32.mrb[0].mxu0
        %v6594 = vadd.f32 %v6344, %v6593
        %v6595 = vpop.f32.mrb[0].mxu0
        %v6596 = vadd.f32 %v6340, %v6595
        %v6597 = vpop.f32.mrb[0].mxu0
        %v6598 = vadd.f32 %v6344, %v6597
        %6599 = vmatprep.mubr.bf16.mxu0 0
        %6600 = vmatmul.mubr.bf16.gmra.mrb[0].mxu0 %v6292
        %v6601 = vpop.f32.mrb[0].mxu0
        %v6602 = vadd.f32 %v6340, %v6601
        %v6603 = vpop.f32.mrb[0].mxu0
        %v6604 = vadd.f32 %v6344, %v6603
        %v6605 = vpop.f32.mrb[0].mxu0
        %v6606 = vadd.f32 %v6340, %v6605
        %v6607 = vpop.f32.mrb[0].mxu0
        %v6608 = vadd.f32 %v6344, %v6607
        %6609 = vmatprep.mubr.bf16.mxu0 0
        %6610 = vmatmul.mubr.bf16.gmra.mrb[0].mxu0 %v6293
        %v6611 = vpop.f32.mrb[0].mxu0
        %v6612 = vadd.f32 %v6340, %v6611
        %v6613 = vpop.f32.mrb[0].mxu0
        %v6614 = vadd.f32 %v6344, %v6613
        %v6615 = vpop.f32.mrb[0].mxu0
        %v6616 = vadd.f32 %v6340, %v6615
        %v6617 = vpop.f32.mrb[0].mxu0
        %v6618 = vadd.f32 %v6344, %v6617
        %6619 = vmatprep.mubr.bf16.mxu0 0
        %6620 = vmatmul.mubr.bf16.gmra.mrb[0].mxu0 %v6294
        %v6621 = vpop.f32.mrb[0].mxu0
        %v6622 = vadd.f32 %v6340, %v6621
        %v6623 = vpop.f32.mrb[0].mxu0
        %v6624 = vadd.f32 %v6344, %v6623
        %v6625 = vpop.f32.mrb[0].mxu0
        %v6626 = vadd.f32 %v6340, %v6625
        %v6627 = vpop.f32.mrb[0].mxu0
        %v6628 = vadd.f32 %v6344, %v6627
        %6629 = vmatprep.mubr.bf16.mxu0 0
        %6630 = vmatmul.mubr.bf16.gmra.mrb[0].mxu0 %v6295
        %v6631 = vpop.f32.mrb[0].mxu0
        %v6632 = vadd.f32 %v6340, %v6631
        %v6633 = vpop.f32.mrb[0].mxu0
        %v6634 = vadd.f32 %v6344, %v6633
        %v6635 = vpop.f32.mrb[0].mxu0
        %v6636 = vadd.f32 %v6340, %v6635
        %v6637 = vpop.f32.mrb[0].mxu0
        %v6638 = vadd.f32 %v6344, %v6637
        %6639 = vmatprep.mubr.bf16.mxu0 0
        %6640 = vmatmul.mubr.bf16.gmra.mrb[0].mxu0 %v6296
        %v6641 = vpop.f32.mrb[0].mxu0
        %v6642 = vadd.f32 %v6340, %v6641
        %v6643 = vpop.f32.mrb[0].mxu0
        %v6644 = vadd.f32 %v6344, %v6643
        %v6645 = vpop.f32.mrb[0].mxu0
        %v6646 = vadd.f32 %v6340, %v6645
        %v6647 = vpop.f32.mrb[0].mxu0
        %v6648 = vadd.f32 %v6344, %v6647
        %6649 = vmatprep.mubr.bf16.mxu0 0
        %6650 = vmatmul.mubr.bf16.gmra.mrb[0].mxu0 %v6297
        %v6651 = vpop.f32.mrb[0].mxu0
        %v6652 = vadd.f32 %v6340, %v6651
        %v6653 = vpop.f32.mrb[0].mxu0
        %v6654 = vadd.f32 %v6344, %v6653
        %v6655 = vpop.f32.mrb[0].mxu0
        %v6656 = vadd.f32 %v6340, %v6655
        %v6657 = vpop.f32.mrb[0].mxu0
        %v6658 = vadd.f32 %v6344, %v6657
        %6659 = vmatprep.mubr.bf16.mxu0 0
        %6660 = vmatmul.mubr.bf16.gmra.mrb[0].mxu0 %v6298
        %v6661 = vpop.f32.mrb[0].mxu0
        %v6662 = vadd.f32 %v6340, %v6661
        %v6663 = vpop.f32.mrb[0].mxu0
        %v6664 = vadd.f32 %v6344, %v6663
        %v6665 = vpop.f32.mrb[0].mxu0
        %v6666 = vadd.f32 %v6340, %v6665
        %v6667 = vpop.f32.mrb[0].mxu0
        %v6668 = vadd.f32 %v6344, %v6667
        %6669 = vmatprep.mubr.bf16.mxu0 0
        %6670 = vmatmul.mubr.bf16.gmra.mrb[0].mxu0 %v6299
        %v6671 = vpop.f32.mrb[0].mxu0
        %v6672 = vadd.f32 %v6340, %v6671
        %v6673 = vpop.f32.mrb[0].mxu0
        %v6674 = vadd.f32 %v6344, %v6673
        %v6675 = vpop.f32.mrb[0].mxu0
        %v6676 = vadd.f32 %v6340, %v6675
        %v6677 = vpop.f32.mrb[0].mxu0
        %v6678 = vadd.f32 %v6344, %v6677
        %6679 = vmatprep.mubr.bf16.mxu0 0
        %6680 = vmatmul.mubr.bf16.gmra.mrb[0].mxu0 %v6300
        %v6681 = vpop.f32.mrb[0].mxu0
        %v6682 = vadd.f32 %v6340, %v6681
        %v6683 = vpop.f32.mrb[0].mxu0
        %v6684 = vadd.f32 %v6344, %v6683
        %v6685 = vpop.f32.mrb[0].mxu0
        %v6686 = vadd.f32 %v6340, %v6685
        %v6687 = vpop.f32.mrb[0].mxu0
        %v6688 = vadd.f32 %v6344, %v6687
        %6689 = vmatprep.mubr.bf16.mxu0 0
        %6690 = vmatmul.mubr.bf16.gmra.mrb[0].mxu0 %v6301
        %v6691 = vpop.f32.mrb[0].mxu0
        %v6692 = vadd.f32 %v6340, %v6691
        %v6693 = vpop.f32.mrb[0].mxu0
        %v6694 = vadd.f32 %v6344, %v6693
        %v6695 = vpop.f32.mrb[0].mxu0
        %v6696 = vadd.f32 %v6340, %v6695
        %v6697 = vpop.f32.mrb[0].mxu0
        %v6698 = vadd.f32 %v6344, %v6697
        %6699 = vmatprep.mubr.bf16.mxu0 0
        %6700 = vmatmul.mubr.bf16.gmra.mrb[0].mxu0 %v6302
        %v6701 = vpop.f32.mrb[0].mxu0
        %v6702 = vadd.f32 %v6340, %v6701
        %v6703 = vpop.f32.mrb[0].mxu0
        %v6704 = vadd.f32 %v6344, %v6703
        %v6705 = vpop.f32.mrb[0].mxu0
        %v6706 = vadd.f32 %v6340, %v6705
        %v6707 = vpop.f32.mrb[0].mxu0
        %v6708 = vadd.f32 %v6344, %v6707
        %6709 = vdwg.mxu0
        %6710 = vmatprep.subr.bf16.mxu0 %v6456
        %6711 = vmatpush1.bf16.msra.mxu0 %v6455
        %6712 = vmatprep.subr.bf16.mxu0 %v6460
        %6713 = vmatpush1.bf16.msra.mxu0 %v6459
        %6714 = vmatprep.subr.bf16.mxu0 %v6464
        %6715 = vmatpush1.bf16.msra.mxu0 %v6463
        %6716 = vmatprep.subr.bf16.mxu0 %v6468
        %6717 = vmatpush1.bf16.msra.mxu0 %v6467
        %6718 = vmatprep.subr.bf16.mxu0 %v6472
        %6719 = vmatpush1.bf16.msra.mxu0 %v6471
        %6720 = vmatprep.subr.bf16.mxu0 %v6476
        %6721 = vmatpush1.bf16.msra.mxu0 %v6475
        %6722 = vmatprep.subr.bf16.mxu0 %v6480
        %6723 = vmatpush1.bf16.msra.mxu0 %v6479
        %6724 = vmatprep.subr.bf16.mxu0 %v6484
        %6725 = vmatpush1.bf16.msra.mxu0 %v6483
        %6726 = vmatprep.subr.bf16.mxu0 0
        %6727 = vmatpush1.bf16.msra.mxu0 0
        %6728 = vmatprep.subr.bf16.mxu0 0
        %6729 = vmatpush1.bf16.msra.mxu0 0
        %6730 = vmatprep.subr.bf16.mxu0 0
        %6731 = vmatpush1.bf16.msra.mxu0 0
        %6732 = vmatprep.subr.bf16.mxu0 0
        %6733 = vmatpush1.bf16.msra.mxu0 0
        %6734 = vmatprep.subr.bf16.mxu0 0
        %6735 = vmatpush1.bf16.msra.mxu0 0
        %6736 = vmatprep.subr.bf16.mxu0 0
        %6737 = vmatpush1.bf16.msra.mxu0 0
        %6738 = vmatprep.subr.bf16.mxu0 0
        %6739 = vmatpush1.bf16.msra.mxu0 0
        %6740 = vmatprep.subr.bf16.mxu0 0
        %6741 = vmatpush1.bf16.msra.mxu0 0
        %6742 = vmatprep.mubr.bf16.mxu0 0
        %6743 = vmatmul.mubr.bf16.gmra.mrb[0].mxu0 %v6287
        %v6744 = vpop.f32.mrb[0].mxu0
        %v6745 = vadd.f32 %v6348, %v6744
        %v6746 = vpop.f32.mrb[0].mxu0
        %v6747 = vadd.f32 %v6352, %v6746
        %v6748 = vpop.f32.mrb[0].mxu0
        %v6749 = vadd.f32 %v6348, %v6748
        %v6750 = vpop.f32.mrb[0].mxu0
        %v6751 = vadd.f32 %v6352, %v6750
        %6752 = vmatprep.mubr.bf16.mxu0 0
        %6753 = vmatmul.mubr.bf16.gmra.mrb[0].mxu0 %v6288
        %v6754 = vpop.f32.mrb[0].mxu0
        %v6755 = vadd.f32 %v6348, %v6754
        %v6756 = vpop.f32.mrb[0].mxu0
        %v6757 = vadd.f32 %v6352, %v6756
        %v6758 = vpop.f32.mrb[0].mxu0
        %v6759 = vadd.f32 %v6348, %v6758
        %v6760 = vpop.f32.mrb[0].mxu0
        %v6761 = vadd.f32 %v6352, %v6760
        %6762 = vmatprep.mubr.bf16.mxu0 0
        %6763 = vmatmul.mubr.bf16.gmra.mrb[0].mxu0 %v6289
        %v6764 = vpop.f32.mrb[0].mxu0
        %v6765 = vadd.f32 %v6348, %v6764
        %v6766 = vpop.f32.mrb[0].mxu0
        %v6767 = vadd.f32 %v6352, %v6766
        %v6768 = vpop.f32.mrb[0].mxu0
        %v6769 = vadd.f32 %v6348, %v6768
        %v6770 = vpop.f32.mrb[0].mxu0
        %v6771 = vadd.f32 %v6352, %v6770
        %6772 = vmatprep.mubr.bf16.mxu0 0
        %6773 = vmatmul.mubr.bf16.gmra.mrb[0].mxu0 %v6290
        %v6774 = vpop.f32.mrb[0].mxu0
        %v6775 = vadd.f32 %v6348, %v6774
        %v6776 = vpop.f32.mrb[0].mxu0
        %v6777 = vadd.f32 %v6352, %v6776
        %v6778 = vpop.f32.mrb[0].mxu0
        %v6779 = vadd.f32 %v6348, %v6778
        %v6780 = vpop.f32.mrb[0].mxu0
        %v6781 = vadd.f32 %v6352, %v6780
        %6782 = vmatprep.mubr.bf16.mxu0 0
        %6783 = vmatmul.mubr.bf16.gmra.mrb[0].mxu0 %v6291
        %v6784 = vpop.f32.mrb[0].mxu0
        %v6785 = vadd.f32 %v6348, %v6784
        %v6786 = vpop.f32.mrb[0].mxu0
        %v6787 = vadd.f32 %v6352, %v6786
        %v6788 = vpop.f32.mrb[0].mxu0
        %v6789 = vadd.f32 %v6348, %v6788
        %v6790 = vpop.f32.mrb[0].mxu0
        %v6791 = vadd.f32 %v6352, %v6790
        %6792 = vmatprep.mubr.bf16.mxu0 0
        %6793 = vmatmul.mubr.bf16.gmra.mrb[0].mxu0 %v6292
        %v6794 = vpop.f32.mrb[0].mxu0
        %v6795 = vadd.f32 %v6348, %v6794
        %v6796 = vpop.f32.mrb[0].mxu0
        %v6797 = vadd.f32 %v6352, %v6796
        %v6798 = vpop.f32.mrb[0].mxu0
        %v6799 = vadd.f32 %v6348, %v6798
        %v6800 = vpop.f32.mrb[0].mxu0
        %v6801 = vadd.f32 %v6352, %v6800
        %6802 = vmatprep.mubr.bf16.mxu0 0
        %6803 = vmatmul.mubr.bf16.gmra.mrb[0].mxu0 %v6293
        %v6804 = vpop.f32.mrb[0].mxu0
        %v6805 = vadd.f32 %v6348, %v6804
        %v6806 = vpop.f32.mrb[0].mxu0
        %v6807 = vadd.f32 %v6352, %v6806
        %v6808 = vpop.f32.mrb[0].mxu0
        %v6809 = vadd.f32 %v6348, %v6808
        %v6810 = vpop.f32.mrb[0].mxu0
        %v6811 = vadd.f32 %v6352, %v6810
        %6812 = vmatprep.mubr.bf16.mxu0 0
        %6813 = vmatmul.mubr.bf16.gmra.mrb[0].mxu0 %v6294
        %v6814 = vpop.f32.mrb[0].mxu0
        %v6815 = vadd.f32 %v6348, %v6814
        %v6816 = vpop.f32.mrb[0].mxu0
        %v6817 = vadd.f32 %v6352, %v6816
        %v6818 = vpop.f32.mrb[0].mxu0
        %v6819 = vadd.f32 %v6348, %v6818
        %v6820 = vpop.f32.mrb[0].mxu0
        %v6821 = vadd.f32 %v6352, %v6820
        %6822 = vmatprep.mubr.bf16.mxu0 0
        %6823 = vmatmul.mubr.bf16.gmra.mrb[0].mxu0 %v6295
        %v6824 = vpop.f32.mrb[0].mxu0
        %v6825 = vadd.f32 %v6348, %v6824
        %v6826 = vpop.f32.mrb[0].mxu0
        %v6827 = vadd.f32 %v6352, %v6826
        %v6828 = vpop.f32.mrb[0].mxu0
        %v6829 = vadd.f32 %v6348, %v6828
        %v6830 = vpop.f32.mrb[0].mxu0
        %v6831 = vadd.f32 %v6352, %v6830
        %6832 = vmatprep.mubr.bf16.mxu0 0
        %6833 = vmatmul.mubr.bf16.gmra.mrb[0].mxu0 %v6296
        %v6834 = vpop.f32.mrb[0].mxu0
        %v6835 = vadd.f32 %v6348, %v6834
        %v6836 = vpop.f32.mrb[0].mxu0
        %v6837 = vadd.f32 %v6352, %v6836
        %v6838 = vpop.f32.mrb[0].mxu0
        %v6839 = vadd.f32 %v6348, %v6838
        %v6840 = vpop.f32.mrb[0].mxu0
        %v6841 = vadd.f32 %v6352, %v6840
        %6842 = vmatprep.mubr.bf16.mxu0 0
        %6843 = vmatmul.mubr.bf16.gmra.mrb[0].mxu0 %v6297
        %v6844 = vpop.f32.mrb[0].mxu0
        %v6845 = vadd.f32 %v6348, %v6844
        %v6846 = vpop.f32.mrb[0].mxu0
        %v6847 = vadd.f32 %v6352, %v6846
        %v6848 = vpop.f32.mrb[0].mxu0
        %v6849 = vadd.f32 %v6348, %v6848
        %v6850 = vpop.f32.mrb[0].mxu0
        %v6851 = vadd.f32 %v6352, %v6850
        %6852 = vmatprep.mubr.bf16.mxu0 0
        %6853 = vmatmul.mubr.bf16.gmra.mrb[0].mxu0 %v6298
        %v6854 = vpop.f32.mrb[0].mxu0
        %v6855 = vadd.f32 %v6348, %v6854
        %v6856 = vpop.f32.mrb[0].mxu0
        %v6857 = vadd.f32 %v6352, %v6856
        %v6858 = vpop.f32.mrb[0].mxu0
        %v6859 = vadd.f32 %v6348, %v6858
        %v6860 = vpop.f32.mrb[0].mxu0
        %v6861 = vadd.f32 %v6352, %v6860
        %6862 = vmatprep.mubr.bf16.mxu0 0
        %6863 = vmatmul.mubr.bf16.gmra.mrb[0].mxu0 %v6299
        %v6864 = vpop.f32.mrb[0].mxu0
        %v6865 = vadd.f32 %v6348, %v6864
        %v6866 = vpop.f32.mrb[0].mxu0
        %v6867 = vadd.f32 %v6352, %v6866
        %v6868 = vpop.f32.mrb[0].mxu0
        %v6869 = vadd.f32 %v6348, %v6868
        %v6870 = vpop.f32.mrb[0].mxu0
        %v6871 = vadd.f32 %v6352, %v6870
        %6872 = vmatprep.mubr.bf16.mxu0 0
        %6873 = vmatmul.mubr.bf16.gmra.mrb[0].mxu0 %v6300
        %v6874 = vpop.f32.mrb[0].mxu0
        %v6875 = vadd.f32 %v6348, %v6874
        %v6876 = vpop.f32.mrb[0].mxu0
        %v6877 = vadd.f32 %v6352, %v6876
        %v6878 = vpop.f32.mrb[0].mxu0
        %v6879 = vadd.f32 %v6348, %v6878
        %v6880 = vpop.f32.mrb[0].mxu0
        %v6881 = vadd.f32 %v6352, %v6880
        %6882 = vmatprep.mubr.bf16.mxu0 0
        %6883 = vmatmul.mubr.bf16.gmra.mrb[0].mxu0 %v6301
        %v6884 = vpop.f32.mrb[0].mxu0
        %v6885 = vadd.f32 %v6348, %v6884
        %v6886 = vpop.f32.mrb[0].mxu0
        %v6887 = vadd.f32 %v6352, %v6886
        %v6888 = vpop.f32.mrb[0].mxu0
        %v6889 = vadd.f32 %v6348, %v6888
        %v6890 = vpop.f32.mrb[0].mxu0
        %v6891 = vadd.f32 %v6352, %v6890
        %6892 = vmatprep.mubr.bf16.mxu0 0
        %6893 = vmatmul.mubr.bf16.gmra.mrb[0].mxu0 %v6302
        %v6894 = vpop.f32.mrb[0].mxu0
        %v6895 = vadd.f32 %v6348, %v6894
        %v6896 = vpop.f32.mrb[0].mxu0
        %v6897 = vadd.f32 %v6352, %v6896
        %v6898 = vpop.f32.mrb[0].mxu0
        %v6899 = vadd.f32 %v6348, %v6898
        %v6900 = vpop.f32.mrb[0].mxu0
        %v6901 = vadd.f32 %v6352, %v6900
        %6902 = vdwg.mxu0
        %v6903 = vmax.f32 %v6552, 0.0
        %v6904 = vmax.f32 %v6554, 0.0
        %v6905 = vmax.f32 %v6745, 0.0
        %v6906 = vmax.f32 %v6747, 0.0
        %v6907 = vmax.f32 %v6556, 0.0
        %v6908 = vmax.f32 %v6558, 0.0
        %v6909 = vmax.f32 %v6749, 0.0
        %v6910 = vmax.f32 %v6751, 0.0
        %v6911 = vmax.f32 %v6562, 0.0
        %v6912 = vmax.f32 %v6564, 0.0
        %v6913 = vmax.f32 %v6755, 0.0
        %v6914 = vmax.f32 %v6757, 0.0
        %v6915 = vmax.f32 %v6566, 0.0
        %v6916 = vmax.f32 %v6568, 0.0
        %v6917 = vmax.f32 %v6759, 0.0
        %v6918 = vmax.f32 %v6761, 0.0
        %v6919 = vmax.f32 %v6572, 0.0
        %v6920 = vmax.f32 %v6574, 0.0
        %v6921 = vmax.f32 %v6765, 0.0
        %v6922 = vmax.f32 %v6767, 0.0
        %v6923 = vmax.f32 %v6576, 0.0
        %v6924 = vmax.f32 %v6578, 0.0
        %v6925 = vmax.f32 %v6769, 0.0
        %v6926 = vmax.f32 %v6771, 0.0
        %v6927 = vmax.f32 %v6582, 0.0
        %v6928 = vmax.f32 %v6584, 0.0
        %v6929 = vmax.f32 %v6775, 0.0
        %v6930 = vmax.f32 %v6777, 0.0
        %v6931 = vmax.f32 %v6586, 0.0
        %v6932 = vmax.f32 %v6588, 0.0
        %v6933 = vmax.f32 %v6779, 0.0
        %v6934 = vmax.f32 %v6781, 0.0
        %v6935 = vmax.f32 %v6592, 0.0
        %v6936 = vmax.f32 %v6594, 0.0
        %v6937 = vmax.f32 %v6785, 0.0
        %v6938 = vmax.f32 %v6787, 0.0
        %v6939 = vmax.f32 %v6596, 0.0
        %v6940 = vmax.f32 %v6598, 0.0
        %v6941 = vmax.f32 %v6789, 0.0
        %v6942 = vmax.f32 %v6791, 0.0
        %v6943 = vmax.f32 %v6602, 0.0
        %v6944 = vmax.f32 %v6604, 0.0
        %v6945 = vmax.f32 %v6795, 0.0
        %v6946 = vmax.f32 %v6797, 0.0
        %v6947 = vmax.f32 %v6606, 0.0
        %v6948 = vmax.f32 %v6608, 0.0
        %v6949 = vmax.f32 %v6799, 0.0
        %v6950 = vmax.f32 %v6801, 0.0
        %v6951 = vmax.f32 %v6612, 0.0
        %v6952 = vmax.f32 %v6614, 0.0
        %v6953 = vmax.f32 %v6805, 0.0
        %v6954 = vmax.f32 %v6807, 0.0
        %v6955 = vmax.f32 %v6616, 0.0
        %v6956 = vmax.f32 %v6618, 0.0
        %v6957 = vmax.f32 %v6809, 0.0
        %v6958 = vmax.f32 %v6811, 0.0
        %v6959 = vmax.f32 %v6622, 0.0
        %v6960 = vmax.f32 %v6624, 0.0
        %v6961 = vmax.f32 %v6815, 0.0
        %v6962 = vmax.f32 %v6817, 0.0
        %v6963 = vmax.f32 %v6626, 0.0
        %v6964 = vmax.f32 %v6628, 0.0
        %v6965 = vmax.f32 %v6819, 0.0
        %v6966 = vmax.f32 %v6821, 0.0
        %v6967 = vmax.f32 %v6632, 0.0
        %v6968 = vmax.f32 %v6634, 0.0
        %v6969 = vmax.f32 %v6825, 0.0
        %v6970 = vmax.f32 %v6827, 0.0
        %v6971 = vmax.f32 %v6636, 0.0
        %v6972 = vmax.f32 %v6638, 0.0
        %v6973 = vmax.f32 %v6829, 0.0
        %v6974 = vmax.f32 %v6831, 0.0
        %v6975 = vmax.f32 %v6642, 0.0
        %v6976 = vmax.f32 %v6644, 0.0
        %v6977 = vmax.f32 %v6835, 0.0
        %v6978 = vmax.f32 %v6837, 0.0
        %v6979 = vmax.f32 %v6646, 0.0
        %v6980 = vmax.f32 %v6648, 0.0
        %v6981 = vmax.f32 %v6839, 0.0
        %v6982 = vmax.f32 %v6841, 0.0
        %v6983 = vmax.f32 %v6652, 0.0
        %v6984 = vmax.f32 %v6654, 0.0
        %v6985 = vmax.f32 %v6845, 0.0
        %v6986 = vmax.f32 %v6847, 0.0
        %v6987 = vmax.f32 %v6656, 0.0
        %v6988 = vmax.f32 %v6658, 0.0
        %v6989 = vmax.f32 %v6849, 0.0
        %v6990 = vmax.f32 %v6851, 0.0
        %v6991 = vmax.f32 %v6662, 0.0
        %v6992 = vmax.f32 %v6664, 0.0
        %v6993 = vmax.f32 %v6855, 0.0
        %v6994 = vmax.f32 %v6857, 0.0
        %v6995 = vmax.f32 %v6666, 0.0
        %v6996 = vmax.f32 %v6668, 0.0
        %v6997 = vmax.f32 %v6859, 0.0
        %v6998 = vmax.f32 %v6861, 0.0
        %v6999 = vmax.f32 %v6672, 0.0
        %v7000 = vmax.f32 %v6674, 0.0
        %v7001 = vmax.f32 %v6865, 0.0
        %v7002 = vmax.f32 %v6867, 0.0
        %v7003 = vmax.f32 %v6676, 0.0
        %v7004 = vmax.f32 %v6678, 0.0
        %v7005 = vmax.f32 %v6869, 0.0
        %v7006 = vmax.f32 %v6871, 0.0
        %v7007 = vmax.f32 %v6682, 0.0
        %v7008 = vmax.f32 %v6684, 0.0
        %v7009 = vmax.f32 %v6875, 0.0
        %v7010 = vmax.f32 %v6877, 0.0
        %v7011 = vmax.f32 %v6686, 0.0
        %v7012 = vmax.f32 %v6688, 0.0
        %v7013 = vmax.f32 %v6879, 0.0
        %v7014 = vmax.f32 %v6881, 0.0
        %v7015 = vmax.f32 %v6692, 0.0
        %v7016 = vmax.f32 %v6694, 0.0
        %v7017 = vmax.f32 %v6885, 0.0
        %v7018 = vmax.f32 %v6887, 0.0
        %v7019 = vmax.f32 %v6696, 0.0
        %v7020 = vmax.f32 %v6698, 0.0
        %v7021 = vmax.f32 %v6889, 0.0
        %v7022 = vmax.f32 %v6891, 0.0
        %v7023 = vmax.f32 %v6702, 0.0
        %v7024 = vmax.f32 %v6704, 0.0
        %v7025 = vmax.f32 %v6895, 0.0
        %v7026 = vmax.f32 %v6897, 0.0
        %v7027 = vmax.f32 %v6706, 0.0
        %v7028 = vmax.f32 %v6708, 0.0
        %v7029 = vmax.f32 %v6899, 0.0
        %v7030 = vmax.f32 %v6901, 0.0
        %v7031 = vpack.c.bf16 %v6907, %v6903
        %v7032 = vpack.c.bf16 %v6908, %v6904
        %v7033 = vpack.c.bf16 %v6909, %v6905
        %v7034 = vpack.c.bf16 %v6910, %v6906
        %v7035 = vpack.c.bf16 %v6915, %v6911
        %v7036 = vpack.c.bf16 %v6916, %v6912
        %v7037 = vpack.c.bf16 %v6917, %v6913
        %v7038 = vpack.c.bf16 %v6918, %v6914
        %v7039 = vpack.c.bf16 %v6923, %v6919
        %v7040 = vpack.c.bf16 %v6924, %v6920
        %v7041 = vpack.c.bf16 %v6925, %v6921
        %v7042 = vpack.c.bf16 %v6926, %v6922
        %v7043 = vpack.c.bf16 %v6931, %v6927
        %v7044 = vpack.c.bf16 %v6932, %v6928
        %v7045 = vpack.c.bf16 %v6933, %v6929
        %v7046 = vpack.c.bf16 %v6934, %v6930
        %v7047 = vpack.c.bf16 %v6939, %v6935
        %v7048 = vpack.c.bf16 %v6940, %v6936
        %v7049 = vpack.c.bf16 %v6941, %v6937
        %v7050 = vpack.c.bf16 %v6942, %v6938
        %v7051 = vpack.c.bf16 %v6947, %v6943
        %v7052 = vpack.c.bf16 %v6948, %v6944
        %v7053 = vpack.c.bf16 %v6949, %v6945
        %v7054 = vpack.c.bf16 %v6950, %v6946
        %v7055 = vpack.c.bf16 %v6955, %v6951
        %v7056 = vpack.c.bf16 %v6956, %v6952
        %v7057 = vpack.c.bf16 %v6957, %v6953
        %v7058 = vpack.c.bf16 %v6958, %v6954
        %v7059 = vpack.c.bf16 %v6963, %v6959
        %v7060 = vpack.c.bf16 %v6964, %v6960
        %v7061 = vpack.c.bf16 %v6965, %v6961
        %v7062 = vpack.c.bf16 %v6966, %v6962
        %v7063 = vpack.c.bf16 %v6971, %v6967
        %v7064 = vpack.c.bf16 %v6972, %v6968
        %v7065 = vpack.c.bf16 %v6973, %v6969
        %v7066 = vpack.c.bf16 %v6974, %v6970
        %v7067 = vpack.c.bf16 %v6979, %v6975
        %v7068 = vpack.c.bf16 %v6980, %v6976
        %v7069 = vpack.c.bf16 %v6981, %v6977
        %v7070 = vpack.c.bf16 %v6982, %v6978
        %v7071 = vpack.c.bf16 %v6987, %v6983
        %v7072 = vpack.c.bf16 %v6988, %v6984
        %v7073 = vpack.c.bf16 %v6989, %v6985
        %v7074 = vpack.c.bf16 %v6990, %v6986
        %v7075 = vpack.c.bf16 %v6995, %v6991
        %v7076 = vpack.c.bf16 %v6996, %v6992
        %v7077 = vpack.c.bf16 %v6997, %v6993
        %v7078 = vpack.c.bf16 %v6998, %v6994
        %v7079 = vpack.c.bf16 %v7003, %v6999
        %v7080 = vpack.c.bf16 %v7004, %v7000
        %v7081 = vpack.c.bf16 %v7005, %v7001
        %v7082 = vpack.c.bf16 %v7006, %v7002
        %v7083 = vpack.c.bf16 %v7011, %v7007
        %v7084 = vpack.c.bf16 %v7012, %v7008
        %v7085 = vpack.c.bf16 %v7013, %v7009
        %v7086 = vpack.c.bf16 %v7014, %v7010
        %v7087 = vpack.c.bf16 %v7019, %v7015
        %v7088 = vpack.c.bf16 %v7020, %v7016
        %v7089 = vpack.c.bf16 %v7021, %v7017
        %v7090 = vpack.c.bf16 %v7022, %v7018
        %v7091 = vpack.c.bf16 %v7027, %v7023
        %v7092 = vpack.c.bf16 %v7028, %v7024
        %v7093 = vpack.c.bf16 %v7029, %v7025
        %v7094 = vpack.c.bf16 %v7030, %v7026
        %v7095 = vld [vmem:[%s810] sm:$0xf]
        %v7096 = vld [vmem:[%s810 + $0x4] sm:$0xf]
        %v7097 = vld [vmem:[%s810 + $0x8] sm:$0xf]
        %v7098 = vld [vmem:[%s810 + $0xc] sm:$0xf]
        %v7099 = vld [vmem:[%s810 + $0x10] sm:$0xf]
        %v7100 = vld [vmem:[%s810 + $0x14] sm:$0xf]
        %v7101 = vld [vmem:[%s810 + $0x18] sm:$0xf]
        %v7102 = vld [vmem:[%s810 + $0x1c] sm:$0xf]
        %v7103 = vld [vmem:[%s810 + $0x20] sm:$0xf]
        %v7104 = vld [vmem:[%s810 + $0x24] sm:$0xf]
        %v7105 = vld [vmem:[%s810 + $0x28] sm:$0xf]
        %v7106 = vld [vmem:[%s810 + $0x2c] sm:$0xf]
        %v7107 = vld [vmem:[%s810 + $0x30] sm:$0xf]
        %v7108 = vld [vmem:[%s810 + $0x34] sm:$0xf]
        %v7109 = vld [vmem:[%s810 + $0x38] sm:$0xf]
        %v7110 = vld [vmem:[%s810 + $0x3c] sm:$0xf]
        %v7111 = vld [vmem:[%s810 + $0x40] sm:$0xf]
        %v7112 = vld [vmem:[%s810 + $0x44] sm:$0xf]
        %v7113 = vld [vmem:[%s810 + $0x48] sm:$0xf]
        %v7114 = vld [vmem:[%s810 + $0x4c] sm:$0xf]
        %v7115 = vld [vmem:[%s810 + $0x50] sm:$0xf]
        %v7116 = vld [vmem:[%s810 + $0x54] sm:$0xf]
        %v7117 = vld [vmem:[%s810 + $0x58] sm:$0xf]
        %v7118 = vld [vmem:[%s810 + $0x5c] sm:$0xf]
        %v7119 = vld [vmem:[%s810 + $0x60] sm:$0xf]
        %v7120 = vld [vmem:[%s810 + $0x64] sm:$0xf]
        %v7121 = vld [vmem:[%s810 + $0x68] sm:$0xf]
        %v7122 = vld [vmem:[%s810 + $0x6c] sm:$0xf]
        %v7123 = vld [vmem:[%s810 + $0x70] sm:$0xf]
        %v7124 = vld [vmem:[%s810 + $0x74] sm:$0xf]
        %v7125 = vld [vmem:[%s810 + $0x78] sm:$0xf]
        %v7126 = vld [vmem:[%s810 + $0x7c] sm:$0xf]
        %v7127 = vld [vmem:[%s810 + $0x80] sm:$0xf]
        %v7128 = vld [vmem:[%s810 + $0x84] sm:$0xf]
        %v7129 = vld [vmem:[%s810 + $0x88] sm:$0xf]
        %v7130 = vld [vmem:[%s810 + $0x8c] sm:$0xf]
        %v7131 = vld [vmem:[%s810 + $0x90] sm:$0xf]
        %v7132 = vld [vmem:[%s810 + $0x94] sm:$0xf]
        %v7133 = vld [vmem:[%s810 + $0x98] sm:$0xf]
        %v7134 = vld [vmem:[%s810 + $0x9c] sm:$0xf]
        %v7135 = vld [vmem:[%s810 + $0xa0] sm:$0xf]
        %v7136 = vld [vmem:[%s810 + $0xa4] sm:$0xf]
        %v7137 = vld [vmem:[%s810 + $0xa8] sm:$0xf]
        %v7138 = vld [vmem:[%s810 + $0xac] sm:$0xf]
        %v7139 = vld [vmem:[%s810 + $0xb0] sm:$0xf]
        %v7140 = vld [vmem:[%s810 + $0xb4] sm:$0xf]
        %v7141 = vld [vmem:[%s810 + $0xb8] sm:$0xf]
        %v7142 = vld [vmem:[%s810 + $0xbc] sm:$0xf]
        %v7143 = vld [vmem:[%s810 + $0xc0] sm:$0xf]
        %v7144 = vld [vmem:[%s810 + $0xc4] sm:$0xf]
        %v7145 = vld [vmem:[%s810 + $0xc8] sm:$0xf]
        %v7146 = vld [vmem:[%s810 + $0xcc] sm:$0xf]
        %v7147 = vld [vmem:[%s810 + $0xd0] sm:$0xf]
        %v7148 = vld [vmem:[%s810 + $0xd4] sm:$0xf]
        %v7149 = vld [vmem:[%s810 + $0xd8] sm:$0xf]
        %v7150 = vld [vmem:[%s810 + $0xdc] sm:$0xf]
        %v7151 = vld [vmem:[%s810 + $0xe0] sm:$0xf]
        %v7152 = vld [vmem:[%s810 + $0xe4] sm:$0xf]
        %v7153 = vld [vmem:[%s810 + $0xe8] sm:$0xf]
        %v7154 = vld [vmem:[%s810 + $0xec] sm:$0xf]
        %v7155 = vld [vmem:[%s810 + $0xf0] sm:$0xf]
        %v7156 = vld [vmem:[%s810 + $0xf4] sm:$0xf]
        %v7157 = vld [vmem:[%s810 + $0xf8] sm:$0xf]
        %v7158 = vld [vmem:[%s810 + $0xfc] sm:$0xf]
        %v7159 = vld [vmem:[%s818] sm:$0x1]
        %v7161 = vlaneseq
        %v7162 = vshrl.u32 %v7161, 7
        %v7163 = vsub.s32 0, %v7162
        %v7164 = vrot.slane %v7159, %v7163
        %v7230 = vunpack.c.l.b16 %v7095
        %v7231 = vunpack.c.l.b16 %v7096
        %v7232 = vunpack.c.l.b16 %v7097
        %v7233 = vunpack.c.l.b16 %v7098
        %v7234 = vunpack.c.l.b16 %v7099
        %v7235 = vunpack.c.l.b16 %v7100
        %v7236 = vunpack.c.l.b16 %v7101
        %v7237 = vunpack.c.l.b16 %v7102
        %v7238 = vunpack.c.l.b16 %v7103
        %v7239 = vunpack.c.l.b16 %v7104
        %v7240 = vunpack.c.l.b16 %v7105
        %v7241 = vunpack.c.l.b16 %v7106
        %v7242 = vunpack.c.l.b16 %v7107
        %v7243 = vunpack.c.l.b16 %v7108
        %v7244 = vunpack.c.l.b16 %v7109
        %v7245 = vunpack.c.l.b16 %v7110
        %v7246 = vunpack.c.l.b16 %v7111
        %v7247 = vunpack.c.l.b16 %v7112
        %v7248 = vunpack.c.l.b16 %v7113
        %v7249 = vunpack.c.l.b16 %v7114
        %v7250 = vunpack.c.l.b16 %v7115
        %v7251 = vunpack.c.l.b16 %v7116
        %v7252 = vunpack.c.l.b16 %v7117
        %v7253 = vunpack.c.l.b16 %v7118
        %v7254 = vunpack.c.l.b16 %v7119
        %v7255 = vunpack.c.l.b16 %v7120
        %v7256 = vunpack.c.l.b16 %v7121
        %v7257 = vunpack.c.l.b16 %v7122
        %v7258 = vunpack.c.l.b16 %v7123
        %v7259 = vunpack.c.l.b16 %v7124
        %v7260 = vunpack.c.l.b16 %v7125
        %v7261 = vunpack.c.l.b16 %v7126
        %v7262 = vunpack.c.l.b16 %v7127
        %v7263 = vunpack.c.l.b16 %v7128
        %v7264 = vunpack.c.l.b16 %v7129
        %v7265 = vunpack.c.l.b16 %v7130
        %v7266 = vunpack.c.l.b16 %v7131
        %v7267 = vunpack.c.l.b16 %v7132
        %v7268 = vunpack.c.l.b16 %v7133
        %v7269 = vunpack.c.l.b16 %v7134
        %v7270 = vunpack.c.l.b16 %v7135
        %v7271 = vunpack.c.l.b16 %v7136
        %v7272 = vunpack.c.l.b16 %v7137
        %v7273 = vunpack.c.l.b16 %v7138
        %v7274 = vunpack.c.l.b16 %v7139
        %v7275 = vunpack.c.l.b16 %v7140
        %v7276 = vunpack.c.l.b16 %v7141
        %v7277 = vunpack.c.l.b16 %v7142
        %v7278 = vunpack.c.l.b16 %v7143
        %v7279 = vunpack.c.l.b16 %v7144
        %v7280 = vunpack.c.l.b16 %v7145
        %v7281 = vunpack.c.l.b16 %v7146
        %v7282 = vunpack.c.l.b16 %v7147
        %v7283 = vunpack.c.l.b16 %v7148
        %v7284 = vunpack.c.l.b16 %v7149
        %v7285 = vunpack.c.l.b16 %v7150
        %v7286 = vunpack.c.l.b16 %v7151
        %v7287 = vunpack.c.l.b16 %v7152
        %v7288 = vunpack.c.l.b16 %v7153
        %v7289 = vunpack.c.l.b16 %v7154
        %v7290 = vunpack.c.l.b16 %v7155
        %v7291 = vunpack.c.l.b16 %v7156
        %v7292 = vunpack.c.l.b16 %v7157
        %v7293 = vunpack.c.l.b16 %v7158
        %v7294 = vpack.c.b16 %v7231, %v7230
        %v7295 = vpack.c.b16 %v7233, %v7232
        %v7296 = vpack.c.b16 %v7235, %v7234
        %v7297 = vpack.c.b16 %v7237, %v7236
        %v7298 = vpack.c.b16 %v7239, %v7238
        %v7299 = vpack.c.b16 %v7241, %v7240
        %v7300 = vpack.c.b16 %v7243, %v7242
        %v7301 = vpack.c.b16 %v7245, %v7244
        %v7302 = vpack.c.b16 %v7247, %v7246
        %v7303 = vpack.c.b16 %v7249, %v7248
        %v7304 = vpack.c.b16 %v7251, %v7250
        %v7305 = vpack.c.b16 %v7253, %v7252
        %v7306 = vpack.c.b16 %v7255, %v7254
        %v7307 = vpack.c.b16 %v7257, %v7256
        %v7308 = vpack.c.b16 %v7259, %v7258
        %v7309 = vpack.c.b16 %v7261, %v7260
        %v7310 = vpack.c.b16 %v7263, %v7262
        %v7311 = vpack.c.b16 %v7265, %v7264
        %v7312 = vpack.c.b16 %v7267, %v7266
        %v7313 = vpack.c.b16 %v7269, %v7268
        %v7314 = vpack.c.b16 %v7271, %v7270
        %v7315 = vpack.c.b16 %v7273, %v7272
        %v7316 = vpack.c.b16 %v7275, %v7274
        %v7317 = vpack.c.b16 %v7277, %v7276
        %v7318 = vpack.c.b16 %v7279, %v7278
        %v7319 = vpack.c.b16 %v7281, %v7280
        %v7320 = vpack.c.b16 %v7283, %v7282
        %v7321 = vpack.c.b16 %v7285, %v7284
        %v7322 = vpack.c.b16 %v7287, %v7286
        %v7323 = vpack.c.b16 %v7289, %v7288
        %v7324 = vpack.c.b16 %v7291, %v7290
        %v7325 = vpack.c.b16 %v7293, %v7292
        %7358 = vmatprep.subr.bf16.mxu0 0
        %7359 = vmatpush1.bf16.msra.mxu0 %v7294
        %7360 = vmatprep.subr.bf16.mxu0 0
        %7361 = vmatpush1.bf16.msra.mxu0 %v7295
        %7362 = vmatprep.subr.bf16.mxu0 0
        %7363 = vmatpush1.bf16.msra.mxu0 %v7296
        %7364 = vmatprep.subr.bf16.mxu0 0
        %7365 = vmatpush1.bf16.msra.mxu0 %v7297
        %7366 = vmatprep.subr.bf16.mxu0 0
        %7367 = vmatpush1.bf16.msra.mxu0 %v7298
        %7368 = vmatprep.subr.bf16.mxu0 0
        %7369 = vmatpush1.bf16.msra.mxu0 %v7299
        %7370 = vmatprep.subr.bf16.mxu0 0
        %7371 = vmatpush1.bf16.msra.mxu0 %v7300
        %7372 = vmatprep.subr.bf16.mxu0 0
        %7373 = vmatpush1.bf16.msra.mxu0 %v7301
        %7374 = vmatprep.subr.bf16.mxu0 0
        %7375 = vmatpush1.bf16.msra.mxu0 %v7302
        %7376 = vmatprep.subr.bf16.mxu0 0
        %7377 = vmatpush1.bf16.msra.mxu0 %v7303
        %7378 = vmatprep.subr.bf16.mxu0 0
        %7379 = vmatpush1.bf16.msra.mxu0 %v7304
        %7380 = vmatprep.subr.bf16.mxu0 0
        %7381 = vmatpush1.bf16.msra.mxu0 %v7305
        %7382 = vmatprep.subr.bf16.mxu0 0
        %7383 = vmatpush1.bf16.msra.mxu0 %v7306
        %7384 = vmatprep.subr.bf16.mxu0 0
        %7385 = vmatpush1.bf16.msra.mxu0 %v7307
        %7386 = vmatprep.subr.bf16.mxu0 0
        %7387 = vmatpush1.bf16.msra.mxu0 %v7308
        %7388 = vmatprep.subr.bf16.mxu0 0
        %7389 = vmatpush1.bf16.msra.mxu0 %v7309
        %7390 = vmatprep.mubr.bf16.mxu0 %v7032
        %7391 = vmatmul.mubr.bf16.gmra.mrb[0].mxu0 %v7031
        %v7392 = vpop.f32.mrb[0].mxu0
        %v7393 = vadd.f32 %v7164, %v7392
        %v7394 = vpop.f32.mrb[0].mxu0
        %v7395 = vpop.f32.mrb[0].mxu0
        %v7396 = vadd.f32 %v7164, %v7395
        %v7397 = vpop.f32.mrb[0].mxu0
        %7398 = vmatprep.mubr.bf16.mxu0 %v7036
        %7399 = vmatmul.mubr.bf16.gmra.mrb[0].mxu0 %v7035
        %v7400 = vpop.f32.mrb[0].mxu0
        %v7401 = vadd.f32 %v7164, %v7400
        %v7402 = vpop.f32.mrb[0].mxu0
        %v7403 = vpop.f32.mrb[0].mxu0
        %v7404 = vadd.f32 %v7164, %v7403
        %v7405 = vpop.f32.mrb[0].mxu0
        %7406 = vmatprep.mubr.bf16.mxu0 %v7040
        %7407 = vmatmul.mubr.bf16.gmra.mrb[0].mxu0 %v7039
        %v7408 = vpop.f32.mrb[0].mxu0
        %v7409 = vadd.f32 %v7164, %v7408
        %v7410 = vpop.f32.mrb[0].mxu0
        %v7411 = vpop.f32.mrb[0].mxu0
        %v7412 = vadd.f32 %v7164, %v7411
        %v7413 = vpop.f32.mrb[0].mxu0
        %7414 = vmatprep.mubr.bf16.mxu0 %v7044
        %7415 = vmatmul.mubr.bf16.gmra.mrb[0].mxu0 %v7043
        %v7416 = vpop.f32.mrb[0].mxu0
        %v7417 = vadd.f32 %v7164, %v7416
        %v7418 = vpop.f32.mrb[0].mxu0
        %v7419 = vpop.f32.mrb[0].mxu0
        %v7420 = vadd.f32 %v7164, %v7419
        %v7421 = vpop.f32.mrb[0].mxu0
        %7422 = vmatprep.mubr.bf16.mxu0 %v7048
        %7423 = vmatmul.mubr.bf16.gmra.mrb[0].mxu0 %v7047
        %v7424 = vpop.f32.mrb[0].mxu0
        %v7425 = vadd.f32 %v7164, %v7424
        %v7426 = vpop.f32.mrb[0].mxu0
        %v7427 = vpop.f32.mrb[0].mxu0
        %v7428 = vadd.f32 %v7164, %v7427
        %v7429 = vpop.f32.mrb[0].mxu0
        %7430 = vmatprep.mubr.bf16.mxu0 %v7052
        %7431 = vmatmul.mubr.bf16.gmra.mrb[0].mxu0 %v7051
        %v7432 = vpop.f32.mrb[0].mxu0
        %v7433 = vadd.f32 %v7164, %v7432
        %v7434 = vpop.f32.mrb[0].mxu0
        %v7435 = vpop.f32.mrb[0].mxu0
        %v7436 = vadd.f32 %v7164, %v7435
        %v7437 = vpop.f32.mrb[0].mxu0
        %7438 = vmatprep.mubr.bf16.mxu0 %v7056
        %7439 = vmatmul.mubr.bf16.gmra.mrb[0].mxu0 %v7055
        %v7440 = vpop.f32.mrb[0].mxu0
        %v7441 = vadd.f32 %v7164, %v7440
        %v7442 = vpop.f32.mrb[0].mxu0
        %v7443 = vpop.f32.mrb[0].mxu0
        %v7444 = vadd.f32 %v7164, %v7443
        %v7445 = vpop.f32.mrb[0].mxu0
        %7446 = vmatprep.mubr.bf16.mxu0 %v7060
        %7447 = vmatmul.mubr.bf16.gmra.mrb[0].mxu0 %v7059
        %v7448 = vpop.f32.mrb[0].mxu0
        %v7449 = vadd.f32 %v7164, %v7448
        %v7450 = vpop.f32.mrb[0].mxu0
        %v7451 = vpop.f32.mrb[0].mxu0
        %v7452 = vadd.f32 %v7164, %v7451
        %v7453 = vpop.f32.mrb[0].mxu0
        %7454 = vmatprep.mubr.bf16.mxu0 %v7064
        %7455 = vmatmul.mubr.bf16.gmra.mrb[0].mxu0 %v7063
        %v7456 = vpop.f32.mrb[0].mxu0
        %v7457 = vadd.f32 %v7164, %v7456
        %v7458 = vpop.f32.mrb[0].mxu0
        %v7459 = vpop.f32.mrb[0].mxu0
        %v7460 = vadd.f32 %v7164, %v7459
        %v7461 = vpop.f32.mrb[0].mxu0
        %7462 = vmatprep.mubr.bf16.mxu0 %v7068
        %7463 = vmatmul.mubr.bf16.gmra.mrb[0].mxu0 %v7067
        %v7464 = vpop.f32.mrb[0].mxu0
        %v7465 = vadd.f32 %v7164, %v7464
        %v7466 = vpop.f32.mrb[0].mxu0
        %v7467 = vpop.f32.mrb[0].mxu0
        %v7468 = vadd.f32 %v7164, %v7467
        %v7469 = vpop.f32.mrb[0].mxu0
        %7470 = vmatprep.mubr.bf16.mxu0 %v7072
        %7471 = vmatmul.mubr.bf16.gmra.mrb[0].mxu0 %v7071
        %v7472 = vpop.f32.mrb[0].mxu0
        %v7473 = vadd.f32 %v7164, %v7472
        %v7474 = vpop.f32.mrb[0].mxu0
        %v7475 = vpop.f32.mrb[0].mxu0
        %v7476 = vadd.f32 %v7164, %v7475
        %v7477 = vpop.f32.mrb[0].mxu0
        %7478 = vmatprep.mubr.bf16.mxu0 %v7076
        %7479 = vmatmul.mubr.bf16.gmra.mrb[0].mxu0 %v7075
        %v7480 = vpop.f32.mrb[0].mxu0
        %v7481 = vadd.f32 %v7164, %v7480
        %v7482 = vpop.f32.mrb[0].mxu0
        %v7483 = vpop.f32.mrb[0].mxu0
        %v7484 = vadd.f32 %v7164, %v7483
        %v7485 = vpop.f32.mrb[0].mxu0
        %7486 = vmatprep.mubr.bf16.mxu0 %v7080
        %7487 = vmatmul.mubr.bf16.gmra.mrb[0].mxu0 %v7079
        %v7488 = vpop.f32.mrb[0].mxu0
        %v7489 = vadd.f32 %v7164, %v7488
        %v7490 = vpop.f32.mrb[0].mxu0
        %v7491 = vpop.f32.mrb[0].mxu0
        %v7492 = vadd.f32 %v7164, %v7491
        %v7493 = vpop.f32.mrb[0].mxu0
        %7494 = vmatprep.mubr.bf16.mxu0 %v7084
        %7495 = vmatmul.mubr.bf16.gmra.mrb[0].mxu0 %v7083
        %v7496 = vpop.f32.mrb[0].mxu0
        %v7497 = vadd.f32 %v7164, %v7496
        %v7498 = vpop.f32.mrb[0].mxu0
        %v7499 = vpop.f32.mrb[0].mxu0
        %v7500 = vadd.f32 %v7164, %v7499
        %v7501 = vpop.f32.mrb[0].mxu0
        %7502 = vmatprep.mubr.bf16.mxu0 %v7088
        %7503 = vmatmul.mubr.bf16.gmra.mrb[0].mxu0 %v7087
        %v7504 = vpop.f32.mrb[0].mxu0
        %v7505 = vadd.f32 %v7164, %v7504
        %v7506 = vpop.f32.mrb[0].mxu0
        %v7507 = vpop.f32.mrb[0].mxu0
        %v7508 = vadd.f32 %v7164, %v7507
        %v7509 = vpop.f32.mrb[0].mxu0
        %7510 = vmatprep.mubr.bf16.mxu0 %v7092
        %7511 = vmatmul.mubr.bf16.gmra.mrb[0].mxu0 %v7091
        %v7512 = vpop.f32.mrb[0].mxu0
        %v7513 = vadd.f32 %v7164, %v7512
        %v7514 = vpop.f32.mrb[0].mxu0
        %v7515 = vpop.f32.mrb[0].mxu0
        %v7516 = vadd.f32 %v7164, %v7515
        %v7517 = vpop.f32.mrb[0].mxu0
        %7518 = vdwg.mxu0
        %7519 = vmatprep.subr.bf16.mxu0 0
        %7520 = vmatpush1.bf16.msra.mxu0 %v7310
        %7521 = vmatprep.subr.bf16.mxu0 0
        %7522 = vmatpush1.bf16.msra.mxu0 %v7311
        %7523 = vmatprep.subr.bf16.mxu0 0
        %7524 = vmatpush1.bf16.msra.mxu0 %v7312
        %7525 = vmatprep.subr.bf16.mxu0 0
        %7526 = vmatpush1.bf16.msra.mxu0 %v7313
        %7527 = vmatprep.subr.bf16.mxu0 0
        %7528 = vmatpush1.bf16.msra.mxu0 %v7314
        %7529 = vmatprep.subr.bf16.mxu0 0
        %7530 = vmatpush1.bf16.msra.mxu0 %v7315
        %7531 = vmatprep.subr.bf16.mxu0 0
        %7532 = vmatpush1.bf16.msra.mxu0 %v7316
        %7533 = vmatprep.subr.bf16.mxu0 0
        %7534 = vmatpush1.bf16.msra.mxu0 %v7317
        %7535 = vmatprep.subr.bf16.mxu0 0
        %7536 = vmatpush1.bf16.msra.mxu0 %v7318
        %7537 = vmatprep.subr.bf16.mxu0 0
        %7538 = vmatpush1.bf16.msra.mxu0 %v7319
        %7539 = vmatprep.subr.bf16.mxu0 0
        %7540 = vmatpush1.bf16.msra.mxu0 %v7320
        %7541 = vmatprep.subr.bf16.mxu0 0
        %7542 = vmatpush1.bf16.msra.mxu0 %v7321
        %7543 = vmatprep.subr.bf16.mxu0 0
        %7544 = vmatpush1.bf16.msra.mxu0 %v7322
        %7545 = vmatprep.subr.bf16.mxu0 0
        %7546 = vmatpush1.bf16.msra.mxu0 %v7323
        %7547 = vmatprep.subr.bf16.mxu0 0
        %7548 = vmatpush1.bf16.msra.mxu0 %v7324
        %7549 = vmatprep.subr.bf16.mxu0 0
        %7550 = vmatpush1.bf16.msra.mxu0 %v7325
        %7551 = vmatprep.mubr.bf16.mxu0 %v7034
        %7552 = vmatmul.mubr.bf16.gmra.mrb[0].mxu0 %v7033
        %v7553 = vpop.f32.mrb[0].mxu0
        %v7554 = vadd.f32 %v7393, %v7553
        %v7555 = vpop.f32.mrb[0].mxu0
        %v7556 = vpop.f32.mrb[0].mxu0
        %v7557 = vadd.f32 %v7396, %v7556
        %v7558 = vpop.f32.mrb[0].mxu0
        %7559 = vmatprep.mubr.bf16.mxu0 %v7038
        %7560 = vmatmul.mubr.bf16.gmra.mrb[0].mxu0 %v7037
        %v7561 = vpop.f32.mrb[0].mxu0
        %v7562 = vadd.f32 %v7401, %v7561
        %v7563 = vpop.f32.mrb[0].mxu0
        %v7564 = vpop.f32.mrb[0].mxu0
        %v7565 = vadd.f32 %v7404, %v7564
        %v7566 = vpop.f32.mrb[0].mxu0
        %7567 = vmatprep.mubr.bf16.mxu0 %v7042
        %7568 = vmatmul.mubr.bf16.gmra.mrb[0].mxu0 %v7041
        %v7569 = vpop.f32.mrb[0].mxu0
        %v7570 = vadd.f32 %v7409, %v7569
        %v7571 = vpop.f32.mrb[0].mxu0
        %v7572 = vpop.f32.mrb[0].mxu0
        %v7573 = vadd.f32 %v7412, %v7572
        %v7574 = vpop.f32.mrb[0].mxu0
        %7575 = vmatprep.mubr.bf16.mxu0 %v7046
        %7576 = vmatmul.mubr.bf16.gmra.mrb[0].mxu0 %v7045
        %v7577 = vpop.f32.mrb[0].mxu0
        %v7578 = vadd.f32 %v7417, %v7577
        %v7579 = vpop.f32.mrb[0].mxu0
        %v7580 = vpop.f32.mrb[0].mxu0
        %v7581 = vadd.f32 %v7420, %v7580
        %v7582 = vpop.f32.mrb[0].mxu0
        %7583 = vmatprep.mubr.bf16.mxu0 %v7050
        %7584 = vmatmul.mubr.bf16.gmra.mrb[0].mxu0 %v7049
        %v7585 = vpop.f32.mrb[0].mxu0
        %v7586 = vadd.f32 %v7425, %v7585
        %v7587 = vpop.f32.mrb[0].mxu0
        %v7588 = vpop.f32.mrb[0].mxu0
        %v7589 = vadd.f32 %v7428, %v7588
        %v7590 = vpop.f32.mrb[0].mxu0
        %7591 = vmatprep.mubr.bf16.mxu0 %v7054
        %7592 = vmatmul.mubr.bf16.gmra.mrb[0].mxu0 %v7053
        %v7593 = vpop.f32.mrb[0].mxu0
        %v7594 = vadd.f32 %v7433, %v7593
        %v7595 = vpop.f32.mrb[0].mxu0
        %v7596 = vpop.f32.mrb[0].mxu0
        %v7597 = vadd.f32 %v7436, %v7596
        %v7598 = vpop.f32.mrb[0].mxu0
        %7599 = vmatprep.mubr.bf16.mxu0 %v7058
        %7600 = vmatmul.mubr.bf16.gmra.mrb[0].mxu0 %v7057
        %v7601 = vpop.f32.mrb[0].mxu0
        %v7602 = vadd.f32 %v7441, %v7601
        %v7603 = vpop.f32.mrb[0].mxu0
        %v7604 = vpop.f32.mrb[0].mxu0
        %v7605 = vadd.f32 %v7444, %v7604
        %v7606 = vpop.f32.mrb[0].mxu0
        %7607 = vmatprep.mubr.bf16.mxu0 %v7062
        %7608 = vmatmul.mubr.bf16.gmra.mrb[0].mxu0 %v7061
        %v7609 = vpop.f32.mrb[0].mxu0
        %v7610 = vadd.f32 %v7449, %v7609
        %v7611 = vpop.f32.mrb[0].mxu0
        %v7612 = vpop.f32.mrb[0].mxu0
        %v7613 = vadd.f32 %v7452, %v7612
        %v7614 = vpop.f32.mrb[0].mxu0
        %7615 = vmatprep.mubr.bf16.mxu0 %v7066
        %7616 = vmatmul.mubr.bf16.gmra.mrb[0].mxu0 %v7065
        %v7617 = vpop.f32.mrb[0].mxu0
        %v7618 = vadd.f32 %v7457, %v7617
        %v7619 = vpop.f32.mrb[0].mxu0
        %v7620 = vpop.f32.mrb[0].mxu0
        %v7621 = vadd.f32 %v7460, %v7620
        %v7622 = vpop.f32.mrb[0].mxu0
        %7623 = vmatprep.mubr.bf16.mxu0 %v7070
        %7624 = vmatmul.mubr.bf16.gmra.mrb[0].mxu0 %v7069
        %v7625 = vpop.f32.mrb[0].mxu0
        %v7626 = vadd.f32 %v7465, %v7625
        %v7627 = vpop.f32.mrb[0].mxu0
        %v7628 = vpop.f32.mrb[0].mxu0
        %v7629 = vadd.f32 %v7468, %v7628
        %v7630 = vpop.f32.mrb[0].mxu0
        %7631 = vmatprep.mubr.bf16.mxu0 %v7074
        %7632 = vmatmul.mubr.bf16.gmra.mrb[0].mxu0 %v7073
        %v7633 = vpop.f32.mrb[0].mxu0
        %v7634 = vadd.f32 %v7473, %v7633
        %v7635 = vpop.f32.mrb[0].mxu0
        %v7636 = vpop.f32.mrb[0].mxu0
        %v7637 = vadd.f32 %v7476, %v7636
        %v7638 = vpop.f32.mrb[0].mxu0
        %7639 = vmatprep.mubr.bf16.mxu0 %v7078
        %7640 = vmatmul.mubr.bf16.gmra.mrb[0].mxu0 %v7077
        %v7641 = vpop.f32.mrb[0].mxu0
        %v7642 = vadd.f32 %v7481, %v7641
        %v7643 = vpop.f32.mrb[0].mxu0
        %v7644 = vpop.f32.mrb[0].mxu0
        %v7645 = vadd.f32 %v7484, %v7644
        %v7646 = vpop.f32.mrb[0].mxu0
        %7647 = vmatprep.mubr.bf16.mxu0 %v7082
        %7648 = vmatmul.mubr.bf16.gmra.mrb[0].mxu0 %v7081
        %v7649 = vpop.f32.mrb[0].mxu0
        %v7650 = vadd.f32 %v7489, %v7649
        %v7651 = vpop.f32.mrb[0].mxu0
        %v7652 = vpop.f32.mrb[0].mxu0
        %v7653 = vadd.f32 %v7492, %v7652
        %v7654 = vpop.f32.mrb[0].mxu0
        %7655 = vmatprep.mubr.bf16.mxu0 %v7086
        %7656 = vmatmul.mubr.bf16.gmra.mrb[0].mxu0 %v7085
        %v7657 = vpop.f32.mrb[0].mxu0
        %v7658 = vadd.f32 %v7497, %v7657
        %v7659 = vpop.f32.mrb[0].mxu0
        %v7660 = vpop.f32.mrb[0].mxu0
        %v7661 = vadd.f32 %v7500, %v7660
        %v7662 = vpop.f32.mrb[0].mxu0
        %7663 = vmatprep.mubr.bf16.mxu0 %v7090
        %7664 = vmatmul.mubr.bf16.gmra.mrb[0].mxu0 %v7089
        %v7665 = vpop.f32.mrb[0].mxu0
        %v7666 = vadd.f32 %v7505, %v7665
        %v7667 = vpop.f32.mrb[0].mxu0
        %v7668 = vpop.f32.mrb[0].mxu0
        %v7669 = vadd.f32 %v7508, %v7668
        %v7670 = vpop.f32.mrb[0].mxu0
        %7671 = vmatprep.mubr.bf16.mxu0 %v7094
        %7672 = vmatmul.mubr.bf16.gmra.mrb[0].mxu0 %v7093
        %v7673 = vpop.f32.mrb[0].mxu0
        %v7674 = vadd.f32 %v7513, %v7673
        %v7675 = vpop.f32.mrb[0].mxu0
        %v7676 = vpop.f32.mrb[0].mxu0
        %v7677 = vadd.f32 %v7516, %v7676
        %v7678 = vpop.f32.mrb[0].mxu0
        %7679 = vdwg.mxu0
        %v7680 = vadd.f32 %v5825, %v7554
        %v7681 = vadd.f32 %v5826, %v7557
        %v7682 = vadd.f32 %v5827, %v7562
        %v7683 = vadd.f32 %v5828, %v7565
        %v7684 = vadd.f32 %v5829, %v7570
        %v7685 = vadd.f32 %v5830, %v7573
        %v7686 = vadd.f32 %v5831, %v7578
        %v7687 = vadd.f32 %v5832, %v7581
        %v7688 = vadd.f32 %v5833, %v7586
        %v7689 = vadd.f32 %v5834, %v7589
        %v7690 = vadd.f32 %v5835, %v7594
        %v7691 = vadd.f32 %v5836, %v7597
        %v7692 = vadd.f32 %v5837, %v7602
        %v7693 = vadd.f32 %v5838, %v7605
        %v7694 = vadd.f32 %v5839, %v7610
        %v7695 = vadd.f32 %v5840, %v7613
        %v7696 = vadd.f32 %v5841, %v7618
        %v7697 = vadd.f32 %v5842, %v7621
        %v7698 = vadd.f32 %v5843, %v7626
        %v7699 = vadd.f32 %v5844, %v7629
        %v7700 = vadd.f32 %v5845, %v7634
        %v7701 = vadd.f32 %v5846, %v7637
        %v7702 = vadd.f32 %v5847, %v7642
        %v7703 = vadd.f32 %v5848, %v7645
        %v7704 = vadd.f32 %v5849, %v7650
        %v7705 = vadd.f32 %v5850, %v7653
        %v7706 = vadd.f32 %v5851, %v7658
        %v7707 = vadd.f32 %v5852, %v7661
        %v7708 = vadd.f32 %v5853, %v7666
        %v7709 = vadd.f32 %v5854, %v7669
        %v7710 = vadd.f32 %v5855, %v7674
        %v7711 = vadd.f32 %v5856, %v7677
        %7712 = vst [vmem:[#allocation2] sm:$0xff] %v7680
        %7713 = vst [vmem:[#allocation2 + $0x8] sm:$0xff] %v7681
        %7714 = vst [vmem:[#allocation2 + $0x10] sm:$0xff] %v7682
        %7715 = vst [vmem:[#allocation2 + $0x18] sm:$0xff] %v7683
        %7716 = vst [vmem:[#allocation2 + $0x20] sm:$0xff] %v7684
        %7717 = vst [vmem:[#allocation2 + $0x28] sm:$0xff] %v7685
        %7718 = vst [vmem:[#allocation2 + $0x30] sm:$0xff] %v7686
        %7719 = vst [vmem:[#allocation2 + $0x38] sm:$0xff] %v7687
        %7720 = vst [vmem:[#allocation2 + $0x40] sm:$0xff] %v7688
        %7721 = vst [vmem:[#allocation2 + $0x48] sm:$0xff] %v7689
        %7722 = vst [vmem:[#allocation2 + $0x50] sm:$0xff] %v7690
        %7723 = vst [vmem:[#allocation2 + $0x58] sm:$0xff] %v7691
        %7724 = vst [vmem:[#allocation2 + $0x60] sm:$0xff] %v7692
        %7725 = vst [vmem:[#allocation2 + $0x68] sm:$0xff] %v7693
        %7726 = vst [vmem:[#allocation2 + $0x70] sm:$0xff] %v7694
        %7727 = vst [vmem:[#allocation2 + $0x78] sm:$0xff] %v7695
        %7728 = vst [vmem:[#allocation2 + $0x80] sm:$0xff] %v7696
        %7729 = vst [vmem:[#allocation2 + $0x88] sm:$0xff] %v7697
        %7730 = vst [vmem:[#allocation2 + $0x90] sm:$0xff] %v7698
        %7731 = vst [vmem:[#allocation2 + $0x98] sm:$0xff] %v7699
        %7732 = vst [vmem:[#allocation2 + $0xa0] sm:$0xff] %v7700
        %7733 = vst [vmem:[#allocation2 + $0xa8] sm:$0xff] %v7701
        %7734 = vst [vmem:[#allocation2 + $0xb0] sm:$0xff] %v7702
        %7735 = vst [vmem:[#allocation2 + $0xb8] sm:$0xff] %v7703
        %7736 = vst [vmem:[#allocation2 + $0xc0] sm:$0xff] %v7704
        %7737 = vst [vmem:[#allocation2 + $0xc8] sm:$0xff] %v7705
        %7738 = vst [vmem:[#allocation2 + $0xd0] sm:$0xff] %v7706
        %7739 = vst [vmem:[#allocation2 + $0xd8] sm:$0xff] %v7707
        %7740 = vst [vmem:[#allocation2 + $0xe0] sm:$0xff] %v7708
        %7741 = vst [vmem:[#allocation2 + $0xe8] sm:$0xff] %v7709
        %7742 = vst [vmem:[#allocation2 + $0xf0] sm:$0xff] %v7710
        %7743 = vst [vmem:[#allocation2 + $0xf8] sm:$0xff] %v7711
        %p7744 = scmp.eq.s32.totalorder %s54, 5
        // Predicated region
        $region145: #{tpu_custom_call.1} parent=79 // pred_check
          %p7745 = pneg %p7744
        $region146: #{tpu_custom_call.1} parent=79 // pred_check_branch
          %7747 = sbr.rel (%p7745) target = $region148
        $region147: #{tpu_custom_call.1} parent=79 // pred_region
          %v7748 = vld [vmem:[#allocation21] sm:$0x1]
          %v7749 = vld [vmem:[#allocation23] sm:$0x1]
          %7750 = vadd.xlane.f32.xlu0 %v7680
          %v7751 = vpop.xlane.xlu0 %7750
          %7752 = vadd.xlane.f32.xlu0 %v7681
          %v7753 = vpop.xlane.xlu0 %7752
          %7754 = vadd.xlane.f32.xlu0 %v7682
          %v7755 = vpop.xlane.xlu0 %7754
          %7756 = vadd.xlane.f32.xlu0 %v7683
          %v7757 = vpop.xlane.xlu0 %7756
          %7758 = vadd.xlane.f32.xlu0 %v7684
          %v7759 = vpop.xlane.xlu0 %7758
          %7760 = vadd.xlane.f32.xlu0 %v7685
          %v7761 = vpop.xlane.xlu0 %7760
          %7762 = vadd.xlane.f32.xlu0 %v7686
          %v7763 = vpop.xlane.xlu0 %7762
          %7764 = vadd.xlane.f32.xlu0 %v7687
          %v7765 = vpop.xlane.xlu0 %7764
          %7766 = vadd.xlane.f32.xlu0 %v7688
          %v7767 = vpop.xlane.xlu0 %7766
          %7768 = vadd.xlane.f32.xlu0 %v7689
          %v7769 = vpop.xlane.xlu0 %7768
          %7770 = vadd.xlane.f32.xlu0 %v7690
          %v7771 = vpop.xlane.xlu0 %7770
          %7772 = vadd.xlane.f32.xlu0 %v7691
          %v7773 = vpop.xlane.xlu0 %7772
          %7774 = vadd.xlane.f32.xlu0 %v7692
          %v7775 = vpop.xlane.xlu0 %7774
          %7776 = vadd.xlane.f32.xlu0 %v7693
          %v7777 = vpop.xlane.xlu0 %7776
          %7778 = vadd.xlane.f32.xlu0 %v7694
          %v7779 = vpop.xlane.xlu0 %7778
          %7780 = vadd.xlane.f32.xlu0 %v7695
          %v7781 = vpop.xlane.xlu0 %7780
          %7782 = vadd.xlane.f32.xlu0 %v7696
          %v7783 = vpop.xlane.xlu0 %7782
          %7784 = vadd.xlane.f32.xlu0 %v7697
          %v7785 = vpop.xlane.xlu0 %7784
          %7786 = vadd.xlane.f32.xlu0 %v7698
          %v7787 = vpop.xlane.xlu0 %7786
          %7788 = vadd.xlane.f32.xlu0 %v7699
          %v7789 = vpop.xlane.xlu0 %7788
          %7790 = vadd.xlane.f32.xlu0 %v7700
          %v7791 = vpop.xlane.xlu0 %7790
          %7792 = vadd.xlane.f32.xlu0 %v7701
          %v7793 = vpop.xlane.xlu0 %7792
          %7794 = vadd.xlane.f32.xlu0 %v7702
          %v7795 = vpop.xlane.xlu0 %7794
          %7796 = vadd.xlane.f32.xlu0 %v7703
          %v7797 = vpop.xlane.xlu0 %7796
          %7798 = vadd.xlane.f32.xlu0 %v7704
          %v7799 = vpop.xlane.xlu0 %7798
          %7800 = vadd.xlane.f32.xlu0 %v7705
          %v7801 = vpop.xlane.xlu0 %7800
          %7802 = vadd.xlane.f32.xlu0 %v7706
          %v7803 = vpop.xlane.xlu0 %7802
          %7804 = vadd.xlane.f32.xlu0 %v7707
          %v7805 = vpop.xlane.xlu0 %7804
          %7806 = vadd.xlane.f32.xlu0 %v7708
          %v7807 = vpop.xlane.xlu0 %7806
          %7808 = vadd.xlane.f32.xlu0 %v7709
          %v7809 = vpop.xlane.xlu0 %7808
          %7810 = vadd.xlane.f32.xlu0 %v7710
          %v7811 = vpop.xlane.xlu0 %7810
          %7812 = vadd.xlane.f32.xlu0 %v7711
          %v7813 = vpop.xlane.xlu0 %7812
          %v7814 = vmul.f32 %v7751, %v1129
          %v7815 = vmul.f32 %v7753, %v1129
          %v7816 = vmul.f32 %v7755, %v1129
          %v7817 = vmul.f32 %v7757, %v1129
          %v7818 = vmul.f32 %v7759, %v1129
          %v7819 = vmul.f32 %v7761, %v1129
          %v7820 = vmul.f32 %v7763, %v1129
          %v7821 = vmul.f32 %v7765, %v1129
          %v7822 = vmul.f32 %v7767, %v1129
          %v7823 = vmul.f32 %v7769, %v1129
          %v7824 = vmul.f32 %v7771, %v1129
          %v7825 = vmul.f32 %v7773, %v1129
          %v7826 = vmul.f32 %v7775, %v1129
          %v7827 = vmul.f32 %v7777, %v1129
          %v7828 = vmul.f32 %v7779, %v1129
          %v7829 = vmul.f32 %v7781, %v1129
          %v7830 = vmul.f32 %v7783, %v1129
          %v7831 = vmul.f32 %v7785, %v1129
          %v7832 = vmul.f32 %v7787, %v1129
          %v7833 = vmul.f32 %v7789, %v1129
          %v7834 = vmul.f32 %v7791, %v1129
          %v7835 = vmul.f32 %v7793, %v1129
          %v7836 = vmul.f32 %v7795, %v1129
          %v7837 = vmul.f32 %v7797, %v1129
          %v7838 = vmul.f32 %v7799, %v1129
          %v7839 = vmul.f32 %v7801, %v1129
          %v7840 = vmul.f32 %v7803, %v1129
          %v7841 = vmul.f32 %v7805, %v1129
          %v7842 = vmul.f32 %v7807, %v1129
          %v7843 = vmul.f32 %v7809, %v1129
          %v7844 = vmul.f32 %v7811, %v1129
          %v7845 = vmul.f32 %v7813, %v1129
          %v7846 = vsub.f32 %v7680, %v7814
          %v7847 = vsub.f32 %v7681, %v7815
          %v7848 = vsub.f32 %v7682, %v7816
          %v7849 = vsub.f32 %v7683, %v7817
          %v7850 = vsub.f32 %v7684, %v7818
          %v7851 = vsub.f32 %v7685, %v7819
          %v7852 = vsub.f32 %v7686, %v7820
          %v7853 = vsub.f32 %v7687, %v7821
          %v7854 = vsub.f32 %v7688, %v7822
          %v7855 = vsub.f32 %v7689, %v7823
          %v7856 = vsub.f32 %v7690, %v7824
          %v7857 = vsub.f32 %v7691, %v7825
          %v7858 = vsub.f32 %v7692, %v7826
          %v7859 = vsub.f32 %v7693, %v7827
          %v7860 = vsub.f32 %v7694, %v7828
          %v7861 = vsub.f32 %v7695, %v7829
          %v7862 = vsub.f32 %v7696, %v7830
          %v7863 = vsub.f32 %v7697, %v7831
          %v7864 = vsub.f32 %v7698, %v7832
          %v7865 = vsub.f32 %v7699, %v7833
          %v7866 = vsub.f32 %v7700, %v7834
          %v7867 = vsub.f32 %v7701, %v7835
          %v7868 = vsub.f32 %v7702, %v7836
          %v7869 = vsub.f32 %v7703, %v7837
          %v7870 = vsub.f32 %v7704, %v7838
          %v7871 = vsub.f32 %v7705, %v7839
          %v7872 = vsub.f32 %v7706, %v7840
          %v7873 = vsub.f32 %v7707, %v7841
          %v7874 = vsub.f32 %v7708, %v7842
          %v7875 = vsub.f32 %v7709, %v7843
          %v7876 = vsub.f32 %v7710, %v7844
          %v7877 = vsub.f32 %v7711, %v7845
          %v7878 = vmul.f32 %v7846, %v7846
          %v7879 = vmul.f32 %v7847, %v7847
          %v7880 = vmul.f32 %v7848, %v7848
          %v7881 = vmul.f32 %v7849, %v7849
          %v7882 = vmul.f32 %v7850, %v7850
          %v7883 = vmul.f32 %v7851, %v7851
          %v7884 = vmul.f32 %v7852, %v7852
          %v7885 = vmul.f32 %v7853, %v7853
          %v7886 = vmul.f32 %v7854, %v7854
          %v7887 = vmul.f32 %v7855, %v7855
          %v7888 = vmul.f32 %v7856, %v7856
          %v7889 = vmul.f32 %v7857, %v7857
          %v7890 = vmul.f32 %v7858, %v7858
          %v7891 = vmul.f32 %v7859, %v7859
          %v7892 = vmul.f32 %v7860, %v7860
          %v7893 = vmul.f32 %v7861, %v7861
          %v7894 = vmul.f32 %v7862, %v7862
          %v7895 = vmul.f32 %v7863, %v7863
          %v7896 = vmul.f32 %v7864, %v7864
          %v7897 = vmul.f32 %v7865, %v7865
          %v7898 = vmul.f32 %v7866, %v7866
          %v7899 = vmul.f32 %v7867, %v7867
          %v7900 = vmul.f32 %v7868, %v7868
          %v7901 = vmul.f32 %v7869, %v7869
          %v7902 = vmul.f32 %v7870, %v7870
          %v7903 = vmul.f32 %v7871, %v7871
          %v7904 = vmul.f32 %v7872, %v7872
          %v7905 = vmul.f32 %v7873, %v7873
          %v7906 = vmul.f32 %v7874, %v7874
          %v7907 = vmul.f32 %v7875, %v7875
          %v7908 = vmul.f32 %v7876, %v7876
          %v7909 = vmul.f32 %v7877, %v7877
          %7910 = vadd.xlane.f32.xlu0 %v7878
          %v7911 = vpop.xlane.xlu0 %7910
          %7912 = vadd.xlane.f32.xlu0 %v7879
          %v7913 = vpop.xlane.xlu0 %7912
          %7914 = vadd.xlane.f32.xlu0 %v7880
          %v7915 = vpop.xlane.xlu0 %7914
          %7916 = vadd.xlane.f32.xlu0 %v7881
          %v7917 = vpop.xlane.xlu0 %7916
          %7918 = vadd.xlane.f32.xlu0 %v7882
          %v7919 = vpop.xlane.xlu0 %7918
          %7920 = vadd.xlane.f32.xlu0 %v7883
          %v7921 = vpop.xlane.xlu0 %7920
          %7922 = vadd.xlane.f32.xlu0 %v7884
          %v7923 = vpop.xlane.xlu0 %7922
          %7924 = vadd.xlane.f32.xlu0 %v7885
          %v7925 = vpop.xlane.xlu0 %7924
          %7926 = vadd.xlane.f32.xlu0 %v7886
          %v7927 = vpop.xlane.xlu0 %7926
          %7928 = vadd.xlane.f32.xlu0 %v7887
          %v7929 = vpop.xlane.xlu0 %7928
          %7930 = vadd.xlane.f32.xlu0 %v7888
          %v7931 = vpop.xlane.xlu0 %7930
          %7932 = vadd.xlane.f32.xlu0 %v7889
          %v7933 = vpop.xlane.xlu0 %7932
          %7934 = vadd.xlane.f32.xlu0 %v7890
          %v7935 = vpop.xlane.xlu0 %7934
          %7936 = vadd.xlane.f32.xlu0 %v7891
          %v7937 = vpop.xlane.xlu0 %7936
          %7938 = vadd.xlane.f32.xlu0 %v7892
          %v7939 = vpop.xlane.xlu0 %7938
          %7940 = vadd.xlane.f32.xlu0 %v7893
          %v7941 = vpop.xlane.xlu0 %7940
          %7942 = vadd.xlane.f32.xlu0 %v7894
          %v7943 = vpop.xlane.xlu0 %7942
          %7944 = vadd.xlane.f32.xlu0 %v7895
          %v7945 = vpop.xlane.xlu0 %7944
          %7946 = vadd.xlane.f32.xlu0 %v7896
          %v7947 = vpop.xlane.xlu0 %7946
          %7948 = vadd.xlane.f32.xlu0 %v7897
          %v7949 = vpop.xlane.xlu0 %7948
          %7950 = vadd.xlane.f32.xlu0 %v7898
          %v7951 = vpop.xlane.xlu0 %7950
          %7952 = vadd.xlane.f32.xlu0 %v7899
          %v7953 = vpop.xlane.xlu0 %7952
          %7954 = vadd.xlane.f32.xlu0 %v7900
          %v7955 = vpop.xlane.xlu0 %7954
          %7956 = vadd.xlane.f32.xlu0 %v7901
          %v7957 = vpop.xlane.xlu0 %7956
          %7958 = vadd.xlane.f32.xlu0 %v7902
          %v7959 = vpop.xlane.xlu0 %7958
          %7960 = vadd.xlane.f32.xlu0 %v7903
          %v7961 = vpop.xlane.xlu0 %7960
          %7962 = vadd.xlane.f32.xlu0 %v7904
          %v7963 = vpop.xlane.xlu0 %7962
          %7964 = vadd.xlane.f32.xlu0 %v7905
          %v7965 = vpop.xlane.xlu0 %7964
          %7966 = vadd.xlane.f32.xlu0 %v7906
          %v7967 = vpop.xlane.xlu0 %7966
          %7968 = vadd.xlane.f32.xlu0 %v7907
          %v7969 = vpop.xlane.xlu0 %7968
          %7970 = vadd.xlane.f32.xlu0 %v7908
          %v7971 = vpop.xlane.xlu0 %7970
          %7972 = vadd.xlane.f32.xlu0 %v7909
          %v7973 = vpop.xlane.xlu0 %7972
          %v7974 = vmul.f32 %v7911, %v1129
          %v7975 = vmul.f32 %v7913, %v1129
          %v7976 = vmul.f32 %v7915, %v1129
          %v7977 = vmul.f32 %v7917, %v1129
          %v7978 = vmul.f32 %v7919, %v1129
          %v7979 = vmul.f32 %v7921, %v1129
          %v7980 = vmul.f32 %v7923, %v1129
          %v7981 = vmul.f32 %v7925, %v1129
          %v7982 = vmul.f32 %v7927, %v1129
          %v7983 = vmul.f32 %v7929, %v1129
          %v7984 = vmul.f32 %v7931, %v1129
          %v7985 = vmul.f32 %v7933, %v1129
          %v7986 = vmul.f32 %v7935, %v1129
          %v7987 = vmul.f32 %v7937, %v1129
          %v7988 = vmul.f32 %v7939, %v1129
          %v7989 = vmul.f32 %v7941, %v1129
          %v7990 = vmul.f32 %v7943, %v1129
          %v7991 = vmul.f32 %v7945, %v1129
          %v7992 = vmul.f32 %v7947, %v1129
          %v7993 = vmul.f32 %v7949, %v1129
          %v7994 = vmul.f32 %v7951, %v1129
          %v7995 = vmul.f32 %v7953, %v1129
          %v7996 = vmul.f32 %v7955, %v1129
          %v7997 = vmul.f32 %v7957, %v1129
          %v7998 = vmul.f32 %v7959, %v1129
          %v7999 = vmul.f32 %v7961, %v1129
          %v8000 = vmul.f32 %v7963, %v1129
          %v8001 = vmul.f32 %v7965, %v1129
          %v8002 = vmul.f32 %v7967, %v1129
          %v8003 = vmul.f32 %v7969, %v1129
          %v8004 = vmul.f32 %v7971, %v1129
          %v8005 = vmul.f32 %v7973, %v1129
          %v8006 = vadd.f32 %v7974, 1e-05
          %v8007 = vadd.f32 %v7975, 1e-05
          %v8008 = vadd.f32 %v7976, 1e-05
          %v8009 = vadd.f32 %v7977, 1e-05
          %v8010 = vadd.f32 %v7978, 1e-05
          %v8011 = vadd.f32 %v7979, 1e-05
          %v8012 = vadd.f32 %v7980, 1e-05
          %v8013 = vadd.f32 %v7981, 1e-05
          %v8014 = vadd.f32 %v7982, 1e-05
          %v8015 = vadd.f32 %v7983, 1e-05
          %v8016 = vadd.f32 %v7984, 1e-05
          %v8017 = vadd.f32 %v7985, 1e-05
          %v8018 = vadd.f32 %v7986, 1e-05
          %v8019 = vadd.f32 %v7987, 1e-05
          %v8020 = vadd.f32 %v7988, 1e-05
          %v8021 = vadd.f32 %v7989, 1e-05
          %v8022 = vadd.f32 %v7990, 1e-05
          %v8023 = vadd.f32 %v7991, 1e-05
          %v8024 = vadd.f32 %v7992, 1e-05
          %v8025 = vadd.f32 %v7993, 1e-05
          %v8026 = vadd.f32 %v7994, 1e-05
          %v8027 = vadd.f32 %v7995, 1e-05
          %v8028 = vadd.f32 %v7996, 1e-05
          %v8029 = vadd.f32 %v7997, 1e-05
          %v8030 = vadd.f32 %v7998, 1e-05
          %v8031 = vadd.f32 %v7999, 1e-05
          %v8032 = vadd.f32 %v8000, 1e-05
          %v8033 = vadd.f32 %v8001, 1e-05
          %v8034 = vadd.f32 %v8002, 1e-05
          %v8035 = vadd.f32 %v8003, 1e-05
          %v8036 = vadd.f32 %v8004, 1e-05
          %v8037 = vadd.f32 %v8005, 1e-05
          %v8038 = vrsqrt.pop %v8006
          %v8039 = vrsqrt.pop %v8007
          %v8040 = vrsqrt.pop %v8008
          %v8041 = vrsqrt.pop %v8009
          %v8042 = vrsqrt.pop %v8010
          %v8043 = vrsqrt.pop %v8011
          %v8044 = vrsqrt.pop %v8012
          %v8045 = vrsqrt.pop %v8013
          %v8046 = vrsqrt.pop %v8014
          %v8047 = vrsqrt.pop %v8015
          %v8048 = vrsqrt.pop %v8016
          %v8049 = vrsqrt.pop %v8017
          %v8050 = vrsqrt.pop %v8018
          %v8051 = vrsqrt.pop %v8019
          %v8052 = vrsqrt.pop %v8020
          %v8053 = vrsqrt.pop %v8021
          %v8054 = vrsqrt.pop %v8022
          %v8055 = vrsqrt.pop %v8023
          %v8056 = vrsqrt.pop %v8024
          %v8057 = vrsqrt.pop %v8025
          %v8058 = vrsqrt.pop %v8026
          %v8059 = vrsqrt.pop %v8027
          %v8060 = vrsqrt.pop %v8028
          %v8061 = vrsqrt.pop %v8029
          %v8062 = vrsqrt.pop %v8030
          %v8063 = vrsqrt.pop %v8031
          %v8064 = vrsqrt.pop %v8032
          %v8065 = vrsqrt.pop %v8033
          %v8066 = vrsqrt.pop %v8034
          %v8067 = vrsqrt.pop %v8035
          %v8068 = vrsqrt.pop %v8036
          %v8069 = vrsqrt.pop %v8037
          %v8070 = vmul.f32 %v7846, %v8038
          %v8071 = vmul.f32 %v7847, %v8039
          %v8072 = vmul.f32 %v7848, %v8040
          %v8073 = vmul.f32 %v7849, %v8041
          %v8074 = vmul.f32 %v7850, %v8042
          %v8075 = vmul.f32 %v7851, %v8043
          %v8076 = vmul.f32 %v7852, %v8044
          %v8077 = vmul.f32 %v7853, %v8045
          %v8078 = vmul.f32 %v7854, %v8046
          %v8079 = vmul.f32 %v7855, %v8047
          %v8080 = vmul.f32 %v7856, %v8048
          %v8081 = vmul.f32 %v7857, %v8049
          %v8082 = vmul.f32 %v7858, %v8050
          %v8083 = vmul.f32 %v7859, %v8051
          %v8084 = vmul.f32 %v7860, %v8052
          %v8085 = vmul.f32 %v7861, %v8053
          %v8086 = vmul.f32 %v7862, %v8054
          %v8087 = vmul.f32 %v7863, %v8055
          %v8088 = vmul.f32 %v7864, %v8056
          %v8089 = vmul.f32 %v7865, %v8057
          %v8090 = vmul.f32 %v7866, %v8058
          %v8091 = vmul.f32 %v7867, %v8059
          %v8092 = vmul.f32 %v7868, %v8060
          %v8093 = vmul.f32 %v7869, %v8061
          %v8094 = vmul.f32 %v7870, %v8062
          %v8095 = vmul.f32 %v7871, %v8063
          %v8096 = vmul.f32 %v7872, %v8064
          %v8097 = vmul.f32 %v7873, %v8065
          %v8098 = vmul.f32 %v7874, %v8066
          %v8099 = vmul.f32 %v7875, %v8067
          %v8100 = vmul.f32 %v7876, %v8068
          %v8101 = vmul.f32 %v7877, %v8069
          %v8103 = vlaneseq
          %v8104 = vshrl.u32 %v8103, 7
          %v8105 = vsub.s32 0, %v8104
          %v8106 = vrot.slane %v7748, %v8105
          %v8108 = vmul.f32 %v8070, %v8106
          %v8109 = vmul.f32 %v8071, %v8106
          %v8110 = vmul.f32 %v8072, %v8106
          %v8111 = vmul.f32 %v8073, %v8106
          %v8112 = vmul.f32 %v8074, %v8106
          %v8113 = vmul.f32 %v8075, %v8106
          %v8114 = vmul.f32 %v8076, %v8106
          %v8115 = vmul.f32 %v8077, %v8106
          %v8116 = vmul.f32 %v8078, %v8106
          %v8117 = vmul.f32 %v8079, %v8106
          %v8118 = vmul.f32 %v8080, %v8106
          %v8119 = vmul.f32 %v8081, %v8106
          %v8120 = vmul.f32 %v8082, %v8106
          %v8121 = vmul.f32 %v8083, %v8106
          %v8122 = vmul.f32 %v8084, %v8106
          %v8123 = vmul.f32 %v8085, %v8106
          %v8124 = vmul.f32 %v8086, %v8106
          %v8125 = vmul.f32 %v8087, %v8106
          %v8126 = vmul.f32 %v8088, %v8106
          %v8127 = vmul.f32 %v8089, %v8106
          %v8128 = vmul.f32 %v8090, %v8106
          %v8129 = vmul.f32 %v8091, %v8106
          %v8130 = vmul.f32 %v8092, %v8106
          %v8131 = vmul.f32 %v8093, %v8106
          %v8132 = vmul.f32 %v8094, %v8106
          %v8133 = vmul.f32 %v8095, %v8106
          %v8134 = vmul.f32 %v8096, %v8106
          %v8135 = vmul.f32 %v8097, %v8106
          %v8136 = vmul.f32 %v8098, %v8106
          %v8137 = vmul.f32 %v8099, %v8106
          %v8138 = vmul.f32 %v8100, %v8106
          %v8139 = vmul.f32 %v8101, %v8106
          %v8141 = vlaneseq
          %v8142 = vshrl.u32 %v8141, 7
          %v8143 = vsub.s32 0, %v8142
          %v8144 = vrot.slane %v7749, %v8143
          %v8146 = vadd.f32 %v8108, %v8144
          %v8147 = vadd.f32 %v8109, %v8144
          %v8148 = vadd.f32 %v8110, %v8144
          %v8149 = vadd.f32 %v8111, %v8144
          %v8150 = vadd.f32 %v8112, %v8144
          %v8151 = vadd.f32 %v8113, %v8144
          %v8152 = vadd.f32 %v8114, %v8144
          %v8153 = vadd.f32 %v8115, %v8144
          %v8154 = vadd.f32 %v8116, %v8144
          %v8155 = vadd.f32 %v8117, %v8144
          %v8156 = vadd.f32 %v8118, %v8144
          %v8157 = vadd.f32 %v8119, %v8144
          %v8158 = vadd.f32 %v8120, %v8144
          %v8159 = vadd.f32 %v8121, %v8144
          %v8160 = vadd.f32 %v8122, %v8144
          %v8161 = vadd.f32 %v8123, %v8144
          %v8162 = vadd.f32 %v8124, %v8144
          %v8163 = vadd.f32 %v8125, %v8144
          %v8164 = vadd.f32 %v8126, %v8144
          %v8165 = vadd.f32 %v8127, %v8144
          %v8166 = vadd.f32 %v8128, %v8144
          %v8167 = vadd.f32 %v8129, %v8144
          %v8168 = vadd.f32 %v8130, %v8144
          %v8169 = vadd.f32 %v8131, %v8144
          %v8170 = vadd.f32 %v8132, %v8144
          %v8171 = vadd.f32 %v8133, %v8144
          %v8172 = vadd.f32 %v8134, %v8144
          %v8173 = vadd.f32 %v8135, %v8144
          %v8174 = vadd.f32 %v8136, %v8144
          %v8175 = vadd.f32 %v8137, %v8144
          %v8176 = vadd.f32 %v8138, %v8144
          %v8177 = vadd.f32 %v8139, %v8144
          %v8178 = vpack.c.bf16 %v8147, %v8146
          %v8179 = vpack.c.bf16 %v8149, %v8148
          %v8180 = vpack.c.bf16 %v8151, %v8150
          %v8181 = vpack.c.bf16 %v8153, %v8152
          %v8182 = vpack.c.bf16 %v8155, %v8154
          %v8183 = vpack.c.bf16 %v8157, %v8156
          %v8184 = vpack.c.bf16 %v8159, %v8158
          %v8185 = vpack.c.bf16 %v8161, %v8160
          %v8186 = vpack.c.bf16 %v8163, %v8162
          %v8187 = vpack.c.bf16 %v8165, %v8164
          %v8188 = vpack.c.bf16 %v8167, %v8166
          %v8189 = vpack.c.bf16 %v8169, %v8168
          %v8190 = vpack.c.bf16 %v8171, %v8170
          %v8191 = vpack.c.bf16 %v8173, %v8172
          %v8192 = vpack.c.bf16 %v8175, %v8174
          %v8193 = vpack.c.bf16 %v8177, %v8176
          %v8194 = vld [vmem:[#allocation24] sm:$0xf]
          %v8195 = vld [vmem:[#allocation24 + $0x4] sm:$0xf]
          %v8196 = vld [vmem:[#allocation24 + $0x8] sm:$0xf]
          %v8197 = vld [vmem:[#allocation24 + $0xc] sm:$0xf]
          %v8198 = vld [vmem:[#allocation24 + $0x10] sm:$0xf]
          %v8199 = vld [vmem:[#allocation24 + $0x14] sm:$0xf]
          %v8200 = vld [vmem:[#allocation24 + $0x18] sm:$0xf]
          %v8201 = vld [vmem:[#allocation24 + $0x1c] sm:$0xf]
          %v8202 = vld [vmem:[#allocation24 + $0x20] sm:$0xf]
          %v8203 = vld [vmem:[#allocation24 + $0x24] sm:$0xf]
          %v8204 = vld [vmem:[#allocation24 + $0x28] sm:$0xf]
          %v8205 = vld [vmem:[#allocation24 + $0x2c] sm:$0xf]
          %v8206 = vld [vmem:[#allocation24 + $0x30] sm:$0xf]
          %v8207 = vld [vmem:[#allocation24 + $0x34] sm:$0xf]
          %v8208 = vld [vmem:[#allocation24 + $0x38] sm:$0xf]
          %v8209 = vld [vmem:[#allocation24 + $0x3c] sm:$0xf]
          %v8210 = vld [vmem:[#allocation26] sm:$0x1]
          %v8212 = vlaneseq
          %v8213 = vshrl.u32 %v8212, 7
          %v8214 = vsub.s32 0, %v8213
          %v8215 = vrot.slane %v8210, %v8214
          %v8233 = vunpack.c.l.b16 %v8194
          %v8234 = vunpack.c.l.b16 %v8195
          %v8235 = vunpack.c.l.b16 %v8196
          %v8236 = vunpack.c.l.b16 %v8197
          %v8237 = vunpack.c.l.b16 %v8198
          %v8238 = vunpack.c.l.b16 %v8199
          %v8239 = vunpack.c.l.b16 %v8200
          %v8240 = vunpack.c.l.b16 %v8201
          %v8241 = vunpack.c.l.b16 %v8202
          %v8242 = vunpack.c.l.b16 %v8203
          %v8243 = vunpack.c.l.b16 %v8204
          %v8244 = vunpack.c.l.b16 %v8205
          %v8245 = vunpack.c.l.b16 %v8206
          %v8246 = vunpack.c.l.b16 %v8207
          %v8247 = vunpack.c.l.b16 %v8208
          %v8248 = vunpack.c.l.b16 %v8209
          %v8249 = vpack.c.b16 %v8234, %v8233
          %v8250 = vpack.c.b16 %v8236, %v8235
          %v8251 = vpack.c.b16 %v8238, %v8237
          %v8252 = vpack.c.b16 %v8240, %v8239
          %v8253 = vpack.c.b16 %v8242, %v8241
          %v8254 = vpack.c.b16 %v8244, %v8243
          %v8255 = vpack.c.b16 %v8246, %v8245
          %v8256 = vpack.c.b16 %v8248, %v8247
          %8265 = vmatprep.subr.bf16.mxu0 0
          %8266 = vmatpush1.bf16.msra.mxu0 %v8249
          %8267 = vmatprep.subr.bf16.mxu0 0
          %8268 = vmatpush1.bf16.msra.mxu0 %v8250
          %8269 = vmatprep.subr.bf16.mxu0 0
          %8270 = vmatpush1.bf16.msra.mxu0 %v8251
          %8271 = vmatprep.subr.bf16.mxu0 0
          %8272 = vmatpush1.bf16.msra.mxu0 %v8252
          %8273 = vmatprep.subr.bf16.mxu0 0
          %8274 = vmatpush1.bf16.msra.mxu0 %v8253
          %8275 = vmatprep.subr.bf16.mxu0 0
          %8276 = vmatpush1.bf16.msra.mxu0 %v8254
          %8277 = vmatprep.subr.bf16.mxu0 0
          %8278 = vmatpush1.bf16.msra.mxu0 %v8255
          %8279 = vmatprep.subr.bf16.mxu0 0
          %8280 = vmatpush1.bf16.msra.mxu0 %v8256
          %8281 = vmatprep.subr.bf16.mxu0 0
          %8282 = vmatpush1.bf16.msra.mxu0 0
          %8283 = vmatprep.subr.bf16.mxu0 0
          %8284 = vmatpush1.bf16.msra.mxu0 0
          %8285 = vmatprep.subr.bf16.mxu0 0
          %8286 = vmatpush1.bf16.msra.mxu0 0
          %8287 = vmatprep.subr.bf16.mxu0 0
          %8288 = vmatpush1.bf16.msra.mxu0 0
          %8289 = vmatprep.subr.bf16.mxu0 0
          %8290 = vmatpush1.bf16.msra.mxu0 0
          %8291 = vmatprep.subr.bf16.mxu0 0
          %8292 = vmatpush1.bf16.msra.mxu0 0
          %8293 = vmatprep.subr.bf16.mxu0 0
          %8294 = vmatpush1.bf16.msra.mxu0 0
          %8295 = vmatprep.subr.bf16.mxu0 0
          %8296 = vmatpush1.bf16.msra.mxu0 0
          %8297 = vmatprep.mubr.bf16.mxu0 0
          %8298 = vmatmul.mubr.bf16.gmra.mrb[0].mxu0 %v8178
          %v8299 = vpop.f32.mrb[0].mxu0
          %v8300 = vadd.f32 %v8215, %v8299
          %v8301 = vpop.f32.mrb[0].mxu0
          %v8302 = vpop.f32.mrb[0].mxu0
          %v8303 = vadd.f32 %v8215, %v8302
          %v8304 = vpop.f32.mrb[0].mxu0
          %8305 = vmatprep.mubr.bf16.mxu0 0
          %8306 = vmatmul.mubr.bf16.gmra.mrb[0].mxu0 %v8179
          %v8307 = vpop.f32.mrb[0].mxu0
          %v8308 = vadd.f32 %v8215, %v8307
          %v8309 = vpop.f32.mrb[0].mxu0
          %v8310 = vpop.f32.mrb[0].mxu0
          %v8311 = vadd.f32 %v8215, %v8310
          %v8312 = vpop.f32.mrb[0].mxu0
          %8313 = vmatprep.mubr.bf16.mxu0 0
          %8314 = vmatmul.mubr.bf16.gmra.mrb[0].mxu0 %v8180
          %v8315 = vpop.f32.mrb[0].mxu0
          %v8316 = vadd.f32 %v8215, %v8315
          %v8317 = vpop.f32.mrb[0].mxu0
          %v8318 = vpop.f32.mrb[0].mxu0
          %v8319 = vadd.f32 %v8215, %v8318
          %v8320 = vpop.f32.mrb[0].mxu0
          %8321 = vmatprep.mubr.bf16.mxu0 0
          %8322 = vmatmul.mubr.bf16.gmra.mrb[0].mxu0 %v8181
          %v8323 = vpop.f32.mrb[0].mxu0
          %v8324 = vadd.f32 %v8215, %v8323
          %v8325 = vpop.f32.mrb[0].mxu0
          %v8326 = vpop.f32.mrb[0].mxu0
          %v8327 = vadd.f32 %v8215, %v8326
          %v8328 = vpop.f32.mrb[0].mxu0
          %8329 = vmatprep.mubr.bf16.mxu0 0
          %8330 = vmatmul.mubr.bf16.gmra.mrb[0].mxu0 %v8182
          %v8331 = vpop.f32.mrb[0].mxu0
          %v8332 = vadd.f32 %v8215, %v8331
          %v8333 = vpop.f32.mrb[0].mxu0
          %v8334 = vpop.f32.mrb[0].mxu0
          %v8335 = vadd.f32 %v8215, %v8334
          %v8336 = vpop.f32.mrb[0].mxu0
          %8337 = vmatprep.mubr.bf16.mxu0 0
          %8338 = vmatmul.mubr.bf16.gmra.mrb[0].mxu0 %v8183
          %v8339 = vpop.f32.mrb[0].mxu0
          %v8340 = vadd.f32 %v8215, %v8339
          %v8341 = vpop.f32.mrb[0].mxu0
          %v8342 = vpop.f32.mrb[0].mxu0
          %v8343 = vadd.f32 %v8215, %v8342
          %v8344 = vpop.f32.mrb[0].mxu0
          %8345 = vmatprep.mubr.bf16.mxu0 0
          %8346 = vmatmul.mubr.bf16.gmra.mrb[0].mxu0 %v8184
          %v8347 = vpop.f32.mrb[0].mxu0
          %v8348 = vadd.f32 %v8215, %v8347
          %v8349 = vpop.f32.mrb[0].mxu0
          %v8350 = vpop.f32.mrb[0].mxu0
          %v8351 = vadd.f32 %v8215, %v8350
          %v8352 = vpop.f32.mrb[0].mxu0
          %8353 = vmatprep.mubr.bf16.mxu0 0
          %8354 = vmatmul.mubr.bf16.gmra.mrb[0].mxu0 %v8185
          %v8355 = vpop.f32.mrb[0].mxu0
          %v8356 = vadd.f32 %v8215, %v8355
          %v8357 = vpop.f32.mrb[0].mxu0
          %v8358 = vpop.f32.mrb[0].mxu0
          %v8359 = vadd.f32 %v8215, %v8358
          %v8360 = vpop.f32.mrb[0].mxu0
          %8361 = vmatprep.mubr.bf16.mxu0 0
          %8362 = vmatmul.mubr.bf16.gmra.mrb[0].mxu0 %v8186
          %v8363 = vpop.f32.mrb[0].mxu0
          %v8364 = vadd.f32 %v8215, %v8363
          %v8365 = vpop.f32.mrb[0].mxu0
          %v8366 = vpop.f32.mrb[0].mxu0
          %v8367 = vadd.f32 %v8215, %v8366
          %v8368 = vpop.f32.mrb[0].mxu0
          %8369 = vmatprep.mubr.bf16.mxu0 0
          %8370 = vmatmul.mubr.bf16.gmra.mrb[0].mxu0 %v8187
          %v8371 = vpop.f32.mrb[0].mxu0
          %v8372 = vadd.f32 %v8215, %v8371
          %v8373 = vpop.f32.mrb[0].mxu0
          %v8374 = vpop.f32.mrb[0].mxu0
          %v8375 = vadd.f32 %v8215, %v8374
          %v8376 = vpop.f32.mrb[0].mxu0
          %8377 = vmatprep.mubr.bf16.mxu0 0
          %8378 = vmatmul.mubr.bf16.gmra.mrb[0].mxu0 %v8188
          %v8379 = vpop.f32.mrb[0].mxu0
          %v8380 = vadd.f32 %v8215, %v8379
          %v8381 = vpop.f32.mrb[0].mxu0
          %v8382 = vpop.f32.mrb[0].mxu0
          %v8383 = vadd.f32 %v8215, %v8382
          %v8384 = vpop.f32.mrb[0].mxu0
          %8385 = vmatprep.mubr.bf16.mxu0 0
          %8386 = vmatmul.mubr.bf16.gmra.mrb[0].mxu0 %v8189
          %v8387 = vpop.f32.mrb[0].mxu0
          %v8388 = vadd.f32 %v8215, %v8387
          %v8389 = vpop.f32.mrb[0].mxu0
          %v8390 = vpop.f32.mrb[0].mxu0
          %v8391 = vadd.f32 %v8215, %v8390
          %v8392 = vpop.f32.mrb[0].mxu0
          %8393 = vmatprep.mubr.bf16.mxu0 0
          %8394 = vmatmul.mubr.bf16.gmra.mrb[0].mxu0 %v8190
          %v8395 = vpop.f32.mrb[0].mxu0
          %v8396 = vadd.f32 %v8215, %v8395
          %v8397 = vpop.f32.mrb[0].mxu0
          %v8398 = vpop.f32.mrb[0].mxu0
          %v8399 = vadd.f32 %v8215, %v8398
          %v8400 = vpop.f32.mrb[0].mxu0
          %8401 = vmatprep.mubr.bf16.mxu0 0
          %8402 = vmatmul.mubr.bf16.gmra.mrb[0].mxu0 %v8191
          %v8403 = vpop.f32.mrb[0].mxu0
          %v8404 = vadd.f32 %v8215, %v8403
          %v8405 = vpop.f32.mrb[0].mxu0
          %v8406 = vpop.f32.mrb[0].mxu0
          %v8407 = vadd.f32 %v8215, %v8406
          %v8408 = vpop.f32.mrb[0].mxu0
          %8409 = vmatprep.mubr.bf16.mxu0 0
          %8410 = vmatmul.mubr.bf16.gmra.mrb[0].mxu0 %v8192
          %v8411 = vpop.f32.mrb[0].mxu0
          %v8412 = vadd.f32 %v8215, %v8411
          %v8413 = vpop.f32.mrb[0].mxu0
          %v8414 = vpop.f32.mrb[0].mxu0
          %v8415 = vadd.f32 %v8215, %v8414
          %v8416 = vpop.f32.mrb[0].mxu0
          %8417 = vmatprep.mubr.bf16.mxu0 0
          %8418 = vmatmul.mubr.bf16.gmra.mrb[0].mxu0 %v8193
          %v8419 = vpop.f32.mrb[0].mxu0
          %v8420 = vadd.f32 %v8215, %v8419
          %v8421 = vpop.f32.mrb[0].mxu0
          %v8422 = vpop.f32.mrb[0].mxu0
          %v8423 = vadd.f32 %v8215, %v8422
          %v8424 = vpop.f32.mrb[0].mxu0
          %8425 = vdwg.mxu0
          %8426 = vst [vmem:[%s924] sm:$0xff] %v8300
          %8427 = vst [vmem:[%s924 + $0x8] sm:$0xff] %v8303
          %8428 = vst [vmem:[%s924 + $0x10] sm:$0xff] %v8308
          %8429 = vst [vmem:[%s924 + $0x18] sm:$0xff] %v8311
          %8430 = vst [vmem:[%s924 + $0x20] sm:$0xff] %v8316
          %8431 = vst [vmem:[%s924 + $0x28] sm:$0xff] %v8319
          %8432 = vst [vmem:[%s924 + $0x30] sm:$0xff] %v8324
          %8433 = vst [vmem:[%s924 + $0x38] sm:$0xff] %v8327
          %8434 = vst [vmem:[%s924 + $0x40] sm:$0xff] %v8332
          %8435 = vst [vmem:[%s924 + $0x48] sm:$0xff] %v8335
          %8436 = vst [vmem:[%s924 + $0x50] sm:$0xff] %v8340
          %8437 = vst [vmem:[%s924 + $0x58] sm:$0xff] %v8343
          %8438 = vst [vmem:[%s924 + $0x60] sm:$0xff] %v8348
          %8439 = vst [vmem:[%s924 + $0x68] sm:$0xff] %v8351
          %8440 = vst [vmem:[%s924 + $0x70] sm:$0xff] %v8356
          %8441 = vst [vmem:[%s924 + $0x78] sm:$0xff] %v8359
          %8442 = vst [vmem:[%s924 + $0x80] sm:$0xff] %v8364
          %8443 = vst [vmem:[%s924 + $0x88] sm:$0xff] %v8367
          %8444 = vst [vmem:[%s924 + $0x90] sm:$0xff] %v8372
          %8445 = vst [vmem:[%s924 + $0x98] sm:$0xff] %v8375
          %8446 = vst [vmem:[%s924 + $0xa0] sm:$0xff] %v8380
          %8447 = vst [vmem:[%s924 + $0xa8] sm:$0xff] %v8383
          %8448 = vst [vmem:[%s924 + $0xb0] sm:$0xff] %v8388
          %8449 = vst [vmem:[%s924 + $0xb8] sm:$0xff] %v8391
          %8450 = vst [vmem:[%s924 + $0xc0] sm:$0xff] %v8396
          %8451 = vst [vmem:[%s924 + $0xc8] sm:$0xff] %v8399
          %8452 = vst [vmem:[%s924 + $0xd0] sm:$0xff] %v8404
          %8453 = vst [vmem:[%s924 + $0xd8] sm:$0xff] %v8407
          %8454 = vst [vmem:[%s924 + $0xe0] sm:$0xff] %v8412
          %8455 = vst [vmem:[%s924 + $0xe8] sm:$0xff] %v8415
          %8456 = vst [vmem:[%s924 + $0xf0] sm:$0xff] %v8420
          %8457 = vst [vmem:[%s924 + $0xf8] sm:$0xff] %v8423
        $region148: #{tpu_custom_call.1} parent=79 // pred_fallthru
          _
        %s8458 = sand.u32 %s439, 1
        %s8459 = scalar_lea.sflag [#allocation5], %s8458
        %s8460 = sand.u32 %s439, 1
        %s8461 = smul.addr %s8460, 256
        %s8462 = scalar_lea.vmem [#allocation27], %s8461
        // Predicated region
        $region149: #{tpu_custom_call.1} parent=79 // pred_check
          %p8463 = pneg %p449
        $region150: #{tpu_custom_call.1} parent=79 // pred_check_branch
          %8465 = sbr.rel (%p8463) target = $region152
        $region151: #{tpu_custom_call.1} parent=79 // pred_region
          %s8466 = smul.u32 2, %s53
          %s8468 = ssub.s32 4096, 4096
          %8469 = vsyncadd %s8459, %s8468
          %s8470 = smul.addr %s8466, 16
          %s8471 = smul.addr %s8470, 128
          %s8472 = scalar_lea.hbm %s15, %s8471
          %s8473 = sshll.u32 %s8462, 4
          %s8474 = int_to_ptr.vmem [resolvable:$true] %s8473
          %8479 = dma.vmem_to_hbm [thread:$0]  %s8474, 4096, %s8472, %s8459, 128, 128, 8
        $region152: #{tpu_custom_call.1} parent=79 // pred_fallthru
          _
      $region80: #{tpu_custom_call.1} parent=5 // pred_fallthru
        _
      %p8480 = scmp.le.s32.totalorder 2, %s44
      // Predicated region
      $region153: #{tpu_custom_call.1} parent=5 // pred_check
        %p8481 = pneg %p8480
      $region154: #{tpu_custom_call.1} parent=5 // pred_check_branch
        %8483 = sbr.rel (%p8481) target = $region156
      $region155: #{tpu_custom_call.1} parent=5 // pred_region
        %s8484 = ssub.s32 %s44, 2
        // Predicated region
        $region157: #{tpu_custom_call.1} parent=155 // pred_check
          %p8485 = pneg %p455
        $region158: #{tpu_custom_call.1} parent=155 // pred_check_branch
          %8487 = sbr.rel (%p8485) target = $region160
        $region159: #{tpu_custom_call.1} parent=155 // pred_region
          %s8488 = sand.u32 %s440, 1
          %s8489 = scalar_lea.sflag [#allocation5], %s8488
          %s8490 = sand.u32 %s440, 1
          %s8491 = smul.addr %s8490, 256
          %s8492 = scalar_lea.vmem [#allocation27], %s8491
          %8493 = dma.done %s8489, 4096
        $region160: #{tpu_custom_call.1} parent=155 // pred_fallthru
          _
      $region156: #{tpu_custom_call.1} parent=5 // pred_fallthru
        _
    $region6: #{tpu_custom_call.1} parent=1 // loop_footer
      %s48 = sadd.s32 1, %s44
    $region7: #{tpu_custom_call.1} parent=1 // loop_footer_branch
      %43 = sbr.rel target = $region3
    $region8: #{tpu_custom_call.1} parent=1 // loop_exit
      _
    %8494 = vsyncpa [#allocation4], 1
    %s8495 = scalar_lea.sflag [#allocation4], 1
    %8496 = vsyncpa %s8495, 1
    %8497 = vsyncpa [#allocation7], 1
    %s8498 = scalar_lea.sflag [#allocation7], 1
    %8499 = vsyncpa %s8498, 1
    %8500 = vsyncpa [#allocation10], 1
    %s8501 = scalar_lea.sflag [#allocation10], 1
    %8502 = vsyncpa %s8501, 1
    %8503 = vsyncpa [#allocation13], 1
    %s8504 = scalar_lea.sflag [#allocation13], 1
    %8505 = vsyncpa %s8504, 1
    %8506 = vsyncpa [#allocation16], 1
    %s8507 = scalar_lea.sflag [#allocation16], 1
    %8508 = vsyncpa %s8507, 1
    %8509 = vsyncpa [#allocation19], 1
    %s8510 = scalar_lea.sflag [#allocation19], 1
    %8511 = vsyncpa %s8510, 1
    %8512 = vsyncpa [#allocation22], 1
    %8513 = vsyncpa [#allocation25], 1
    %8514 = vsyncpa [#allocation5], 1
    %s8515 = scalar_lea.sflag [#allocation5], 1
    %8516 = vsyncpa %s8515, 1

</llo_original>
